<compile_context>
chip_gen: v6e
topology: v6e:2x2x1
jax: 0.10.0
libtpu: 0.0.40
codegen_flags: <defaults>
</compile_context>

<pallas_src>
import functools

import jax
import jax.numpy as jnp
from jax.experimental import pallas as pl
from jax.experimental.pallas import tpu as pltpu


# ----------------------------------------------------------------------------
# helpers
# ----------------------------------------------------------------------------
def _round_up(x, m):
    return ((x + m - 1) // m) * m


def _full_spec(shape):
    """Whole-array block (grid-less pallas_call)."""
    return pl.BlockSpec(shape, lambda: (0,) * len(shape))


# ----------------------------------------------------------------------------
# Tiled matmul (+bias, +optional ReLU): bf16 operands, f32 accumulation
# ----------------------------------------------------------------------------
def _matmul_kernel_multi_k(a_ref, b_ref, bias_ref, o_ref, acc_ref, *, relu):
    k = pl.program_id(2)

    @pl.when(k == 0)
    def _():
        acc_ref[...] = jnp.zeros_like(acc_ref)

    acc_ref[...] += jnp.dot(a_ref[...], b_ref[...],
                            preferred_element_type=jnp.float32)

    @pl.when(k == pl.num_programs(2) - 1)
    def _():
        acc = acc_ref[...] + bias_ref[...]
        if relu:
            acc = jnp.maximum(acc, 0.0)
        o_ref[...] = acc.astype(o_ref.dtype)


def _matmul_kernel_single_k(a_ref, b_ref, bias_ref, o_ref, *, relu):
    acc = jnp.dot(a_ref[...], b_ref[...],
                  preferred_element_type=jnp.float32) + bias_ref[...]
    if relu:
        acc = jnp.maximum(acc, 0.0)
    o_ref[...] = acc.astype(o_ref.dtype)


def matmul_pallas(a, w_t, bias, relu=False, out_dtype=jnp.float32):
    """a: (M, K); w_t: (K, N); bias: (N,). Returns (M, N) in out_dtype."""
    M, K = a.shape
    N = w_t.shape[1]
    # Tile caps sized well under the v7x 64 MiB / default 32 MiB scoped VMEM
    # budget including double-buffered inputs.
    tm = min(256, _round_up(M, 8))
    tn = min(512, _round_up(N, 128))
    tk = min(1024, _round_up(K, 128))
    Mp, Kp, Np = _round_up(M, tm), _round_up(K, tk), _round_up(N, tn)

    a_p = jnp.pad(a.astype(jnp.bfloat16), ((0, Mp - M), (0, Kp - K)))
    w_p = jnp.pad(w_t.astype(jnp.bfloat16), ((0, Kp - K), (0, Np - N)))
    b_p = jnp.pad(bias.astype(jnp.float32).reshape(1, N), ((0, 0), (0, Np - N)))

    if Kp // tk == 1:
        # Whole reduction in one tile: no accumulator scratch, no init/finalize.
        out = pl.pallas_call(
            functools.partial(_matmul_kernel_single_k, relu=relu),
            out_shape=jax.ShapeDtypeStruct((Mp, Np), out_dtype),
            grid_spec=pltpu.PrefetchScalarGridSpec(
                num_scalar_prefetch=0,
                grid=(Mp // tm, Np // tn),
                in_specs=[
                    pl.BlockSpec((tm, Kp), lambda i, j: (i, 0)),
                    pl.BlockSpec((Kp, tn), lambda i, j: (0, j)),
                    pl.BlockSpec((1, tn), lambda i, j: (0, j)),
                ],
                out_specs=pl.BlockSpec((tm, tn), lambda i, j: (i, j)),
            ),
            compiler_params=pltpu.CompilerParams(
                dimension_semantics=("parallel", "parallel"),
                vmem_limit_bytes=48 * 1024 * 1024,
            ),
        )(a_p, w_p, b_p)
    else:
        out = pl.pallas_call(
            functools.partial(_matmul_kernel_multi_k, relu=relu),
            out_shape=jax.ShapeDtypeStruct((Mp, Np), out_dtype),
            grid_spec=pltpu.PrefetchScalarGridSpec(
                num_scalar_prefetch=0,
                grid=(Mp // tm, Np // tn, Kp // tk),
                in_specs=[
                    pl.BlockSpec((tm, tk), lambda i, j, k: (i, k)),
                    pl.BlockSpec((tk, tn), lambda i, j, k: (k, j)),
                    pl.BlockSpec((1, tn), lambda i, j, k: (0, j)),
                ],
                out_specs=pl.BlockSpec((tm, tn), lambda i, j, k: (i, j)),
                scratch_shapes=[pltpu.VMEM((tm, tn), jnp.float32)],
            ),
            compiler_params=pltpu.CompilerParams(
                dimension_semantics=("parallel", "parallel", "arbitrary"),
                vmem_limit_bytes=48 * 1024 * 1024,
            ),
        )(a_p, w_p, b_p)
    return out[:M, :N]


# ----------------------------------------------------------------------------
# Conv1d = im2col (keeps (K, C_in) order, no transpose materialization)
#          + tiled Pallas matmul
# ----------------------------------------------------------------------------
def conv1d_pallas(x_btc, w, b, stride, relu, out_dtype=jnp.float32):
    """x: (B, T, C_in); w: torch layout (C_out, C_in, K); b: (C_out,)."""
    B, T, C_in = x_btc.shape
    C_out, _, K = w.shape
    T_out = (T - K) // stride + 1
    idx = jnp.arange(T_out)[:, None] * stride + jnp.arange(K)[None, :]  # (T_out, K)
    patches = x_btc[:, idx, :]                       # (B, T_out, K, C_in)
    a = patches.reshape(B * T_out, K * C_in)         # (K, C_in) flattening order
    w2 = jnp.transpose(w, (2, 1, 0)).reshape(K * C_in, C_out)
    out = matmul_pallas(a, w2, b, relu=relu, out_dtype=out_dtype)
    return out.reshape(B, T_out, C_out)


# ----------------------------------------------------------------------------
# Fused: per-view BatchNorm1d (train-mode batch stats) for both views at once
# ----------------------------------------------------------------------------
def _bn_pair_kernel(x_ref, g_ref, b_ref, o_ref, *, eps):
    x = x_ref[...]                                   # (2, B*T, D), f32
    mean = jnp.mean(x, axis=1, keepdims=True)
    var = jnp.mean(jnp.square(x - mean), axis=1, keepdims=True)
    y = (x - mean) * jax.lax.rsqrt(var + eps) * g_ref[...] + b_ref[...]
    o_ref[...] = y.astype(o_ref.dtype)


def batchnorm_pair_pallas(y1, y2, gamma, beta, eps=1e-5):
    B, T, D = y1.shape
    x = jnp.stack([y1.reshape(B * T, D), y2.reshape(B * T, D)], axis=0)
    out = pl.pallas_call(
        functools.partial(_bn_pair_kernel, eps=eps),
        out_shape=jax.ShapeDtypeStruct((2, B * T, D), jnp.bfloat16),
        in_specs=[_full_spec((2, B * T, D)),
                  _full_spec((1, 1, D)), _full_spec((1, 1, D))],
        out_specs=_full_spec((2, B * T, D)),
    )(x.astype(jnp.float32), gamma.reshape(1, 1, D), beta.reshape(1, 1, D))
    return out.reshape(2 * B, T, D)                  # [view1 batch ; view2 batch]


# ----------------------------------------------------------------------------
# Fused: temporal mean + backbone Linear, gridded over batch rows
# ----------------------------------------------------------------------------
def _mean_fc_kernel(h_ref, w_ref, b_ref, o_ref):
    m = jnp.mean(h_ref[...].astype(jnp.float32), axis=1)          # (tb, C)
    o_ref[...] = (jnp.dot(m.astype(w_ref.dtype), w_ref[...],
                          preferred_element_type=jnp.float32) + b_ref[...])


def mean_fc_pallas(h, fc_w, fc_b):
    M, T, C = h.shape
    N = fc_w.shape[0]
    tb = min(128, _round_up(M, 8))
    Mp = _round_up(M, tb)
    h_p = jnp.pad(h, ((0, Mp - M), (0, 0), (0, 0)))
    w_t = jnp.transpose(fc_w).astype(jnp.bfloat16)
    out = pl.pallas_call(
        _mean_fc_kernel,
        out_shape=jax.ShapeDtypeStruct((Mp, N), jnp.float32),
        grid_spec=pltpu.PrefetchScalarGridSpec(
            num_scalar_prefetch=0,
            grid=(Mp // tb,),
            in_specs=[pl.BlockSpec((tb, T, C), lambda i: (i, 0, 0)),
                      pl.BlockSpec((C, N), lambda i: (0, 0)),
                      pl.BlockSpec((1, N), lambda i: (0, 0))],
            out_specs=pl.BlockSpec((tb, N), lambda i: (i, 0)),
        ),
        compiler_params=pltpu.CompilerParams(
            dimension_semantics=("parallel",),
            vmem_limit_bytes=48 * 1024 * 1024,
        ),
    )(h_p, w_t, fc_b.reshape(1, N).astype(jnp.float32))
    return out[:M]


# ----------------------------------------------------------------------------
# Fused losses: projector (Linear->BN->ReLU->Linear->BN, per view) +
# symmetric infoNCE + online-head Linear + BCEWithLogits
# ----------------------------------------------------------------------------
def _bn_cols(v, g, b, eps):
    mu = jnp.mean(v, axis=0, keepdims=True)
    var = jnp.mean(jnp.square(v - mu), axis=0, keepdims=True)
    return (v - mu) * jax.lax.rsqrt(var + eps) * g + b


def _losses_kernel(r_ref, w0_ref, g1_ref, b1_ref, w1_ref, g2_ref, b2_ref,
                   hw_ref, hb_ref, y_ref, loss_ref, logit_ref,
                   *, n, eps, inv_temp):
    r = r_ref[...]                                                 # (2n, 512) f32
    # ---- projector (per-view BN, batch stats) ----
    z = jnp.dot(r.astype(jnp.bfloat16), w0_ref[...],
                preferred_element_type=jnp.float32)                # (2n, 256)
    z1, z2 = z[:n], z[n:]
    g1, b1, g2, b2 = g1_ref[...], b1_ref[...], g2_ref[...], b2_ref[...]
    z1 = jnp.maximum(_bn_cols(z1, g1, b1, eps), 0.0)
    z2 = jnp.maximum(_bn_cols(z2, g1, b1, eps), 0.0)
    z1 = jnp.dot(z1.astype(jnp.bfloat16), w1_ref[...],
                 preferred_element_type=jnp.float32)
    z2 = jnp.dot(z2.astype(jnp.bfloat16), w1_ref[...],
                 preferred_element_type=jnp.float32)
    z1 = _bn_cols(z1, g2, b2, eps)
    z2 = _bn_cols(z2, g2, b2, eps)
    # F.normalize (eps=1e-12) via rsqrt
    n1 = z1 * jax.lax.rsqrt(jnp.maximum(jnp.sum(z1 * z1, axis=1, keepdims=True), 1e-24))
    n2 = z2 * jax.lax.rsqrt(jnp.maximum(jnp.sum(z2 * z2, axis=1, keepdims=True), 1e-24))
    # infoNCE(z1,z2) = row CE; infoNCE(z2,z1) = column CE of the same matrix.
    lg = jax.lax.dot_general(n1, n2, (((1,), (1,)), ((), ())),
                             preferred_element_type=jnp.float32) * inv_temp  # (n, n)
    mr = jnp.max(lg, axis=1, keepdims=True)
    lse_r = mr + jnp.log(jnp.sum(jnp.exp(lg - mr), axis=1, keepdims=True))
    mc = jnp.max(lg, axis=0, keepdims=True)
    lse_c = mc + jnp.log(jnp.sum(jnp.exp(lg - mc), axis=0, keepdims=True))
    row = jax.lax.broadcasted_iota(jnp.int32, (n, n), 0)
    col = jax.lax.broadcasted_iota(jnp.int32, (n, n), 1)
    diag = jnp.sum(jnp.where(row == col, lg, 0.0))
    loss_ssl = (jnp.sum(lse_r) + jnp.sum(lse_c) - 2.0 * diag) / (2.0 * n)
    # ---- online head (on view-1 reps) + BCEWithLogits ----
    logits = jnp.dot(r[:n], hw_ref[...],
                     preferred_element_type=jnp.float32) + hb_ref[...]
    y = y_ref[...]
    bce = jnp.maximum(logits, 0.0) - logits * y + jnp.log(1.0 + jnp.exp(-jnp.abs(logits)))
    loss_clc = jnp.mean(bce)
    logit_ref[...] = logits
    loss_ref[...] = jnp.reshape(loss_ssl + loss_clc, (1, 1))


def losses_pallas(r, p, labels, temperature=0.1):
    M, C = r.shape                                  # (2B, 512)
    n = M // 2
    d = p["proj0_w"].shape[0]                       # 256
    nc = p["head_w"].shape[0]
    w0 = jnp.transpose(p["proj0_w"]).astype(jnp.bfloat16)   # (512, 256)
    w1 = jnp.transpose(p["proj1_w"]).astype(jnp.bfloat16)   # (256, 256)
    hw = jnp.transpose(p["head_w"]).astype(jnp.float32)     # (512, nc)
    loss, logits = pl.pallas_call(
        functools.partial(_losses_kernel, n=n, eps=1e-5, inv_temp=1.0 / temperature),
        out_shape=(jax.ShapeDtypeStruct((1, 1), jnp.float32),
                   jax.ShapeDtypeStruct((n, nc), jnp.float32)),
        in_specs=[_full_spec((M, C)), _full_spec((C, d)),
                  _full_spec((1, d)), _full_spec((1, d)),
                  _full_spec((d, d)),
                  _full_spec((1, d)), _full_spec((1, d)),
                  _full_spec((C, nc)), _full_spec((1, nc)),
                  _full_spec((n, nc))],
        out_specs=(_full_spec((1, 1)), _full_spec((n, nc))),
    )(r.astype(jnp.float32), w0,
      p["proj_bn1_g"].reshape(1, d), p["proj_bn1_b"].reshape(1, d),
      w1,
      p["proj_bn2_g"].reshape(1, d), p["proj_bn2_b"].reshape(1, d),
      hw, p["head_b"].reshape(1, nc).astype(jnp.float32),
      labels.astype(jnp.float32))
    return loss[0, 0], logits


# ----------------------------------------------------------------------------
# Model forward
# ----------------------------------------------------------------------------
def ss_model_forward(p, y1, y2, labels):
    B, T, D = y1.shape
    # Per-view bn0 (batch stats per view == PyTorch's separate backbone calls),
    # then both views share the BN-free conv/FC stack as one 2B batch.
    h = batchnorm_pair_pallas(y1, y2, p["bn0_g"], p["bn0_b"])       # (2B, T, D) bf16
    h = conv1d_pallas(h, p["conv0_w"], p["conv0_b"], stride=13, relu=True,
                      out_dtype=jnp.bfloat16)
    h = conv1d_pallas(h, p["conv1_w"], p["conv1_b"], stride=7, relu=True,
                      out_dtype=jnp.bfloat16)
    h = conv1d_pallas(h, p["conv2_w"], p["conv2_b"], stride=1, relu=True,
                      out_dtype=jnp.float32)
    r = mean_fc_pallas(h, p["fc_w"], p["fc_b"])                     # (2B, 512)

    num_classes = p["head_w"].shape[0]
    labels_flat = labels.reshape(-1, num_classes).astype(jnp.float32)
    # r1.detach() only matters for backward; forward is identical.
    loss, logits = losses_pallas(r, p, labels_flat, temperature=0.1)
    return loss, logits


# ----------------------------------------------------------------------------
# Deterministic parameter init (shapes from SS_Model.__init__)
# ----------------------------------------------------------------------------
def init_params(key, dim_in, num_classes):
    ks = list(jax.random.split(key, 12))

    def xavier(k, shape, fan_in, fan_out):
        bound = (6.0 / (fan_in + fan_out)) ** 0.5
        return jax.random.uniform(k, shape, jnp.float32, -bound, bound)

    def bias(k, shape, fan_in):
        bound = 1.0 / (fan_in ** 0.5)
        return jax.random.uniform(k, shape, jnp.float32, -bound, bound)

    p = {}
    # backbone
    p["bn0_g"] = jnp.ones((dim_in,), jnp.float32)
    p["bn0_b"] = jnp.zeros((dim_in,), jnp.float32)
    p["conv0_w"] = xavier(ks[0], (128, dim_in, 29), dim_in * 29, 128 * 29)
    p["conv0_b"] = bias(ks[1], (128,), dim_in * 29)
    p["conv1_w"] = xavier(ks[2], (256, 128, 15), 128 * 15, 256 * 15)
    p["conv1_b"] = bias(ks[3], (256,), 128 * 15)
    p["conv2_w"] = xavier(ks[4], (512, 256, 3), 256 * 3, 512 * 3)
    p["conv2_b"] = bias(ks[5], (512,), 256 * 3)
    p["fc_w"] = xavier(ks[6], (512, 512), 512, 512)
    p["fc_b"] = bias(ks[7], (512,), 512)
    # online head
    p["head_w"] = xavier(ks[8], (num_classes, 512), 512, num_classes)
    p["head_b"] = bias(ks[9], (num_classes,), 512)
    # projector
    p["proj0_w"] = xavier(ks[10], (256, 512), 512, 256)
    p["proj_bn1_g"] = jnp.ones((256,), jnp.float32)
    p["proj_bn1_b"] = jnp.zeros((256,), jnp.float32)
    p["proj1_w"] = xavier(ks[11], (256, 256), 256, 256)
    p["proj_bn2_g"] = jnp.ones((256,), jnp.float32)
    p["proj_bn2_b"] = jnp.zeros((256,), jnp.float32)
    return p


if __name__ == "__main__":
    # Small but conv-valid shapes: T must survive k=29/s=13, k=15/s=7, k=3/s=1.
    B, T, D = 2, 400, 30
    NUM_CLASSES = 6

    key = jax.random.PRNGKey(0)
    kx1, kx2, kl, kp = jax.random.split(key, 4)
    y1 = jax.random.normal(kx1, (B, T, D), jnp.float32)
    y2 = jax.random.normal(kx2, (B, T, D), jnp.float32)
    labels = (jax.random.uniform(kl, (B, NUM_CLASSES)) > 0.5).astype(jnp.float32)
    params = init_params(kp, D, NUM_CLASSES)

    fwd = jax.jit(ss_model_forward)
    loss, logits = fwd(params, y1, y2, labels)
    jax.block_until_ready((loss, logits))
    assert logits.shape == (B, NUM_CLASSES)
    assert bool(jnp.isfinite(loss))
    print("KERNEL_OK")
</pallas_src>

<mosaic_0001>
module attributes {stable_mosaic.version = 11 : i64} {
  func.func @_bn_pair_kernel(%arg0: memref<2x800x30xf32, #tpu.memory_space<vmem>>, %arg1: memref<1x1x30xf32, #tpu.memory_space<vmem>>, %arg2: memref<1x1x30xf32, #tpu.memory_space<vmem>>, %arg3: memref<2x800x30xbf16, #tpu.memory_space<vmem>>) attributes {dimension_semantics = [], scalar_prefetch = 0 : i64, scratch_operands = 0 : i64, tpu.core_type = #tpu.core_type<tc>} {
    %c0 = arith.constant 0 : index
    %c0_0 = arith.constant 0 : index
    %c0_1 = arith.constant 0 : index
    %0 = vector.load %arg0[%c0, %c0_0, %c0_1] : memref<2x800x30xf32, #tpu.memory_space<vmem>>, vector<2x800x30xf32>
    %cst = arith.constant dense<0.000000e+00> : vector<2x30xf32>
    %1 = vector.multi_reduction <add>, %0, %cst [1] : vector<2x800x30xf32> to vector<2x30xf32>
    %2 = vector.shape_cast %1 : vector<2x30xf32> to vector<2x1x30xf32>
    %cst_2 = arith.constant 8.000000e+02 : f32
    %3 = vector.broadcast %cst_2 : f32 to vector<2x1x30xf32>
    %4 = arith.divf %2, %3 : vector<2x1x30xf32>
    %5 = vector.broadcast %4 : vector<2x1x30xf32> to vector<2x800x30xf32>
    %6 = arith.subf %0, %5 : vector<2x800x30xf32>
    %7 = arith.mulf %6, %6 : vector<2x800x30xf32>
    %cst_3 = arith.constant dense<0.000000e+00> : vector<2x30xf32>
    %8 = vector.multi_reduction <add>, %7, %cst_3 [1] : vector<2x800x30xf32> to vector<2x30xf32>
    %9 = vector.shape_cast %8 : vector<2x30xf32> to vector<2x1x30xf32>
    %cst_4 = arith.constant 8.000000e+02 : f32
    %10 = vector.broadcast %cst_4 : f32 to vector<2x1x30xf32>
    %11 = arith.divf %9, %10 : vector<2x1x30xf32>
    %12 = vector.broadcast %4 : vector<2x1x30xf32> to vector<2x800x30xf32>
    %13 = arith.subf %0, %12 : vector<2x800x30xf32>
    %cst_5 = arith.constant 9.99999974E-6 : f32
    %14 = vector.broadcast %cst_5 : f32 to vector<2x1x30xf32>
    %15 = arith.addf %11, %14 : vector<2x1x30xf32>
    %16 = math.rsqrt %15 : vector<2x1x30xf32>
    %17 = vector.broadcast %16 : vector<2x1x30xf32> to vector<2x800x30xf32>
    %18 = arith.mulf %13, %17 : vector<2x800x30xf32>
    %c0_6 = arith.constant 0 : index
    %c0_7 = arith.constant 0 : index
    %c0_8 = arith.constant 0 : index
    %19 = vector.load %arg1[%c0_6, %c0_7, %c0_8] : memref<1x1x30xf32, #tpu.memory_space<vmem>>, vector<1x1x30xf32>
    %20 = vector.broadcast %19 : vector<1x1x30xf32> to vector<2x800x30xf32>
    %21 = arith.mulf %18, %20 : vector<2x800x30xf32>
    %c0_9 = arith.constant 0 : index
    %c0_10 = arith.constant 0 : index
    %c0_11 = arith.constant 0 : index
    %22 = vector.load %arg2[%c0_9, %c0_10, %c0_11] : memref<1x1x30xf32, #tpu.memory_space<vmem>>, vector<1x1x30xf32>
    %23 = vector.broadcast %22 : vector<1x1x30xf32> to vector<2x800x30xf32>
    %24 = arith.addf %21, %23 : vector<2x800x30xf32>
    %25 = arith.truncf %24 : vector<2x800x30xf32> to vector<2x800x30xbf16>
    %c0_12 = arith.constant 0 : index
    %c0_13 = arith.constant 0 : index
    %c0_14 = arith.constant 0 : index
    %26 = vector.load %arg3[%c0_12, %c0_13, %c0_14] : memref<2x800x30xbf16, #tpu.memory_space<vmem>>, vector<2x800x30xbf16>
    tpu.vector_store %arg3[%c0_12, %c0_13, %c0_14], %25 {strides = array<i32>} : memref<2x800x30xbf16, #tpu.memory_space<vmem>>, vector<2x800x30xbf16>,
    return
  }
}

module attributes {stable_mosaic.version = 11 : i64} {
  func.func @_matmul_kernel_single_k(%arg0: i32, %arg1: i32, %arg2: memref<120x896xbf16, #tpu.memory_space<vmem>>, %arg3: memref<896x128xbf16, #tpu.memory_space<vmem>>, %arg4: memref<1x128xf32, #tpu.memory_space<vmem>>, %arg5: memref<120x128xbf16, #tpu.memory_space<vmem>>) attributes {dimension_semantics = [#tpu.dimension_semantics<parallel>, #tpu.dimension_semantics<parallel>], iteration_bounds = array<i64: 1, 1>, scalar_prefetch = 0 : i64, scratch_operands = 0 : i64, tpu.core_type = #tpu.core_type<tc>, window_params = [{transform_indices = @transform_0, window_bounds = array<i64: 120, 896>}, {transform_indices = @transform_1, window_bounds = array<i64: 896, 128>}, {transform_indices = @transform_2, window_bounds = array<i64: 1, 128>}, {transform_indices = @transform_3, window_bounds = array<i64: 120, 128>}]} {
    %c0 = arith.constant 0 : index
    %c0_0 = arith.constant 0 : index
    %0 = vector.load %arg2[%c0, %c0_0] : memref<120x896xbf16, #tpu.memory_space<vmem>>, vector<120x896xbf16>
    %c0_1 = arith.constant 0 : index
    %c0_2 = arith.constant 0 : index
    %1 = vector.load %arg3[%c0_1, %c0_2] : memref<896x128xbf16, #tpu.memory_space<vmem>>, vector<896x128xbf16>
    %cst = arith.constant dense<0.000000e+00> : vector<120x128xf32>
    %2 = tpu.matmul %0, %1, %cst {dimension_numbers = #tpu.dot_dimension_numbers<[1], [0], [0], [1], [0, 0, 1, 1], [], []>} : vector<120x896xbf16>, vector<896x128xbf16>, vector<120x128xf32> -> vector<120x128xf32>
    %c0_3 = arith.constant 0 : index
    %c0_4 = arith.constant 0 : index
    %3 = vector.load %arg4[%c0_3, %c0_4] : memref<1x128xf32, #tpu.memory_space<vmem>>, vector<1x128xf32>
    %4 = vector.broadcast %3 : vector<1x128xf32> to vector<120x128xf32>
    %5 = arith.addf %2, %4 : vector<120x128xf32>
    %cst_5 = arith.constant 0.000000e+00 : f32
    %6 = vector.broadcast %cst_5 : f32 to vector<120x128xf32>
    %7 = arith.maximumf %5, %6 : vector<120x128xf32>
    %8 = arith.truncf %7 : vector<120x128xf32> to vector<120x128xbf16>
    %c0_6 = arith.constant 0 : index
    %c0_7 = arith.constant 0 : index
    %9 = vector.load %arg5[%c0_6, %c0_7] : memref<120x128xbf16, #tpu.memory_space<vmem>>, vector<120x128xbf16>
    tpu.vector_store %arg5[%c0_6, %c0_7], %8 {strides = array<i32>} : memref<120x128xbf16, #tpu.memory_space<vmem>>, vector<120x128xbf16>,
    return
  }
  func.func @transform_0(%arg0: i32, %arg1: i32) -> (i32, i32) {
    %c0_i32 = arith.constant 0 : i32
    %c0_i32_0 = arith.constant 0 : i32
    return %arg0, %c0_i32 : i32, i32
  }
  func.func @transform_1(%arg0: i32, %arg1: i32) -> (i32, i32) {
    %c0_i32 = arith.constant 0 : i32
    %c0_i32_0 = arith.constant 0 : i32
    return %c0_i32, %arg1 : i32, i32
  }
  func.func @transform_2(%arg0: i32, %arg1: i32) -> (i32, i32) {
    %c0_i32 = arith.constant 0 : i32
    %c0_i32_0 = arith.constant 0 : i32
    return %c0_i32, %arg1 : i32, i32
  }
  func.func @transform_3(%arg0: i32, %arg1: i32) -> (i32, i32) {
    %c0_i32 = arith.constant 0 : i32
    return %arg0, %arg1 : i32, i32
  }
}

module attributes {stable_mosaic.version = 11 : i64} {
  func.func @_matmul_kernel_multi_k(%arg0: i32, %arg1: i32, %arg2: i32, %arg3: memref<16x1024xbf16, #tpu.memory_space<vmem>>, %arg4: memref<1024x256xbf16, #tpu.memory_space<vmem>>, %arg5: memref<1x256xf32, #tpu.memory_space<vmem>>, %arg6: memref<16x256xbf16, #tpu.memory_space<vmem>>, %arg7: memref<16x256xf32, #tpu.memory_space<vmem>>) attributes {dimension_semantics = [#tpu.dimension_semantics<parallel>, #tpu.dimension_semantics<parallel>, #tpu.dimension_semantics<arbitrary>], iteration_bounds = array<i64: 1, 1, 2>, scalar_prefetch = 0 : i64, scratch_operands = 1 : i64, tpu.core_type = #tpu.core_type<tc>, window_params = [{transform_indices = @transform_0, window_bounds = array<i64: 16, 1024>}, {transform_indices = @transform_1, window_bounds = array<i64: 1024, 256>}, {transform_indices = @transform_2, window_bounds = array<i64: 1, 256>}, {transform_indices = @transform_3, window_bounds = array<i64: 16, 256>}]} {
    %c0_i32 = arith.constant 0 : i32
    %0 = arith.cmpi eq, %arg2, %c0_i32 : i32
    %1 = arith.extui %0 : i1 to i32
    %c0_i32_0 = arith.constant 0 : i32
    %2 = arith.cmpi ne, %1, %c0_i32_0 : i32
    scf.if %2 {
      %cst_9 = arith.constant 0.000000e+00 : f32
      %12 = vector.broadcast %cst_9 : f32 to vector<16x256xf32>
      %c0_10 = arith.constant 0 : index
      %c0_11 = arith.constant 0 : index
      %13 = vector.load %arg7[%c0_10, %c0_11] : memref<16x256xf32, #tpu.memory_space<vmem>>, vector<16x256xf32>
      tpu.vector_store %arg7[%c0_10, %c0_11], %12 {strides = array<i32>} : memref<16x256xf32, #tpu.memory_space<vmem>>, vector<16x256xf32>,
    } else {
    }
    %c0 = arith.constant 0 : index
    %c0_1 = arith.constant 0 : index
    %3 = vector.load %arg7[%c0, %c0_1] : memref<16x256xf32, #tpu.memory_space<vmem>>, vector<16x256xf32>
    %c0_2 = arith.constant 0 : index
    %c0_3 = arith.constant 0 : index
    %4 = vector.load %arg3[%c0_2, %c0_3] : memref<16x1024xbf16, #tpu.memory_space<vmem>>, vector<16x1024xbf16>
    %c0_4 = arith.constant 0 : index
    %c0_5 = arith.constant 0 : index
    %5 = vector.load %arg4[%c0_4, %c0_5] : memref<1024x256xbf16, #tpu.memory_space<vmem>>, vector<1024x256xbf16>
    %cst = arith.constant dense<0.000000e+00> : vector<16x256xf32>
    %6 = tpu.matmul %4, %5, %cst {dimension_numbers = #tpu.dot_dimension_numbers<[1], [0], [0], [1], [0, 0, 1, 1], [], []>} : vector<16x1024xbf16>, vector<1024x256xbf16>, vector<16x256xf32> -> vector<16x256xf32>
    %7 = arith.addf %3, %6 : vector<16x256xf32>
    %c0_6 = arith.constant 0 : index
    %c0_7 = arith.constant 0 : index
    %8 = vector.load %arg7[%c0_6, %c0_7] : memref<16x256xf32, #tpu.memory_space<vmem>>, vector<16x256xf32>
    tpu.vector_store %arg7[%c0_6, %c0_7], %7 {strides = array<i32>} : memref<16x256xf32, #tpu.memory_space<vmem>>, vector<16x256xf32>,
    %c1_i32 = arith.constant 1 : i32
    %9 = arith.cmpi eq, %arg2, %c1_i32 : i32
    %10 = arith.extui %9 : i1 to i32
    %c0_i32_8 = arith.constant 0 : i32
    %11 = arith.cmpi ne, %10, %c0_i32_8 : i32
    scf.if %11 {
      %c0_9 = arith.constant 0 : index
      %c0_10 = arith.constant 0 : index
      %12 = vector.load %arg7[%c0_9, %c0_10] : memref<16x256xf32, #tpu.memory_space<vmem>>, vector<16x256xf32>
      %c0_11 = arith.constant 0 : index
      %c0_12 = arith.constant 0 : index
      %13 = vector.load %arg5[%c0_11, %c0_12] : memref<1x256xf32, #tpu.memory_space<vmem>>, vector<1x256xf32>
      %14 = vector.broadcast %13 : vector<1x256xf32> to vector<16x256xf32>
      %15 = arith.addf %12, %14 : vector<16x256xf32>
      %cst_13 = arith.constant 0.000000e+00 : f32
      %16 = vector.broadcast %cst_13 : f32 to vector<16x256xf32>
      %17 = arith.maximumf %15, %16 : vector<16x256xf32>
      %18 = arith.truncf %17 : vector<16x256xf32> to vector<16x256xbf16>
      %c0_14 = arith.constant 0 : index
      %c0_15 = arith.constant 0 : index
      %19 = vector.load %arg6[%c0_14, %c0_15] : memref<16x256xbf16, #tpu.memory_space<vmem>>, vector<16x256xbf16>
      tpu.vector_store %arg6[%c0_14, %c0_15], %18 {strides = array<i32>} : memref<16x256xbf16, #tpu.memory_space<vmem>>, vector<16x256xbf16>,
    } else {
    }
    return
  }
  func.func @transform_0(%arg0: i32, %arg1: i32, %arg2: i32) -> (i32, i32) {
    %c0_i32 = arith.constant 0 : i32
    return %arg0, %arg2 : i32, i32
  }
  func.func @transform_1(%arg0: i32, %arg1: i32, %arg2: i32) -> (i32, i32) {
    %c0_i32 = arith.constant 0 : i32
    return %arg2, %arg1 : i32, i32
  }
  func.func @transform_2(%arg0: i32, %arg1: i32, %arg2: i32) -> (i32, i32) {
    %c0_i32 = arith.constant 0 : i32
    %c0_i32_0 = arith.constant 0 : i32
    return %c0_i32, %arg1 : i32, i32
  }
  func.func @transform_3(%arg0: i32, %arg1: i32, %arg2: i32) -> (i32, i32) {
    %c0_i32 = arith.constant 0 : i32
    return %arg0, %arg1 : i32, i32
  }
}

module attributes {stable_mosaic.version = 11 : i64} {
  func.func @_matmul_kernel_single_k(%arg0: i32, %arg1: i32, %arg2: memref<8x768xbf16, #tpu.memory_space<vmem>>, %arg3: memref<768x512xbf16, #tpu.memory_space<vmem>>, %arg4: memref<1x512xf32, #tpu.memory_space<vmem>>, %arg5: memref<8x512xf32, #tpu.memory_space<vmem>>) attributes {dimension_semantics = [#tpu.dimension_semantics<parallel>, #tpu.dimension_semantics<parallel>], iteration_bounds = array<i64: 1, 1>, scalar_prefetch = 0 : i64, scratch_operands = 0 : i64, tpu.core_type = #tpu.core_type<tc>, window_params = [{transform_indices = @transform_0, window_bounds = array<i64: 8, 768>}, {transform_indices = @transform_1, window_bounds = array<i64: 768, 512>}, {transform_indices = @transform_2, window_bounds = array<i64: 1, 512>}, {transform_indices = @transform_3, window_bounds = array<i64: 8, 512>}]} {
    %c0 = arith.constant 0 : index
    %c0_0 = arith.constant 0 : index
    %0 = vector.load %arg2[%c0, %c0_0] : memref<8x768xbf16, #tpu.memory_space<vmem>>, vector<8x768xbf16>
    %c0_1 = arith.constant 0 : index
    %c0_2 = arith.constant 0 : index
    %1 = vector.load %arg3[%c0_1, %c0_2] : memref<768x512xbf16, #tpu.memory_space<vmem>>, vector<768x512xbf16>
    %cst = arith.constant dense<0.000000e+00> : vector<8x512xf32>
    %2 = tpu.matmul %0, %1, %cst {dimension_numbers = #tpu.dot_dimension_numbers<[1], [0], [0], [1], [0, 0, 1, 1], [], []>} : vector<8x768xbf16>, vector<768x512xbf16>, vector<8x512xf32> -> vector<8x512xf32>
    %c0_3 = arith.constant 0 : index
    %c0_4 = arith.constant 0 : index
    %3 = vector.load %arg4[%c0_3, %c0_4] : memref<1x512xf32, #tpu.memory_space<vmem>>, vector<1x512xf32>
    %4 = vector.broadcast %3 : vector<1x512xf32> to vector<8x512xf32>
    %5 = arith.addf %2, %4 : vector<8x512xf32>
    %cst_5 = arith.constant 0.000000e+00 : f32
    %6 = vector.broadcast %cst_5 : f32 to vector<8x512xf32>
    %7 = arith.maximumf %5, %6 : vector<8x512xf32>
    %c0_6 = arith.constant 0 : index
    %c0_7 = arith.constant 0 : index
    %8 = vector.load %arg5[%c0_6, %c0_7] : memref<8x512xf32, #tpu.memory_space<vmem>>, vector<8x512xf32>
    tpu.vector_store %arg5[%c0_6, %c0_7], %7 {strides = array<i32>} : memref<8x512xf32, #tpu.memory_space<vmem>>, vector<8x512xf32>,
    return
  }
  func.func @transform_0(%arg0: i32, %arg1: i32) -> (i32, i32) {
    %c0_i32 = arith.constant 0 : i32
    %c0_i32_0 = arith.constant 0 : i32
    return %arg0, %c0_i32 : i32, i32
  }
  func.func @transform_1(%arg0: i32, %arg1: i32) -> (i32, i32) {
    %c0_i32 = arith.constant 0 : i32
    %c0_i32_0 = arith.constant 0 : i32
    return %c0_i32, %arg1 : i32, i32
  }
  func.func @transform_2(%arg0: i32, %arg1: i32) -> (i32, i32) {
    %c0_i32 = arith.constant 0 : i32
    %c0_i32_0 = arith.constant 0 : i32
    return %c0_i32, %arg1 : i32, i32
  }
  func.func @transform_3(%arg0: i32, %arg1: i32) -> (i32, i32) {
    %c0_i32 = arith.constant 0 : i32
    return %arg0, %arg1 : i32, i32
  }
}

module attributes {stable_mosaic.version = 11 : i64} {
  func.func @_mean_fc_kernel(%arg0: i32, %arg1: memref<8x1x512xf32, #tpu.memory_space<vmem>>, %arg2: memref<512x512xbf16, #tpu.memory_space<vmem>>, %arg3: memref<1x512xf32, #tpu.memory_space<vmem>>, %arg4: memref<8x512xf32, #tpu.memory_space<vmem>>) attributes {dimension_semantics = [#tpu.dimension_semantics<parallel>], iteration_bounds = array<i64: 1>, scalar_prefetch = 0 : i64, scratch_operands = 0 : i64, tpu.core_type = #tpu.core_type<tc>, window_params = [{transform_indices = @transform_0, window_bounds = array<i64: 8, 1, 512>}, {pipeline_mode = #tpu.pipeline_mode<synchronous>, transform_indices = @transform_1, window_bounds = array<i64: 512, 512>}, {pipeline_mode = #tpu.pipeline_mode<synchronous>, transform_indices = @transform_2, window_bounds = array<i64: 1, 512>}, {transform_indices = @transform_3, window_bounds = array<i64: 8, 512>}]} {
    %c0 = arith.constant 0 : index
    %c0_0 = arith.constant 0 : index
    %c0_1 = arith.constant 0 : index
    %0 = vector.load %arg1[%c0, %c0_0, %c0_1] : memref<8x1x512xf32, #tpu.memory_space<vmem>>, vector<8x1x512xf32>
    %cst = arith.constant dense<0.000000e+00> : vector<8x512xf32>
    %1 = vector.multi_reduction <add>, %0, %cst [1] : vector<8x1x512xf32> to vector<8x512xf32>
    %cst_2 = arith.constant 1.000000e+00 : f32
    %2 = vector.broadcast %cst_2 : f32 to vector<8x512xf32>
    %3 = arith.divf %1, %2 : vector<8x512xf32>
    %4 = arith.truncf %3 : vector<8x512xf32> to vector<8x512xbf16>
    %c0_3 = arith.constant 0 : index
    %c0_4 = arith.constant 0 : index
    %5 = vector.load %arg2[%c0_3, %c0_4] : memref<512x512xbf16, #tpu.memory_space<vmem>>, vector<512x512xbf16>
    %cst_5 = arith.constant dense<0.000000e+00> : vector<8x512xf32>
    %6 = tpu.matmul %4, %5, %cst_5 {dimension_numbers = #tpu.dot_dimension_numbers<[1], [0], [0], [1], [0, 0, 1, 1], [], []>} : vector<8x512xbf16>, vector<512x512xbf16>, vector<8x512xf32> -> vector<8x512xf32>
    %c0_6 = arith.constant 0 : index
    %c0_7 = arith.constant 0 : index
    %7 = vector.load %arg3[%c0_6, %c0_7] : memref<1x512xf32, #tpu.memory_space<vmem>>, vector<1x512xf32>
    %8 = vector.broadcast %7 : vector<1x512xf32> to vector<8x512xf32>
    %9 = arith.addf %6, %8 : vector<8x512xf32>
    %c0_8 = arith.constant 0 : index
    %c0_9 = arith.constant 0 : index
    %10 = vector.load %arg4[%c0_8, %c0_9] : memref<8x512xf32, #tpu.memory_space<vmem>>, vector<8x512xf32>
    tpu.vector_store %arg4[%c0_8, %c0_9], %9 {strides = array<i32>} : memref<8x512xf32, #tpu.memory_space<vmem>>, vector<8x512xf32>,
    return
  }
  func.func @transform_0(%arg0: i32) -> (i32, i32, i32) {
    %c0_i32 = arith.constant 0 : i32
    %c0_i32_0 = arith.constant 0 : i32
    %c0_i32_1 = arith.constant 0 : i32
    return %arg0, %c0_i32, %c0_i32_0 : i32, i32, i32
  }
  func.func @transform_1(%arg0: i32) -> (i32, i32) {
    %c0_i32 = arith.constant 0 : i32
    %c0_i32_0 = arith.constant 0 : i32
    %c0_i32_1 = arith.constant 0 : i32
    return %c0_i32, %c0_i32_0 : i32, i32
  }
  func.func @transform_2(%arg0: i32) -> (i32, i32) {
    %c0_i32 = arith.constant 0 : i32
    %c0_i32_0 = arith.constant 0 : i32
    %c0_i32_1 = arith.constant 0 : i32
    return %c0_i32, %c0_i32_0 : i32, i32
  }
  func.func @transform_3(%arg0: i32) -> (i32, i32) {
    %c0_i32 = arith.constant 0 : i32
    %c0_i32_0 = arith.constant 0 : i32
    return %arg0, %c0_i32 : i32, i32
  }
}

module attributes {stable_mosaic.version = 11 : i64} {
  func.func @_losses_kernel(%arg0: memref<4x512xf32, #tpu.memory_space<vmem>>, %arg1: memref<512x256xbf16, #tpu.memory_space<vmem>>, %arg2: memref<1x256xf32, #tpu.memory_space<vmem>>, %arg3: memref<1x256xf32, #tpu.memory_space<vmem>>, %arg4: memref<256x256xbf16, #tpu.memory_space<vmem>>, %arg5: memref<1x256xf32, #tpu.memory_space<vmem>>, %arg6: memref<1x256xf32, #tpu.memory_space<vmem>>, %arg7: memref<512x6xf32, #tpu.memory_space<vmem>>, %arg8: memref<1x6xf32, #tpu.memory_space<vmem>>, %arg9: memref<2x6xf32, #tpu.memory_space<vmem>>, %arg10: memref<1x1xf32, #tpu.memory_space<vmem>>, %arg11: memref<2x6xf32, #tpu.memory_space<vmem>>) attributes {dimension_semantics = [], scalar_prefetch = 0 : i64, scratch_operands = 0 : i64, tpu.core_type = #tpu.core_type<tc>} {
    %c0 = arith.constant 0 : index
    %c0_0 = arith.constant 0 : index
    %0 = vector.load %arg0[%c0, %c0_0] : memref<4x512xf32, #tpu.memory_space<vmem>>, vector<4x512xf32>
    %1 = arith.truncf %0 : vector<4x512xf32> to vector<4x512xbf16>
    %c0_1 = arith.constant 0 : index
    %c0_2 = arith.constant 0 : index
    %2 = vector.load %arg1[%c0_1, %c0_2] : memref<512x256xbf16, #tpu.memory_space<vmem>>, vector<512x256xbf16>
    %cst = arith.constant dense<0.000000e+00> : vector<4x256xf32>
    %3 = tpu.matmul %1, %2, %cst {dimension_numbers = #tpu.dot_dimension_numbers<[1], [0], [0], [1], [0, 0, 1, 1], [], []>} : vector<4x512xbf16>, vector<512x256xbf16>, vector<4x256xf32> -> vector<4x256xf32>
    %4 = vector.extract_strided_slice %3 {offsets = [0, 0], sizes = [2, 256], strides = [1, 1]} : vector<4x256xf32> to vector<2x256xf32>
    %5 = vector.extract_strided_slice %3 {offsets = [2, 0], sizes = [2, 256], strides = [1, 1]} : vector<4x256xf32> to vector<2x256xf32>
    %c0_3 = arith.constant 0 : index
    %c0_4 = arith.constant 0 : index
    %6 = vector.load %arg2[%c0_3, %c0_4] : memref<1x256xf32, #tpu.memory_space<vmem>>, vector<1x256xf32>
    %c0_5 = arith.constant 0 : index
    %c0_6 = arith.constant 0 : index
    %7 = vector.load %arg3[%c0_5, %c0_6] : memref<1x256xf32, #tpu.memory_space<vmem>>, vector<1x256xf32>
    %c0_7 = arith.constant 0 : index
    %c0_8 = arith.constant 0 : index
    %8 = vector.load %arg5[%c0_7, %c0_8] : memref<1x256xf32, #tpu.memory_space<vmem>>, vector<1x256xf32>
    %c0_9 = arith.constant 0 : index
    %c0_10 = arith.constant 0 : index
    %9 = vector.load %arg6[%c0_9, %c0_10] : memref<1x256xf32, #tpu.memory_space<vmem>>, vector<1x256xf32>
    %cst_11 = arith.constant dense<0.000000e+00> : vector<256xf32>
    %10 = vector.multi_reduction <add>, %4, %cst_11 [0] : vector<2x256xf32> to vector<256xf32>
    %11 = vector.shape_cast %10 : vector<256xf32> to vector<1x256xf32>
    %cst_12 = arith.constant 2.000000e+00 : f32
    %12 = vector.broadcast %cst_12 : f32 to vector<1x256xf32>
    %13 = arith.divf %11, %12 : vector<1x256xf32>
    %14 = vector.broadcast %13 : vector<1x256xf32> to vector<2x256xf32>
    %15 = arith.subf %4, %14 : vector<2x256xf32>
    %16 = arith.mulf %15, %15 : vector<2x256xf32>
    %cst_13 = arith.constant dense<0.000000e+00> : vector<256xf32>
    %17 = vector.multi_reduction <add>, %16, %cst_13 [0] : vector<2x256xf32> to vector<256xf32>
    %18 = vector.shape_cast %17 : vector<256xf32> to vector<1x256xf32>
    %cst_14 = arith.constant 2.000000e+00 : f32
    %19 = vector.broadcast %cst_14 : f32 to vector<1x256xf32>
    %20 = arith.divf %18, %19 : vector<1x256xf32>
    %21 = vector.broadcast %13 : vector<1x256xf32> to vector<2x256xf32>
    %22 = arith.subf %4, %21 : vector<2x256xf32>
    %cst_15 = arith.constant 9.99999974E-6 : f32
    %23 = vector.broadcast %cst_15 : f32 to vector<1x256xf32>
    %24 = arith.addf %20, %23 : vector<1x256xf32>
    %25 = math.rsqrt %24 : vector<1x256xf32>
    %26 = vector.broadcast %25 : vector<1x256xf32> to vector<2x256xf32>
    %27 = arith.mulf %22, %26 : vector<2x256xf32>
    %28 = vector.broadcast %6 : vector<1x256xf32> to vector<2x256xf32>
    %29 = arith.mulf %27, %28 : vector<2x256xf32>
    %30 = vector.broadcast %7 : vector<1x256xf32> to vector<2x256xf32>
    %31 = arith.addf %29, %30 : vector<2x256xf32>
    %cst_16 = arith.constant 0.000000e+00 : f32
    %32 = vector.broadcast %cst_16 : f32 to vector<2x256xf32>
    %33 = arith.maximumf %31, %32 : vector<2x256xf32>
    %cst_17 = arith.constant dense<0.000000e+00> : vector<256xf32>
    %34 = vector.multi_reduction <add>, %5, %cst_17 [0] : vector<2x256xf32> to vector<256xf32>
    %35 = vector.shape_cast %34 : vector<256xf32> to vector<1x256xf32>
    %cst_18 = arith.constant 2.000000e+00 : f32
    %36 = vector.broadcast %cst_18 : f32 to vector<1x256xf32>
    %37 = arith.divf %35, %36 : vector<1x256xf32>
    %38 = vector.broadcast %37 : vector<1x256xf32> to vector<2x256xf32>
    %39 = arith.subf %5, %38 : vector<2x256xf32>
    %40 = arith.mulf %39, %39 : vector<2x256xf32>
    %cst_19 = arith.constant dense<0.000000e+00> : vector<256xf32>
    %41 = vector.multi_reduction <add>, %40, %cst_19 [0] : vector<2x256xf32> to vector<256xf32>
    %42 = vector.shape_cast %41 : vector<256xf32> to vector<1x256xf32>
    %cst_20 = arith.constant 2.000000e+00 : f32
    %43 = vector.broadcast %cst_20 : f32 to vector<1x256xf32>
    %44 = arith.divf %42, %43 : vector<1x256xf32>
    %45 = vector.broadcast %37 : vector<1x256xf32> to vector<2x256xf32>
    %46 = arith.subf %5, %45 : vector<2x256xf32>
    %cst_21 = arith.constant 9.99999974E-6 : f32
    %47 = vector.broadcast %cst_21 : f32 to vector<1x256xf32>
    %48 = arith.addf %44, %47 : vector<1x256xf32>
    %49 = math.rsqrt %48 : vector<1x256xf32>
    %50 = vector.broadcast %49 : vector<1x256xf32> to vector<2x256xf32>
    %51 = arith.mulf %46, %50 : vector<2x256xf32>
    %52 = vector.broadcast %6 : vector<1x256xf32> to vector<2x256xf32>
    %53 = arith.mulf %51, %52 : vector<2x256xf32>
    %54 = vector.broadcast %7 : vector<1x256xf32> to vector<2x256xf32>
    %55 = arith.addf %53, %54 : vector<2x256xf32>
    %cst_22 = arith.constant 0.000000e+00 : f32
    %56 = vector.broadcast %cst_22 : f32 to vector<2x256xf32>
    %57 = arith.maximumf %55, %56 : vector<2x256xf32>
    %58 = arith.truncf %33 : vector<2x256xf32> to vector<2x256xbf16>
    %c0_23 = arith.constant 0 : index
    %c0_24 = arith.constant 0 : index
    %59 = vector.load %arg4[%c0_23, %c0_24] : memref<256x256xbf16, #tpu.memory_space<vmem>>, vector<256x256xbf16>
    %cst_25 = arith.constant dense<0.000000e+00> : vector<2x256xf32>
    %60 = tpu.matmul %58, %59, %cst_25 {dimension_numbers = #tpu.dot_dimension_numbers<[1], [0], [0], [1], [0, 0, 1, 1], [], []>} : vector<2x256xbf16>, vector<256x256xbf16>, vector<2x256xf32> -> vector<2x256xf32>
    %61 = arith.truncf %57 : vector<2x256xf32> to vector<2x256xbf16>
    %c0_26 = arith.constant 0 : index
    %c0_27 = arith.constant 0 : index
    %62 = vector.load %arg4[%c0_26, %c0_27] : memref<256x256xbf16, #tpu.memory_space<vmem>>, vector<256x256xbf16>
    %cst_28 = arith.constant dense<0.000000e+00> : vector<2x256xf32>
    %63 = tpu.matmul %61, %62, %cst_28 {dimension_numbers = #tpu.dot_dimension_numbers<[1], [0], [0], [1], [0, 0, 1, 1], [], []>} : vector<2x256xbf16>, vector<256x256xbf16>, vector<2x256xf32> -> vector<2x256xf32>
    %cst_29 = arith.constant dense<0.000000e+00> : vector<256xf32>
    %64 = vector.multi_reduction <add>, %60, %cst_29 [0] : vector<2x256xf32> to vector<256xf32>
    %65 = vector.shape_cast %64 : vector<256xf32> to vector<1x256xf32>
    %cst_30 = arith.constant 2.000000e+00 : f32
    %66 = vector.broadcast %cst_30 : f32 to vector<1x256xf32>
    %67 = arith.divf %65, %66 : vector<1x256xf32>
    %68 = vector.broadcast %67 : vector<1x256xf32> to vector<2x256xf32>
    %69 = arith.subf %60, %68 : vector<2x256xf32>
    %70 = arith.mulf %69, %69 : vector<2x256xf32>
    %cst_31 = arith.constant dense<0.000000e+00> : vector<256xf32>
    %71 = vector.multi_reduction <add>, %70, %cst_31 [0] : vector<2x256xf32> to vector<256xf32>
    %72 = vector.shape_cast %71 : vector<256xf32> to vector<1x256xf32>
    %cst_32 = arith.constant 2.000000e+00 : f32
    %73 = vector.broadcast %cst_32 : f32 to vector<1x256xf32>
    %74 = arith.divf %72, %73 : vector<1x256xf32>
    %75 = vector.broadcast %67 : vector<1x256xf32> to vector<2x256xf32>
    %76 = arith.subf %60, %75 : vector<2x256xf32>
    %cst_33 = arith.constant 9.99999974E-6 : f32
    %77 = vector.broadcast %cst_33 : f32 to vector<1x256xf32>
    %78 = arith.addf %74, %77 : vector<1x256xf32>
    %79 = math.rsqrt %78 : vector<1x256xf32>
    %80 = vector.broadcast %79 : vector<1x256xf32> to vector<2x256xf32>
    %81 = arith.mulf %76, %80 : vector<2x256xf32>
    %82 = vector.broadcast %8 : vector<1x256xf32> to vector<2x256xf32>
    %83 = arith.mulf %81, %82 : vector<2x256xf32>
    %84 = vector.broadcast %9 : vector<1x256xf32> to vector<2x256xf32>
    %85 = arith.addf %83, %84 : vector<2x256xf32>
    %cst_34 = arith.constant dense<0.000000e+00> : vector<256xf32>
    %86 = vector.multi_reduction <add>, %63, %cst_34 [0] : vector<2x256xf32> to vector<256xf32>
    %87 = vector.shape_cast %86 : vector<256xf32> to vector<1x256xf32>
    %cst_35 = arith.constant 2.000000e+00 : f32
    %88 = vector.broadcast %cst_35 : f32 to vector<1x256xf32>
    %89 = arith.divf %87, %88 : vector<1x256xf32>
    %90 = vector.broadcast %89 : vector<1x256xf32> to vector<2x256xf32>
    %91 = arith.subf %63, %90 : vector<2x256xf32>
    %92 = arith.mulf %91, %91 : vector<2x256xf32>
    %cst_36 = arith.constant dense<0.000000e+00> : vector<256xf32>
    %93 = vector.multi_reduction <add>, %92, %cst_36 [0] : vector<2x256xf32> to vector<256xf32>
    %94 = vector.shape_cast %93 : vector<256xf32> to vector<1x256xf32>
    %cst_37 = arith.constant 2.000000e+00 : f32
    %95 = vector.broadcast %cst_37 : f32 to vector<1x256xf32>
    %96 = arith.divf %94, %95 : vector<1x256xf32>
    %97 = vector.broadcast %89 : vector<1x256xf32> to vector<2x256xf32>
    %98 = arith.subf %63, %97 : vector<2x256xf32>
    %cst_38 = arith.constant 9.99999974E-6 : f32
    %99 = vector.broadcast %cst_38 : f32 to vector<1x256xf32>
    %100 = arith.addf %96, %99 : vector<1x256xf32>
    %101 = math.rsqrt %100 : vector<1x256xf32>
    %102 = vector.broadcast %101 : vector<1x256xf32> to vector<2x256xf32>
    %103 = arith.mulf %98, %102 : vector<2x256xf32>
    %104 = vector.broadcast %8 : vector<1x256xf32> to vector<2x256xf32>
    %105 = arith.mulf %103, %104 : vector<2x256xf32>
    %106 = vector.broadcast %9 : vector<1x256xf32> to vector<2x256xf32>
    %107 = arith.addf %105, %106 : vector<2x256xf32>
    %108 = arith.mulf %85, %85 : vector<2x256xf32>
    %cst_39 = arith.constant dense<0.000000e+00> : vector<2xf32>
    %109 = vector.multi_reduction <add>, %108, %cst_39 [1] : vector<2x256xf32> to vector<2xf32>
    %110 = vector.shape_cast %109 : vector<2xf32> to vector<2x1xf32>
    %cst_40 = arith.constant 1.000000e-24 : f32
    %111 = vector.broadcast %cst_40 : f32 to vector<2x1xf32>
    %112 = arith.maximumf %110, %111 : vector<2x1xf32>
    %113 = math.rsqrt %112 : vector<2x1xf32>
    %114 = vector.broadcast %113 : vector<2x1xf32> to vector<2x256xf32>
    %115 = arith.mulf %85, %114 : vector<2x256xf32>
    %116 = arith.mulf %107, %107 : vector<2x256xf32>
    %cst_41 = arith.constant dense<0.000000e+00> : vector<2xf32>
    %117 = vector.multi_reduction <add>, %116, %cst_41 [1] : vector<2x256xf32> to vector<2xf32>
    %118 = vector.shape_cast %117 : vector<2xf32> to vector<2x1xf32>
    %cst_42 = arith.constant 1.000000e-24 : f32
    %119 = vector.broadcast %cst_42 : f32 to vector<2x1xf32>
    %120 = arith.maximumf %118, %119 : vector<2x1xf32>
    %121 = math.rsqrt %120 : vector<2x1xf32>
    %122 = vector.broadcast %121 : vector<2x1xf32> to vector<2x256xf32>
    %123 = arith.mulf %107, %122 : vector<2x256xf32>
    %cst_43 = arith.constant dense<0.000000e+00> : vector<2x2xf32>
    %124 = tpu.matmul %115, %123, %cst_43 {dimension_numbers = #tpu.dot_dimension_numbers<[1], [1], [0], [0], [0, 0, 1, 0], [], []>} : vector<2x256xf32>, vector<2x256xf32>, vector<2x2xf32> -> vector<2x2xf32>
    %cst_44 = arith.constant 1.000000e+01 : f32
    %125 = vector.broadcast %cst_44 : f32 to vector<2x2xf32>
    %126 = arith.mulf %124, %125 : vector<2x2xf32>
    %cst_45 = arith.constant dense<0xFF800000> : vector<2xf32>
    %127 = vector.multi_reduction <maximumf>, %126, %cst_45 [1] : vector<2x2xf32> to vector<2xf32>
    %128 = vector.shape_cast %127 : vector<2xf32> to vector<2x1xf32>
    %129 = vector.broadcast %128 : vector<2x1xf32> to vector<2x2xf32>
    %130 = arith.subf %126, %129 : vector<2x2xf32>
    %131 = math.exp %130 : vector<2x2xf32>
    %cst_46 = arith.constant dense<0.000000e+00> : vector<2xf32>
    %132 = vector.multi_reduction <add>, %131, %cst_46 [1] : vector<2x2xf32> to vector<2xf32>
    %133 = vector.shape_cast %132 : vector<2xf32> to vector<2x1xf32>
    %134 = math.log %133 : vector<2x1xf32>
    %135 = arith.addf %128, %134 : vector<2x1xf32>
    %cst_47 = arith.constant dense<0xFF800000> : vector<2xf32>
    %136 = vector.multi_reduction <maximumf>, %126, %cst_47 [0] : vector<2x2xf32> to vector<2xf32>
    %137 = vector.shape_cast %136 : vector<2xf32> to vector<1x2xf32>
    %138 = vector.broadcast %137 : vector<1x2xf32> to vector<2x2xf32>
    %139 = arith.subf %126, %138 : vector<2x2xf32>
    %140 = math.exp %139 : vector<2x2xf32>
    %cst_48 = arith.constant dense<0.000000e+00> : vector<2xf32>
    %141 = vector.multi_reduction <add>, %140, %cst_48 [0] : vector<2x2xf32> to vector<2xf32>
    %142 = vector.shape_cast %141 : vector<2xf32> to vector<1x2xf32>
    %143 = math.log %142 : vector<1x2xf32>
    %144 = arith.addf %137, %143 : vector<1x2xf32>
    %145 = tpu.iota {dimensions = array<i32: 0>} : vector<2x2xi32>
    %146 = tpu.iota {dimensions = array<i32: 1>} : vector<2x2xi32>
    %147 = arith.cmpi eq, %145, %146 : vector<2x2xi32>
    %cst_49 = arith.constant 0.000000e+00 : f32
    %148 = vector.broadcast %cst_49 : f32 to vector<2x2xf32>
    %149 = arith.select %147, %126, %148 : vector<2x2xi1>, vector<2x2xf32>
    %150 = vector.shape_cast %149 : vector<2x2xf32> to vector<1x2x2xf32>
    %cst_50 = arith.constant dense<0.000000e+00> : vector<1xf32>
    %151 = vector.multi_reduction <add>, %150, %cst_50 [1, 2] : vector<1x2x2xf32> to vector<1xf32>
    %152 = vector.shape_cast %151 : vector<1xf32> to vector<1x1x1xf32>
    %153 = vector.extract %152[0, 0, 0] : f32 from vector<1x1x1xf32>
    %154 = vector.shape_cast %135 : vector<2x1xf32> to vector<1x2x1xf32>
    %cst_51 = arith.constant dense<0.000000e+00> : vector<1xf32>
    %155 = vector.multi_reduction <add>, %154, %cst_51 [1, 2] : vector<1x2x1xf32> to vector<1xf32>
    %156 = vector.shape_cast %155 : vector<1xf32> to vector<1x1x1xf32>
    %157 = vector.extract %156[0, 0, 0] : f32 from vector<1x1x1xf32>
    %158 = vector.shape_cast %144 : vector<1x2xf32> to vector<1x1x2xf32>
    %cst_52 = arith.constant dense<0.000000e+00> : vector<1xf32>
    %159 = vector.multi_reduction <add>, %158, %cst_52 [1, 2] : vector<1x1x2xf32> to vector<1xf32>
    %160 = vector.shape_cast %159 : vector<1xf32> to vector<1x1x1xf32>
    %161 = vector.extract %160[0, 0, 0] : f32 from vector<1x1x1xf32>
    %162 = arith.addf %157, %161 : f32
    %cst_53 = arith.constant 2.000000e+00 : f32
    %163 = arith.mulf %cst_53, %153 : f32
    %164 = arith.subf %162, %163 : f32
    %cst_54 = arith.constant 4.000000e+00 : f32
    %165 = arith.divf %164, %cst_54 : f32
    %166 = vector.extract_strided_slice %0 {offsets = [0, 0], sizes = [2, 512], strides = [1, 1]} : vector<4x512xf32> to vector<2x512xf32>
    %c0_55 = arith.constant 0 : index
    %c0_56 = arith.constant 0 : index
    %167 = vector.load %arg7[%c0_55, %c0_56] : memref<512x6xf32, #tpu.memory_space<vmem>>, vector<512x6xf32>
    %cst_57 = arith.constant dense<0.000000e+00> : vector<2x6xf32>
    %168 = tpu.matmul %166, %167, %cst_57 {dimension_numbers = #tpu.dot_dimension_numbers<[1], [0], [0], [1], [0, 0, 1, 1], [], []>} : vector<2x512xf32>, vector<512x6xf32>, vector<2x6xf32> -> vector<2x6xf32>
    %c0_58 = arith.constant 0 : index
    %c0_59 = arith.constant 0 : index
    %169 = vector.load %arg8[%c0_58, %c0_59] : memref<1x6xf32, #tpu.memory_space<vmem>>, vector<1x6xf32>
    %170 = vector.broadcast %169 : vector<1x6xf32> to vector<2x6xf32>
    %171 = arith.addf %168, %170 : vector<2x6xf32>
    %c0_60 = arith.constant 0 : index
    %c0_61 = arith.constant 0 : index
    %172 = vector.load %arg9[%c0_60, %c0_61] : memref<2x6xf32, #tpu.memory_space<vmem>>, vector<2x6xf32>
    %cst_62 = arith.constant 0.000000e+00 : f32
    %173 = vector.broadcast %cst_62 : f32 to vector<2x6xf32>
    %174 = arith.maximumf %171, %173 : vector<2x6xf32>
    %175 = arith.mulf %171, %172 : vector<2x6xf32>
    %176 = arith.subf %174, %175 : vector<2x6xf32>
    %177 = math.absf %171 : vector<2x6xf32>
    %cst_63 = arith.constant 0.000000e+00 : f32
    %178 = vector.broadcast %cst_63 : f32 to vector<2x6xf32>
    %179 = arith.subf %178, %177 : vector<2x6xf32>
    %180 = math.exp %179 : vector<2x6xf32>
    %cst_64 = arith.constant 1.000000e+00 : f32
    %181 = vector.broadcast %cst_64 : f32 to vector<2x6xf32>
    %182 = arith.addf %181, %180 : vector<2x6xf32>
    %183 = math.log %182 : vector<2x6xf32>
    %184 = arith.addf %176, %183 : vector<2x6xf32>
    %185 = vector.shape_cast %184 : vector<2x6xf32> to vector<1x2x6xf32>
    %cst_65 = arith.constant dense<0.000000e+00> : vector<1xf32>
    %186 = vector.multi_reduction <add>, %185, %cst_65 [1, 2] : vector<1x2x6xf32> to vector<1xf32>
    %187 = vector.shape_cast %186 : vector<1xf32> to vector<1x1x1xf32>
    %188 = vector.extract %187[0, 0, 0] : f32 from vector<1x1x1xf32>
    %cst_66 = arith.constant 1.200000e+01 : f32
    %189 = arith.divf %188, %cst_66 : f32
    %c0_67 = arith.constant 0 : index
    %c0_68 = arith.constant 0 : index
    %190 = vector.load %arg11[%c0_67, %c0_68] : memref<2x6xf32, #tpu.memory_space<vmem>>, vector<2x6xf32>
    tpu.vector_store %arg11[%c0_67, %c0_68], %171 {strides = array<i32>} : memref<2x6xf32, #tpu.memory_space<vmem>>, vector<2x6xf32>,
    %191 = arith.addf %165, %189 : f32
    %192 = vector.broadcast %191 : f32 to vector<1x1xf32>
    %c0_69 = arith.constant 0 : index
    %c0_70 = arith.constant 0 : index
    %193 = vector.load %arg10[%c0_69, %c0_70] : memref<1x1xf32, #tpu.memory_space<vmem>>, vector<1x1xf32>
    tpu.vector_store %arg10[%c0_69, %c0_70], %192 {strides = array<i32>} : memref<1x1xf32, #tpu.memory_space<vmem>>, vector<1x1xf32>,
    return
  }
}

</mosaic_0001>

<llo_original>
// kernel: ss_model_forward.6
$region0: #{ss_model_forward.6}
  #allocation0 [shape = 'u32[]', space=smem, size = 0x4, offset = 0x4, fixed_abs, tag = 'smem constant byte address 0x4 - core index']
  #allocation1 [shape = 'u32[144,128]{1,0:T(1,128)}', space=vmem, size = 0x12000, scoped, tag = 'internal scratch']
  %s0 = inlined_call_operand.vmem [shape: f32[2,800,30], index: 0, kind: input, shape index: {}]
  %s1 = inlined_call_operand.hbm [shape: f32[1,1,30], index: 1, kind: input, shape index: {}]
  %s2 = inlined_call_operand.hbm [shape: f32[1,1,30], index: 2, kind: input, shape index: {}]
  %s3 = inlined_call_operand.vmem [shape: bf16[2,800,30], index: 3, kind: output, shape index: {}]
  %s4 = sld [smem:[#allocation0]]
  $region30: #{ss_model_forward.6} parent=0
    _
  %s6 = ssub.s32 1, %s4
  %s7 = scalar_select 0, %s6, %s4
  $region1: #{ss_model_forward.6} parent=0
    #allocation2 [shape = 'u8[512]{0}', space=vmem, size = 0x400, scoped, tag = 'input window, operand 1, single buffered']
    #allocation3 [shape = 's32[1]{0}', space=sflag, size = 0x4, scoped, tag = 'scoped memory for ss_model_forward.6']
    #allocation4 [shape = 'u8[512]{0}', space=vmem, size = 0x400, scoped, tag = 'input window, operand 2, single buffered']
    #allocation5 [shape = 's32[1]{0}', space=sflag, size = 0x4, scoped, tag = 'scoped memory for ss_model_forward.6']
    %8 = vsyncpa [#allocation3], 0
    %9 = vsyncpa [#allocation5], 0
    // Predicated region
    $region2: #{ss_model_forward.6} parent=1 // pred_check
      _
    $region3: #{ss_model_forward.6} parent=1 // pred_check_branch
      %11 = sbr.rel (0) target = $region5
    $region4: #{ss_model_forward.6} parent=1 // pred_region
      _
    $region5: #{ss_model_forward.6} parent=1 // pred_fallthru
      _
    // Predicated region
    $region6: #{ss_model_forward.6} parent=1 // pred_check
      _
    $region7: #{ss_model_forward.6} parent=1 // pred_check_branch
      %13 = sbr.rel (0) target = $region9
    $region8: #{ss_model_forward.6} parent=1 // pred_region
      %s15 = ssub.s32 16, 16
      %16 = vsyncadd [#allocation3], %s15
      %s18 = sshll.u32 [#allocation2], 4
      %s19 = int_to_ptr.vmem [resolvable:$true] %s18
      %21 = dma.hbm_to_vmem [thread:$0]  %s1, 16, %s19, [#allocation3]
    $region9: #{ss_model_forward.6} parent=1 // pred_fallthru
      _
    // Predicated region
    $region10: #{ss_model_forward.6} parent=1 // pred_check
      _
    $region11: #{ss_model_forward.6} parent=1 // pred_check_branch
      %23 = sbr.rel (0) target = $region13
    $region12: #{ss_model_forward.6} parent=1 // pred_region
      %s25 = ssub.s32 16, 16
      %26 = vsyncadd [#allocation5], %s25
      %s28 = sshll.u32 [#allocation4], 4
      %s29 = int_to_ptr.vmem [resolvable:$true] %s28
      %31 = dma.hbm_to_vmem [thread:$0]  %s2, 16, %s29, [#allocation5]
    $region13: #{ss_model_forward.6} parent=1 // pred_fallthru
      _
    // Predicated region
    $region14: #{ss_model_forward.6} parent=1 // pred_check
      _
    $region15: #{ss_model_forward.6} parent=1 // pred_check_branch
      %33 = sbr.rel (0) target = $region17
    $region16: #{ss_model_forward.6} parent=1 // pred_region
      %34 = dma.done [#allocation3], 16
    $region17: #{ss_model_forward.6} parent=1 // pred_fallthru
      _
    // Predicated region
    $region18: #{ss_model_forward.6} parent=1 // pred_check
      _
    $region19: #{ss_model_forward.6} parent=1 // pred_check_branch
      %36 = sbr.rel (0) target = $region21
    $region20: #{ss_model_forward.6} parent=1 // pred_region
      %37 = dma.done [#allocation5], 16
    $region21: #{ss_model_forward.6} parent=1 // pred_fallthru
      _
    %v38 = vld [vmem:[%s0] sm:$0xff]
    %v39 = vld [vmem:[%s0 + $0x8] sm:$0xff]
    %v40 = vld [vmem:[%s0 + $0x10] sm:$0xff]
    %v41 = vld [vmem:[%s0 + $0x18] sm:$0xff]
    %v42 = vld [vmem:[%s0 + $0x20] sm:$0xff]
    %v43 = vld [vmem:[%s0 + $0x28] sm:$0xff]
    %v44 = vld [vmem:[%s0 + $0x30] sm:$0xff]
    %v45 = vld [vmem:[%s0 + $0x38] sm:$0xff]
    %v46 = vld [vmem:[%s0 + $0x40] sm:$0xff]
    %v47 = vld [vmem:[%s0 + $0x48] sm:$0xff]
    %v48 = vld [vmem:[%s0 + $0x50] sm:$0xff]
    %v49 = vld [vmem:[%s0 + $0x58] sm:$0xff]
    %v50 = vld [vmem:[%s0 + $0x60] sm:$0xff]
    %v51 = vld [vmem:[%s0 + $0x68] sm:$0xff]
    %v52 = vld [vmem:[%s0 + $0x70] sm:$0xff]
    %v53 = vld [vmem:[%s0 + $0x78] sm:$0xff]
    %v54 = vld [vmem:[%s0 + $0x80] sm:$0xff]
    %v55 = vld [vmem:[%s0 + $0x88] sm:$0xff]
    %v56 = vld [vmem:[%s0 + $0x90] sm:$0xff]
    %v57 = vld [vmem:[%s0 + $0x98] sm:$0xff]
    %v58 = vld [vmem:[%s0 + $0xa0] sm:$0xff]
    %v59 = vld [vmem:[%s0 + $0xa8] sm:$0xff]
    %v60 = vld [vmem:[%s0 + $0xb0] sm:$0xff]
    %v61 = vld [vmem:[%s0 + $0xb8] sm:$0xff]
    %v62 = vld [vmem:[%s0 + $0xc0] sm:$0xff]
    %v63 = vld [vmem:[%s0 + $0xc8] sm:$0xff]
    %v64 = vld [vmem:[%s0 + $0xd0] sm:$0xff]
    %v65 = vld [vmem:[%s0 + $0xd8] sm:$0xff]
    %v66 = vld [vmem:[%s0 + $0xe0] sm:$0xff]
    %v67 = vld [vmem:[%s0 + $0xe8] sm:$0xff]
    %v68 = vld [vmem:[%s0 + $0xf0] sm:$0xff]
    %v69 = vld [vmem:[%s0 + $0xf8] sm:$0xff]
    %v70 = vld [vmem:[%s0 + $0x100] sm:$0xff]
    %v71 = vld [vmem:[%s0 + $0x108] sm:$0xff]
    %v72 = vld [vmem:[%s0 + $0x110] sm:$0xff]
    %v73 = vld [vmem:[%s0 + $0x118] sm:$0xff]
    %v74 = vld [vmem:[%s0 + $0x120] sm:$0xff]
    %v75 = vld [vmem:[%s0 + $0x128] sm:$0xff]
    %v76 = vld [vmem:[%s0 + $0x130] sm:$0xff]
    %v77 = vld [vmem:[%s0 + $0x138] sm:$0xff]
    %v78 = vld [vmem:[%s0 + $0x140] sm:$0xff]
    %v79 = vld [vmem:[%s0 + $0x148] sm:$0xff]
    %v80 = vld [vmem:[%s0 + $0x150] sm:$0xff]
    %v81 = vld [vmem:[%s0 + $0x158] sm:$0xff]
    %v82 = vld [vmem:[%s0 + $0x160] sm:$0xff]
    %v83 = vld [vmem:[%s0 + $0x168] sm:$0xff]
    %v84 = vld [vmem:[%s0 + $0x170] sm:$0xff]
    %v85 = vld [vmem:[%s0 + $0x178] sm:$0xff]
    %v86 = vld [vmem:[%s0 + $0x180] sm:$0xff]
    %v87 = vld [vmem:[%s0 + $0x188] sm:$0xff]
    %v88 = vld [vmem:[%s0 + $0x190] sm:$0xff]
    %v89 = vld [vmem:[%s0 + $0x198] sm:$0xff]
    %v90 = vld [vmem:[%s0 + $0x1a0] sm:$0xff]
    %v91 = vld [vmem:[%s0 + $0x1a8] sm:$0xff]
    %v92 = vld [vmem:[%s0 + $0x1b0] sm:$0xff]
    %v93 = vld [vmem:[%s0 + $0x1b8] sm:$0xff]
    %v94 = vld [vmem:[%s0 + $0x1c0] sm:$0xff]
    %v95 = vld [vmem:[%s0 + $0x1c8] sm:$0xff]
    %v96 = vld [vmem:[%s0 + $0x1d0] sm:$0xff]
    %v97 = vld [vmem:[%s0 + $0x1d8] sm:$0xff]
    %v98 = vld [vmem:[%s0 + $0x1e0] sm:$0xff]
    %v99 = vld [vmem:[%s0 + $0x1e8] sm:$0xff]
    %v100 = vld [vmem:[%s0 + $0x1f0] sm:$0xff]
    %v101 = vld [vmem:[%s0 + $0x1f8] sm:$0xff]
    %v102 = vld [vmem:[%s0 + $0x200] sm:$0xff]
    %v103 = vld [vmem:[%s0 + $0x208] sm:$0xff]
    %v104 = vld [vmem:[%s0 + $0x210] sm:$0xff]
    %v105 = vld [vmem:[%s0 + $0x218] sm:$0xff]
    %v106 = vld [vmem:[%s0 + $0x220] sm:$0xff]
    %v107 = vld [vmem:[%s0 + $0x228] sm:$0xff]
    %v108 = vld [vmem:[%s0 + $0x230] sm:$0xff]
    %v109 = vld [vmem:[%s0 + $0x238] sm:$0xff]
    %v110 = vld [vmem:[%s0 + $0x240] sm:$0xff]
    %v111 = vld [vmem:[%s0 + $0x248] sm:$0xff]
    %v112 = vld [vmem:[%s0 + $0x250] sm:$0xff]
    %v113 = vld [vmem:[%s0 + $0x258] sm:$0xff]
    %v114 = vld [vmem:[%s0 + $0x260] sm:$0xff]
    %v115 = vld [vmem:[%s0 + $0x268] sm:$0xff]
    %v116 = vld [vmem:[%s0 + $0x270] sm:$0xff]
    %v117 = vld [vmem:[%s0 + $0x278] sm:$0xff]
    %v118 = vld [vmem:[%s0 + $0x280] sm:$0xff]
    %v119 = vld [vmem:[%s0 + $0x288] sm:$0xff]
    %v120 = vld [vmem:[%s0 + $0x290] sm:$0xff]
    %v121 = vld [vmem:[%s0 + $0x298] sm:$0xff]
    %v122 = vld [vmem:[%s0 + $0x2a0] sm:$0xff]
    %v123 = vld [vmem:[%s0 + $0x2a8] sm:$0xff]
    %v124 = vld [vmem:[%s0 + $0x2b0] sm:$0xff]
    %v125 = vld [vmem:[%s0 + $0x2b8] sm:$0xff]
    %v126 = vld [vmem:[%s0 + $0x2c0] sm:$0xff]
    %v127 = vld [vmem:[%s0 + $0x2c8] sm:$0xff]
    %v128 = vld [vmem:[%s0 + $0x2d0] sm:$0xff]
    %v129 = vld [vmem:[%s0 + $0x2d8] sm:$0xff]
    %v130 = vld [vmem:[%s0 + $0x2e0] sm:$0xff]
    %v131 = vld [vmem:[%s0 + $0x2e8] sm:$0xff]
    %v132 = vld [vmem:[%s0 + $0x2f0] sm:$0xff]
    %v133 = vld [vmem:[%s0 + $0x2f8] sm:$0xff]
    %v134 = vld [vmem:[%s0 + $0x300] sm:$0xff]
    %v135 = vld [vmem:[%s0 + $0x308] sm:$0xff]
    %v136 = vld [vmem:[%s0 + $0x310] sm:$0xff]
    %v137 = vld [vmem:[%s0 + $0x318] sm:$0xff]
    %v138 = vld [vmem:[%s0 + $0x320] sm:$0xff]
    %v139 = vld [vmem:[%s0 + $0x328] sm:$0xff]
    %v140 = vld [vmem:[%s0 + $0x330] sm:$0xff]
    %v141 = vld [vmem:[%s0 + $0x338] sm:$0xff]
    %v142 = vld [vmem:[%s0 + $0x340] sm:$0xff]
    %v143 = vld [vmem:[%s0 + $0x348] sm:$0xff]
    %v144 = vld [vmem:[%s0 + $0x350] sm:$0xff]
    %v145 = vld [vmem:[%s0 + $0x358] sm:$0xff]
    %v146 = vld [vmem:[%s0 + $0x360] sm:$0xff]
    %v147 = vld [vmem:[%s0 + $0x368] sm:$0xff]
    %v148 = vld [vmem:[%s0 + $0x370] sm:$0xff]
    %v149 = vld [vmem:[%s0 + $0x378] sm:$0xff]
    %v150 = vld [vmem:[%s0 + $0x380] sm:$0xff]
    %v151 = vld [vmem:[%s0 + $0x388] sm:$0xff]
    %v152 = vld [vmem:[%s0 + $0x390] sm:$0xff]
    %v153 = vld [vmem:[%s0 + $0x398] sm:$0xff]
    %v154 = vld [vmem:[%s0 + $0x3a0] sm:$0xff]
    %v155 = vld [vmem:[%s0 + $0x3a8] sm:$0xff]
    %v156 = vld [vmem:[%s0 + $0x3b0] sm:$0xff]
    %v157 = vld [vmem:[%s0 + $0x3b8] sm:$0xff]
    %v158 = vld [vmem:[%s0 + $0x3c0] sm:$0xff]
    %v159 = vld [vmem:[%s0 + $0x3c8] sm:$0xff]
    %v160 = vld [vmem:[%s0 + $0x3d0] sm:$0xff]
    %v161 = vld [vmem:[%s0 + $0x3d8] sm:$0xff]
    %v162 = vld [vmem:[%s0 + $0x3e0] sm:$0xff]
    %v163 = vld [vmem:[%s0 + $0x3e8] sm:$0xff]
    %v164 = vld [vmem:[%s0 + $0x3f0] sm:$0xff]
    %v165 = vld [vmem:[%s0 + $0x3f8] sm:$0xff]
    %v166 = vld [vmem:[%s0 + $0x400] sm:$0xff]
    %v167 = vld [vmem:[%s0 + $0x408] sm:$0xff]
    %v168 = vld [vmem:[%s0 + $0x410] sm:$0xff]
    %v169 = vld [vmem:[%s0 + $0x418] sm:$0xff]
    %v170 = vld [vmem:[%s0 + $0x420] sm:$0xff]
    %v171 = vld [vmem:[%s0 + $0x428] sm:$0xff]
    %v172 = vld [vmem:[%s0 + $0x430] sm:$0xff]
    %v173 = vld [vmem:[%s0 + $0x438] sm:$0xff]
    %v174 = vld [vmem:[%s0 + $0x440] sm:$0xff]
    %v175 = vld [vmem:[%s0 + $0x448] sm:$0xff]
    %v176 = vld [vmem:[%s0 + $0x450] sm:$0xff]
    %v177 = vld [vmem:[%s0 + $0x458] sm:$0xff]
    %v178 = vld [vmem:[%s0 + $0x460] sm:$0xff]
    %v179 = vld [vmem:[%s0 + $0x468] sm:$0xff]
    %v180 = vld [vmem:[%s0 + $0x470] sm:$0xff]
    %v181 = vld [vmem:[%s0 + $0x478] sm:$0xff]
    %v182 = vld [vmem:[%s0 + $0x480] sm:$0xff]
    %v183 = vld [vmem:[%s0 + $0x488] sm:$0xff]
    %v184 = vld [vmem:[%s0 + $0x490] sm:$0xff]
    %v185 = vld [vmem:[%s0 + $0x498] sm:$0xff]
    %v186 = vld [vmem:[%s0 + $0x4a0] sm:$0xff]
    %v187 = vld [vmem:[%s0 + $0x4a8] sm:$0xff]
    %v188 = vld [vmem:[%s0 + $0x4b0] sm:$0xff]
    %v189 = vld [vmem:[%s0 + $0x4b8] sm:$0xff]
    %v190 = vld [vmem:[%s0 + $0x4c0] sm:$0xff]
    %v191 = vld [vmem:[%s0 + $0x4c8] sm:$0xff]
    %v192 = vld [vmem:[%s0 + $0x4d0] sm:$0xff]
    %v193 = vld [vmem:[%s0 + $0x4d8] sm:$0xff]
    %v194 = vld [vmem:[%s0 + $0x4e0] sm:$0xff]
    %v195 = vld [vmem:[%s0 + $0x4e8] sm:$0xff]
    %v196 = vld [vmem:[%s0 + $0x4f0] sm:$0xff]
    %v197 = vld [vmem:[%s0 + $0x4f8] sm:$0xff]
    %v198 = vld [vmem:[%s0 + $0x500] sm:$0xff]
    %v199 = vld [vmem:[%s0 + $0x508] sm:$0xff]
    %v200 = vld [vmem:[%s0 + $0x510] sm:$0xff]
    %v201 = vld [vmem:[%s0 + $0x518] sm:$0xff]
    %v202 = vld [vmem:[%s0 + $0x520] sm:$0xff]
    %v203 = vld [vmem:[%s0 + $0x528] sm:$0xff]
    %v204 = vld [vmem:[%s0 + $0x530] sm:$0xff]
    %v205 = vld [vmem:[%s0 + $0x538] sm:$0xff]
    %v206 = vld [vmem:[%s0 + $0x540] sm:$0xff]
    %v207 = vld [vmem:[%s0 + $0x548] sm:$0xff]
    %v208 = vld [vmem:[%s0 + $0x550] sm:$0xff]
    %v209 = vld [vmem:[%s0 + $0x558] sm:$0xff]
    %v210 = vld [vmem:[%s0 + $0x560] sm:$0xff]
    %v211 = vld [vmem:[%s0 + $0x568] sm:$0xff]
    %v212 = vld [vmem:[%s0 + $0x570] sm:$0xff]
    %v213 = vld [vmem:[%s0 + $0x578] sm:$0xff]
    %v214 = vld [vmem:[%s0 + $0x580] sm:$0xff]
    %v215 = vld [vmem:[%s0 + $0x588] sm:$0xff]
    %v216 = vld [vmem:[%s0 + $0x590] sm:$0xff]
    %v217 = vld [vmem:[%s0 + $0x598] sm:$0xff]
    %v218 = vld [vmem:[%s0 + $0x5a0] sm:$0xff]
    %v219 = vld [vmem:[%s0 + $0x5a8] sm:$0xff]
    %v220 = vld [vmem:[%s0 + $0x5b0] sm:$0xff]
    %v221 = vld [vmem:[%s0 + $0x5b8] sm:$0xff]
    %v222 = vld [vmem:[%s0 + $0x5c0] sm:$0xff]
    %v223 = vld [vmem:[%s0 + $0x5c8] sm:$0xff]
    %v224 = vld [vmem:[%s0 + $0x5d0] sm:$0xff]
    %v225 = vld [vmem:[%s0 + $0x5d8] sm:$0xff]
    %v226 = vld [vmem:[%s0 + $0x5e0] sm:$0xff]
    %v227 = vld [vmem:[%s0 + $0x5e8] sm:$0xff]
    %v228 = vld [vmem:[%s0 + $0x5f0] sm:$0xff]
    %v229 = vld [vmem:[%s0 + $0x5f8] sm:$0xff]
    %v230 = vld [vmem:[%s0 + $0x600] sm:$0xff]
    %v231 = vld [vmem:[%s0 + $0x608] sm:$0xff]
    %v232 = vld [vmem:[%s0 + $0x610] sm:$0xff]
    %v233 = vld [vmem:[%s0 + $0x618] sm:$0xff]
    %v234 = vld [vmem:[%s0 + $0x620] sm:$0xff]
    %v235 = vld [vmem:[%s0 + $0x628] sm:$0xff]
    %v236 = vld [vmem:[%s0 + $0x630] sm:$0xff]
    %v237 = vld [vmem:[%s0 + $0x638] sm:$0xff]
    %vm238 = vcmask 244736
    %v239 = vsel %vm238, %v38, 0.0
    %v240 = vsel %vm238, %v39, 0.0
    %v241 = vadd.f32 %v239, %v240
    %v242 = vsel %vm238, %v40, 0.0
    %v243 = vadd.f32 %v241, %v242
    %v244 = vsel %vm238, %v41, 0.0
    %v245 = vadd.f32 %v243, %v244
    %v246 = vsel %vm238, %v42, 0.0
    %v247 = vadd.f32 %v245, %v246
    %v248 = vsel %vm238, %v43, 0.0
    %v249 = vadd.f32 %v247, %v248
    %v250 = vsel %vm238, %v44, 0.0
    %v251 = vadd.f32 %v249, %v250
    %v252 = vsel %vm238, %v45, 0.0
    %v253 = vadd.f32 %v251, %v252
    %v254 = vsel %vm238, %v46, 0.0
    %v255 = vadd.f32 %v253, %v254
    %v256 = vsel %vm238, %v47, 0.0
    %v257 = vadd.f32 %v255, %v256
    %v258 = vsel %vm238, %v48, 0.0
    %v259 = vadd.f32 %v257, %v258
    %v260 = vsel %vm238, %v49, 0.0
    %v261 = vadd.f32 %v259, %v260
    %v262 = vsel %vm238, %v50, 0.0
    %v263 = vadd.f32 %v261, %v262
    %v264 = vsel %vm238, %v51, 0.0
    %v265 = vadd.f32 %v263, %v264
    %v266 = vsel %vm238, %v52, 0.0
    %v267 = vadd.f32 %v265, %v266
    %v268 = vsel %vm238, %v53, 0.0
    %v269 = vadd.f32 %v267, %v268
    %v270 = vsel %vm238, %v54, 0.0
    %v271 = vadd.f32 %v269, %v270
    %v272 = vsel %vm238, %v55, 0.0
    %v273 = vadd.f32 %v271, %v272
    %v274 = vsel %vm238, %v56, 0.0
    %v275 = vadd.f32 %v273, %v274
    %v276 = vsel %vm238, %v57, 0.0
    %v277 = vadd.f32 %v275, %v276
    %v278 = vsel %vm238, %v58, 0.0
    %v279 = vadd.f32 %v277, %v278
    %v280 = vsel %vm238, %v59, 0.0
    %v281 = vadd.f32 %v279, %v280
    %v282 = vsel %vm238, %v60, 0.0
    %v283 = vadd.f32 %v281, %v282
    %v284 = vsel %vm238, %v61, 0.0
    %v285 = vadd.f32 %v283, %v284
    %v286 = vsel %vm238, %v62, 0.0
    %v287 = vadd.f32 %v285, %v286
    %v288 = vsel %vm238, %v63, 0.0
    %v289 = vadd.f32 %v287, %v288
    %v290 = vsel %vm238, %v64, 0.0
    %v291 = vadd.f32 %v289, %v290
    %v292 = vsel %vm238, %v65, 0.0
    %v293 = vadd.f32 %v291, %v292
    %v294 = vsel %vm238, %v66, 0.0
    %v295 = vadd.f32 %v293, %v294
    %v296 = vsel %vm238, %v67, 0.0
    %v297 = vadd.f32 %v295, %v296
    %v298 = vsel %vm238, %v68, 0.0
    %v299 = vadd.f32 %v297, %v298
    %v300 = vsel %vm238, %v69, 0.0
    %v301 = vadd.f32 %v299, %v300
    %v302 = vsel %vm238, %v70, 0.0
    %v303 = vadd.f32 %v301, %v302
    %v304 = vsel %vm238, %v71, 0.0
    %v305 = vadd.f32 %v303, %v304
    %v306 = vsel %vm238, %v72, 0.0
    %v307 = vadd.f32 %v305, %v306
    %v308 = vsel %vm238, %v73, 0.0
    %v309 = vadd.f32 %v307, %v308
    %v310 = vsel %vm238, %v74, 0.0
    %v311 = vadd.f32 %v309, %v310
    %v312 = vsel %vm238, %v75, 0.0
    %v313 = vadd.f32 %v311, %v312
    %v314 = vsel %vm238, %v76, 0.0
    %v315 = vadd.f32 %v313, %v314
    %v316 = vsel %vm238, %v77, 0.0
    %v317 = vadd.f32 %v315, %v316
    %v318 = vsel %vm238, %v78, 0.0
    %v319 = vadd.f32 %v317, %v318
    %v320 = vsel %vm238, %v79, 0.0
    %v321 = vadd.f32 %v319, %v320
    %v322 = vsel %vm238, %v80, 0.0
    %v323 = vadd.f32 %v321, %v322
    %v324 = vsel %vm238, %v81, 0.0
    %v325 = vadd.f32 %v323, %v324
    %v326 = vsel %vm238, %v82, 0.0
    %v327 = vadd.f32 %v325, %v326
    %v328 = vsel %vm238, %v83, 0.0
    %v329 = vadd.f32 %v327, %v328
    %v330 = vsel %vm238, %v84, 0.0
    %v331 = vadd.f32 %v329, %v330
    %v332 = vsel %vm238, %v85, 0.0
    %v333 = vadd.f32 %v331, %v332
    %v334 = vsel %vm238, %v86, 0.0
    %v335 = vadd.f32 %v333, %v334
    %v336 = vsel %vm238, %v87, 0.0
    %v337 = vadd.f32 %v335, %v336
    %v338 = vsel %vm238, %v88, 0.0
    %v339 = vadd.f32 %v337, %v338
    %v340 = vsel %vm238, %v89, 0.0
    %v341 = vadd.f32 %v339, %v340
    %v342 = vsel %vm238, %v90, 0.0
    %v343 = vadd.f32 %v341, %v342
    %v344 = vsel %vm238, %v91, 0.0
    %v345 = vadd.f32 %v343, %v344
    %v346 = vsel %vm238, %v92, 0.0
    %v347 = vadd.f32 %v345, %v346
    %v348 = vsel %vm238, %v93, 0.0
    %v349 = vadd.f32 %v347, %v348
    %v350 = vsel %vm238, %v94, 0.0
    %v351 = vadd.f32 %v349, %v350
    %v352 = vsel %vm238, %v95, 0.0
    %v353 = vadd.f32 %v351, %v352
    %v354 = vsel %vm238, %v96, 0.0
    %v355 = vadd.f32 %v353, %v354
    %v356 = vsel %vm238, %v97, 0.0
    %v357 = vadd.f32 %v355, %v356
    %v358 = vsel %vm238, %v98, 0.0
    %v359 = vadd.f32 %v357, %v358
    %v360 = vsel %vm238, %v99, 0.0
    %v361 = vadd.f32 %v359, %v360
    %v362 = vsel %vm238, %v100, 0.0
    %v363 = vadd.f32 %v361, %v362
    %v364 = vsel %vm238, %v101, 0.0
    %v365 = vadd.f32 %v363, %v364
    %v366 = vsel %vm238, %v102, 0.0
    %v367 = vadd.f32 %v365, %v366
    %v368 = vsel %vm238, %v103, 0.0
    %v369 = vadd.f32 %v367, %v368
    %v370 = vsel %vm238, %v104, 0.0
    %v371 = vadd.f32 %v369, %v370
    %v372 = vsel %vm238, %v105, 0.0
    %v373 = vadd.f32 %v371, %v372
    %v374 = vsel %vm238, %v106, 0.0
    %v375 = vadd.f32 %v373, %v374
    %v376 = vsel %vm238, %v107, 0.0
    %v377 = vadd.f32 %v375, %v376
    %v378 = vsel %vm238, %v108, 0.0
    %v379 = vadd.f32 %v377, %v378
    %v380 = vsel %vm238, %v109, 0.0
    %v381 = vadd.f32 %v379, %v380
    %v382 = vsel %vm238, %v110, 0.0
    %v383 = vadd.f32 %v381, %v382
    %v384 = vsel %vm238, %v111, 0.0
    %v385 = vadd.f32 %v383, %v384
    %v386 = vsel %vm238, %v112, 0.0
    %v387 = vadd.f32 %v385, %v386
    %v388 = vsel %vm238, %v113, 0.0
    %v389 = vadd.f32 %v387, %v388
    %v390 = vsel %vm238, %v114, 0.0
    %v391 = vadd.f32 %v389, %v390
    %v392 = vsel %vm238, %v115, 0.0
    %v393 = vadd.f32 %v391, %v392
    %v394 = vsel %vm238, %v116, 0.0
    %v395 = vadd.f32 %v393, %v394
    %v396 = vsel %vm238, %v117, 0.0
    %v397 = vadd.f32 %v395, %v396
    %v398 = vsel %vm238, %v118, 0.0
    %v399 = vadd.f32 %v397, %v398
    %v400 = vsel %vm238, %v119, 0.0
    %v401 = vadd.f32 %v399, %v400
    %v402 = vsel %vm238, %v120, 0.0
    %v403 = vadd.f32 %v401, %v402
    %v404 = vsel %vm238, %v121, 0.0
    %v405 = vadd.f32 %v403, %v404
    %v406 = vsel %vm238, %v122, 0.0
    %v407 = vadd.f32 %v405, %v406
    %v408 = vsel %vm238, %v123, 0.0
    %v409 = vadd.f32 %v407, %v408
    %v410 = vsel %vm238, %v124, 0.0
    %v411 = vadd.f32 %v409, %v410
    %v412 = vsel %vm238, %v125, 0.0
    %v413 = vadd.f32 %v411, %v412
    %v414 = vsel %vm238, %v126, 0.0
    %v415 = vadd.f32 %v413, %v414
    %v416 = vsel %vm238, %v127, 0.0
    %v417 = vadd.f32 %v415, %v416
    %v418 = vsel %vm238, %v128, 0.0
    %v419 = vadd.f32 %v417, %v418
    %v420 = vsel %vm238, %v129, 0.0
    %v421 = vadd.f32 %v419, %v420
    %v422 = vsel %vm238, %v130, 0.0
    %v423 = vadd.f32 %v421, %v422
    %v424 = vsel %vm238, %v131, 0.0
    %v425 = vadd.f32 %v423, %v424
    %v426 = vsel %vm238, %v132, 0.0
    %v427 = vadd.f32 %v425, %v426
    %v428 = vsel %vm238, %v133, 0.0
    %v429 = vadd.f32 %v427, %v428
    %v430 = vsel %vm238, %v134, 0.0
    %v431 = vadd.f32 %v429, %v430
    %v432 = vsel %vm238, %v135, 0.0
    %v433 = vadd.f32 %v431, %v432
    %v434 = vsel %vm238, %v136, 0.0
    %v435 = vadd.f32 %v433, %v434
    %v436 = vsel %vm238, %v137, 0.0
    %v437 = vadd.f32 %v435, %v436
    %v438 = vrot.slane %v437, 4
    %v439 = vadd.f32 %v437, %v438
    %v440 = vrot.slane %v439, 2
    %v441 = vadd.f32 %v439, %v440
    %v442 = vrot.slane %v441, 1
    %v443 = vadd.f32 %v441, %v442
    %v444 = vsel %vm238, %v138, 0.0
    %v445 = vsel %vm238, %v139, 0.0
    %v446 = vadd.f32 %v444, %v445
    %v447 = vsel %vm238, %v140, 0.0
    %v448 = vadd.f32 %v446, %v447
    %v449 = vsel %vm238, %v141, 0.0
    %v450 = vadd.f32 %v448, %v449
    %v451 = vsel %vm238, %v142, 0.0
    %v452 = vadd.f32 %v450, %v451
    %v453 = vsel %vm238, %v143, 0.0
    %v454 = vadd.f32 %v452, %v453
    %v455 = vsel %vm238, %v144, 0.0
    %v456 = vadd.f32 %v454, %v455
    %v457 = vsel %vm238, %v145, 0.0
    %v458 = vadd.f32 %v456, %v457
    %v459 = vsel %vm238, %v146, 0.0
    %v460 = vadd.f32 %v458, %v459
    %v461 = vsel %vm238, %v147, 0.0
    %v462 = vadd.f32 %v460, %v461
    %v463 = vsel %vm238, %v148, 0.0
    %v464 = vadd.f32 %v462, %v463
    %v465 = vsel %vm238, %v149, 0.0
    %v466 = vadd.f32 %v464, %v465
    %v467 = vsel %vm238, %v150, 0.0
    %v468 = vadd.f32 %v466, %v467
    %v469 = vsel %vm238, %v151, 0.0
    %v470 = vadd.f32 %v468, %v469
    %v471 = vsel %vm238, %v152, 0.0
    %v472 = vadd.f32 %v470, %v471
    %v473 = vsel %vm238, %v153, 0.0
    %v474 = vadd.f32 %v472, %v473
    %v475 = vsel %vm238, %v154, 0.0
    %v476 = vadd.f32 %v474, %v475
    %v477 = vsel %vm238, %v155, 0.0
    %v478 = vadd.f32 %v476, %v477
    %v479 = vsel %vm238, %v156, 0.0
    %v480 = vadd.f32 %v478, %v479
    %v481 = vsel %vm238, %v157, 0.0
    %v482 = vadd.f32 %v480, %v481
    %v483 = vsel %vm238, %v158, 0.0
    %v484 = vadd.f32 %v482, %v483
    %v485 = vsel %vm238, %v159, 0.0
    %v486 = vadd.f32 %v484, %v485
    %v487 = vsel %vm238, %v160, 0.0
    %v488 = vadd.f32 %v486, %v487
    %v489 = vsel %vm238, %v161, 0.0
    %v490 = vadd.f32 %v488, %v489
    %v491 = vsel %vm238, %v162, 0.0
    %v492 = vadd.f32 %v490, %v491
    %v493 = vsel %vm238, %v163, 0.0
    %v494 = vadd.f32 %v492, %v493
    %v495 = vsel %vm238, %v164, 0.0
    %v496 = vadd.f32 %v494, %v495
    %v497 = vsel %vm238, %v165, 0.0
    %v498 = vadd.f32 %v496, %v497
    %v499 = vsel %vm238, %v166, 0.0
    %v500 = vadd.f32 %v498, %v499
    %v501 = vsel %vm238, %v167, 0.0
    %v502 = vadd.f32 %v500, %v501
    %v503 = vsel %vm238, %v168, 0.0
    %v504 = vadd.f32 %v502, %v503
    %v505 = vsel %vm238, %v169, 0.0
    %v506 = vadd.f32 %v504, %v505
    %v507 = vsel %vm238, %v170, 0.0
    %v508 = vadd.f32 %v506, %v507
    %v509 = vsel %vm238, %v171, 0.0
    %v510 = vadd.f32 %v508, %v509
    %v511 = vsel %vm238, %v172, 0.0
    %v512 = vadd.f32 %v510, %v511
    %v513 = vsel %vm238, %v173, 0.0
    %v514 = vadd.f32 %v512, %v513
    %v515 = vsel %vm238, %v174, 0.0
    %v516 = vadd.f32 %v514, %v515
    %v517 = vsel %vm238, %v175, 0.0
    %v518 = vadd.f32 %v516, %v517
    %v519 = vsel %vm238, %v176, 0.0
    %v520 = vadd.f32 %v518, %v519
    %v521 = vsel %vm238, %v177, 0.0
    %v522 = vadd.f32 %v520, %v521
    %v523 = vsel %vm238, %v178, 0.0
    %v524 = vadd.f32 %v522, %v523
    %v525 = vsel %vm238, %v179, 0.0
    %v526 = vadd.f32 %v524, %v525
    %v527 = vsel %vm238, %v180, 0.0
    %v528 = vadd.f32 %v526, %v527
    %v529 = vsel %vm238, %v181, 0.0
    %v530 = vadd.f32 %v528, %v529
    %v531 = vsel %vm238, %v182, 0.0
    %v532 = vadd.f32 %v530, %v531
    %v533 = vsel %vm238, %v183, 0.0
    %v534 = vadd.f32 %v532, %v533
    %v535 = vsel %vm238, %v184, 0.0
    %v536 = vadd.f32 %v534, %v535
    %v537 = vsel %vm238, %v185, 0.0
    %v538 = vadd.f32 %v536, %v537
    %v539 = vsel %vm238, %v186, 0.0
    %v540 = vadd.f32 %v538, %v539
    %v541 = vsel %vm238, %v187, 0.0
    %v542 = vadd.f32 %v540, %v541
    %v543 = vsel %vm238, %v188, 0.0
    %v544 = vadd.f32 %v542, %v543
    %v545 = vsel %vm238, %v189, 0.0
    %v546 = vadd.f32 %v544, %v545
    %v547 = vsel %vm238, %v190, 0.0
    %v548 = vadd.f32 %v546, %v547
    %v549 = vsel %vm238, %v191, 0.0
    %v550 = vadd.f32 %v548, %v549
    %v551 = vsel %vm238, %v192, 0.0
    %v552 = vadd.f32 %v550, %v551
    %v553 = vsel %vm238, %v193, 0.0
    %v554 = vadd.f32 %v552, %v553
    %v555 = vsel %vm238, %v194, 0.0
    %v556 = vadd.f32 %v554, %v555
    %v557 = vsel %vm238, %v195, 0.0
    %v558 = vadd.f32 %v556, %v557
    %v559 = vsel %vm238, %v196, 0.0
    %v560 = vadd.f32 %v558, %v559
    %v561 = vsel %vm238, %v197, 0.0
    %v562 = vadd.f32 %v560, %v561
    %v563 = vsel %vm238, %v198, 0.0
    %v564 = vadd.f32 %v562, %v563
    %v565 = vsel %vm238, %v199, 0.0
    %v566 = vadd.f32 %v564, %v565
    %v567 = vsel %vm238, %v200, 0.0
    %v568 = vadd.f32 %v566, %v567
    %v569 = vsel %vm238, %v201, 0.0
    %v570 = vadd.f32 %v568, %v569
    %v571 = vsel %vm238, %v202, 0.0
    %v572 = vadd.f32 %v570, %v571
    %v573 = vsel %vm238, %v203, 0.0
    %v574 = vadd.f32 %v572, %v573
    %v575 = vsel %vm238, %v204, 0.0
    %v576 = vadd.f32 %v574, %v575
    %v577 = vsel %vm238, %v205, 0.0
    %v578 = vadd.f32 %v576, %v577
    %v579 = vsel %vm238, %v206, 0.0
    %v580 = vadd.f32 %v578, %v579
    %v581 = vsel %vm238, %v207, 0.0
    %v582 = vadd.f32 %v580, %v581
    %v583 = vsel %vm238, %v208, 0.0
    %v584 = vadd.f32 %v582, %v583
    %v585 = vsel %vm238, %v209, 0.0
    %v586 = vadd.f32 %v584, %v585
    %v587 = vsel %vm238, %v210, 0.0
    %v588 = vadd.f32 %v586, %v587
    %v589 = vsel %vm238, %v211, 0.0
    %v590 = vadd.f32 %v588, %v589
    %v591 = vsel %vm238, %v212, 0.0
    %v592 = vadd.f32 %v590, %v591
    %v593 = vsel %vm238, %v213, 0.0
    %v594 = vadd.f32 %v592, %v593
    %v595 = vsel %vm238, %v214, 0.0
    %v596 = vadd.f32 %v594, %v595
    %v597 = vsel %vm238, %v215, 0.0
    %v598 = vadd.f32 %v596, %v597
    %v599 = vsel %vm238, %v216, 0.0
    %v600 = vadd.f32 %v598, %v599
    %v601 = vsel %vm238, %v217, 0.0
    %v602 = vadd.f32 %v600, %v601
    %v603 = vsel %vm238, %v218, 0.0
    %v604 = vadd.f32 %v602, %v603
    %v605 = vsel %vm238, %v219, 0.0
    %v606 = vadd.f32 %v604, %v605
    %v607 = vsel %vm238, %v220, 0.0
    %v608 = vadd.f32 %v606, %v607
    %v609 = vsel %vm238, %v221, 0.0
    %v610 = vadd.f32 %v608, %v609
    %v611 = vsel %vm238, %v222, 0.0
    %v612 = vadd.f32 %v610, %v611
    %v613 = vsel %vm238, %v223, 0.0
    %v614 = vadd.f32 %v612, %v613
    %v615 = vsel %vm238, %v224, 0.0
    %v616 = vadd.f32 %v614, %v615
    %v617 = vsel %vm238, %v225, 0.0
    %v618 = vadd.f32 %v616, %v617
    %v619 = vsel %vm238, %v226, 0.0
    %v620 = vadd.f32 %v618, %v619
    %v621 = vsel %vm238, %v227, 0.0
    %v622 = vadd.f32 %v620, %v621
    %v623 = vsel %vm238, %v228, 0.0
    %v624 = vadd.f32 %v622, %v623
    %v625 = vsel %vm238, %v229, 0.0
    %v626 = vadd.f32 %v624, %v625
    %v627 = vsel %vm238, %v230, 0.0
    %v628 = vadd.f32 %v626, %v627
    %v629 = vsel %vm238, %v231, 0.0
    %v630 = vadd.f32 %v628, %v629
    %v631 = vsel %vm238, %v232, 0.0
    %v632 = vadd.f32 %v630, %v631
    %v633 = vsel %vm238, %v233, 0.0
    %v634 = vadd.f32 %v632, %v633
    %v635 = vsel %vm238, %v234, 0.0
    %v636 = vadd.f32 %v634, %v635
    %v637 = vsel %vm238, %v235, 0.0
    %v638 = vadd.f32 %v636, %v637
    %v639 = vsel %vm238, %v236, 0.0
    %v640 = vadd.f32 %v638, %v639
    %v641 = vsel %vm238, %v237, 0.0
    %v642 = vadd.f32 %v640, %v641
    %v643 = vrot.slane %v642, 4
    %v644 = vadd.f32 %v642, %v643
    %v645 = vrot.slane %v644, 2
    %v646 = vadd.f32 %v644, %v645
    %v647 = vrot.slane %v646, 1
    %v648 = vadd.f32 %v646, %v647
    %v649 = vrcp.pop 800.0
    %v650 = vmul.f32 %v443, %v649
    %v651 = vmul.f32 %v648, %v649
    %v652 = vsub.f32 %v38, %v650
    %v653 = vsub.f32 %v39, %v650
    %v654 = vsub.f32 %v40, %v650
    %v655 = vsub.f32 %v41, %v650
    %v656 = vsub.f32 %v42, %v650
    %v657 = vsub.f32 %v43, %v650
    %v658 = vsub.f32 %v44, %v650
    %v659 = vsub.f32 %v45, %v650
    %v660 = vsub.f32 %v46, %v650
    %v661 = vsub.f32 %v47, %v650
    %v662 = vsub.f32 %v48, %v650
    %v663 = vsub.f32 %v49, %v650
    %v664 = vsub.f32 %v50, %v650
    %v665 = vsub.f32 %v51, %v650
    %v666 = vsub.f32 %v52, %v650
    %v667 = vsub.f32 %v53, %v650
    %v668 = vsub.f32 %v54, %v650
    %v669 = vsub.f32 %v55, %v650
    %v670 = vsub.f32 %v56, %v650
    %v671 = vsub.f32 %v57, %v650
    %v672 = vsub.f32 %v58, %v650
    %v673 = vsub.f32 %v59, %v650
    %v674 = vsub.f32 %v60, %v650
    %v675 = vsub.f32 %v61, %v650
    %v676 = vsub.f32 %v62, %v650
    %v677 = vsub.f32 %v63, %v650
    %v678 = vsub.f32 %v64, %v650
    %v679 = vsub.f32 %v65, %v650
    %v680 = vsub.f32 %v66, %v650
    %v681 = vsub.f32 %v67, %v650
    %v682 = vsub.f32 %v68, %v650
    %v683 = vsub.f32 %v69, %v650
    %v684 = vsub.f32 %v70, %v650
    %v685 = vsub.f32 %v71, %v650
    %v686 = vsub.f32 %v72, %v650
    %v687 = vsub.f32 %v73, %v650
    %v688 = vsub.f32 %v74, %v650
    %v689 = vsub.f32 %v75, %v650
    %v690 = vsub.f32 %v76, %v650
    %v691 = vsub.f32 %v77, %v650
    %v692 = vsub.f32 %v78, %v650
    %v693 = vsub.f32 %v79, %v650
    %v694 = vsub.f32 %v80, %v650
    %v695 = vsub.f32 %v81, %v650
    %v696 = vsub.f32 %v82, %v650
    %v697 = vsub.f32 %v83, %v650
    %v698 = vsub.f32 %v84, %v650
    %v699 = vsub.f32 %v85, %v650
    %v700 = vsub.f32 %v86, %v650
    %v701 = vsub.f32 %v87, %v650
    %v702 = vsub.f32 %v88, %v650
    %v703 = vsub.f32 %v89, %v650
    %v704 = vsub.f32 %v90, %v650
    %v705 = vsub.f32 %v91, %v650
    %v706 = vsub.f32 %v92, %v650
    %v707 = vsub.f32 %v93, %v650
    %v708 = vsub.f32 %v94, %v650
    %v709 = vsub.f32 %v95, %v650
    %v710 = vsub.f32 %v96, %v650
    %v711 = vsub.f32 %v97, %v650
    %v712 = vsub.f32 %v98, %v650
    %v713 = vsub.f32 %v99, %v650
    %v714 = vsub.f32 %v100, %v650
    %v715 = vsub.f32 %v101, %v650
    %v716 = vsub.f32 %v102, %v650
    %v717 = vsub.f32 %v103, %v650
    %v718 = vsub.f32 %v104, %v650
    %v719 = vsub.f32 %v105, %v650
    %v720 = vsub.f32 %v106, %v650
    %v721 = vsub.f32 %v107, %v650
    %v722 = vsub.f32 %v108, %v650
    %v723 = vsub.f32 %v109, %v650
    %v724 = vsub.f32 %v110, %v650
    %v725 = vsub.f32 %v111, %v650
    %v726 = vsub.f32 %v112, %v650
    %v727 = vsub.f32 %v113, %v650
    %v728 = vsub.f32 %v114, %v650
    %v729 = vsub.f32 %v115, %v650
    %v730 = vsub.f32 %v116, %v650
    %v731 = vsub.f32 %v117, %v650
    %v732 = vsub.f32 %v118, %v650
    %v733 = vsub.f32 %v119, %v650
    %v734 = vsub.f32 %v120, %v650
    %v735 = vsub.f32 %v121, %v650
    %v736 = vsub.f32 %v122, %v650
    %v737 = vsub.f32 %v123, %v650
    %v738 = vsub.f32 %v124, %v650
    %v739 = vsub.f32 %v125, %v650
    %v740 = vsub.f32 %v126, %v650
    %v741 = vsub.f32 %v127, %v650
    %v742 = vsub.f32 %v128, %v650
    %v743 = vsub.f32 %v129, %v650
    %v744 = vsub.f32 %v130, %v650
    %v745 = vsub.f32 %v131, %v650
    %v746 = vsub.f32 %v132, %v650
    %v747 = vsub.f32 %v133, %v650
    %v748 = vsub.f32 %v134, %v650
    %v749 = vsub.f32 %v135, %v650
    %v750 = vsub.f32 %v136, %v650
    %v751 = vsub.f32 %v137, %v650
    %v752 = vsub.f32 %v138, %v651
    %v753 = vsub.f32 %v139, %v651
    %v754 = vsub.f32 %v140, %v651
    %v755 = vsub.f32 %v141, %v651
    %v756 = vsub.f32 %v142, %v651
    %v757 = vsub.f32 %v143, %v651
    %v758 = vsub.f32 %v144, %v651
    %v759 = vsub.f32 %v145, %v651
    %v760 = vsub.f32 %v146, %v651
    %v761 = vsub.f32 %v147, %v651
    %v762 = vsub.f32 %v148, %v651
    %v763 = vsub.f32 %v149, %v651
    %v764 = vsub.f32 %v150, %v651
    %v765 = vsub.f32 %v151, %v651
    %v766 = vsub.f32 %v152, %v651
    %v767 = vsub.f32 %v153, %v651
    %v768 = vsub.f32 %v154, %v651
    %v769 = vsub.f32 %v155, %v651
    %v770 = vsub.f32 %v156, %v651
    %v771 = vsub.f32 %v157, %v651
    %v772 = vsub.f32 %v158, %v651
    %v773 = vsub.f32 %v159, %v651
    %v774 = vsub.f32 %v160, %v651
    %v775 = vsub.f32 %v161, %v651
    %v776 = vsub.f32 %v162, %v651
    %v777 = vsub.f32 %v163, %v651
    %v778 = vsub.f32 %v164, %v651
    %v779 = vsub.f32 %v165, %v651
    %v780 = vsub.f32 %v166, %v651
    %v781 = vsub.f32 %v167, %v651
    %v782 = vsub.f32 %v168, %v651
    %v783 = vsub.f32 %v169, %v651
    %v784 = vsub.f32 %v170, %v651
    %v785 = vsub.f32 %v171, %v651
    %v786 = vsub.f32 %v172, %v651
    %v787 = vsub.f32 %v173, %v651
    %v788 = vsub.f32 %v174, %v651
    %v789 = vsub.f32 %v175, %v651
    %v790 = vsub.f32 %v176, %v651
    %v791 = vsub.f32 %v177, %v651
    %v792 = vsub.f32 %v178, %v651
    %v793 = vsub.f32 %v179, %v651
    %v794 = vsub.f32 %v180, %v651
    %v795 = vsub.f32 %v181, %v651
    %v796 = vsub.f32 %v182, %v651
    %v797 = vsub.f32 %v183, %v651
    %v798 = vsub.f32 %v184, %v651
    %v799 = vsub.f32 %v185, %v651
    %v800 = vsub.f32 %v186, %v651
    %v801 = vsub.f32 %v187, %v651
    %v802 = vsub.f32 %v188, %v651
    %v803 = vsub.f32 %v189, %v651
    %v804 = vsub.f32 %v190, %v651
    %v805 = vsub.f32 %v191, %v651
    %v806 = vsub.f32 %v192, %v651
    %v807 = vsub.f32 %v193, %v651
    %v808 = vsub.f32 %v194, %v651
    %v809 = vsub.f32 %v195, %v651
    %v810 = vsub.f32 %v196, %v651
    %v811 = vsub.f32 %v197, %v651
    %v812 = vsub.f32 %v198, %v651
    %v813 = vsub.f32 %v199, %v651
    %v814 = vsub.f32 %v200, %v651
    %v815 = vsub.f32 %v201, %v651
    %v816 = vsub.f32 %v202, %v651
    %v817 = vsub.f32 %v203, %v651
    %v818 = vsub.f32 %v204, %v651
    %v819 = vsub.f32 %v205, %v651
    %v820 = vsub.f32 %v206, %v651
    %v821 = vsub.f32 %v207, %v651
    %v822 = vsub.f32 %v208, %v651
    %v823 = vsub.f32 %v209, %v651
    %v824 = vsub.f32 %v210, %v651
    %v825 = vsub.f32 %v211, %v651
    %v826 = vsub.f32 %v212, %v651
    %v827 = vsub.f32 %v213, %v651
    %v828 = vsub.f32 %v214, %v651
    %v829 = vsub.f32 %v215, %v651
    %v830 = vsub.f32 %v216, %v651
    %v831 = vsub.f32 %v217, %v651
    %v832 = vsub.f32 %v218, %v651
    %v833 = vsub.f32 %v219, %v651
    %v834 = vsub.f32 %v220, %v651
    %v835 = vsub.f32 %v221, %v651
    %v836 = vsub.f32 %v222, %v651
    %v837 = vsub.f32 %v223, %v651
    %v838 = vsub.f32 %v224, %v651
    %v839 = vsub.f32 %v225, %v651
    %v840 = vsub.f32 %v226, %v651
    %v841 = vsub.f32 %v227, %v651
    %v842 = vsub.f32 %v228, %v651
    %v843 = vsub.f32 %v229, %v651
    %v844 = vsub.f32 %v230, %v651
    %v845 = vsub.f32 %v231, %v651
    %v846 = vsub.f32 %v232, %v651
    %v847 = vsub.f32 %v233, %v651
    %v848 = vsub.f32 %v234, %v651
    %v849 = vsub.f32 %v235, %v651
    %v850 = vsub.f32 %v236, %v651
    %v851 = vsub.f32 %v237, %v651
    %v852 = vmul.f32 %v652, %v652
    %v853 = vmul.f32 %v653, %v653
    %v854 = vmul.f32 %v654, %v654
    %v855 = vmul.f32 %v655, %v655
    %v856 = vmul.f32 %v656, %v656
    %v857 = vmul.f32 %v657, %v657
    %v858 = vmul.f32 %v658, %v658
    %v859 = vmul.f32 %v659, %v659
    %v860 = vmul.f32 %v660, %v660
    %v861 = vmul.f32 %v661, %v661
    %v862 = vmul.f32 %v662, %v662
    %v863 = vmul.f32 %v663, %v663
    %v864 = vmul.f32 %v664, %v664
    %v865 = vmul.f32 %v665, %v665
    %v866 = vmul.f32 %v666, %v666
    %v867 = vmul.f32 %v667, %v667
    %v868 = vmul.f32 %v668, %v668
    %v869 = vmul.f32 %v669, %v669
    %v870 = vmul.f32 %v670, %v670
    %v871 = vmul.f32 %v671, %v671
    %v872 = vmul.f32 %v672, %v672
    %v873 = vmul.f32 %v673, %v673
    %v874 = vmul.f32 %v674, %v674
    %v875 = vmul.f32 %v675, %v675
    %v876 = vmul.f32 %v676, %v676
    %v877 = vmul.f32 %v677, %v677
    %v878 = vmul.f32 %v678, %v678
    %v879 = vmul.f32 %v679, %v679
    %v880 = vmul.f32 %v680, %v680
    %v881 = vmul.f32 %v681, %v681
    %v882 = vmul.f32 %v682, %v682
    %v883 = vmul.f32 %v683, %v683
    %v884 = vmul.f32 %v684, %v684
    %v885 = vmul.f32 %v685, %v685
    %v886 = vmul.f32 %v686, %v686
    %v887 = vmul.f32 %v687, %v687
    %v888 = vmul.f32 %v688, %v688
    %v889 = vmul.f32 %v689, %v689
    %v890 = vmul.f32 %v690, %v690
    %v891 = vmul.f32 %v691, %v691
    %v892 = vmul.f32 %v692, %v692
    %v893 = vmul.f32 %v693, %v693
    %v894 = vmul.f32 %v694, %v694
    %v895 = vmul.f32 %v695, %v695
    %v896 = vmul.f32 %v696, %v696
    %v897 = vmul.f32 %v697, %v697
    %v898 = vmul.f32 %v698, %v698
    %v899 = vmul.f32 %v699, %v699
    %v900 = vmul.f32 %v700, %v700
    %v901 = vmul.f32 %v701, %v701
    %v902 = vmul.f32 %v702, %v702
    %v903 = vmul.f32 %v703, %v703
    %v904 = vmul.f32 %v704, %v704
    %v905 = vmul.f32 %v705, %v705
    %v906 = vmul.f32 %v706, %v706
    %v907 = vmul.f32 %v707, %v707
    %v908 = vmul.f32 %v708, %v708
    %v909 = vmul.f32 %v709, %v709
    %v910 = vmul.f32 %v710, %v710
    %v911 = vmul.f32 %v711, %v711
    %v912 = vmul.f32 %v712, %v712
    %v913 = vmul.f32 %v713, %v713
    %v914 = vmul.f32 %v714, %v714
    %v915 = vmul.f32 %v715, %v715
    %v916 = vmul.f32 %v716, %v716
    %v917 = vmul.f32 %v717, %v717
    %v918 = vmul.f32 %v718, %v718
    %v919 = vmul.f32 %v719, %v719
    %v920 = vmul.f32 %v720, %v720
    %v921 = vmul.f32 %v721, %v721
    %v922 = vmul.f32 %v722, %v722
    %v923 = vmul.f32 %v723, %v723
    %v924 = vmul.f32 %v724, %v724
    %v925 = vmul.f32 %v725, %v725
    %v926 = vmul.f32 %v726, %v726
    %v927 = vmul.f32 %v727, %v727
    %v928 = vmul.f32 %v728, %v728
    %v929 = vmul.f32 %v729, %v729
    %v930 = vmul.f32 %v730, %v730
    %v931 = vmul.f32 %v731, %v731
    %v932 = vmul.f32 %v732, %v732
    %v933 = vmul.f32 %v733, %v733
    %v934 = vmul.f32 %v734, %v734
    %v935 = vmul.f32 %v735, %v735
    %v936 = vmul.f32 %v736, %v736
    %v937 = vmul.f32 %v737, %v737
    %v938 = vmul.f32 %v738, %v738
    %v939 = vmul.f32 %v739, %v739
    %v940 = vmul.f32 %v740, %v740
    %v941 = vmul.f32 %v741, %v741
    %v942 = vmul.f32 %v742, %v742
    %v943 = vmul.f32 %v743, %v743
    %v944 = vmul.f32 %v744, %v744
    %v945 = vmul.f32 %v745, %v745
    %v946 = vmul.f32 %v746, %v746
    %v947 = vmul.f32 %v747, %v747
    %v948 = vmul.f32 %v748, %v748
    %v949 = vmul.f32 %v749, %v749
    %v950 = vmul.f32 %v750, %v750
    %v951 = vmul.f32 %v751, %v751
    %v952 = vmul.f32 %v752, %v752
    %v953 = vmul.f32 %v753, %v753
    %v954 = vmul.f32 %v754, %v754
    %v955 = vmul.f32 %v755, %v755
    %v956 = vmul.f32 %v756, %v756
    %v957 = vmul.f32 %v757, %v757
    %v958 = vmul.f32 %v758, %v758
    %v959 = vmul.f32 %v759, %v759
    %v960 = vmul.f32 %v760, %v760
    %v961 = vmul.f32 %v761, %v761
    %v962 = vmul.f32 %v762, %v762
    %v963 = vmul.f32 %v763, %v763
    %v964 = vmul.f32 %v764, %v764
    %v965 = vmul.f32 %v765, %v765
    %v966 = vmul.f32 %v766, %v766
    %v967 = vmul.f32 %v767, %v767
    %v968 = vmul.f32 %v768, %v768
    %v969 = vmul.f32 %v769, %v769
    %v970 = vmul.f32 %v770, %v770
    %v971 = vmul.f32 %v771, %v771
    %v972 = vmul.f32 %v772, %v772
    %v973 = vmul.f32 %v773, %v773
    %v974 = vmul.f32 %v774, %v774
    %v975 = vmul.f32 %v775, %v775
    %v976 = vmul.f32 %v776, %v776
    %v977 = vmul.f32 %v777, %v777
    %v978 = vmul.f32 %v778, %v778
    %v979 = vmul.f32 %v779, %v779
    %v980 = vmul.f32 %v780, %v780
    %v981 = vmul.f32 %v781, %v781
    %v982 = vmul.f32 %v782, %v782
    %v983 = vmul.f32 %v783, %v783
    %v984 = vmul.f32 %v784, %v784
    %v985 = vmul.f32 %v785, %v785
    %v986 = vmul.f32 %v786, %v786
    %v987 = vmul.f32 %v787, %v787
    %v988 = vmul.f32 %v788, %v788
    %v989 = vmul.f32 %v789, %v789
    %v990 = vmul.f32 %v790, %v790
    %v991 = vmul.f32 %v791, %v791
    %v992 = vmul.f32 %v792, %v792
    %v993 = vmul.f32 %v793, %v793
    %v994 = vmul.f32 %v794, %v794
    %v995 = vmul.f32 %v795, %v795
    %v996 = vmul.f32 %v796, %v796
    %v997 = vmul.f32 %v797, %v797
    %v998 = vmul.f32 %v798, %v798
    %v999 = vmul.f32 %v799, %v799
    %v1000 = vmul.f32 %v800, %v800
    %v1001 = vmul.f32 %v801, %v801
    %v1002 = vmul.f32 %v802, %v802
    %v1003 = vmul.f32 %v803, %v803
    %v1004 = vmul.f32 %v804, %v804
    %v1005 = vmul.f32 %v805, %v805
    %v1006 = vmul.f32 %v806, %v806
    %v1007 = vmul.f32 %v807, %v807
    %v1008 = vmul.f32 %v808, %v808
    %v1009 = vmul.f32 %v809, %v809
    %v1010 = vmul.f32 %v810, %v810
    %v1011 = vmul.f32 %v811, %v811
    %v1012 = vmul.f32 %v812, %v812
    %v1013 = vmul.f32 %v813, %v813
    %v1014 = vmul.f32 %v814, %v814
    %v1015 = vmul.f32 %v815, %v815
    %v1016 = vmul.f32 %v816, %v816
    %v1017 = vmul.f32 %v817, %v817
    %v1018 = vmul.f32 %v818, %v818
    %v1019 = vmul.f32 %v819, %v819
    %v1020 = vmul.f32 %v820, %v820
    %v1021 = vmul.f32 %v821, %v821
    %v1022 = vmul.f32 %v822, %v822
    %v1023 = vmul.f32 %v823, %v823
    %v1024 = vmul.f32 %v824, %v824
    %v1025 = vmul.f32 %v825, %v825
    %v1026 = vmul.f32 %v826, %v826
    %v1027 = vmul.f32 %v827, %v827
    %v1028 = vmul.f32 %v828, %v828
    %v1029 = vmul.f32 %v829, %v829
    %v1030 = vmul.f32 %v830, %v830
    %v1031 = vmul.f32 %v831, %v831
    %v1032 = vmul.f32 %v832, %v832
    %v1033 = vmul.f32 %v833, %v833
    %v1034 = vmul.f32 %v834, %v834
    %v1035 = vmul.f32 %v835, %v835
    %v1036 = vmul.f32 %v836, %v836
    %v1037 = vmul.f32 %v837, %v837
    %v1038 = vmul.f32 %v838, %v838
    %v1039 = vmul.f32 %v839, %v839
    %v1040 = vmul.f32 %v840, %v840
    %v1041 = vmul.f32 %v841, %v841
    %v1042 = vmul.f32 %v842, %v842
    %v1043 = vmul.f32 %v843, %v843
    %v1044 = vmul.f32 %v844, %v844
    %v1045 = vmul.f32 %v845, %v845
    %v1046 = vmul.f32 %v846, %v846
    %v1047 = vmul.f32 %v847, %v847
    %v1048 = vmul.f32 %v848, %v848
    %v1049 = vmul.f32 %v849, %v849
    %v1050 = vmul.f32 %v850, %v850
    %v1051 = vmul.f32 %v851, %v851
    %v1052 = vsel %vm238, %v852, 0.0
    %v1053 = vsel %vm238, %v853, 0.0
    %v1054 = vadd.f32 %v1052, %v1053
    %v1055 = vsel %vm238, %v854, 0.0
    %v1056 = vadd.f32 %v1054, %v1055
    %v1057 = vsel %vm238, %v855, 0.0
    %v1058 = vadd.f32 %v1056, %v1057
    %v1059 = vsel %vm238, %v856, 0.0
    %v1060 = vadd.f32 %v1058, %v1059
    %v1061 = vsel %vm238, %v857, 0.0
    %v1062 = vadd.f32 %v1060, %v1061
    %v1063 = vsel %vm238, %v858, 0.0
    %v1064 = vadd.f32 %v1062, %v1063
    %v1065 = vsel %vm238, %v859, 0.0
    %v1066 = vadd.f32 %v1064, %v1065
    %v1067 = vsel %vm238, %v860, 0.0
    %v1068 = vadd.f32 %v1066, %v1067
    %v1069 = vsel %vm238, %v861, 0.0
    %v1070 = vadd.f32 %v1068, %v1069
    %v1071 = vsel %vm238, %v862, 0.0
    %v1072 = vadd.f32 %v1070, %v1071
    %v1073 = vsel %vm238, %v863, 0.0
    %v1074 = vadd.f32 %v1072, %v1073
    %v1075 = vsel %vm238, %v864, 0.0
    %v1076 = vadd.f32 %v1074, %v1075
    %v1077 = vsel %vm238, %v865, 0.0
    %v1078 = vadd.f32 %v1076, %v1077
    %v1079 = vsel %vm238, %v866, 0.0
    %v1080 = vadd.f32 %v1078, %v1079
    %v1081 = vsel %vm238, %v867, 0.0
    %v1082 = vadd.f32 %v1080, %v1081
    %v1083 = vsel %vm238, %v868, 0.0
    %v1084 = vadd.f32 %v1082, %v1083
    %v1085 = vsel %vm238, %v869, 0.0
    %v1086 = vadd.f32 %v1084, %v1085
    %v1087 = vsel %vm238, %v870, 0.0
    %v1088 = vadd.f32 %v1086, %v1087
    %v1089 = vsel %vm238, %v871, 0.0
    %v1090 = vadd.f32 %v1088, %v1089
    %v1091 = vsel %vm238, %v872, 0.0
    %v1092 = vadd.f32 %v1090, %v1091
    %v1093 = vsel %vm238, %v873, 0.0
    %v1094 = vadd.f32 %v1092, %v1093
    %v1095 = vsel %vm238, %v874, 0.0
    %v1096 = vadd.f32 %v1094, %v1095
    %v1097 = vsel %vm238, %v875, 0.0
    %v1098 = vadd.f32 %v1096, %v1097
    %v1099 = vsel %vm238, %v876, 0.0
    %v1100 = vadd.f32 %v1098, %v1099
    %v1101 = vsel %vm238, %v877, 0.0
    %v1102 = vadd.f32 %v1100, %v1101
    %v1103 = vsel %vm238, %v878, 0.0
    %v1104 = vadd.f32 %v1102, %v1103
    %v1105 = vsel %vm238, %v879, 0.0
    %v1106 = vadd.f32 %v1104, %v1105
    %v1107 = vsel %vm238, %v880, 0.0
    %v1108 = vadd.f32 %v1106, %v1107
    %v1109 = vsel %vm238, %v881, 0.0
    %v1110 = vadd.f32 %v1108, %v1109
    %v1111 = vsel %vm238, %v882, 0.0
    %v1112 = vadd.f32 %v1110, %v1111
    %v1113 = vsel %vm238, %v883, 0.0
    %v1114 = vadd.f32 %v1112, %v1113
    %v1115 = vsel %vm238, %v884, 0.0
    %v1116 = vadd.f32 %v1114, %v1115
    %v1117 = vsel %vm238, %v885, 0.0
    %v1118 = vadd.f32 %v1116, %v1117
    %v1119 = vsel %vm238, %v886, 0.0
    %v1120 = vadd.f32 %v1118, %v1119
    %v1121 = vsel %vm238, %v887, 0.0
    %v1122 = vadd.f32 %v1120, %v1121
    %v1123 = vsel %vm238, %v888, 0.0
    %v1124 = vadd.f32 %v1122, %v1123
    %v1125 = vsel %vm238, %v889, 0.0
    %v1126 = vadd.f32 %v1124, %v1125
    %v1127 = vsel %vm238, %v890, 0.0
    %v1128 = vadd.f32 %v1126, %v1127
    %v1129 = vsel %vm238, %v891, 0.0
    %v1130 = vadd.f32 %v1128, %v1129
    %v1131 = vsel %vm238, %v892, 0.0
    %v1132 = vadd.f32 %v1130, %v1131
    %v1133 = vsel %vm238, %v893, 0.0
    %v1134 = vadd.f32 %v1132, %v1133
    %v1135 = vsel %vm238, %v894, 0.0
    %v1136 = vadd.f32 %v1134, %v1135
    %v1137 = vsel %vm238, %v895, 0.0
    %v1138 = vadd.f32 %v1136, %v1137
    %v1139 = vsel %vm238, %v896, 0.0
    %v1140 = vadd.f32 %v1138, %v1139
    %v1141 = vsel %vm238, %v897, 0.0
    %v1142 = vadd.f32 %v1140, %v1141
    %v1143 = vsel %vm238, %v898, 0.0
    %v1144 = vadd.f32 %v1142, %v1143
    %v1145 = vsel %vm238, %v899, 0.0
    %v1146 = vadd.f32 %v1144, %v1145
    %v1147 = vsel %vm238, %v900, 0.0
    %v1148 = vadd.f32 %v1146, %v1147
    %v1149 = vsel %vm238, %v901, 0.0
    %v1150 = vadd.f32 %v1148, %v1149
    %v1151 = vsel %vm238, %v902, 0.0
    %v1152 = vadd.f32 %v1150, %v1151
    %v1153 = vsel %vm238, %v903, 0.0
    %v1154 = vadd.f32 %v1152, %v1153
    %v1155 = vsel %vm238, %v904, 0.0
    %v1156 = vadd.f32 %v1154, %v1155
    %v1157 = vsel %vm238, %v905, 0.0
    %v1158 = vadd.f32 %v1156, %v1157
    %v1159 = vsel %vm238, %v906, 0.0
    %v1160 = vadd.f32 %v1158, %v1159
    %v1161 = vsel %vm238, %v907, 0.0
    %v1162 = vadd.f32 %v1160, %v1161
    %v1163 = vsel %vm238, %v908, 0.0
    %v1164 = vadd.f32 %v1162, %v1163
    %v1165 = vsel %vm238, %v909, 0.0
    %v1166 = vadd.f32 %v1164, %v1165
    %v1167 = vsel %vm238, %v910, 0.0
    %v1168 = vadd.f32 %v1166, %v1167
    %v1169 = vsel %vm238, %v911, 0.0
    %v1170 = vadd.f32 %v1168, %v1169
    %v1171 = vsel %vm238, %v912, 0.0
    %v1172 = vadd.f32 %v1170, %v1171
    %v1173 = vsel %vm238, %v913, 0.0
    %v1174 = vadd.f32 %v1172, %v1173
    %v1175 = vsel %vm238, %v914, 0.0
    %v1176 = vadd.f32 %v1174, %v1175
    %v1177 = vsel %vm238, %v915, 0.0
    %v1178 = vadd.f32 %v1176, %v1177
    %v1179 = vsel %vm238, %v916, 0.0
    %v1180 = vadd.f32 %v1178, %v1179
    %v1181 = vsel %vm238, %v917, 0.0
    %v1182 = vadd.f32 %v1180, %v1181
    %v1183 = vsel %vm238, %v918, 0.0
    %v1184 = vadd.f32 %v1182, %v1183
    %v1185 = vsel %vm238, %v919, 0.0
    %v1186 = vadd.f32 %v1184, %v1185
    %v1187 = vsel %vm238, %v920, 0.0
    %v1188 = vadd.f32 %v1186, %v1187
    %v1189 = vsel %vm238, %v921, 0.0
    %v1190 = vadd.f32 %v1188, %v1189
    %v1191 = vsel %vm238, %v922, 0.0
    %v1192 = vadd.f32 %v1190, %v1191
    %v1193 = vsel %vm238, %v923, 0.0
    %v1194 = vadd.f32 %v1192, %v1193
    %v1195 = vsel %vm238, %v924, 0.0
    %v1196 = vadd.f32 %v1194, %v1195
    %v1197 = vsel %vm238, %v925, 0.0
    %v1198 = vadd.f32 %v1196, %v1197
    %v1199 = vsel %vm238, %v926, 0.0
    %v1200 = vadd.f32 %v1198, %v1199
    %v1201 = vsel %vm238, %v927, 0.0
    %v1202 = vadd.f32 %v1200, %v1201
    %v1203 = vsel %vm238, %v928, 0.0
    %v1204 = vadd.f32 %v1202, %v1203
    %v1205 = vsel %vm238, %v929, 0.0
    %v1206 = vadd.f32 %v1204, %v1205
    %v1207 = vsel %vm238, %v930, 0.0
    %v1208 = vadd.f32 %v1206, %v1207
    %v1209 = vsel %vm238, %v931, 0.0
    %v1210 = vadd.f32 %v1208, %v1209
    %v1211 = vsel %vm238, %v932, 0.0
    %v1212 = vadd.f32 %v1210, %v1211
    %v1213 = vsel %vm238, %v933, 0.0
    %v1214 = vadd.f32 %v1212, %v1213
    %v1215 = vsel %vm238, %v934, 0.0
    %v1216 = vadd.f32 %v1214, %v1215
    %v1217 = vsel %vm238, %v935, 0.0
    %v1218 = vadd.f32 %v1216, %v1217
    %v1219 = vsel %vm238, %v936, 0.0
    %v1220 = vadd.f32 %v1218, %v1219
    %v1221 = vsel %vm238, %v937, 0.0
    %v1222 = vadd.f32 %v1220, %v1221
    %v1223 = vsel %vm238, %v938, 0.0
    %v1224 = vadd.f32 %v1222, %v1223
    %v1225 = vsel %vm238, %v939, 0.0
    %v1226 = vadd.f32 %v1224, %v1225
    %v1227 = vsel %vm238, %v940, 0.0
    %v1228 = vadd.f32 %v1226, %v1227
    %v1229 = vsel %vm238, %v941, 0.0
    %v1230 = vadd.f32 %v1228, %v1229
    %v1231 = vsel %vm238, %v942, 0.0
    %v1232 = vadd.f32 %v1230, %v1231
    %v1233 = vsel %vm238, %v943, 0.0
    %v1234 = vadd.f32 %v1232, %v1233
    %v1235 = vsel %vm238, %v944, 0.0
    %v1236 = vadd.f32 %v1234, %v1235
    %v1237 = vsel %vm238, %v945, 0.0
    %v1238 = vadd.f32 %v1236, %v1237
    %v1239 = vsel %vm238, %v946, 0.0
    %v1240 = vadd.f32 %v1238, %v1239
    %v1241 = vsel %vm238, %v947, 0.0
    %v1242 = vadd.f32 %v1240, %v1241
    %v1243 = vsel %vm238, %v948, 0.0
    %v1244 = vadd.f32 %v1242, %v1243
    %v1245 = vsel %vm238, %v949, 0.0
    %v1246 = vadd.f32 %v1244, %v1245
    %v1247 = vsel %vm238, %v950, 0.0
    %v1248 = vadd.f32 %v1246, %v1247
    %v1249 = vsel %vm238, %v951, 0.0
    %v1250 = vadd.f32 %v1248, %v1249
    %v1251 = vrot.slane %v1250, 4
    %v1252 = vadd.f32 %v1250, %v1251
    %v1253 = vrot.slane %v1252, 2
    %v1254 = vadd.f32 %v1252, %v1253
    %v1255 = vrot.slane %v1254, 1
    %v1256 = vadd.f32 %v1254, %v1255
    %v1257 = vsel %vm238, %v952, 0.0
    %v1258 = vsel %vm238, %v953, 0.0
    %v1259 = vadd.f32 %v1257, %v1258
    %v1260 = vsel %vm238, %v954, 0.0
    %v1261 = vadd.f32 %v1259, %v1260
    %v1262 = vsel %vm238, %v955, 0.0
    %v1263 = vadd.f32 %v1261, %v1262
    %v1264 = vsel %vm238, %v956, 0.0
    %v1265 = vadd.f32 %v1263, %v1264
    %v1266 = vsel %vm238, %v957, 0.0
    %v1267 = vadd.f32 %v1265, %v1266
    %v1268 = vsel %vm238, %v958, 0.0
    %v1269 = vadd.f32 %v1267, %v1268
    %v1270 = vsel %vm238, %v959, 0.0
    %v1271 = vadd.f32 %v1269, %v1270
    %v1272 = vsel %vm238, %v960, 0.0
    %v1273 = vadd.f32 %v1271, %v1272
    %v1274 = vsel %vm238, %v961, 0.0
    %v1275 = vadd.f32 %v1273, %v1274
    %v1276 = vsel %vm238, %v962, 0.0
    %v1277 = vadd.f32 %v1275, %v1276
    %v1278 = vsel %vm238, %v963, 0.0
    %v1279 = vadd.f32 %v1277, %v1278
    %v1280 = vsel %vm238, %v964, 0.0
    %v1281 = vadd.f32 %v1279, %v1280
    %v1282 = vsel %vm238, %v965, 0.0
    %v1283 = vadd.f32 %v1281, %v1282
    %v1284 = vsel %vm238, %v966, 0.0
    %v1285 = vadd.f32 %v1283, %v1284
    %v1286 = vsel %vm238, %v967, 0.0
    %v1287 = vadd.f32 %v1285, %v1286
    %v1288 = vsel %vm238, %v968, 0.0
    %v1289 = vadd.f32 %v1287, %v1288
    %v1290 = vsel %vm238, %v969, 0.0
    %v1291 = vadd.f32 %v1289, %v1290
    %v1292 = vsel %vm238, %v970, 0.0
    %v1293 = vadd.f32 %v1291, %v1292
    %v1294 = vsel %vm238, %v971, 0.0
    %v1295 = vadd.f32 %v1293, %v1294
    %v1296 = vsel %vm238, %v972, 0.0
    %v1297 = vadd.f32 %v1295, %v1296
    %v1298 = vsel %vm238, %v973, 0.0
    %v1299 = vadd.f32 %v1297, %v1298
    %v1300 = vsel %vm238, %v974, 0.0
    %v1301 = vadd.f32 %v1299, %v1300
    %v1302 = vsel %vm238, %v975, 0.0
    %v1303 = vadd.f32 %v1301, %v1302
    %v1304 = vsel %vm238, %v976, 0.0
    %v1305 = vadd.f32 %v1303, %v1304
    %v1306 = vsel %vm238, %v977, 0.0
    %v1307 = vadd.f32 %v1305, %v1306
    %v1308 = vsel %vm238, %v978, 0.0
    %v1309 = vadd.f32 %v1307, %v1308
    %v1310 = vsel %vm238, %v979, 0.0
    %v1311 = vadd.f32 %v1309, %v1310
    %v1312 = vsel %vm238, %v980, 0.0
    %v1313 = vadd.f32 %v1311, %v1312
    %v1314 = vsel %vm238, %v981, 0.0
    %v1315 = vadd.f32 %v1313, %v1314
    %v1316 = vsel %vm238, %v982, 0.0
    %v1317 = vadd.f32 %v1315, %v1316
    %v1318 = vsel %vm238, %v983, 0.0
    %v1319 = vadd.f32 %v1317, %v1318
    %v1320 = vsel %vm238, %v984, 0.0
    %v1321 = vadd.f32 %v1319, %v1320
    %v1322 = vsel %vm238, %v985, 0.0
    %v1323 = vadd.f32 %v1321, %v1322
    %v1324 = vsel %vm238, %v986, 0.0
    %v1325 = vadd.f32 %v1323, %v1324
    %v1326 = vsel %vm238, %v987, 0.0
    %v1327 = vadd.f32 %v1325, %v1326
    %v1328 = vsel %vm238, %v988, 0.0
    %v1329 = vadd.f32 %v1327, %v1328
    %v1330 = vsel %vm238, %v989, 0.0
    %v1331 = vadd.f32 %v1329, %v1330
    %v1332 = vsel %vm238, %v990, 0.0
    %v1333 = vadd.f32 %v1331, %v1332
    %v1334 = vsel %vm238, %v991, 0.0
    %v1335 = vadd.f32 %v1333, %v1334
    %v1336 = vsel %vm238, %v992, 0.0
    %v1337 = vadd.f32 %v1335, %v1336
    %v1338 = vsel %vm238, %v993, 0.0
    %v1339 = vadd.f32 %v1337, %v1338
    %v1340 = vsel %vm238, %v994, 0.0
    %v1341 = vadd.f32 %v1339, %v1340
    %v1342 = vsel %vm238, %v995, 0.0
    %v1343 = vadd.f32 %v1341, %v1342
    %v1344 = vsel %vm238, %v996, 0.0
    %v1345 = vadd.f32 %v1343, %v1344
    %v1346 = vsel %vm238, %v997, 0.0
    %v1347 = vadd.f32 %v1345, %v1346
    %v1348 = vsel %vm238, %v998, 0.0
    %v1349 = vadd.f32 %v1347, %v1348
    %v1350 = vsel %vm238, %v999, 0.0
    %v1351 = vadd.f32 %v1349, %v1350
    %v1352 = vsel %vm238, %v1000, 0.0
    %v1353 = vadd.f32 %v1351, %v1352
    %v1354 = vsel %vm238, %v1001, 0.0
    %v1355 = vadd.f32 %v1353, %v1354
    %v1356 = vsel %vm238, %v1002, 0.0
    %v1357 = vadd.f32 %v1355, %v1356
    %v1358 = vsel %vm238, %v1003, 0.0
    %v1359 = vadd.f32 %v1357, %v1358
    %v1360 = vsel %vm238, %v1004, 0.0
    %v1361 = vadd.f32 %v1359, %v1360
    %v1362 = vsel %vm238, %v1005, 0.0
    %v1363 = vadd.f32 %v1361, %v1362
    %v1364 = vsel %vm238, %v1006, 0.0
    %v1365 = vadd.f32 %v1363, %v1364
    %v1366 = vsel %vm238, %v1007, 0.0
    %v1367 = vadd.f32 %v1365, %v1366
    %v1368 = vsel %vm238, %v1008, 0.0
    %v1369 = vadd.f32 %v1367, %v1368
    %v1370 = vsel %vm238, %v1009, 0.0
    %v1371 = vadd.f32 %v1369, %v1370
    %v1372 = vsel %vm238, %v1010, 0.0
    %v1373 = vadd.f32 %v1371, %v1372
    %v1374 = vsel %vm238, %v1011, 0.0
    %v1375 = vadd.f32 %v1373, %v1374
    %v1376 = vsel %vm238, %v1012, 0.0
    %v1377 = vadd.f32 %v1375, %v1376
    %v1378 = vsel %vm238, %v1013, 0.0
    %v1379 = vadd.f32 %v1377, %v1378
    %v1380 = vsel %vm238, %v1014, 0.0
    %v1381 = vadd.f32 %v1379, %v1380
    %v1382 = vsel %vm238, %v1015, 0.0
    %v1383 = vadd.f32 %v1381, %v1382
    %v1384 = vsel %vm238, %v1016, 0.0
    %v1385 = vadd.f32 %v1383, %v1384
    %v1386 = vsel %vm238, %v1017, 0.0
    %v1387 = vadd.f32 %v1385, %v1386
    %v1388 = vsel %vm238, %v1018, 0.0
    %v1389 = vadd.f32 %v1387, %v1388
    %v1390 = vsel %vm238, %v1019, 0.0
    %v1391 = vadd.f32 %v1389, %v1390
    %v1392 = vsel %vm238, %v1020, 0.0
    %v1393 = vadd.f32 %v1391, %v1392
    %v1394 = vsel %vm238, %v1021, 0.0
    %v1395 = vadd.f32 %v1393, %v1394
    %v1396 = vsel %vm238, %v1022, 0.0
    %v1397 = vadd.f32 %v1395, %v1396
    %v1398 = vsel %vm238, %v1023, 0.0
    %v1399 = vadd.f32 %v1397, %v1398
    %v1400 = vsel %vm238, %v1024, 0.0
    %v1401 = vadd.f32 %v1399, %v1400
    %v1402 = vsel %vm238, %v1025, 0.0
    %v1403 = vadd.f32 %v1401, %v1402
    %v1404 = vsel %vm238, %v1026, 0.0
    %v1405 = vadd.f32 %v1403, %v1404
    %v1406 = vsel %vm238, %v1027, 0.0
    %v1407 = vadd.f32 %v1405, %v1406
    %v1408 = vsel %vm238, %v1028, 0.0
    %v1409 = vadd.f32 %v1407, %v1408
    %v1410 = vsel %vm238, %v1029, 0.0
    %v1411 = vadd.f32 %v1409, %v1410
    %v1412 = vsel %vm238, %v1030, 0.0
    %v1413 = vadd.f32 %v1411, %v1412
    %v1414 = vsel %vm238, %v1031, 0.0
    %v1415 = vadd.f32 %v1413, %v1414
    %v1416 = vsel %vm238, %v1032, 0.0
    %v1417 = vadd.f32 %v1415, %v1416
    %v1418 = vsel %vm238, %v1033, 0.0
    %v1419 = vadd.f32 %v1417, %v1418
    %v1420 = vsel %vm238, %v1034, 0.0
    %v1421 = vadd.f32 %v1419, %v1420
    %v1422 = vsel %vm238, %v1035, 0.0
    %v1423 = vadd.f32 %v1421, %v1422
    %v1424 = vsel %vm238, %v1036, 0.0
    %v1425 = vadd.f32 %v1423, %v1424
    %v1426 = vsel %vm238, %v1037, 0.0
    %v1427 = vadd.f32 %v1425, %v1426
    %v1428 = vsel %vm238, %v1038, 0.0
    %v1429 = vadd.f32 %v1427, %v1428
    %v1430 = vsel %vm238, %v1039, 0.0
    %v1431 = vadd.f32 %v1429, %v1430
    %v1432 = vsel %vm238, %v1040, 0.0
    %v1433 = vadd.f32 %v1431, %v1432
    %v1434 = vsel %vm238, %v1041, 0.0
    %v1435 = vadd.f32 %v1433, %v1434
    %v1436 = vsel %vm238, %v1042, 0.0
    %v1437 = vadd.f32 %v1435, %v1436
    %v1438 = vsel %vm238, %v1043, 0.0
    %v1439 = vadd.f32 %v1437, %v1438
    %v1440 = vsel %vm238, %v1044, 0.0
    %v1441 = vadd.f32 %v1439, %v1440
    %v1442 = vsel %vm238, %v1045, 0.0
    %v1443 = vadd.f32 %v1441, %v1442
    %v1444 = vsel %vm238, %v1046, 0.0
    %v1445 = vadd.f32 %v1443, %v1444
    %v1446 = vsel %vm238, %v1047, 0.0
    %v1447 = vadd.f32 %v1445, %v1446
    %v1448 = vsel %vm238, %v1048, 0.0
    %v1449 = vadd.f32 %v1447, %v1448
    %v1450 = vsel %vm238, %v1049, 0.0
    %v1451 = vadd.f32 %v1449, %v1450
    %v1452 = vsel %vm238, %v1050, 0.0
    %v1453 = vadd.f32 %v1451, %v1452
    %v1454 = vsel %vm238, %v1051, 0.0
    %v1455 = vadd.f32 %v1453, %v1454
    %v1456 = vrot.slane %v1455, 4
    %v1457 = vadd.f32 %v1455, %v1456
    %v1458 = vrot.slane %v1457, 2
    %v1459 = vadd.f32 %v1457, %v1458
    %v1460 = vrot.slane %v1459, 1
    %v1461 = vadd.f32 %v1459, %v1460
    %v1462 = vmul.f32 %v1256, %v649
    %v1463 = vmul.f32 %v1461, %v649
    %v1464 = vadd.f32 %v1462, 1e-05
    %v1465 = vadd.f32 %v1463, 1e-05
    %v1466 = vrsqrt.pop %v1464
    %v1467 = vrsqrt.pop %v1465
    %v1468 = vmul.f32 %v652, %v1466
    %v1469 = vmul.f32 %v653, %v1466
    %v1470 = vmul.f32 %v654, %v1466
    %v1471 = vmul.f32 %v655, %v1466
    %v1472 = vmul.f32 %v656, %v1466
    %v1473 = vmul.f32 %v657, %v1466
    %v1474 = vmul.f32 %v658, %v1466
    %v1475 = vmul.f32 %v659, %v1466
    %v1476 = vmul.f32 %v660, %v1466
    %v1477 = vmul.f32 %v661, %v1466
    %v1478 = vmul.f32 %v662, %v1466
    %v1479 = vmul.f32 %v663, %v1466
    %v1480 = vmul.f32 %v664, %v1466
    %v1481 = vmul.f32 %v665, %v1466
    %v1482 = vmul.f32 %v666, %v1466
    %v1483 = vmul.f32 %v667, %v1466
    %v1484 = vmul.f32 %v668, %v1466
    %v1485 = vmul.f32 %v669, %v1466
    %v1486 = vmul.f32 %v670, %v1466
    %v1487 = vmul.f32 %v671, %v1466
    %v1488 = vmul.f32 %v672, %v1466
    %v1489 = vmul.f32 %v673, %v1466
    %v1490 = vmul.f32 %v674, %v1466
    %v1491 = vmul.f32 %v675, %v1466
    %v1492 = vmul.f32 %v676, %v1466
    %v1493 = vmul.f32 %v677, %v1466
    %v1494 = vmul.f32 %v678, %v1466
    %v1495 = vmul.f32 %v679, %v1466
    %v1496 = vmul.f32 %v680, %v1466
    %v1497 = vmul.f32 %v681, %v1466
    %v1498 = vmul.f32 %v682, %v1466
    %v1499 = vmul.f32 %v683, %v1466
    %v1500 = vmul.f32 %v684, %v1466
    %v1501 = vmul.f32 %v685, %v1466
    %v1502 = vmul.f32 %v686, %v1466
    %v1503 = vmul.f32 %v687, %v1466
    %v1504 = vmul.f32 %v688, %v1466
    %v1505 = vmul.f32 %v689, %v1466
    %v1506 = vmul.f32 %v690, %v1466
    %v1507 = vmul.f32 %v691, %v1466
    %v1508 = vmul.f32 %v692, %v1466
    %v1509 = vmul.f32 %v693, %v1466
    %v1510 = vmul.f32 %v694, %v1466
    %v1511 = vmul.f32 %v695, %v1466
    %v1512 = vmul.f32 %v696, %v1466
    %v1513 = vmul.f32 %v697, %v1466
    %v1514 = vmul.f32 %v698, %v1466
    %v1515 = vmul.f32 %v699, %v1466
    %v1516 = vmul.f32 %v700, %v1466
    %v1517 = vmul.f32 %v701, %v1466
    %v1518 = vmul.f32 %v702, %v1466
    %v1519 = vmul.f32 %v703, %v1466
    %v1520 = vmul.f32 %v704, %v1466
    %v1521 = vmul.f32 %v705, %v1466
    %v1522 = vmul.f32 %v706, %v1466
    %v1523 = vmul.f32 %v707, %v1466
    %v1524 = vmul.f32 %v708, %v1466
    %v1525 = vmul.f32 %v709, %v1466
    %v1526 = vmul.f32 %v710, %v1466
    %v1527 = vmul.f32 %v711, %v1466
    %v1528 = vmul.f32 %v712, %v1466
    %v1529 = vmul.f32 %v713, %v1466
    %v1530 = vmul.f32 %v714, %v1466
    %v1531 = vmul.f32 %v715, %v1466
    %v1532 = vmul.f32 %v716, %v1466
    %v1533 = vmul.f32 %v717, %v1466
    %v1534 = vmul.f32 %v718, %v1466
    %v1535 = vmul.f32 %v719, %v1466
    %v1536 = vmul.f32 %v720, %v1466
    %v1537 = vmul.f32 %v721, %v1466
    %v1538 = vmul.f32 %v722, %v1466
    %v1539 = vmul.f32 %v723, %v1466
    %v1540 = vmul.f32 %v724, %v1466
    %v1541 = vmul.f32 %v725, %v1466
    %v1542 = vmul.f32 %v726, %v1466
    %v1543 = vmul.f32 %v727, %v1466
    %v1544 = vmul.f32 %v728, %v1466
    %v1545 = vmul.f32 %v729, %v1466
    %v1546 = vmul.f32 %v730, %v1466
    %v1547 = vmul.f32 %v731, %v1466
    %v1548 = vmul.f32 %v732, %v1466
    %v1549 = vmul.f32 %v733, %v1466
    %v1550 = vmul.f32 %v734, %v1466
    %v1551 = vmul.f32 %v735, %v1466
    %v1552 = vmul.f32 %v736, %v1466
    %v1553 = vmul.f32 %v737, %v1466
    %v1554 = vmul.f32 %v738, %v1466
    %v1555 = vmul.f32 %v739, %v1466
    %v1556 = vmul.f32 %v740, %v1466
    %v1557 = vmul.f32 %v741, %v1466
    %v1558 = vmul.f32 %v742, %v1466
    %v1559 = vmul.f32 %v743, %v1466
    %v1560 = vmul.f32 %v744, %v1466
    %v1561 = vmul.f32 %v745, %v1466
    %v1562 = vmul.f32 %v746, %v1466
    %v1563 = vmul.f32 %v747, %v1466
    %v1564 = vmul.f32 %v748, %v1466
    %v1565 = vmul.f32 %v749, %v1466
    %v1566 = vmul.f32 %v750, %v1466
    %v1567 = vmul.f32 %v751, %v1466
    %v1568 = vmul.f32 %v752, %v1467
    %v1569 = vmul.f32 %v753, %v1467
    %v1570 = vmul.f32 %v754, %v1467
    %v1571 = vmul.f32 %v755, %v1467
    %v1572 = vmul.f32 %v756, %v1467
    %v1573 = vmul.f32 %v757, %v1467
    %v1574 = vmul.f32 %v758, %v1467
    %v1575 = vmul.f32 %v759, %v1467
    %v1576 = vmul.f32 %v760, %v1467
    %v1577 = vmul.f32 %v761, %v1467
    %v1578 = vmul.f32 %v762, %v1467
    %v1579 = vmul.f32 %v763, %v1467
    %v1580 = vmul.f32 %v764, %v1467
    %v1581 = vmul.f32 %v765, %v1467
    %v1582 = vmul.f32 %v766, %v1467
    %v1583 = vmul.f32 %v767, %v1467
    %v1584 = vmul.f32 %v768, %v1467
    %v1585 = vmul.f32 %v769, %v1467
    %v1586 = vmul.f32 %v770, %v1467
    %v1587 = vmul.f32 %v771, %v1467
    %v1588 = vmul.f32 %v772, %v1467
    %v1589 = vmul.f32 %v773, %v1467
    %v1590 = vmul.f32 %v774, %v1467
    %v1591 = vmul.f32 %v775, %v1467
    %v1592 = vmul.f32 %v776, %v1467
    %v1593 = vmul.f32 %v777, %v1467
    %v1594 = vmul.f32 %v778, %v1467
    %v1595 = vmul.f32 %v779, %v1467
    %v1596 = vmul.f32 %v780, %v1467
    %v1597 = vmul.f32 %v781, %v1467
    %v1598 = vmul.f32 %v782, %v1467
    %v1599 = vmul.f32 %v783, %v1467
    %v1600 = vmul.f32 %v784, %v1467
    %v1601 = vmul.f32 %v785, %v1467
    %v1602 = vmul.f32 %v786, %v1467
    %v1603 = vmul.f32 %v787, %v1467
    %v1604 = vmul.f32 %v788, %v1467
    %v1605 = vmul.f32 %v789, %v1467
    %v1606 = vmul.f32 %v790, %v1467
    %v1607 = vmul.f32 %v791, %v1467
    %v1608 = vmul.f32 %v792, %v1467
    %v1609 = vmul.f32 %v793, %v1467
    %v1610 = vmul.f32 %v794, %v1467
    %v1611 = vmul.f32 %v795, %v1467
    %v1612 = vmul.f32 %v796, %v1467
    %v1613 = vmul.f32 %v797, %v1467
    %v1614 = vmul.f32 %v798, %v1467
    %v1615 = vmul.f32 %v799, %v1467
    %v1616 = vmul.f32 %v800, %v1467
    %v1617 = vmul.f32 %v801, %v1467
    %v1618 = vmul.f32 %v802, %v1467
    %v1619 = vmul.f32 %v803, %v1467
    %v1620 = vmul.f32 %v804, %v1467
    %v1621 = vmul.f32 %v805, %v1467
    %v1622 = vmul.f32 %v806, %v1467
    %v1623 = vmul.f32 %v807, %v1467
    %v1624 = vmul.f32 %v808, %v1467
    %v1625 = vmul.f32 %v809, %v1467
    %v1626 = vmul.f32 %v810, %v1467
    %v1627 = vmul.f32 %v811, %v1467
    %v1628 = vmul.f32 %v812, %v1467
    %v1629 = vmul.f32 %v813, %v1467
    %v1630 = vmul.f32 %v814, %v1467
    %v1631 = vmul.f32 %v815, %v1467
    %v1632 = vmul.f32 %v816, %v1467
    %v1633 = vmul.f32 %v817, %v1467
    %v1634 = vmul.f32 %v818, %v1467
    %v1635 = vmul.f32 %v819, %v1467
    %v1636 = vmul.f32 %v820, %v1467
    %v1637 = vmul.f32 %v821, %v1467
    %v1638 = vmul.f32 %v822, %v1467
    %v1639 = vmul.f32 %v823, %v1467
    %v1640 = vmul.f32 %v824, %v1467
    %v1641 = vmul.f32 %v825, %v1467
    %v1642 = vmul.f32 %v826, %v1467
    %v1643 = vmul.f32 %v827, %v1467
    %v1644 = vmul.f32 %v828, %v1467
    %v1645 = vmul.f32 %v829, %v1467
    %v1646 = vmul.f32 %v830, %v1467
    %v1647 = vmul.f32 %v831, %v1467
    %v1648 = vmul.f32 %v832, %v1467
    %v1649 = vmul.f32 %v833, %v1467
    %v1650 = vmul.f32 %v834, %v1467
    %v1651 = vmul.f32 %v835, %v1467
    %v1652 = vmul.f32 %v836, %v1467
    %v1653 = vmul.f32 %v837, %v1467
    %v1654 = vmul.f32 %v838, %v1467
    %v1655 = vmul.f32 %v839, %v1467
    %v1656 = vmul.f32 %v840, %v1467
    %v1657 = vmul.f32 %v841, %v1467
    %v1658 = vmul.f32 %v842, %v1467
    %v1659 = vmul.f32 %v843, %v1467
    %v1660 = vmul.f32 %v844, %v1467
    %v1661 = vmul.f32 %v845, %v1467
    %v1662 = vmul.f32 %v846, %v1467
    %v1663 = vmul.f32 %v847, %v1467
    %v1664 = vmul.f32 %v848, %v1467
    %v1665 = vmul.f32 %v849, %v1467
    %v1666 = vmul.f32 %v850, %v1467
    %v1667 = vmul.f32 %v851, %v1467
    %v1668 = vld [vmem:[#allocation2] sm:$0x1]
    %v1670 = vlaneseq
    %v1671 = vshrl.u32 %v1670, 7
    %v1672 = vsub.s32 0, %v1671
    %v1673 = vrot.slane %v1668, %v1672
    %v1675 = vmul.f32 %v1468, %v1673
    %v1676 = vmul.f32 %v1469, %v1673
    %v1677 = vmul.f32 %v1470, %v1673
    %v1678 = vmul.f32 %v1471, %v1673
    %v1679 = vmul.f32 %v1472, %v1673
    %v1680 = vmul.f32 %v1473, %v1673
    %v1681 = vmul.f32 %v1474, %v1673
    %v1682 = vmul.f32 %v1475, %v1673
    %v1683 = vmul.f32 %v1476, %v1673
    %v1684 = vmul.f32 %v1477, %v1673
    %v1685 = vmul.f32 %v1478, %v1673
    %v1686 = vmul.f32 %v1479, %v1673
    %v1687 = vmul.f32 %v1480, %v1673
    %v1688 = vmul.f32 %v1481, %v1673
    %v1689 = vmul.f32 %v1482, %v1673
    %v1690 = vmul.f32 %v1483, %v1673
    %v1691 = vmul.f32 %v1484, %v1673
    %v1692 = vmul.f32 %v1485, %v1673
    %v1693 = vmul.f32 %v1486, %v1673
    %v1694 = vmul.f32 %v1487, %v1673
    %v1695 = vmul.f32 %v1488, %v1673
    %v1696 = vmul.f32 %v1489, %v1673
    %v1697 = vmul.f32 %v1490, %v1673
    %v1698 = vmul.f32 %v1491, %v1673
    %v1699 = vmul.f32 %v1492, %v1673
    %v1700 = vmul.f32 %v1493, %v1673
    %v1701 = vmul.f32 %v1494, %v1673
    %v1702 = vmul.f32 %v1495, %v1673
    %v1703 = vmul.f32 %v1496, %v1673
    %v1704 = vmul.f32 %v1497, %v1673
    %v1705 = vmul.f32 %v1498, %v1673
    %v1706 = vmul.f32 %v1499, %v1673
    %v1707 = vmul.f32 %v1500, %v1673
    %v1708 = vmul.f32 %v1501, %v1673
    %v1709 = vmul.f32 %v1502, %v1673
    %v1710 = vmul.f32 %v1503, %v1673
    %v1711 = vmul.f32 %v1504, %v1673
    %v1712 = vmul.f32 %v1505, %v1673
    %v1713 = vmul.f32 %v1506, %v1673
    %v1714 = vmul.f32 %v1507, %v1673
    %v1715 = vmul.f32 %v1508, %v1673
    %v1716 = vmul.f32 %v1509, %v1673
    %v1717 = vmul.f32 %v1510, %v1673
    %v1718 = vmul.f32 %v1511, %v1673
    %v1719 = vmul.f32 %v1512, %v1673
    %v1720 = vmul.f32 %v1513, %v1673
    %v1721 = vmul.f32 %v1514, %v1673
    %v1722 = vmul.f32 %v1515, %v1673
    %v1723 = vmul.f32 %v1516, %v1673
    %v1724 = vmul.f32 %v1517, %v1673
    %v1725 = vmul.f32 %v1518, %v1673
    %v1726 = vmul.f32 %v1519, %v1673
    %v1727 = vmul.f32 %v1520, %v1673
    %v1728 = vmul.f32 %v1521, %v1673
    %v1729 = vmul.f32 %v1522, %v1673
    %v1730 = vmul.f32 %v1523, %v1673
    %v1731 = vmul.f32 %v1524, %v1673
    %v1732 = vmul.f32 %v1525, %v1673
    %v1733 = vmul.f32 %v1526, %v1673
    %v1734 = vmul.f32 %v1527, %v1673
    %v1735 = vmul.f32 %v1528, %v1673
    %v1736 = vmul.f32 %v1529, %v1673
    %v1737 = vmul.f32 %v1530, %v1673
    %v1738 = vmul.f32 %v1531, %v1673
    %v1739 = vmul.f32 %v1532, %v1673
    %v1740 = vmul.f32 %v1533, %v1673
    %v1741 = vmul.f32 %v1534, %v1673
    %v1742 = vmul.f32 %v1535, %v1673
    %v1743 = vmul.f32 %v1536, %v1673
    %v1744 = vmul.f32 %v1537, %v1673
    %v1745 = vmul.f32 %v1538, %v1673
    %v1746 = vmul.f32 %v1539, %v1673
    %v1747 = vmul.f32 %v1540, %v1673
    %v1748 = vmul.f32 %v1541, %v1673
    %v1749 = vmul.f32 %v1542, %v1673
    %v1750 = vmul.f32 %v1543, %v1673
    %v1751 = vmul.f32 %v1544, %v1673
    %v1752 = vmul.f32 %v1545, %v1673
    %v1753 = vmul.f32 %v1546, %v1673
    %v1754 = vmul.f32 %v1547, %v1673
    %v1755 = vmul.f32 %v1548, %v1673
    %v1756 = vmul.f32 %v1549, %v1673
    %v1757 = vmul.f32 %v1550, %v1673
    %v1758 = vmul.f32 %v1551, %v1673
    %v1759 = vmul.f32 %v1552, %v1673
    %v1760 = vmul.f32 %v1553, %v1673
    %v1761 = vmul.f32 %v1554, %v1673
    %v1762 = vmul.f32 %v1555, %v1673
    %v1763 = vmul.f32 %v1556, %v1673
    %v1764 = vmul.f32 %v1557, %v1673
    %v1765 = vmul.f32 %v1558, %v1673
    %v1766 = vmul.f32 %v1559, %v1673
    %v1767 = vmul.f32 %v1560, %v1673
    %v1768 = vmul.f32 %v1561, %v1673
    %v1769 = vmul.f32 %v1562, %v1673
    %v1770 = vmul.f32 %v1563, %v1673
    %v1771 = vmul.f32 %v1564, %v1673
    %v1772 = vmul.f32 %v1565, %v1673
    %v1773 = vmul.f32 %v1566, %v1673
    %v1774 = vmul.f32 %v1567, %v1673
    %v1775 = vmul.f32 %v1568, %v1673
    %v1776 = vmul.f32 %v1569, %v1673
    %v1777 = vmul.f32 %v1570, %v1673
    %v1778 = vmul.f32 %v1571, %v1673
    %v1779 = vmul.f32 %v1572, %v1673
    %v1780 = vmul.f32 %v1573, %v1673
    %v1781 = vmul.f32 %v1574, %v1673
    %v1782 = vmul.f32 %v1575, %v1673
    %v1783 = vmul.f32 %v1576, %v1673
    %v1784 = vmul.f32 %v1577, %v1673
    %v1785 = vmul.f32 %v1578, %v1673
    %v1786 = vmul.f32 %v1579, %v1673
    %v1787 = vmul.f32 %v1580, %v1673
    %v1788 = vmul.f32 %v1581, %v1673
    %v1789 = vmul.f32 %v1582, %v1673
    %v1790 = vmul.f32 %v1583, %v1673
    %v1791 = vmul.f32 %v1584, %v1673
    %v1792 = vmul.f32 %v1585, %v1673
    %v1793 = vmul.f32 %v1586, %v1673
    %v1794 = vmul.f32 %v1587, %v1673
    %v1795 = vmul.f32 %v1588, %v1673
    %v1796 = vmul.f32 %v1589, %v1673
    %v1797 = vmul.f32 %v1590, %v1673
    %v1798 = vmul.f32 %v1591, %v1673
    %v1799 = vmul.f32 %v1592, %v1673
    %v1800 = vmul.f32 %v1593, %v1673
    %v1801 = vmul.f32 %v1594, %v1673
    %v1802 = vmul.f32 %v1595, %v1673
    %v1803 = vmul.f32 %v1596, %v1673
    %v1804 = vmul.f32 %v1597, %v1673
    %v1805 = vmul.f32 %v1598, %v1673
    %v1806 = vmul.f32 %v1599, %v1673
    %v1807 = vmul.f32 %v1600, %v1673
    %v1808 = vmul.f32 %v1601, %v1673
    %v1809 = vmul.f32 %v1602, %v1673
    %v1810 = vmul.f32 %v1603, %v1673
    %v1811 = vmul.f32 %v1604, %v1673
    %v1812 = vmul.f32 %v1605, %v1673
    %v1813 = vmul.f32 %v1606, %v1673
    %v1814 = vmul.f32 %v1607, %v1673
    %v1815 = vmul.f32 %v1608, %v1673
    %v1816 = vmul.f32 %v1609, %v1673
    %v1817 = vmul.f32 %v1610, %v1673
    %v1818 = vmul.f32 %v1611, %v1673
    %v1819 = vmul.f32 %v1612, %v1673
    %v1820 = vmul.f32 %v1613, %v1673
    %v1821 = vmul.f32 %v1614, %v1673
    %v1822 = vmul.f32 %v1615, %v1673
    %v1823 = vmul.f32 %v1616, %v1673
    %v1824 = vmul.f32 %v1617, %v1673
    %v1825 = vmul.f32 %v1618, %v1673
    %v1826 = vmul.f32 %v1619, %v1673
    %v1827 = vmul.f32 %v1620, %v1673
    %v1828 = vmul.f32 %v1621, %v1673
    %v1829 = vmul.f32 %v1622, %v1673
    %v1830 = vmul.f32 %v1623, %v1673
    %v1831 = vmul.f32 %v1624, %v1673
    %v1832 = vmul.f32 %v1625, %v1673
    %v1833 = vmul.f32 %v1626, %v1673
    %v1834 = vmul.f32 %v1627, %v1673
    %v1835 = vmul.f32 %v1628, %v1673
    %v1836 = vmul.f32 %v1629, %v1673
    %v1837 = vmul.f32 %v1630, %v1673
    %v1838 = vmul.f32 %v1631, %v1673
    %v1839 = vmul.f32 %v1632, %v1673
    %v1840 = vmul.f32 %v1633, %v1673
    %v1841 = vmul.f32 %v1634, %v1673
    %v1842 = vmul.f32 %v1635, %v1673
    %v1843 = vmul.f32 %v1636, %v1673
    %v1844 = vmul.f32 %v1637, %v1673
    %v1845 = vmul.f32 %v1638, %v1673
    %v1846 = vmul.f32 %v1639, %v1673
    %v1847 = vmul.f32 %v1640, %v1673
    %v1848 = vmul.f32 %v1641, %v1673
    %v1849 = vmul.f32 %v1642, %v1673
    %v1850 = vmul.f32 %v1643, %v1673
    %v1851 = vmul.f32 %v1644, %v1673
    %v1852 = vmul.f32 %v1645, %v1673
    %v1853 = vmul.f32 %v1646, %v1673
    %v1854 = vmul.f32 %v1647, %v1673
    %v1855 = vmul.f32 %v1648, %v1673
    %v1856 = vmul.f32 %v1649, %v1673
    %v1857 = vmul.f32 %v1650, %v1673
    %v1858 = vmul.f32 %v1651, %v1673
    %v1859 = vmul.f32 %v1652, %v1673
    %v1860 = vmul.f32 %v1653, %v1673
    %v1861 = vmul.f32 %v1654, %v1673
    %v1862 = vmul.f32 %v1655, %v1673
    %v1863 = vmul.f32 %v1656, %v1673
    %v1864 = vmul.f32 %v1657, %v1673
    %v1865 = vmul.f32 %v1658, %v1673
    %v1866 = vmul.f32 %v1659, %v1673
    %v1867 = vmul.f32 %v1660, %v1673
    %v1868 = vmul.f32 %v1661, %v1673
    %v1869 = vmul.f32 %v1662, %v1673
    %v1870 = vmul.f32 %v1663, %v1673
    %v1871 = vmul.f32 %v1664, %v1673
    %v1872 = vmul.f32 %v1665, %v1673
    %v1873 = vmul.f32 %v1666, %v1673
    %v1874 = vmul.f32 %v1667, %v1673
    %v1875 = vld [vmem:[#allocation4] sm:$0x1]
    %v1877 = vlaneseq
    %v1878 = vshrl.u32 %v1877, 7
    %v1879 = vsub.s32 0, %v1878
    %v1880 = vrot.slane %v1875, %v1879
    %v1882 = vadd.f32 %v1675, %v1880
    %v1883 = vadd.f32 %v1676, %v1880
    %v1884 = vadd.f32 %v1677, %v1880
    %v1885 = vadd.f32 %v1678, %v1880
    %v1886 = vadd.f32 %v1679, %v1880
    %v1887 = vadd.f32 %v1680, %v1880
    %v1888 = vadd.f32 %v1681, %v1880
    %v1889 = vadd.f32 %v1682, %v1880
    %v1890 = vadd.f32 %v1683, %v1880
    %v1891 = vadd.f32 %v1684, %v1880
    %v1892 = vadd.f32 %v1685, %v1880
    %v1893 = vadd.f32 %v1686, %v1880
    %v1894 = vadd.f32 %v1687, %v1880
    %v1895 = vadd.f32 %v1688, %v1880
    %v1896 = vadd.f32 %v1689, %v1880
    %v1897 = vadd.f32 %v1690, %v1880
    %v1898 = vadd.f32 %v1691, %v1880
    %v1899 = vadd.f32 %v1692, %v1880
    %v1900 = vadd.f32 %v1693, %v1880
    %v1901 = vadd.f32 %v1694, %v1880
    %v1902 = vadd.f32 %v1695, %v1880
    %v1903 = vadd.f32 %v1696, %v1880
    %v1904 = vadd.f32 %v1697, %v1880
    %v1905 = vadd.f32 %v1698, %v1880
    %v1906 = vadd.f32 %v1699, %v1880
    %v1907 = vadd.f32 %v1700, %v1880
    %v1908 = vadd.f32 %v1701, %v1880
    %v1909 = vadd.f32 %v1702, %v1880
    %v1910 = vadd.f32 %v1703, %v1880
    %v1911 = vadd.f32 %v1704, %v1880
    %v1912 = vadd.f32 %v1705, %v1880
    %v1913 = vadd.f32 %v1706, %v1880
    %v1914 = vadd.f32 %v1707, %v1880
    %v1915 = vadd.f32 %v1708, %v1880
    %v1916 = vadd.f32 %v1709, %v1880
    %v1917 = vadd.f32 %v1710, %v1880
    %v1918 = vadd.f32 %v1711, %v1880
    %v1919 = vadd.f32 %v1712, %v1880
    %v1920 = vadd.f32 %v1713, %v1880
    %v1921 = vadd.f32 %v1714, %v1880
    %v1922 = vadd.f32 %v1715, %v1880
    %v1923 = vadd.f32 %v1716, %v1880
    %v1924 = vadd.f32 %v1717, %v1880
    %v1925 = vadd.f32 %v1718, %v1880
    %v1926 = vadd.f32 %v1719, %v1880
    %v1927 = vadd.f32 %v1720, %v1880
    %v1928 = vadd.f32 %v1721, %v1880
    %v1929 = vadd.f32 %v1722, %v1880
    %v1930 = vadd.f32 %v1723, %v1880
    %v1931 = vadd.f32 %v1724, %v1880
    %v1932 = vadd.f32 %v1725, %v1880
    %v1933 = vadd.f32 %v1726, %v1880
    %v1934 = vadd.f32 %v1727, %v1880
    %v1935 = vadd.f32 %v1728, %v1880
    %v1936 = vadd.f32 %v1729, %v1880
    %v1937 = vadd.f32 %v1730, %v1880
    %v1938 = vadd.f32 %v1731, %v1880
    %v1939 = vadd.f32 %v1732, %v1880
    %v1940 = vadd.f32 %v1733, %v1880
    %v1941 = vadd.f32 %v1734, %v1880
    %v1942 = vadd.f32 %v1735, %v1880
    %v1943 = vadd.f32 %v1736, %v1880
    %v1944 = vadd.f32 %v1737, %v1880
    %v1945 = vadd.f32 %v1738, %v1880
    %v1946 = vadd.f32 %v1739, %v1880
    %v1947 = vadd.f32 %v1740, %v1880
    %v1948 = vadd.f32 %v1741, %v1880
    %v1949 = vadd.f32 %v1742, %v1880
    %v1950 = vadd.f32 %v1743, %v1880
    %v1951 = vadd.f32 %v1744, %v1880
    %v1952 = vadd.f32 %v1745, %v1880
    %v1953 = vadd.f32 %v1746, %v1880
    %v1954 = vadd.f32 %v1747, %v1880
    %v1955 = vadd.f32 %v1748, %v1880
    %v1956 = vadd.f32 %v1749, %v1880
    %v1957 = vadd.f32 %v1750, %v1880
    %v1958 = vadd.f32 %v1751, %v1880
    %v1959 = vadd.f32 %v1752, %v1880
    %v1960 = vadd.f32 %v1753, %v1880
    %v1961 = vadd.f32 %v1754, %v1880
    %v1962 = vadd.f32 %v1755, %v1880
    %v1963 = vadd.f32 %v1756, %v1880
    %v1964 = vadd.f32 %v1757, %v1880
    %v1965 = vadd.f32 %v1758, %v1880
    %v1966 = vadd.f32 %v1759, %v1880
    %v1967 = vadd.f32 %v1760, %v1880
    %v1968 = vadd.f32 %v1761, %v1880
    %v1969 = vadd.f32 %v1762, %v1880
    %v1970 = vadd.f32 %v1763, %v1880
    %v1971 = vadd.f32 %v1764, %v1880
    %v1972 = vadd.f32 %v1765, %v1880
    %v1973 = vadd.f32 %v1766, %v1880
    %v1974 = vadd.f32 %v1767, %v1880
    %v1975 = vadd.f32 %v1768, %v1880
    %v1976 = vadd.f32 %v1769, %v1880
    %v1977 = vadd.f32 %v1770, %v1880
    %v1978 = vadd.f32 %v1771, %v1880
    %v1979 = vadd.f32 %v1772, %v1880
    %v1980 = vadd.f32 %v1773, %v1880
    %v1981 = vadd.f32 %v1774, %v1880
    %v1982 = vadd.f32 %v1775, %v1880
    %v1983 = vadd.f32 %v1776, %v1880
    %v1984 = vadd.f32 %v1777, %v1880
    %v1985 = vadd.f32 %v1778, %v1880
    %v1986 = vadd.f32 %v1779, %v1880
    %v1987 = vadd.f32 %v1780, %v1880
    %v1988 = vadd.f32 %v1781, %v1880
    %v1989 = vadd.f32 %v1782, %v1880
    %v1990 = vadd.f32 %v1783, %v1880
    %v1991 = vadd.f32 %v1784, %v1880
    %v1992 = vadd.f32 %v1785, %v1880
    %v1993 = vadd.f32 %v1786, %v1880
    %v1994 = vadd.f32 %v1787, %v1880
    %v1995 = vadd.f32 %v1788, %v1880
    %v1996 = vadd.f32 %v1789, %v1880
    %v1997 = vadd.f32 %v1790, %v1880
    %v1998 = vadd.f32 %v1791, %v1880
    %v1999 = vadd.f32 %v1792, %v1880
    %v2000 = vadd.f32 %v1793, %v1880
    %v2001 = vadd.f32 %v1794, %v1880
    %v2002 = vadd.f32 %v1795, %v1880
    %v2003 = vadd.f32 %v1796, %v1880
    %v2004 = vadd.f32 %v1797, %v1880
    %v2005 = vadd.f32 %v1798, %v1880
    %v2006 = vadd.f32 %v1799, %v1880
    %v2007 = vadd.f32 %v1800, %v1880
    %v2008 = vadd.f32 %v1801, %v1880
    %v2009 = vadd.f32 %v1802, %v1880
    %v2010 = vadd.f32 %v1803, %v1880
    %v2011 = vadd.f32 %v1804, %v1880
    %v2012 = vadd.f32 %v1805, %v1880
    %v2013 = vadd.f32 %v1806, %v1880
    %v2014 = vadd.f32 %v1807, %v1880
    %v2015 = vadd.f32 %v1808, %v1880
    %v2016 = vadd.f32 %v1809, %v1880
    %v2017 = vadd.f32 %v1810, %v1880
    %v2018 = vadd.f32 %v1811, %v1880
    %v2019 = vadd.f32 %v1812, %v1880
    %v2020 = vadd.f32 %v1813, %v1880
    %v2021 = vadd.f32 %v1814, %v1880
    %v2022 = vadd.f32 %v1815, %v1880
    %v2023 = vadd.f32 %v1816, %v1880
    %v2024 = vadd.f32 %v1817, %v1880
    %v2025 = vadd.f32 %v1818, %v1880
    %v2026 = vadd.f32 %v1819, %v1880
    %v2027 = vadd.f32 %v1820, %v1880
    %v2028 = vadd.f32 %v1821, %v1880
    %v2029 = vadd.f32 %v1822, %v1880
    %v2030 = vadd.f32 %v1823, %v1880
    %v2031 = vadd.f32 %v1824, %v1880
    %v2032 = vadd.f32 %v1825, %v1880
    %v2033 = vadd.f32 %v1826, %v1880
    %v2034 = vadd.f32 %v1827, %v1880
    %v2035 = vadd.f32 %v1828, %v1880
    %v2036 = vadd.f32 %v1829, %v1880
    %v2037 = vadd.f32 %v1830, %v1880
    %v2038 = vadd.f32 %v1831, %v1880
    %v2039 = vadd.f32 %v1832, %v1880
    %v2040 = vadd.f32 %v1833, %v1880
    %v2041 = vadd.f32 %v1834, %v1880
    %v2042 = vadd.f32 %v1835, %v1880
    %v2043 = vadd.f32 %v1836, %v1880
    %v2044 = vadd.f32 %v1837, %v1880
    %v2045 = vadd.f32 %v1838, %v1880
    %v2046 = vadd.f32 %v1839, %v1880
    %v2047 = vadd.f32 %v1840, %v1880
    %v2048 = vadd.f32 %v1841, %v1880
    %v2049 = vadd.f32 %v1842, %v1880
    %v2050 = vadd.f32 %v1843, %v1880
    %v2051 = vadd.f32 %v1844, %v1880
    %v2052 = vadd.f32 %v1845, %v1880
    %v2053 = vadd.f32 %v1846, %v1880
    %v2054 = vadd.f32 %v1847, %v1880
    %v2055 = vadd.f32 %v1848, %v1880
    %v2056 = vadd.f32 %v1849, %v1880
    %v2057 = vadd.f32 %v1850, %v1880
    %v2058 = vadd.f32 %v1851, %v1880
    %v2059 = vadd.f32 %v1852, %v1880
    %v2060 = vadd.f32 %v1853, %v1880
    %v2061 = vadd.f32 %v1854, %v1880
    %v2062 = vadd.f32 %v1855, %v1880
    %v2063 = vadd.f32 %v1856, %v1880
    %v2064 = vadd.f32 %v1857, %v1880
    %v2065 = vadd.f32 %v1858, %v1880
    %v2066 = vadd.f32 %v1859, %v1880
    %v2067 = vadd.f32 %v1860, %v1880
    %v2068 = vadd.f32 %v1861, %v1880
    %v2069 = vadd.f32 %v1862, %v1880
    %v2070 = vadd.f32 %v1863, %v1880
    %v2071 = vadd.f32 %v1864, %v1880
    %v2072 = vadd.f32 %v1865, %v1880
    %v2073 = vadd.f32 %v1866, %v1880
    %v2074 = vadd.f32 %v1867, %v1880
    %v2075 = vadd.f32 %v1868, %v1880
    %v2076 = vadd.f32 %v1869, %v1880
    %v2077 = vadd.f32 %v1870, %v1880
    %v2078 = vadd.f32 %v1871, %v1880
    %v2079 = vadd.f32 %v1872, %v1880
    %v2080 = vadd.f32 %v1873, %v1880
    %v2081 = vadd.f32 %v1874, %v1880
    %v2082 = vpack.c.bf16 %v1883, %v1882
    %v2083 = vpack.c.bf16 %v1885, %v1884
    %v2084 = vpack.c.bf16 %v1887, %v1886
    %v2085 = vpack.c.bf16 %v1889, %v1888
    %v2086 = vpack.c.bf16 %v1891, %v1890
    %v2087 = vpack.c.bf16 %v1893, %v1892
    %v2088 = vpack.c.bf16 %v1895, %v1894
    %v2089 = vpack.c.bf16 %v1897, %v1896
    %v2090 = vpack.c.bf16 %v1899, %v1898
    %v2091 = vpack.c.bf16 %v1901, %v1900
    %v2092 = vpack.c.bf16 %v1903, %v1902
    %v2093 = vpack.c.bf16 %v1905, %v1904
    %v2094 = vpack.c.bf16 %v1907, %v1906
    %v2095 = vpack.c.bf16 %v1909, %v1908
    %v2096 = vpack.c.bf16 %v1911, %v1910
    %v2097 = vpack.c.bf16 %v1913, %v1912
    %v2098 = vpack.c.bf16 %v1915, %v1914
    %v2099 = vpack.c.bf16 %v1917, %v1916
    %v2100 = vpack.c.bf16 %v1919, %v1918
    %v2101 = vpack.c.bf16 %v1921, %v1920
    %v2102 = vpack.c.bf16 %v1923, %v1922
    %v2103 = vpack.c.bf16 %v1925, %v1924
    %v2104 = vpack.c.bf16 %v1927, %v1926
    %v2105 = vpack.c.bf16 %v1929, %v1928
    %v2106 = vpack.c.bf16 %v1931, %v1930
    %v2107 = vpack.c.bf16 %v1933, %v1932
    %v2108 = vpack.c.bf16 %v1935, %v1934
    %v2109 = vpack.c.bf16 %v1937, %v1936
    %v2110 = vpack.c.bf16 %v1939, %v1938
    %v2111 = vpack.c.bf16 %v1941, %v1940
    %v2112 = vpack.c.bf16 %v1943, %v1942
    %v2113 = vpack.c.bf16 %v1945, %v1944
    %v2114 = vpack.c.bf16 %v1947, %v1946
    %v2115 = vpack.c.bf16 %v1949, %v1948
    %v2116 = vpack.c.bf16 %v1951, %v1950
    %v2117 = vpack.c.bf16 %v1953, %v1952
    %v2118 = vpack.c.bf16 %v1955, %v1954
    %v2119 = vpack.c.bf16 %v1957, %v1956
    %v2120 = vpack.c.bf16 %v1959, %v1958
    %v2121 = vpack.c.bf16 %v1961, %v1960
    %v2122 = vpack.c.bf16 %v1963, %v1962
    %v2123 = vpack.c.bf16 %v1965, %v1964
    %v2124 = vpack.c.bf16 %v1967, %v1966
    %v2125 = vpack.c.bf16 %v1969, %v1968
    %v2126 = vpack.c.bf16 %v1971, %v1970
    %v2127 = vpack.c.bf16 %v1973, %v1972
    %v2128 = vpack.c.bf16 %v1975, %v1974
    %v2129 = vpack.c.bf16 %v1977, %v1976
    %v2130 = vpack.c.bf16 %v1979, %v1978
    %v2131 = vpack.c.bf16 %v1981, %v1980
    %v2132 = vpack.c.bf16 %v1983, %v1982
    %v2133 = vpack.c.bf16 %v1985, %v1984
    %v2134 = vpack.c.bf16 %v1987, %v1986
    %v2135 = vpack.c.bf16 %v1989, %v1988
    %v2136 = vpack.c.bf16 %v1991, %v1990
    %v2137 = vpack.c.bf16 %v1993, %v1992
    %v2138 = vpack.c.bf16 %v1995, %v1994
    %v2139 = vpack.c.bf16 %v1997, %v1996
    %v2140 = vpack.c.bf16 %v1999, %v1998
    %v2141 = vpack.c.bf16 %v2001, %v2000
    %v2142 = vpack.c.bf16 %v2003, %v2002
    %v2143 = vpack.c.bf16 %v2005, %v2004
    %v2144 = vpack.c.bf16 %v2007, %v2006
    %v2145 = vpack.c.bf16 %v2009, %v2008
    %v2146 = vpack.c.bf16 %v2011, %v2010
    %v2147 = vpack.c.bf16 %v2013, %v2012
    %v2148 = vpack.c.bf16 %v2015, %v2014
    %v2149 = vpack.c.bf16 %v2017, %v2016
    %v2150 = vpack.c.bf16 %v2019, %v2018
    %v2151 = vpack.c.bf16 %v2021, %v2020
    %v2152 = vpack.c.bf16 %v2023, %v2022
    %v2153 = vpack.c.bf16 %v2025, %v2024
    %v2154 = vpack.c.bf16 %v2027, %v2026
    %v2155 = vpack.c.bf16 %v2029, %v2028
    %v2156 = vpack.c.bf16 %v2031, %v2030
    %v2157 = vpack.c.bf16 %v2033, %v2032
    %v2158 = vpack.c.bf16 %v2035, %v2034
    %v2159 = vpack.c.bf16 %v2037, %v2036
    %v2160 = vpack.c.bf16 %v2039, %v2038
    %v2161 = vpack.c.bf16 %v2041, %v2040
    %v2162 = vpack.c.bf16 %v2043, %v2042
    %v2163 = vpack.c.bf16 %v2045, %v2044
    %v2164 = vpack.c.bf16 %v2047, %v2046
    %v2165 = vpack.c.bf16 %v2049, %v2048
    %v2166 = vpack.c.bf16 %v2051, %v2050
    %v2167 = vpack.c.bf16 %v2053, %v2052
    %v2168 = vpack.c.bf16 %v2055, %v2054
    %v2169 = vpack.c.bf16 %v2057, %v2056
    %v2170 = vpack.c.bf16 %v2059, %v2058
    %v2171 = vpack.c.bf16 %v2061, %v2060
    %v2172 = vpack.c.bf16 %v2063, %v2062
    %v2173 = vpack.c.bf16 %v2065, %v2064
    %v2174 = vpack.c.bf16 %v2067, %v2066
    %v2175 = vpack.c.bf16 %v2069, %v2068
    %v2176 = vpack.c.bf16 %v2071, %v2070
    %v2177 = vpack.c.bf16 %v2073, %v2072
    %v2178 = vpack.c.bf16 %v2075, %v2074
    %v2179 = vpack.c.bf16 %v2077, %v2076
    %v2180 = vpack.c.bf16 %v2079, %v2078
    %v2181 = vpack.c.bf16 %v2081, %v2080
    %v2282 = vunpack.c.l.b16 %v2082
    %v2283 = vunpack.c.h.b16 %v2082
    %v2284 = vunpack.c.l.b16 %v2083
    %v2285 = vunpack.c.h.b16 %v2083
    %v2286 = vunpack.c.l.b16 %v2084
    %v2287 = vunpack.c.h.b16 %v2084
    %v2288 = vunpack.c.l.b16 %v2085
    %v2289 = vunpack.c.h.b16 %v2085
    %v2290 = vunpack.c.l.b16 %v2086
    %v2291 = vunpack.c.h.b16 %v2086
    %v2292 = vunpack.c.l.b16 %v2087
    %v2293 = vunpack.c.h.b16 %v2087
    %v2294 = vunpack.c.l.b16 %v2088
    %v2295 = vunpack.c.h.b16 %v2088
    %v2296 = vunpack.c.l.b16 %v2089
    %v2297 = vunpack.c.h.b16 %v2089
    %v2298 = vunpack.c.l.b16 %v2090
    %v2299 = vunpack.c.h.b16 %v2090
    %v2300 = vunpack.c.l.b16 %v2091
    %v2301 = vunpack.c.h.b16 %v2091
    %v2302 = vunpack.c.l.b16 %v2092
    %v2303 = vunpack.c.h.b16 %v2092
    %v2304 = vunpack.c.l.b16 %v2093
    %v2305 = vunpack.c.h.b16 %v2093
    %v2306 = vunpack.c.l.b16 %v2094
    %v2307 = vunpack.c.h.b16 %v2094
    %v2308 = vunpack.c.l.b16 %v2095
    %v2309 = vunpack.c.h.b16 %v2095
    %v2310 = vunpack.c.l.b16 %v2096
    %v2311 = vunpack.c.h.b16 %v2096
    %v2312 = vunpack.c.l.b16 %v2097
    %v2313 = vunpack.c.h.b16 %v2097
    %v2314 = vunpack.c.l.b16 %v2098
    %v2315 = vunpack.c.h.b16 %v2098
    %v2316 = vunpack.c.l.b16 %v2099
    %v2317 = vunpack.c.h.b16 %v2099
    %v2318 = vunpack.c.l.b16 %v2100
    %v2319 = vunpack.c.h.b16 %v2100
    %v2320 = vunpack.c.l.b16 %v2101
    %v2321 = vunpack.c.h.b16 %v2101
    %v2322 = vunpack.c.l.b16 %v2102
    %v2323 = vunpack.c.h.b16 %v2102
    %v2324 = vunpack.c.l.b16 %v2103
    %v2325 = vunpack.c.h.b16 %v2103
    %v2326 = vunpack.c.l.b16 %v2104
    %v2327 = vunpack.c.h.b16 %v2104
    %v2328 = vunpack.c.l.b16 %v2105
    %v2329 = vunpack.c.h.b16 %v2105
    %v2330 = vunpack.c.l.b16 %v2106
    %v2331 = vunpack.c.h.b16 %v2106
    %v2332 = vunpack.c.l.b16 %v2107
    %v2333 = vunpack.c.h.b16 %v2107
    %v2334 = vunpack.c.l.b16 %v2108
    %v2335 = vunpack.c.h.b16 %v2108
    %v2336 = vunpack.c.l.b16 %v2109
    %v2337 = vunpack.c.h.b16 %v2109
    %v2338 = vunpack.c.l.b16 %v2110
    %v2339 = vunpack.c.h.b16 %v2110
    %v2340 = vunpack.c.l.b16 %v2111
    %v2341 = vunpack.c.h.b16 %v2111
    %v2342 = vunpack.c.l.b16 %v2112
    %v2343 = vunpack.c.h.b16 %v2112
    %v2344 = vunpack.c.l.b16 %v2113
    %v2345 = vunpack.c.h.b16 %v2113
    %v2346 = vunpack.c.l.b16 %v2114
    %v2347 = vunpack.c.h.b16 %v2114
    %v2348 = vunpack.c.l.b16 %v2115
    %v2349 = vunpack.c.h.b16 %v2115
    %v2350 = vunpack.c.l.b16 %v2116
    %v2351 = vunpack.c.h.b16 %v2116
    %v2352 = vunpack.c.l.b16 %v2117
    %v2353 = vunpack.c.h.b16 %v2117
    %v2354 = vunpack.c.l.b16 %v2118
    %v2355 = vunpack.c.h.b16 %v2118
    %v2356 = vunpack.c.l.b16 %v2119
    %v2357 = vunpack.c.h.b16 %v2119
    %v2358 = vunpack.c.l.b16 %v2120
    %v2359 = vunpack.c.h.b16 %v2120
    %v2360 = vunpack.c.l.b16 %v2121
    %v2361 = vunpack.c.h.b16 %v2121
    %v2362 = vunpack.c.l.b16 %v2122
    %v2363 = vunpack.c.h.b16 %v2122
    %v2364 = vunpack.c.l.b16 %v2123
    %v2365 = vunpack.c.h.b16 %v2123
    %v2366 = vunpack.c.l.b16 %v2124
    %v2367 = vunpack.c.h.b16 %v2124
    %v2368 = vunpack.c.l.b16 %v2125
    %v2369 = vunpack.c.h.b16 %v2125
    %v2370 = vunpack.c.l.b16 %v2126
    %v2371 = vunpack.c.h.b16 %v2126
    %v2372 = vunpack.c.l.b16 %v2127
    %v2373 = vunpack.c.h.b16 %v2127
    %v2374 = vunpack.c.l.b16 %v2128
    %v2375 = vunpack.c.h.b16 %v2128
    %v2376 = vunpack.c.l.b16 %v2129
    %v2377 = vunpack.c.h.b16 %v2129
    %v2378 = vunpack.c.l.b16 %v2130
    %v2379 = vunpack.c.h.b16 %v2130
    %v2380 = vunpack.c.l.b16 %v2131
    %v2381 = vunpack.c.h.b16 %v2131
    %v2382 = vunpack.c.l.b16 %v2132
    %v2383 = vunpack.c.h.b16 %v2132
    %v2384 = vunpack.c.l.b16 %v2133
    %v2385 = vunpack.c.h.b16 %v2133
    %v2386 = vunpack.c.l.b16 %v2134
    %v2387 = vunpack.c.h.b16 %v2134
    %v2388 = vunpack.c.l.b16 %v2135
    %v2389 = vunpack.c.h.b16 %v2135
    %v2390 = vunpack.c.l.b16 %v2136
    %v2391 = vunpack.c.h.b16 %v2136
    %v2392 = vunpack.c.l.b16 %v2137
    %v2393 = vunpack.c.h.b16 %v2137
    %v2394 = vunpack.c.l.b16 %v2138
    %v2395 = vunpack.c.h.b16 %v2138
    %v2396 = vunpack.c.l.b16 %v2139
    %v2397 = vunpack.c.h.b16 %v2139
    %v2398 = vunpack.c.l.b16 %v2140
    %v2399 = vunpack.c.h.b16 %v2140
    %v2400 = vunpack.c.l.b16 %v2141
    %v2401 = vunpack.c.h.b16 %v2141
    %v2402 = vunpack.c.l.b16 %v2142
    %v2403 = vunpack.c.h.b16 %v2142
    %v2404 = vunpack.c.l.b16 %v2143
    %v2405 = vunpack.c.h.b16 %v2143
    %v2406 = vunpack.c.l.b16 %v2144
    %v2407 = vunpack.c.h.b16 %v2144
    %v2408 = vunpack.c.l.b16 %v2145
    %v2409 = vunpack.c.h.b16 %v2145
    %v2410 = vunpack.c.l.b16 %v2146
    %v2411 = vunpack.c.h.b16 %v2146
    %v2412 = vunpack.c.l.b16 %v2147
    %v2413 = vunpack.c.h.b16 %v2147
    %v2414 = vunpack.c.l.b16 %v2148
    %v2415 = vunpack.c.h.b16 %v2148
    %v2416 = vunpack.c.l.b16 %v2149
    %v2417 = vunpack.c.h.b16 %v2149
    %v2418 = vunpack.c.l.b16 %v2150
    %v2419 = vunpack.c.h.b16 %v2150
    %v2420 = vunpack.c.l.b16 %v2151
    %v2421 = vunpack.c.h.b16 %v2151
    %v2422 = vunpack.c.l.b16 %v2152
    %v2423 = vunpack.c.h.b16 %v2152
    %v2424 = vunpack.c.l.b16 %v2153
    %v2425 = vunpack.c.h.b16 %v2153
    %v2426 = vunpack.c.l.b16 %v2154
    %v2427 = vunpack.c.h.b16 %v2154
    %v2428 = vunpack.c.l.b16 %v2155
    %v2429 = vunpack.c.h.b16 %v2155
    %v2430 = vunpack.c.l.b16 %v2156
    %v2431 = vunpack.c.h.b16 %v2156
    %v2432 = vunpack.c.l.b16 %v2157
    %v2433 = vunpack.c.h.b16 %v2157
    %v2434 = vunpack.c.l.b16 %v2158
    %v2435 = vunpack.c.h.b16 %v2158
    %v2436 = vunpack.c.l.b16 %v2159
    %v2437 = vunpack.c.h.b16 %v2159
    %v2438 = vunpack.c.l.b16 %v2160
    %v2439 = vunpack.c.h.b16 %v2160
    %v2440 = vunpack.c.l.b16 %v2161
    %v2441 = vunpack.c.h.b16 %v2161
    %v2442 = vunpack.c.l.b16 %v2162
    %v2443 = vunpack.c.h.b16 %v2162
    %v2444 = vunpack.c.l.b16 %v2163
    %v2445 = vunpack.c.h.b16 %v2163
    %v2446 = vunpack.c.l.b16 %v2164
    %v2447 = vunpack.c.h.b16 %v2164
    %v2448 = vunpack.c.l.b16 %v2165
    %v2449 = vunpack.c.h.b16 %v2165
    %v2450 = vunpack.c.l.b16 %v2166
    %v2451 = vunpack.c.h.b16 %v2166
    %v2452 = vunpack.c.l.b16 %v2167
    %v2453 = vunpack.c.h.b16 %v2167
    %v2454 = vunpack.c.l.b16 %v2168
    %v2455 = vunpack.c.h.b16 %v2168
    %v2456 = vunpack.c.l.b16 %v2169
    %v2457 = vunpack.c.h.b16 %v2169
    %v2458 = vunpack.c.l.b16 %v2170
    %v2459 = vunpack.c.h.b16 %v2170
    %v2460 = vunpack.c.l.b16 %v2171
    %v2461 = vunpack.c.h.b16 %v2171
    %v2462 = vunpack.c.l.b16 %v2172
    %v2463 = vunpack.c.h.b16 %v2172
    %v2464 = vunpack.c.l.b16 %v2173
    %v2465 = vunpack.c.h.b16 %v2173
    %v2466 = vunpack.c.l.b16 %v2174
    %v2467 = vunpack.c.h.b16 %v2174
    %v2468 = vunpack.c.l.b16 %v2175
    %v2469 = vunpack.c.h.b16 %v2175
    %v2470 = vunpack.c.l.b16 %v2176
    %v2471 = vunpack.c.h.b16 %v2176
    %v2472 = vunpack.c.l.b16 %v2177
    %v2473 = vunpack.c.h.b16 %v2177
    %v2474 = vunpack.c.l.b16 %v2178
    %v2475 = vunpack.c.h.b16 %v2178
    %v2476 = vunpack.c.l.b16 %v2179
    %v2477 = vunpack.c.h.b16 %v2179
    %v2478 = vunpack.c.l.b16 %v2180
    %v2479 = vunpack.c.h.b16 %v2180
    %v2480 = vunpack.c.l.b16 %v2181
    %v2481 = vunpack.c.h.b16 %v2181
    %v2482 = vpack.c.b16 %v2282, %v2282
    %v2483 = vpack.c.b16 %v2283, %v2283
    %v2484 = vpack.c.b16 %v2284, %v2284
    %v2485 = vpack.c.b16 %v2285, %v2285
    %v2486 = vpack.c.b16 %v2286, %v2286
    %v2487 = vpack.c.b16 %v2287, %v2287
    %v2488 = vpack.c.b16 %v2288, %v2288
    %v2489 = vpack.c.b16 %v2289, %v2289
    %v2490 = vpack.c.b16 %v2290, %v2290
    %v2491 = vpack.c.b16 %v2291, %v2291
    %v2492 = vpack.c.b16 %v2292, %v2292
    %v2493 = vpack.c.b16 %v2293, %v2293
    %v2494 = vpack.c.b16 %v2294, %v2294
    %v2495 = vpack.c.b16 %v2295, %v2295
    %v2496 = vpack.c.b16 %v2296, %v2296
    %v2497 = vpack.c.b16 %v2297, %v2297
    %v2498 = vpack.c.b16 %v2298, %v2298
    %v2499 = vpack.c.b16 %v2299, %v2299
    %v2500 = vpack.c.b16 %v2300, %v2300
    %v2501 = vpack.c.b16 %v2301, %v2301
    %v2502 = vpack.c.b16 %v2302, %v2302
    %v2503 = vpack.c.b16 %v2303, %v2303
    %v2504 = vpack.c.b16 %v2304, %v2304
    %v2505 = vpack.c.b16 %v2305, %v2305
    %v2506 = vpack.c.b16 %v2306, %v2306
    %v2507 = vpack.c.b16 %v2307, %v2307
    %v2508 = vpack.c.b16 %v2308, %v2308
    %v2509 = vpack.c.b16 %v2309, %v2309
    %v2510 = vpack.c.b16 %v2310, %v2310
    %v2511 = vpack.c.b16 %v2311, %v2311
    %v2512 = vpack.c.b16 %v2312, %v2312
    %v2513 = vpack.c.b16 %v2313, %v2313
    %v2514 = vpack.c.b16 %v2314, %v2314
    %v2515 = vpack.c.b16 %v2315, %v2315
    %v2516 = vpack.c.b16 %v2316, %v2316
    %v2517 = vpack.c.b16 %v2317, %v2317
    %v2518 = vpack.c.b16 %v2318, %v2318
    %v2519 = vpack.c.b16 %v2319, %v2319
    %v2520 = vpack.c.b16 %v2320, %v2320
    %v2521 = vpack.c.b16 %v2321, %v2321
    %v2522 = vpack.c.b16 %v2322, %v2322
    %v2523 = vpack.c.b16 %v2323, %v2323
    %v2524 = vpack.c.b16 %v2324, %v2324
    %v2525 = vpack.c.b16 %v2325, %v2325
    %v2526 = vpack.c.b16 %v2326, %v2326
    %v2527 = vpack.c.b16 %v2327, %v2327
    %v2528 = vpack.c.b16 %v2328, %v2328
    %v2529 = vpack.c.b16 %v2329, %v2329
    %v2530 = vpack.c.b16 %v2330, %v2330
    %v2531 = vpack.c.b16 %v2331, %v2331
    %v2532 = vpack.c.b16 %v2332, %v2332
    %v2533 = vpack.c.b16 %v2333, %v2333
    %v2534 = vpack.c.b16 %v2334, %v2334
    %v2535 = vpack.c.b16 %v2335, %v2335
    %v2536 = vpack.c.b16 %v2336, %v2336
    %v2537 = vpack.c.b16 %v2337, %v2337
    %v2538 = vpack.c.b16 %v2338, %v2338
    %v2539 = vpack.c.b16 %v2339, %v2339
    %v2540 = vpack.c.b16 %v2340, %v2340
    %v2541 = vpack.c.b16 %v2341, %v2341
    %v2542 = vpack.c.b16 %v2342, %v2342
    %v2543 = vpack.c.b16 %v2343, %v2343
    %v2544 = vpack.c.b16 %v2344, %v2344
    %v2545 = vpack.c.b16 %v2345, %v2345
    %v2546 = vpack.c.b16 %v2346, %v2346
    %v2547 = vpack.c.b16 %v2347, %v2347
    %v2548 = vpack.c.b16 %v2348, %v2348
    %v2549 = vpack.c.b16 %v2349, %v2349
    %v2550 = vpack.c.b16 %v2350, %v2350
    %v2551 = vpack.c.b16 %v2351, %v2351
    %v2552 = vpack.c.b16 %v2352, %v2352
    %v2553 = vpack.c.b16 %v2353, %v2353
    %v2554 = vpack.c.b16 %v2354, %v2354
    %v2555 = vpack.c.b16 %v2355, %v2355
    %v2556 = vpack.c.b16 %v2356, %v2356
    %v2557 = vpack.c.b16 %v2357, %v2357
    %v2558 = vpack.c.b16 %v2358, %v2358
    %v2559 = vpack.c.b16 %v2359, %v2359
    %v2560 = vpack.c.b16 %v2360, %v2360
    %v2561 = vpack.c.b16 %v2361, %v2361
    %v2562 = vpack.c.b16 %v2362, %v2362
    %v2563 = vpack.c.b16 %v2363, %v2363
    %v2564 = vpack.c.b16 %v2364, %v2364
    %v2565 = vpack.c.b16 %v2365, %v2365
    %v2566 = vpack.c.b16 %v2366, %v2366
    %v2567 = vpack.c.b16 %v2367, %v2367
    %v2568 = vpack.c.b16 %v2368, %v2368
    %v2569 = vpack.c.b16 %v2369, %v2369
    %v2570 = vpack.c.b16 %v2370, %v2370
    %v2571 = vpack.c.b16 %v2371, %v2371
    %v2572 = vpack.c.b16 %v2372, %v2372
    %v2573 = vpack.c.b16 %v2373, %v2373
    %v2574 = vpack.c.b16 %v2374, %v2374
    %v2575 = vpack.c.b16 %v2375, %v2375
    %v2576 = vpack.c.b16 %v2376, %v2376
    %v2577 = vpack.c.b16 %v2377, %v2377
    %v2578 = vpack.c.b16 %v2378, %v2378
    %v2579 = vpack.c.b16 %v2379, %v2379
    %v2580 = vpack.c.b16 %v2380, %v2380
    %v2581 = vpack.c.b16 %v2381, %v2381
    %v2582 = vpack.c.b16 %v2382, %v2382
    %v2583 = vpack.c.b16 %v2383, %v2383
    %v2584 = vpack.c.b16 %v2384, %v2384
    %v2585 = vpack.c.b16 %v2385, %v2385
    %v2586 = vpack.c.b16 %v2386, %v2386
    %v2587 = vpack.c.b16 %v2387, %v2387
    %v2588 = vpack.c.b16 %v2388, %v2388
    %v2589 = vpack.c.b16 %v2389, %v2389
    %v2590 = vpack.c.b16 %v2390, %v2390
    %v2591 = vpack.c.b16 %v2391, %v2391
    %v2592 = vpack.c.b16 %v2392, %v2392
    %v2593 = vpack.c.b16 %v2393, %v2393
    %v2594 = vpack.c.b16 %v2394, %v2394
    %v2595 = vpack.c.b16 %v2395, %v2395
    %v2596 = vpack.c.b16 %v2396, %v2396
    %v2597 = vpack.c.b16 %v2397, %v2397
    %v2598 = vpack.c.b16 %v2398, %v2398
    %v2599 = vpack.c.b16 %v2399, %v2399
    %v2600 = vpack.c.b16 %v2400, %v2400
    %v2601 = vpack.c.b16 %v2401, %v2401
    %v2602 = vpack.c.b16 %v2402, %v2402
    %v2603 = vpack.c.b16 %v2403, %v2403
    %v2604 = vpack.c.b16 %v2404, %v2404
    %v2605 = vpack.c.b16 %v2405, %v2405
    %v2606 = vpack.c.b16 %v2406, %v2406
    %v2607 = vpack.c.b16 %v2407, %v2407
    %v2608 = vpack.c.b16 %v2408, %v2408
    %v2609 = vpack.c.b16 %v2409, %v2409
    %v2610 = vpack.c.b16 %v2410, %v2410
    %v2611 = vpack.c.b16 %v2411, %v2411
    %v2612 = vpack.c.b16 %v2412, %v2412
    %v2613 = vpack.c.b16 %v2413, %v2413
    %v2614 = vpack.c.b16 %v2414, %v2414
    %v2615 = vpack.c.b16 %v2415, %v2415
    %v2616 = vpack.c.b16 %v2416, %v2416
    %v2617 = vpack.c.b16 %v2417, %v2417
    %v2618 = vpack.c.b16 %v2418, %v2418
    %v2619 = vpack.c.b16 %v2419, %v2419
    %v2620 = vpack.c.b16 %v2420, %v2420
    %v2621 = vpack.c.b16 %v2421, %v2421
    %v2622 = vpack.c.b16 %v2422, %v2422
    %v2623 = vpack.c.b16 %v2423, %v2423
    %v2624 = vpack.c.b16 %v2424, %v2424
    %v2625 = vpack.c.b16 %v2425, %v2425
    %v2626 = vpack.c.b16 %v2426, %v2426
    %v2627 = vpack.c.b16 %v2427, %v2427
    %v2628 = vpack.c.b16 %v2428, %v2428
    %v2629 = vpack.c.b16 %v2429, %v2429
    %v2630 = vpack.c.b16 %v2430, %v2430
    %v2631 = vpack.c.b16 %v2431, %v2431
    %v2632 = vpack.c.b16 %v2432, %v2432
    %v2633 = vpack.c.b16 %v2433, %v2433
    %v2634 = vpack.c.b16 %v2434, %v2434
    %v2635 = vpack.c.b16 %v2435, %v2435
    %v2636 = vpack.c.b16 %v2436, %v2436
    %v2637 = vpack.c.b16 %v2437, %v2437
    %v2638 = vpack.c.b16 %v2438, %v2438
    %v2639 = vpack.c.b16 %v2439, %v2439
    %v2640 = vpack.c.b16 %v2440, %v2440
    %v2641 = vpack.c.b16 %v2441, %v2441
    %v2642 = vpack.c.b16 %v2442, %v2442
    %v2643 = vpack.c.b16 %v2443, %v2443
    %v2644 = vpack.c.b16 %v2444, %v2444
    %v2645 = vpack.c.b16 %v2445, %v2445
    %v2646 = vpack.c.b16 %v2446, %v2446
    %v2647 = vpack.c.b16 %v2447, %v2447
    %v2648 = vpack.c.b16 %v2448, %v2448
    %v2649 = vpack.c.b16 %v2449, %v2449
    %v2650 = vpack.c.b16 %v2450, %v2450
    %v2651 = vpack.c.b16 %v2451, %v2451
    %v2652 = vpack.c.b16 %v2452, %v2452
    %v2653 = vpack.c.b16 %v2453, %v2453
    %v2654 = vpack.c.b16 %v2454, %v2454
    %v2655 = vpack.c.b16 %v2455, %v2455
    %v2656 = vpack.c.b16 %v2456, %v2456
    %v2657 = vpack.c.b16 %v2457, %v2457
    %v2658 = vpack.c.b16 %v2458, %v2458
    %v2659 = vpack.c.b16 %v2459, %v2459
    %v2660 = vpack.c.b16 %v2460, %v2460
    %v2661 = vpack.c.b16 %v2461, %v2461
    %v2662 = vpack.c.b16 %v2462, %v2462
    %v2663 = vpack.c.b16 %v2463, %v2463
    %v2664 = vpack.c.b16 %v2464, %v2464
    %v2665 = vpack.c.b16 %v2465, %v2465
    %v2666 = vpack.c.b16 %v2466, %v2466
    %v2667 = vpack.c.b16 %v2467, %v2467
    %v2668 = vpack.c.b16 %v2468, %v2468
    %v2669 = vpack.c.b16 %v2469, %v2469
    %v2670 = vpack.c.b16 %v2470, %v2470
    %v2671 = vpack.c.b16 %v2471, %v2471
    %v2672 = vpack.c.b16 %v2472, %v2472
    %v2673 = vpack.c.b16 %v2473, %v2473
    %v2674 = vpack.c.b16 %v2474, %v2474
    %v2675 = vpack.c.b16 %v2475, %v2475
    %v2676 = vpack.c.b16 %v2476, %v2476
    %v2677 = vpack.c.b16 %v2477, %v2477
    %v2678 = vpack.c.b16 %v2478, %v2478
    %v2679 = vpack.c.b16 %v2479, %v2479
    %v2680 = vpack.c.b16 %v2480, %v2480
    %v2681 = vpack.c.b16 %v2481, %v2481
    %vm2882 = vcmask 240640
    %2883 = vst.msk [vmem:[%s3] sm:$0xf] %vm2882, %v2482
    %2884 = vst.msk [vmem:[%s3 + $0x4] sm:$0xf] %vm2882, %v2483
    %2885 = vst.msk [vmem:[%s3 + $0x8] sm:$0xf] %vm2882, %v2484
    %2886 = vst.msk [vmem:[%s3 + $0xc] sm:$0xf] %vm2882, %v2485
    %2887 = vst.msk [vmem:[%s3 + $0x10] sm:$0xf] %vm2882, %v2486
    %2888 = vst.msk [vmem:[%s3 + $0x14] sm:$0xf] %vm2882, %v2487
    %2889 = vst.msk [vmem:[%s3 + $0x18] sm:$0xf] %vm2882, %v2488
    %2890 = vst.msk [vmem:[%s3 + $0x1c] sm:$0xf] %vm2882, %v2489
    %2891 = vst.msk [vmem:[%s3 + $0x20] sm:$0xf] %vm2882, %v2490
    %2892 = vst.msk [vmem:[%s3 + $0x24] sm:$0xf] %vm2882, %v2491
    %2893 = vst.msk [vmem:[%s3 + $0x28] sm:$0xf] %vm2882, %v2492
    %2894 = vst.msk [vmem:[%s3 + $0x2c] sm:$0xf] %vm2882, %v2493
    %2895 = vst.msk [vmem:[%s3 + $0x30] sm:$0xf] %vm2882, %v2494
    %2896 = vst.msk [vmem:[%s3 + $0x34] sm:$0xf] %vm2882, %v2495
    %2897 = vst.msk [vmem:[%s3 + $0x38] sm:$0xf] %vm2882, %v2496
    %2898 = vst.msk [vmem:[%s3 + $0x3c] sm:$0xf] %vm2882, %v2497
    %2899 = vst.msk [vmem:[%s3 + $0x40] sm:$0xf] %vm2882, %v2498
    %2900 = vst.msk [vmem:[%s3 + $0x44] sm:$0xf] %vm2882, %v2499
    %2901 = vst.msk [vmem:[%s3 + $0x48] sm:$0xf] %vm2882, %v2500
    %2902 = vst.msk [vmem:[%s3 + $0x4c] sm:$0xf] %vm2882, %v2501
    %2903 = vst.msk [vmem:[%s3 + $0x50] sm:$0xf] %vm2882, %v2502
    %2904 = vst.msk [vmem:[%s3 + $0x54] sm:$0xf] %vm2882, %v2503
    %2905 = vst.msk [vmem:[%s3 + $0x58] sm:$0xf] %vm2882, %v2504
    %2906 = vst.msk [vmem:[%s3 + $0x5c] sm:$0xf] %vm2882, %v2505
    %2907 = vst.msk [vmem:[%s3 + $0x60] sm:$0xf] %vm2882, %v2506
    %2908 = vst.msk [vmem:[%s3 + $0x64] sm:$0xf] %vm2882, %v2507
    %2909 = vst.msk [vmem:[%s3 + $0x68] sm:$0xf] %vm2882, %v2508
    %2910 = vst.msk [vmem:[%s3 + $0x6c] sm:$0xf] %vm2882, %v2509
    %2911 = vst.msk [vmem:[%s3 + $0x70] sm:$0xf] %vm2882, %v2510
    %2912 = vst.msk [vmem:[%s3 + $0x74] sm:$0xf] %vm2882, %v2511
    %2913 = vst.msk [vmem:[%s3 + $0x78] sm:$0xf] %vm2882, %v2512
    %2914 = vst.msk [vmem:[%s3 + $0x7c] sm:$0xf] %vm2882, %v2513
    %2915 = vst.msk [vmem:[%s3 + $0x80] sm:$0xf] %vm2882, %v2514
    %2916 = vst.msk [vmem:[%s3 + $0x84] sm:$0xf] %vm2882, %v2515
    %2917 = vst.msk [vmem:[%s3 + $0x88] sm:$0xf] %vm2882, %v2516
    %2918 = vst.msk [vmem:[%s3 + $0x8c] sm:$0xf] %vm2882, %v2517
    %2919 = vst.msk [vmem:[%s3 + $0x90] sm:$0xf] %vm2882, %v2518
    %2920 = vst.msk [vmem:[%s3 + $0x94] sm:$0xf] %vm2882, %v2519
    %2921 = vst.msk [vmem:[%s3 + $0x98] sm:$0xf] %vm2882, %v2520
    %2922 = vst.msk [vmem:[%s3 + $0x9c] sm:$0xf] %vm2882, %v2521
    %2923 = vst.msk [vmem:[%s3 + $0xa0] sm:$0xf] %vm2882, %v2522
    %2924 = vst.msk [vmem:[%s3 + $0xa4] sm:$0xf] %vm2882, %v2523
    %2925 = vst.msk [vmem:[%s3 + $0xa8] sm:$0xf] %vm2882, %v2524
    %2926 = vst.msk [vmem:[%s3 + $0xac] sm:$0xf] %vm2882, %v2525
    %2927 = vst.msk [vmem:[%s3 + $0xb0] sm:$0xf] %vm2882, %v2526
    %2928 = vst.msk [vmem:[%s3 + $0xb4] sm:$0xf] %vm2882, %v2527
    %2929 = vst.msk [vmem:[%s3 + $0xb8] sm:$0xf] %vm2882, %v2528
    %2930 = vst.msk [vmem:[%s3 + $0xbc] sm:$0xf] %vm2882, %v2529
    %2931 = vst.msk [vmem:[%s3 + $0xc0] sm:$0xf] %vm2882, %v2530
    %2932 = vst.msk [vmem:[%s3 + $0xc4] sm:$0xf] %vm2882, %v2531
    %2933 = vst.msk [vmem:[%s3 + $0xc8] sm:$0xf] %vm2882, %v2532
    %2934 = vst.msk [vmem:[%s3 + $0xcc] sm:$0xf] %vm2882, %v2533
    %2935 = vst.msk [vmem:[%s3 + $0xd0] sm:$0xf] %vm2882, %v2534
    %2936 = vst.msk [vmem:[%s3 + $0xd4] sm:$0xf] %vm2882, %v2535
    %2937 = vst.msk [vmem:[%s3 + $0xd8] sm:$0xf] %vm2882, %v2536
    %2938 = vst.msk [vmem:[%s3 + $0xdc] sm:$0xf] %vm2882, %v2537
    %2939 = vst.msk [vmem:[%s3 + $0xe0] sm:$0xf] %vm2882, %v2538
    %2940 = vst.msk [vmem:[%s3 + $0xe4] sm:$0xf] %vm2882, %v2539
    %2941 = vst.msk [vmem:[%s3 + $0xe8] sm:$0xf] %vm2882, %v2540
    %2942 = vst.msk [vmem:[%s3 + $0xec] sm:$0xf] %vm2882, %v2541
    %2943 = vst.msk [vmem:[%s3 + $0xf0] sm:$0xf] %vm2882, %v2542
    %2944 = vst.msk [vmem:[%s3 + $0xf4] sm:$0xf] %vm2882, %v2543
    %2945 = vst.msk [vmem:[%s3 + $0xf8] sm:$0xf] %vm2882, %v2544
    %2946 = vst.msk [vmem:[%s3 + $0xfc] sm:$0xf] %vm2882, %v2545
    %2947 = vst.msk [vmem:[%s3 + $0x100] sm:$0xf] %vm2882, %v2546
    %2948 = vst.msk [vmem:[%s3 + $0x104] sm:$0xf] %vm2882, %v2547
    %2949 = vst.msk [vmem:[%s3 + $0x108] sm:$0xf] %vm2882, %v2548
    %2950 = vst.msk [vmem:[%s3 + $0x10c] sm:$0xf] %vm2882, %v2549
    %2951 = vst.msk [vmem:[%s3 + $0x110] sm:$0xf] %vm2882, %v2550
    %2952 = vst.msk [vmem:[%s3 + $0x114] sm:$0xf] %vm2882, %v2551
    %2953 = vst.msk [vmem:[%s3 + $0x118] sm:$0xf] %vm2882, %v2552
    %2954 = vst.msk [vmem:[%s3 + $0x11c] sm:$0xf] %vm2882, %v2553
    %2955 = vst.msk [vmem:[%s3 + $0x120] sm:$0xf] %vm2882, %v2554
    %2956 = vst.msk [vmem:[%s3 + $0x124] sm:$0xf] %vm2882, %v2555
    %2957 = vst.msk [vmem:[%s3 + $0x128] sm:$0xf] %vm2882, %v2556
    %2958 = vst.msk [vmem:[%s3 + $0x12c] sm:$0xf] %vm2882, %v2557
    %2959 = vst.msk [vmem:[%s3 + $0x130] sm:$0xf] %vm2882, %v2558
    %2960 = vst.msk [vmem:[%s3 + $0x134] sm:$0xf] %vm2882, %v2559
    %2961 = vst.msk [vmem:[%s3 + $0x138] sm:$0xf] %vm2882, %v2560
    %2962 = vst.msk [vmem:[%s3 + $0x13c] sm:$0xf] %vm2882, %v2561
    %2963 = vst.msk [vmem:[%s3 + $0x140] sm:$0xf] %vm2882, %v2562
    %2964 = vst.msk [vmem:[%s3 + $0x144] sm:$0xf] %vm2882, %v2563
    %2965 = vst.msk [vmem:[%s3 + $0x148] sm:$0xf] %vm2882, %v2564
    %2966 = vst.msk [vmem:[%s3 + $0x14c] sm:$0xf] %vm2882, %v2565
    %2967 = vst.msk [vmem:[%s3 + $0x150] sm:$0xf] %vm2882, %v2566
    %2968 = vst.msk [vmem:[%s3 + $0x154] sm:$0xf] %vm2882, %v2567
    %2969 = vst.msk [vmem:[%s3 + $0x158] sm:$0xf] %vm2882, %v2568
    %2970 = vst.msk [vmem:[%s3 + $0x15c] sm:$0xf] %vm2882, %v2569
    %2971 = vst.msk [vmem:[%s3 + $0x160] sm:$0xf] %vm2882, %v2570
    %2972 = vst.msk [vmem:[%s3 + $0x164] sm:$0xf] %vm2882, %v2571
    %2973 = vst.msk [vmem:[%s3 + $0x168] sm:$0xf] %vm2882, %v2572
    %2974 = vst.msk [vmem:[%s3 + $0x16c] sm:$0xf] %vm2882, %v2573
    %2975 = vst.msk [vmem:[%s3 + $0x170] sm:$0xf] %vm2882, %v2574
    %2976 = vst.msk [vmem:[%s3 + $0x174] sm:$0xf] %vm2882, %v2575
    %2977 = vst.msk [vmem:[%s3 + $0x178] sm:$0xf] %vm2882, %v2576
    %2978 = vst.msk [vmem:[%s3 + $0x17c] sm:$0xf] %vm2882, %v2577
    %2979 = vst.msk [vmem:[%s3 + $0x180] sm:$0xf] %vm2882, %v2578
    %2980 = vst.msk [vmem:[%s3 + $0x184] sm:$0xf] %vm2882, %v2579
    %2981 = vst.msk [vmem:[%s3 + $0x188] sm:$0xf] %vm2882, %v2580
    %2982 = vst.msk [vmem:[%s3 + $0x18c] sm:$0xf] %vm2882, %v2581
    %2983 = vst.msk [vmem:[%s3 + $0x190] sm:$0xf] %vm2882, %v2582
    %2984 = vst.msk [vmem:[%s3 + $0x194] sm:$0xf] %vm2882, %v2583
    %2985 = vst.msk [vmem:[%s3 + $0x198] sm:$0xf] %vm2882, %v2584
    %2986 = vst.msk [vmem:[%s3 + $0x19c] sm:$0xf] %vm2882, %v2585
    %2987 = vst.msk [vmem:[%s3 + $0x1a0] sm:$0xf] %vm2882, %v2586
    %2988 = vst.msk [vmem:[%s3 + $0x1a4] sm:$0xf] %vm2882, %v2587
    %2989 = vst.msk [vmem:[%s3 + $0x1a8] sm:$0xf] %vm2882, %v2588
    %2990 = vst.msk [vmem:[%s3 + $0x1ac] sm:$0xf] %vm2882, %v2589
    %2991 = vst.msk [vmem:[%s3 + $0x1b0] sm:$0xf] %vm2882, %v2590
    %2992 = vst.msk [vmem:[%s3 + $0x1b4] sm:$0xf] %vm2882, %v2591
    %2993 = vst.msk [vmem:[%s3 + $0x1b8] sm:$0xf] %vm2882, %v2592
    %2994 = vst.msk [vmem:[%s3 + $0x1bc] sm:$0xf] %vm2882, %v2593
    %2995 = vst.msk [vmem:[%s3 + $0x1c0] sm:$0xf] %vm2882, %v2594
    %2996 = vst.msk [vmem:[%s3 + $0x1c4] sm:$0xf] %vm2882, %v2595
    %2997 = vst.msk [vmem:[%s3 + $0x1c8] sm:$0xf] %vm2882, %v2596
    %2998 = vst.msk [vmem:[%s3 + $0x1cc] sm:$0xf] %vm2882, %v2597
    %2999 = vst.msk [vmem:[%s3 + $0x1d0] sm:$0xf] %vm2882, %v2598
    %3000 = vst.msk [vmem:[%s3 + $0x1d4] sm:$0xf] %vm2882, %v2599
    %3001 = vst.msk [vmem:[%s3 + $0x1d8] sm:$0xf] %vm2882, %v2600
    %3002 = vst.msk [vmem:[%s3 + $0x1dc] sm:$0xf] %vm2882, %v2601
    %3003 = vst.msk [vmem:[%s3 + $0x1e0] sm:$0xf] %vm2882, %v2602
    %3004 = vst.msk [vmem:[%s3 + $0x1e4] sm:$0xf] %vm2882, %v2603
    %3005 = vst.msk [vmem:[%s3 + $0x1e8] sm:$0xf] %vm2882, %v2604
    %3006 = vst.msk [vmem:[%s3 + $0x1ec] sm:$0xf] %vm2882, %v2605
    %3007 = vst.msk [vmem:[%s3 + $0x1f0] sm:$0xf] %vm2882, %v2606
    %3008 = vst.msk [vmem:[%s3 + $0x1f4] sm:$0xf] %vm2882, %v2607
    %3009 = vst.msk [vmem:[%s3 + $0x1f8] sm:$0xf] %vm2882, %v2608
    %3010 = vst.msk [vmem:[%s3 + $0x1fc] sm:$0xf] %vm2882, %v2609
    %3011 = vst.msk [vmem:[%s3 + $0x200] sm:$0xf] %vm2882, %v2610
    %3012 = vst.msk [vmem:[%s3 + $0x204] sm:$0xf] %vm2882, %v2611
    %3013 = vst.msk [vmem:[%s3 + $0x208] sm:$0xf] %vm2882, %v2612
    %3014 = vst.msk [vmem:[%s3 + $0x20c] sm:$0xf] %vm2882, %v2613
    %3015 = vst.msk [vmem:[%s3 + $0x210] sm:$0xf] %vm2882, %v2614
    %3016 = vst.msk [vmem:[%s3 + $0x214] sm:$0xf] %vm2882, %v2615
    %3017 = vst.msk [vmem:[%s3 + $0x218] sm:$0xf] %vm2882, %v2616
    %3018 = vst.msk [vmem:[%s3 + $0x21c] sm:$0xf] %vm2882, %v2617
    %3019 = vst.msk [vmem:[%s3 + $0x220] sm:$0xf] %vm2882, %v2618
    %3020 = vst.msk [vmem:[%s3 + $0x224] sm:$0xf] %vm2882, %v2619
    %3021 = vst.msk [vmem:[%s3 + $0x228] sm:$0xf] %vm2882, %v2620
    %3022 = vst.msk [vmem:[%s3 + $0x22c] sm:$0xf] %vm2882, %v2621
    %3023 = vst.msk [vmem:[%s3 + $0x230] sm:$0xf] %vm2882, %v2622
    %3024 = vst.msk [vmem:[%s3 + $0x234] sm:$0xf] %vm2882, %v2623
    %3025 = vst.msk [vmem:[%s3 + $0x238] sm:$0xf] %vm2882, %v2624
    %3026 = vst.msk [vmem:[%s3 + $0x23c] sm:$0xf] %vm2882, %v2625
    %3027 = vst.msk [vmem:[%s3 + $0x240] sm:$0xf] %vm2882, %v2626
    %3028 = vst.msk [vmem:[%s3 + $0x244] sm:$0xf] %vm2882, %v2627
    %3029 = vst.msk [vmem:[%s3 + $0x248] sm:$0xf] %vm2882, %v2628
    %3030 = vst.msk [vmem:[%s3 + $0x24c] sm:$0xf] %vm2882, %v2629
    %3031 = vst.msk [vmem:[%s3 + $0x250] sm:$0xf] %vm2882, %v2630
    %3032 = vst.msk [vmem:[%s3 + $0x254] sm:$0xf] %vm2882, %v2631
    %3033 = vst.msk [vmem:[%s3 + $0x258] sm:$0xf] %vm2882, %v2632
    %3034 = vst.msk [vmem:[%s3 + $0x25c] sm:$0xf] %vm2882, %v2633
    %3035 = vst.msk [vmem:[%s3 + $0x260] sm:$0xf] %vm2882, %v2634
    %3036 = vst.msk [vmem:[%s3 + $0x264] sm:$0xf] %vm2882, %v2635
    %3037 = vst.msk [vmem:[%s3 + $0x268] sm:$0xf] %vm2882, %v2636
    %3038 = vst.msk [vmem:[%s3 + $0x26c] sm:$0xf] %vm2882, %v2637
    %3039 = vst.msk [vmem:[%s3 + $0x270] sm:$0xf] %vm2882, %v2638
    %3040 = vst.msk [vmem:[%s3 + $0x274] sm:$0xf] %vm2882, %v2639
    %3041 = vst.msk [vmem:[%s3 + $0x278] sm:$0xf] %vm2882, %v2640
    %3042 = vst.msk [vmem:[%s3 + $0x27c] sm:$0xf] %vm2882, %v2641
    %3043 = vst.msk [vmem:[%s3 + $0x280] sm:$0xf] %vm2882, %v2642
    %3044 = vst.msk [vmem:[%s3 + $0x284] sm:$0xf] %vm2882, %v2643
    %3045 = vst.msk [vmem:[%s3 + $0x288] sm:$0xf] %vm2882, %v2644
    %3046 = vst.msk [vmem:[%s3 + $0x28c] sm:$0xf] %vm2882, %v2645
    %3047 = vst.msk [vmem:[%s3 + $0x290] sm:$0xf] %vm2882, %v2646
    %3048 = vst.msk [vmem:[%s3 + $0x294] sm:$0xf] %vm2882, %v2647
    %3049 = vst.msk [vmem:[%s3 + $0x298] sm:$0xf] %vm2882, %v2648
    %3050 = vst.msk [vmem:[%s3 + $0x29c] sm:$0xf] %vm2882, %v2649
    %3051 = vst.msk [vmem:[%s3 + $0x2a0] sm:$0xf] %vm2882, %v2650
    %3052 = vst.msk [vmem:[%s3 + $0x2a4] sm:$0xf] %vm2882, %v2651
    %3053 = vst.msk [vmem:[%s3 + $0x2a8] sm:$0xf] %vm2882, %v2652
    %3054 = vst.msk [vmem:[%s3 + $0x2ac] sm:$0xf] %vm2882, %v2653
    %3055 = vst.msk [vmem:[%s3 + $0x2b0] sm:$0xf] %vm2882, %v2654
    %3056 = vst.msk [vmem:[%s3 + $0x2b4] sm:$0xf] %vm2882, %v2655
    %3057 = vst.msk [vmem:[%s3 + $0x2b8] sm:$0xf] %vm2882, %v2656
    %3058 = vst.msk [vmem:[%s3 + $0x2bc] sm:$0xf] %vm2882, %v2657
    %3059 = vst.msk [vmem:[%s3 + $0x2c0] sm:$0xf] %vm2882, %v2658
    %3060 = vst.msk [vmem:[%s3 + $0x2c4] sm:$0xf] %vm2882, %v2659
    %3061 = vst.msk [vmem:[%s3 + $0x2c8] sm:$0xf] %vm2882, %v2660
    %3062 = vst.msk [vmem:[%s3 + $0x2cc] sm:$0xf] %vm2882, %v2661
    %3063 = vst.msk [vmem:[%s3 + $0x2d0] sm:$0xf] %vm2882, %v2662
    %3064 = vst.msk [vmem:[%s3 + $0x2d4] sm:$0xf] %vm2882, %v2663
    %3065 = vst.msk [vmem:[%s3 + $0x2d8] sm:$0xf] %vm2882, %v2664
    %3066 = vst.msk [vmem:[%s3 + $0x2dc] sm:$0xf] %vm2882, %v2665
    %3067 = vst.msk [vmem:[%s3 + $0x2e0] sm:$0xf] %vm2882, %v2666
    %3068 = vst.msk [vmem:[%s3 + $0x2e4] sm:$0xf] %vm2882, %v2667
    %3069 = vst.msk [vmem:[%s3 + $0x2e8] sm:$0xf] %vm2882, %v2668
    %3070 = vst.msk [vmem:[%s3 + $0x2ec] sm:$0xf] %vm2882, %v2669
    %3071 = vst.msk [vmem:[%s3 + $0x2f0] sm:$0xf] %vm2882, %v2670
    %3072 = vst.msk [vmem:[%s3 + $0x2f4] sm:$0xf] %vm2882, %v2671
    %3073 = vst.msk [vmem:[%s3 + $0x2f8] sm:$0xf] %vm2882, %v2672
    %3074 = vst.msk [vmem:[%s3 + $0x2fc] sm:$0xf] %vm2882, %v2673
    %3075 = vst.msk [vmem:[%s3 + $0x300] sm:$0xf] %vm2882, %v2674
    %3076 = vst.msk [vmem:[%s3 + $0x304] sm:$0xf] %vm2882, %v2675
    %3077 = vst.msk [vmem:[%s3 + $0x308] sm:$0xf] %vm2882, %v2676
    %3078 = vst.msk [vmem:[%s3 + $0x30c] sm:$0xf] %vm2882, %v2677
    %3079 = vst.msk [vmem:[%s3 + $0x310] sm:$0xf] %vm2882, %v2678
    %3080 = vst.msk [vmem:[%s3 + $0x314] sm:$0xf] %vm2882, %v2679
    %3081 = vst.msk [vmem:[%s3 + $0x318] sm:$0xf] %vm2882, %v2680
    %3082 = vst.msk [vmem:[%s3 + $0x31c] sm:$0xf] %vm2882, %v2681
    // Predicated region
    $region22: #{ss_model_forward.6} parent=1 // pred_check
      _
    $region23: #{ss_model_forward.6} parent=1 // pred_check_branch
      %3084 = sbr.rel (0) target = $region25
    $region24: #{ss_model_forward.6} parent=1 // pred_region
      _
    $region25: #{ss_model_forward.6} parent=1 // pred_fallthru
      _
    // Predicated region
    $region26: #{ss_model_forward.6} parent=1 // pred_check
      _
    $region27: #{ss_model_forward.6} parent=1 // pred_check_branch
      %3086 = sbr.rel (0) target = $region29
    $region28: #{ss_model_forward.6} parent=1 // pred_region
      _
    $region29: #{ss_model_forward.6} parent=1 // pred_fallthru
      _
    %3087 = vsyncpa [#allocation3], 1
    %3088 = vsyncpa [#allocation5], 1

// kernel: ss_model_forward.7
$region0: #{ss_model_forward.7}
  #allocation0 [shape = 'u32[]', space=smem, size = 0x4, offset = 0x4, fixed_abs, tag = 'smem constant byte address 0x4 - core index']
  #allocation1 [shape = 'u32[144,128]{1,0:T(1,128)}', space=vmem, size = 0x12000, scoped, tag = 'internal scratch']
  %s0 = inlined_call_operand.vmem [shape: bf16[120,896], index: 0, kind: input, shape index: {}]
  %s1 = inlined_call_operand.vmem [shape: bf16[896,128], index: 1, kind: input, shape index: {}]
  %s2 = inlined_call_operand.vmem [shape: f32[1,128], index: 2, kind: input, shape index: {}]
  %s3 = inlined_call_operand.vmem [shape: bf16[120,128], index: 3, kind: output, shape index: {}]
  %s4 = sld [smem:[#allocation0]]
  $region22: #{ss_model_forward.7} parent=0
    _
  %s6 = ssub.s32 1, %s4
  %s7 = scalar_select 0, %s6, %s4
  // Predicated region
  $region2: #{ss_model_forward.7} parent=0 // pred_check
    _
  $region3: #{ss_model_forward.7} parent=0 // pred_check_branch
    %9 = sbr.rel (0) target = $region5
  $region4: #{ss_model_forward.7} parent=0 // pred_region
    _
  $region5: #{ss_model_forward.7} parent=0 // pred_fallthru
    _
  // Predicated region
  $region6: #{ss_model_forward.7} parent=0 // pred_check
    _
  $region7: #{ss_model_forward.7} parent=0 // pred_check_branch
    %11 = sbr.rel (0) target = $region9
  $region8: #{ss_model_forward.7} parent=0 // pred_region
    _
  $region9: #{ss_model_forward.7} parent=0 // pred_fallthru
    _
  // Predicated region
  $region10: #{ss_model_forward.7} parent=0 // pred_check
    _
  $region11: #{ss_model_forward.7} parent=0 // pred_check_branch
    %13 = sbr.rel (0) target = $region13
  $region12: #{ss_model_forward.7} parent=0 // pred_region
    _
  $region13: #{ss_model_forward.7} parent=0 // pred_fallthru
    _
  %v15 = vld [vmem:[%s0] sm:$0xff]
  %v16 = vld [vmem:[%s0 + $0x8] sm:$0xff]
  %v17 = vld [vmem:[%s0 + $0x10] sm:$0xff]
  %v18 = vld [vmem:[%s0 + $0x18] sm:$0xf]
  %v19 = vld [vmem:[%s0 + $0x1c] sm:$0xff]
  %v20 = vld [vmem:[%s0 + $0x24] sm:$0xff]
  %v21 = vld [vmem:[%s0 + $0x2c] sm:$0xff]
  %v22 = vld [vmem:[%s0 + $0x34] sm:$0xf]
  %v23 = vld [vmem:[%s0 + $0x38] sm:$0xff]
  %v24 = vld [vmem:[%s0 + $0x40] sm:$0xff]
  %v25 = vld [vmem:[%s0 + $0x48] sm:$0xff]
  %v26 = vld [vmem:[%s0 + $0x50] sm:$0xf]
  %v27 = vld [vmem:[%s0 + $0x54] sm:$0xff]
  %v28 = vld [vmem:[%s0 + $0x5c] sm:$0xff]
  %v29 = vld [vmem:[%s0 + $0x64] sm:$0xff]
  %v30 = vld [vmem:[%s0 + $0x6c] sm:$0xf]
  %v31 = vld [vmem:[%s0 + $0x70] sm:$0xff]
  %v32 = vld [vmem:[%s0 + $0x78] sm:$0xff]
  %v33 = vld [vmem:[%s0 + $0x80] sm:$0xff]
  %v34 = vld [vmem:[%s0 + $0x88] sm:$0xf]
  %v35 = vld [vmem:[%s0 + $0x8c] sm:$0xff]
  %v36 = vld [vmem:[%s0 + $0x94] sm:$0xff]
  %v37 = vld [vmem:[%s0 + $0x9c] sm:$0xff]
  %v38 = vld [vmem:[%s0 + $0xa4] sm:$0xf]
  %v39 = vld [vmem:[%s0 + $0xa8] sm:$0xff]
  %v40 = vld [vmem:[%s0 + $0xb0] sm:$0xff]
  %v41 = vld [vmem:[%s0 + $0xb8] sm:$0xff]
  %v42 = vld [vmem:[%s0 + $0xc0] sm:$0xf]
  %v43 = vld [vmem:[%s0 + $0xc4] sm:$0xff]
  %v44 = vld [vmem:[%s0 + $0xcc] sm:$0xff]
  %v45 = vld [vmem:[%s0 + $0xd4] sm:$0xff]
  %v46 = vld [vmem:[%s0 + $0xdc] sm:$0xf]
  %v47 = vld [vmem:[%s0 + $0xe0] sm:$0xff]
  %v48 = vld [vmem:[%s0 + $0xe8] sm:$0xff]
  %v49 = vld [vmem:[%s0 + $0xf0] sm:$0xff]
  %v50 = vld [vmem:[%s0 + $0xf8] sm:$0xf]
  %v51 = vld [vmem:[%s0 + $0xfc] sm:$0xff]
  %v52 = vld [vmem:[%s0 + $0x104] sm:$0xff]
  %v53 = vld [vmem:[%s0 + $0x10c] sm:$0xff]
  %v54 = vld [vmem:[%s0 + $0x114] sm:$0xf]
  %v55 = vld [vmem:[%s0 + $0x118] sm:$0xff]
  %v56 = vld [vmem:[%s0 + $0x120] sm:$0xff]
  %v57 = vld [vmem:[%s0 + $0x128] sm:$0xff]
  %v58 = vld [vmem:[%s0 + $0x130] sm:$0xf]
  %v59 = vld [vmem:[%s0 + $0x134] sm:$0xff]
  %v60 = vld [vmem:[%s0 + $0x13c] sm:$0xff]
  %v61 = vld [vmem:[%s0 + $0x144] sm:$0xff]
  %v62 = vld [vmem:[%s0 + $0x14c] sm:$0xf]
  %v63 = vld [vmem:[%s0 + $0x150] sm:$0xff]
  %v64 = vld [vmem:[%s0 + $0x158] sm:$0xff]
  %v65 = vld [vmem:[%s0 + $0x160] sm:$0xff]
  %v66 = vld [vmem:[%s0 + $0x168] sm:$0xf]
  %v67 = vld [vmem:[%s0 + $0x16c] sm:$0xff]
  %v68 = vld [vmem:[%s0 + $0x174] sm:$0xff]
  %v69 = vld [vmem:[%s0 + $0x17c] sm:$0xff]
  %v70 = vld [vmem:[%s0 + $0x184] sm:$0xf]
  %v71 = vld [vmem:[%s0 + $0x188] sm:$0xff]
  %v72 = vld [vmem:[%s0 + $0x190] sm:$0xff]
  %v73 = vld [vmem:[%s0 + $0x198] sm:$0xff]
  %v74 = vld [vmem:[%s0 + $0x1a0] sm:$0xf]
  %v75 = vld [vmem:[%s1] sm:$0xf]
  %v76 = vld [vmem:[%s1 + $0x4] sm:$0xf]
  %v77 = vld [vmem:[%s1 + $0x8] sm:$0xf]
  %v78 = vld [vmem:[%s1 + $0xc] sm:$0xf]
  %v79 = vld [vmem:[%s1 + $0x10] sm:$0xf]
  %v80 = vld [vmem:[%s1 + $0x14] sm:$0xf]
  %v81 = vld [vmem:[%s1 + $0x18] sm:$0xf]
  %v82 = vld [vmem:[%s1 + $0x1c] sm:$0xf]
  %v83 = vld [vmem:[%s1 + $0x20] sm:$0xf]
  %v84 = vld [vmem:[%s1 + $0x24] sm:$0xf]
  %v85 = vld [vmem:[%s1 + $0x28] sm:$0xf]
  %v86 = vld [vmem:[%s1 + $0x2c] sm:$0xf]
  %v87 = vld [vmem:[%s1 + $0x30] sm:$0xf]
  %v88 = vld [vmem:[%s1 + $0x34] sm:$0xf]
  %v89 = vld [vmem:[%s1 + $0x38] sm:$0xf]
  %v90 = vld [vmem:[%s1 + $0x3c] sm:$0xf]
  %v91 = vld [vmem:[%s1 + $0x40] sm:$0xf]
  %v92 = vld [vmem:[%s1 + $0x44] sm:$0xf]
  %v93 = vld [vmem:[%s1 + $0x48] sm:$0xf]
  %v94 = vld [vmem:[%s1 + $0x4c] sm:$0xf]
  %v95 = vld [vmem:[%s1 + $0x50] sm:$0xf]
  %v96 = vld [vmem:[%s1 + $0x54] sm:$0xf]
  %v97 = vld [vmem:[%s1 + $0x58] sm:$0xf]
  %v98 = vld [vmem:[%s1 + $0x5c] sm:$0xf]
  %v99 = vld [vmem:[%s1 + $0x60] sm:$0xf]
  %v100 = vld [vmem:[%s1 + $0x64] sm:$0xf]
  %v101 = vld [vmem:[%s1 + $0x68] sm:$0xf]
  %v102 = vld [vmem:[%s1 + $0x6c] sm:$0xf]
  %v103 = vld [vmem:[%s1 + $0x70] sm:$0xf]
  %v104 = vld [vmem:[%s1 + $0x74] sm:$0xf]
  %v105 = vld [vmem:[%s1 + $0x78] sm:$0xf]
  %v106 = vld [vmem:[%s1 + $0x7c] sm:$0xf]
  %v107 = vld [vmem:[%s1 + $0x80] sm:$0xf]
  %v108 = vld [vmem:[%s1 + $0x84] sm:$0xf]
  %v109 = vld [vmem:[%s1 + $0x88] sm:$0xf]
  %v110 = vld [vmem:[%s1 + $0x8c] sm:$0xf]
  %v111 = vld [vmem:[%s1 + $0x90] sm:$0xf]
  %v112 = vld [vmem:[%s1 + $0x94] sm:$0xf]
  %v113 = vld [vmem:[%s1 + $0x98] sm:$0xf]
  %v114 = vld [vmem:[%s1 + $0x9c] sm:$0xf]
  %v115 = vld [vmem:[%s1 + $0xa0] sm:$0xf]
  %v116 = vld [vmem:[%s1 + $0xa4] sm:$0xf]
  %v117 = vld [vmem:[%s1 + $0xa8] sm:$0xf]
  %v118 = vld [vmem:[%s1 + $0xac] sm:$0xf]
  %v119 = vld [vmem:[%s1 + $0xb0] sm:$0xf]
  %v120 = vld [vmem:[%s1 + $0xb4] sm:$0xf]
  %v121 = vld [vmem:[%s1 + $0xb8] sm:$0xf]
  %v122 = vld [vmem:[%s1 + $0xbc] sm:$0xf]
  %v123 = vld [vmem:[%s1 + $0xc0] sm:$0xf]
  %v124 = vld [vmem:[%s1 + $0xc4] sm:$0xf]
  %v125 = vld [vmem:[%s1 + $0xc8] sm:$0xf]
  %v126 = vld [vmem:[%s1 + $0xcc] sm:$0xf]
  %v127 = vld [vmem:[%s1 + $0xd0] sm:$0xf]
  %v128 = vld [vmem:[%s1 + $0xd4] sm:$0xf]
  %v129 = vld [vmem:[%s1 + $0xd8] sm:$0xf]
  %v130 = vld [vmem:[%s1 + $0xdc] sm:$0xf]
  %v131 = vld [vmem:[%s1 + $0xe0] sm:$0xf]
  %v132 = vld [vmem:[%s1 + $0xe4] sm:$0xf]
  %v133 = vld [vmem:[%s1 + $0xe8] sm:$0xf]
  %v134 = vld [vmem:[%s1 + $0xec] sm:$0xf]
  %v135 = vld [vmem:[%s1 + $0xf0] sm:$0xf]
  %v136 = vld [vmem:[%s1 + $0xf4] sm:$0xf]
  %v137 = vld [vmem:[%s1 + $0xf8] sm:$0xf]
  %v138 = vld [vmem:[%s1 + $0xfc] sm:$0xf]
  %v139 = vld [vmem:[%s1 + $0x100] sm:$0xf]
  %v140 = vld [vmem:[%s1 + $0x104] sm:$0xf]
  %v141 = vld [vmem:[%s1 + $0x108] sm:$0xf]
  %v142 = vld [vmem:[%s1 + $0x10c] sm:$0xf]
  %v143 = vld [vmem:[%s1 + $0x110] sm:$0xf]
  %v144 = vld [vmem:[%s1 + $0x114] sm:$0xf]
  %v145 = vld [vmem:[%s1 + $0x118] sm:$0xf]
  %v146 = vld [vmem:[%s1 + $0x11c] sm:$0xf]
  %v147 = vld [vmem:[%s1 + $0x120] sm:$0xf]
  %v148 = vld [vmem:[%s1 + $0x124] sm:$0xf]
  %v149 = vld [vmem:[%s1 + $0x128] sm:$0xf]
  %v150 = vld [vmem:[%s1 + $0x12c] sm:$0xf]
  %v151 = vld [vmem:[%s1 + $0x130] sm:$0xf]
  %v152 = vld [vmem:[%s1 + $0x134] sm:$0xf]
  %v153 = vld [vmem:[%s1 + $0x138] sm:$0xf]
  %v154 = vld [vmem:[%s1 + $0x13c] sm:$0xf]
  %v155 = vld [vmem:[%s1 + $0x140] sm:$0xf]
  %v156 = vld [vmem:[%s1 + $0x144] sm:$0xf]
  %v157 = vld [vmem:[%s1 + $0x148] sm:$0xf]
  %v158 = vld [vmem:[%s1 + $0x14c] sm:$0xf]
  %v159 = vld [vmem:[%s1 + $0x150] sm:$0xf]
  %v160 = vld [vmem:[%s1 + $0x154] sm:$0xf]
  %v161 = vld [vmem:[%s1 + $0x158] sm:$0xf]
  %v162 = vld [vmem:[%s1 + $0x15c] sm:$0xf]
  %v163 = vld [vmem:[%s1 + $0x160] sm:$0xf]
  %v164 = vld [vmem:[%s1 + $0x164] sm:$0xf]
  %v165 = vld [vmem:[%s1 + $0x168] sm:$0xf]
  %v166 = vld [vmem:[%s1 + $0x16c] sm:$0xf]
  %v167 = vld [vmem:[%s1 + $0x170] sm:$0xf]
  %v168 = vld [vmem:[%s1 + $0x174] sm:$0xf]
  %v169 = vld [vmem:[%s1 + $0x178] sm:$0xf]
  %v170 = vld [vmem:[%s1 + $0x17c] sm:$0xf]
  %v171 = vld [vmem:[%s1 + $0x180] sm:$0xf]
  %v172 = vld [vmem:[%s1 + $0x184] sm:$0xf]
  %v173 = vld [vmem:[%s1 + $0x188] sm:$0xf]
  %v174 = vld [vmem:[%s1 + $0x18c] sm:$0xf]
  %v175 = vld [vmem:[%s1 + $0x190] sm:$0xf]
  %v176 = vld [vmem:[%s1 + $0x194] sm:$0xf]
  %v177 = vld [vmem:[%s1 + $0x198] sm:$0xf]
  %v178 = vld [vmem:[%s1 + $0x19c] sm:$0xf]
  %v179 = vld [vmem:[%s1 + $0x1a0] sm:$0xf]
  %v180 = vld [vmem:[%s1 + $0x1a4] sm:$0xf]
  %v181 = vld [vmem:[%s1 + $0x1a8] sm:$0xf]
  %v182 = vld [vmem:[%s1 + $0x1ac] sm:$0xf]
  %v183 = vld [vmem:[%s1 + $0x1b0] sm:$0xf]
  %v184 = vld [vmem:[%s1 + $0x1b4] sm:$0xf]
  %v185 = vld [vmem:[%s1 + $0x1b8] sm:$0xf]
  %v186 = vld [vmem:[%s1 + $0x1bc] sm:$0xf]
  %v187 = vld [vmem:[%s2] sm:$0x1]
  %v189 = vlaneseq
  %v190 = vshrl.u32 %v189, 7
  %v191 = vsub.s32 0, %v190
  %v192 = vrot.slane %v187, %v191
  %v254 = vunpack.c.l.b16 %v15
  %v255 = vunpack.c.h.b16 %v15
  %v256 = vunpack.c.l.b16 %v16
  %v257 = vunpack.c.h.b16 %v16
  %v258 = vunpack.c.l.b16 %v17
  %v259 = vunpack.c.h.b16 %v17
  %v260 = vunpack.c.l.b16 %v18
  %v261 = vunpack.c.l.b16 %v19
  %v262 = vunpack.c.h.b16 %v19
  %v263 = vunpack.c.l.b16 %v20
  %v264 = vunpack.c.h.b16 %v20
  %v265 = vunpack.c.l.b16 %v21
  %v266 = vunpack.c.h.b16 %v21
  %v267 = vunpack.c.l.b16 %v22
  %v268 = vunpack.c.l.b16 %v23
  %v269 = vunpack.c.h.b16 %v23
  %v270 = vunpack.c.l.b16 %v24
  %v271 = vunpack.c.h.b16 %v24
  %v272 = vunpack.c.l.b16 %v25
  %v273 = vunpack.c.h.b16 %v25
  %v274 = vunpack.c.l.b16 %v26
  %v275 = vunpack.c.l.b16 %v27
  %v276 = vunpack.c.h.b16 %v27
  %v277 = vunpack.c.l.b16 %v28
  %v278 = vunpack.c.h.b16 %v28
  %v279 = vunpack.c.l.b16 %v29
  %v280 = vunpack.c.h.b16 %v29
  %v281 = vunpack.c.l.b16 %v30
  %v282 = vunpack.c.l.b16 %v31
  %v283 = vunpack.c.h.b16 %v31
  %v284 = vunpack.c.l.b16 %v32
  %v285 = vunpack.c.h.b16 %v32
  %v286 = vunpack.c.l.b16 %v33
  %v287 = vunpack.c.h.b16 %v33
  %v288 = vunpack.c.l.b16 %v34
  %v289 = vunpack.c.l.b16 %v35
  %v290 = vunpack.c.h.b16 %v35
  %v291 = vunpack.c.l.b16 %v36
  %v292 = vunpack.c.h.b16 %v36
  %v293 = vunpack.c.l.b16 %v37
  %v294 = vunpack.c.h.b16 %v37
  %v295 = vunpack.c.l.b16 %v38
  %v296 = vunpack.c.l.b16 %v39
  %v297 = vunpack.c.h.b16 %v39
  %v298 = vunpack.c.l.b16 %v40
  %v299 = vunpack.c.h.b16 %v40
  %v300 = vunpack.c.l.b16 %v41
  %v301 = vunpack.c.h.b16 %v41
  %v302 = vunpack.c.l.b16 %v42
  %v303 = vunpack.c.l.b16 %v43
  %v304 = vunpack.c.h.b16 %v43
  %v305 = vunpack.c.l.b16 %v44
  %v306 = vunpack.c.h.b16 %v44
  %v307 = vunpack.c.l.b16 %v45
  %v308 = vunpack.c.h.b16 %v45
  %v309 = vunpack.c.l.b16 %v46
  %v310 = vunpack.c.l.b16 %v47
  %v311 = vunpack.c.h.b16 %v47
  %v312 = vunpack.c.l.b16 %v48
  %v313 = vunpack.c.h.b16 %v48
  %v314 = vunpack.c.l.b16 %v49
  %v315 = vunpack.c.h.b16 %v49
  %v316 = vunpack.c.l.b16 %v50
  %v317 = vunpack.c.l.b16 %v51
  %v318 = vunpack.c.h.b16 %v51
  %v319 = vunpack.c.l.b16 %v52
  %v320 = vunpack.c.h.b16 %v52
  %v321 = vunpack.c.l.b16 %v53
  %v322 = vunpack.c.h.b16 %v53
  %v323 = vunpack.c.l.b16 %v54
  %v324 = vunpack.c.l.b16 %v55
  %v325 = vunpack.c.h.b16 %v55
  %v326 = vunpack.c.l.b16 %v56
  %v327 = vunpack.c.h.b16 %v56
  %v328 = vunpack.c.l.b16 %v57
  %v329 = vunpack.c.h.b16 %v57
  %v330 = vunpack.c.l.b16 %v58
  %v331 = vunpack.c.l.b16 %v59
  %v332 = vunpack.c.h.b16 %v59
  %v333 = vunpack.c.l.b16 %v60
  %v334 = vunpack.c.h.b16 %v60
  %v335 = vunpack.c.l.b16 %v61
  %v336 = vunpack.c.h.b16 %v61
  %v337 = vunpack.c.l.b16 %v62
  %v338 = vunpack.c.l.b16 %v63
  %v339 = vunpack.c.h.b16 %v63
  %v340 = vunpack.c.l.b16 %v64
  %v341 = vunpack.c.h.b16 %v64
  %v342 = vunpack.c.l.b16 %v65
  %v343 = vunpack.c.h.b16 %v65
  %v344 = vunpack.c.l.b16 %v66
  %v345 = vunpack.c.l.b16 %v67
  %v346 = vunpack.c.h.b16 %v67
  %v347 = vunpack.c.l.b16 %v68
  %v348 = vunpack.c.h.b16 %v68
  %v349 = vunpack.c.l.b16 %v69
  %v350 = vunpack.c.h.b16 %v69
  %v351 = vunpack.c.l.b16 %v70
  %v352 = vunpack.c.l.b16 %v71
  %v353 = vunpack.c.h.b16 %v71
  %v354 = vunpack.c.l.b16 %v72
  %v355 = vunpack.c.h.b16 %v72
  %v356 = vunpack.c.l.b16 %v73
  %v357 = vunpack.c.h.b16 %v73
  %v358 = vunpack.c.l.b16 %v74
  %v359 = vpack.c.b16 %v261, %v254
  %v360 = vpack.c.b16 %v262, %v255
  %v361 = vpack.c.b16 %v263, %v256
  %v362 = vpack.c.b16 %v264, %v257
  %v363 = vpack.c.b16 %v265, %v258
  %v364 = vpack.c.b16 %v266, %v259
  %v365 = vpack.c.b16 %v267, %v260
  %v366 = vpack.c.b16 %v275, %v268
  %v367 = vpack.c.b16 %v276, %v269
  %v368 = vpack.c.b16 %v277, %v270
  %v369 = vpack.c.b16 %v278, %v271
  %v370 = vpack.c.b16 %v279, %v272
  %v371 = vpack.c.b16 %v280, %v273
  %v372 = vpack.c.b16 %v281, %v274
  %v373 = vpack.c.b16 %v289, %v282
  %v374 = vpack.c.b16 %v290, %v283
  %v375 = vpack.c.b16 %v291, %v284
  %v376 = vpack.c.b16 %v292, %v285
  %v377 = vpack.c.b16 %v293, %v286
  %v378 = vpack.c.b16 %v294, %v287
  %v379 = vpack.c.b16 %v295, %v288
  %v380 = vpack.c.b16 %v303, %v296
  %v381 = vpack.c.b16 %v304, %v297
  %v382 = vpack.c.b16 %v305, %v298
  %v383 = vpack.c.b16 %v306, %v299
  %v384 = vpack.c.b16 %v307, %v300
  %v385 = vpack.c.b16 %v308, %v301
  %v386 = vpack.c.b16 %v309, %v302
  %v387 = vpack.c.b16 %v317, %v310
  %v388 = vpack.c.b16 %v318, %v311
  %v389 = vpack.c.b16 %v319, %v312
  %v390 = vpack.c.b16 %v320, %v313
  %v391 = vpack.c.b16 %v321, %v314
  %v392 = vpack.c.b16 %v322, %v315
  %v393 = vpack.c.b16 %v323, %v316
  %v394 = vpack.c.b16 %v331, %v324
  %v395 = vpack.c.b16 %v332, %v325
  %v396 = vpack.c.b16 %v333, %v326
  %v397 = vpack.c.b16 %v334, %v327
  %v398 = vpack.c.b16 %v335, %v328
  %v399 = vpack.c.b16 %v336, %v329
  %v400 = vpack.c.b16 %v337, %v330
  %v401 = vpack.c.b16 %v345, %v338
  %v402 = vpack.c.b16 %v346, %v339
  %v403 = vpack.c.b16 %v347, %v340
  %v404 = vpack.c.b16 %v348, %v341
  %v405 = vpack.c.b16 %v349, %v342
  %v406 = vpack.c.b16 %v350, %v343
  %v407 = vpack.c.b16 %v351, %v344
  %v408 = vpack.c.b16 %v352, %v352
  %v409 = vpack.c.b16 %v353, %v353
  %v410 = vpack.c.b16 %v354, %v354
  %v411 = vpack.c.b16 %v355, %v355
  %v412 = vpack.c.b16 %v356, %v356
  %v413 = vpack.c.b16 %v357, %v357
  %v414 = vpack.c.b16 %v358, %v358
  %v583 = vunpack.c.l.b16 %v75
  %v584 = vunpack.c.l.b16 %v76
  %v585 = vunpack.c.l.b16 %v77
  %v586 = vunpack.c.l.b16 %v78
  %v587 = vunpack.c.l.b16 %v79
  %v588 = vunpack.c.l.b16 %v80
  %v589 = vunpack.c.l.b16 %v81
  %v590 = vunpack.c.l.b16 %v82
  %v591 = vunpack.c.l.b16 %v83
  %v592 = vunpack.c.l.b16 %v84
  %v593 = vunpack.c.l.b16 %v85
  %v594 = vunpack.c.l.b16 %v86
  %v595 = vunpack.c.l.b16 %v87
  %v596 = vunpack.c.l.b16 %v88
  %v597 = vunpack.c.l.b16 %v89
  %v598 = vunpack.c.l.b16 %v90
  %v599 = vunpack.c.l.b16 %v91
  %v600 = vunpack.c.l.b16 %v92
  %v601 = vunpack.c.l.b16 %v93
  %v602 = vunpack.c.l.b16 %v94
  %v603 = vunpack.c.l.b16 %v95
  %v604 = vunpack.c.l.b16 %v96
  %v605 = vunpack.c.l.b16 %v97
  %v606 = vunpack.c.l.b16 %v98
  %v607 = vunpack.c.l.b16 %v99
  %v608 = vunpack.c.l.b16 %v100
  %v609 = vunpack.c.l.b16 %v101
  %v610 = vunpack.c.l.b16 %v102
  %v611 = vunpack.c.l.b16 %v103
  %v612 = vunpack.c.l.b16 %v104
  %v613 = vunpack.c.l.b16 %v105
  %v614 = vunpack.c.l.b16 %v106
  %v615 = vunpack.c.l.b16 %v107
  %v616 = vunpack.c.l.b16 %v108
  %v617 = vunpack.c.l.b16 %v109
  %v618 = vunpack.c.l.b16 %v110
  %v619 = vunpack.c.l.b16 %v111
  %v620 = vunpack.c.l.b16 %v112
  %v621 = vunpack.c.l.b16 %v113
  %v622 = vunpack.c.l.b16 %v114
  %v623 = vunpack.c.l.b16 %v115
  %v624 = vunpack.c.l.b16 %v116
  %v625 = vunpack.c.l.b16 %v117
  %v626 = vunpack.c.l.b16 %v118
  %v627 = vunpack.c.l.b16 %v119
  %v628 = vunpack.c.l.b16 %v120
  %v629 = vunpack.c.l.b16 %v121
  %v630 = vunpack.c.l.b16 %v122
  %v631 = vunpack.c.l.b16 %v123
  %v632 = vunpack.c.l.b16 %v124
  %v633 = vunpack.c.l.b16 %v125
  %v634 = vunpack.c.l.b16 %v126
  %v635 = vunpack.c.l.b16 %v127
  %v636 = vunpack.c.l.b16 %v128
  %v637 = vunpack.c.l.b16 %v129
  %v638 = vunpack.c.l.b16 %v130
  %v639 = vunpack.c.l.b16 %v131
  %v640 = vunpack.c.l.b16 %v132
  %v641 = vunpack.c.l.b16 %v133
  %v642 = vunpack.c.l.b16 %v134
  %v643 = vunpack.c.l.b16 %v135
  %v644 = vunpack.c.l.b16 %v136
  %v645 = vunpack.c.l.b16 %v137
  %v646 = vunpack.c.l.b16 %v138
  %v647 = vunpack.c.l.b16 %v139
  %v648 = vunpack.c.l.b16 %v140
  %v649 = vunpack.c.l.b16 %v141
  %v650 = vunpack.c.l.b16 %v142
  %v651 = vunpack.c.l.b16 %v143
  %v652 = vunpack.c.l.b16 %v144
  %v653 = vunpack.c.l.b16 %v145
  %v654 = vunpack.c.l.b16 %v146
  %v655 = vunpack.c.l.b16 %v147
  %v656 = vunpack.c.l.b16 %v148
  %v657 = vunpack.c.l.b16 %v149
  %v658 = vunpack.c.l.b16 %v150
  %v659 = vunpack.c.l.b16 %v151
  %v660 = vunpack.c.l.b16 %v152
  %v661 = vunpack.c.l.b16 %v153
  %v662 = vunpack.c.l.b16 %v154
  %v663 = vunpack.c.l.b16 %v155
  %v664 = vunpack.c.l.b16 %v156
  %v665 = vunpack.c.l.b16 %v157
  %v666 = vunpack.c.l.b16 %v158
  %v667 = vunpack.c.l.b16 %v159
  %v668 = vunpack.c.l.b16 %v160
  %v669 = vunpack.c.l.b16 %v161
  %v670 = vunpack.c.l.b16 %v162
  %v671 = vunpack.c.l.b16 %v163
  %v672 = vunpack.c.l.b16 %v164
  %v673 = vunpack.c.l.b16 %v165
  %v674 = vunpack.c.l.b16 %v166
  %v675 = vunpack.c.l.b16 %v167
  %v676 = vunpack.c.l.b16 %v168
  %v677 = vunpack.c.l.b16 %v169
  %v678 = vunpack.c.l.b16 %v170
  %v679 = vunpack.c.l.b16 %v171
  %v680 = vunpack.c.l.b16 %v172
  %v681 = vunpack.c.l.b16 %v173
  %v682 = vunpack.c.l.b16 %v174
  %v683 = vunpack.c.l.b16 %v175
  %v684 = vunpack.c.l.b16 %v176
  %v685 = vunpack.c.l.b16 %v177
  %v686 = vunpack.c.l.b16 %v178
  %v687 = vunpack.c.l.b16 %v179
  %v688 = vunpack.c.l.b16 %v180
  %v689 = vunpack.c.l.b16 %v181
  %v690 = vunpack.c.l.b16 %v182
  %v691 = vunpack.c.l.b16 %v183
  %v692 = vunpack.c.l.b16 %v184
  %v693 = vunpack.c.l.b16 %v185
  %v694 = vunpack.c.l.b16 %v186
  %v695 = vpack.c.b16 %v584, %v583
  %v696 = vpack.c.b16 %v586, %v585
  %v697 = vpack.c.b16 %v588, %v587
  %v698 = vpack.c.b16 %v590, %v589
  %v699 = vpack.c.b16 %v592, %v591
  %v700 = vpack.c.b16 %v594, %v593
  %v701 = vpack.c.b16 %v596, %v595
  %v702 = vpack.c.b16 %v598, %v597
  %v703 = vpack.c.b16 %v600, %v599
  %v704 = vpack.c.b16 %v602, %v601
  %v705 = vpack.c.b16 %v604, %v603
  %v706 = vpack.c.b16 %v606, %v605
  %v707 = vpack.c.b16 %v608, %v607
  %v708 = vpack.c.b16 %v610, %v609
  %v709 = vpack.c.b16 %v612, %v611
  %v710 = vpack.c.b16 %v614, %v613
  %v711 = vpack.c.b16 %v616, %v615
  %v712 = vpack.c.b16 %v618, %v617
  %v713 = vpack.c.b16 %v620, %v619
  %v714 = vpack.c.b16 %v622, %v621
  %v715 = vpack.c.b16 %v624, %v623
  %v716 = vpack.c.b16 %v626, %v625
  %v717 = vpack.c.b16 %v628, %v627
  %v718 = vpack.c.b16 %v630, %v629
  %v719 = vpack.c.b16 %v632, %v631
  %v720 = vpack.c.b16 %v634, %v633
  %v721 = vpack.c.b16 %v636, %v635
  %v722 = vpack.c.b16 %v638, %v637
  %v723 = vpack.c.b16 %v640, %v639
  %v724 = vpack.c.b16 %v642, %v641
  %v725 = vpack.c.b16 %v644, %v643
  %v726 = vpack.c.b16 %v646, %v645
  %v727 = vpack.c.b16 %v648, %v647
  %v728 = vpack.c.b16 %v650, %v649
  %v729 = vpack.c.b16 %v652, %v651
  %v730 = vpack.c.b16 %v654, %v653
  %v731 = vpack.c.b16 %v656, %v655
  %v732 = vpack.c.b16 %v658, %v657
  %v733 = vpack.c.b16 %v660, %v659
  %v734 = vpack.c.b16 %v662, %v661
  %v735 = vpack.c.b16 %v664, %v663
  %v736 = vpack.c.b16 %v666, %v665
  %v737 = vpack.c.b16 %v668, %v667
  %v738 = vpack.c.b16 %v670, %v669
  %v739 = vpack.c.b16 %v672, %v671
  %v740 = vpack.c.b16 %v674, %v673
  %v741 = vpack.c.b16 %v676, %v675
  %v742 = vpack.c.b16 %v678, %v677
  %v743 = vpack.c.b16 %v680, %v679
  %v744 = vpack.c.b16 %v682, %v681
  %v745 = vpack.c.b16 %v684, %v683
  %v746 = vpack.c.b16 %v686, %v685
  %v747 = vpack.c.b16 %v688, %v687
  %v748 = vpack.c.b16 %v690, %v689
  %v749 = vpack.c.b16 %v692, %v691
  %v750 = vpack.c.b16 %v694, %v693
  %807 = vmatprep.subr.bf16.mxu0 0
  %808 = vmatpush1.bf16.msra.mxu0 %v702
  %809 = vmatprep.subr.bf16.mxu0 0
  %810 = vmatpush1.bf16.msra.mxu0 %v701
  %811 = vmatprep.subr.bf16.mxu0 0
  %812 = vmatpush1.bf16.msra.mxu0 %v700
  %813 = vmatprep.subr.bf16.mxu0 0
  %814 = vmatpush1.bf16.msra.mxu0 %v699
  %815 = vmatprep.subr.bf16.mxu0 0
  %816 = vmatpush1.bf16.msra.mxu0 %v698
  %817 = vmatprep.subr.bf16.mxu0 0
  %818 = vmatpush1.bf16.msra.mxu0 %v697
  %819 = vmatprep.subr.bf16.mxu0 0
  %820 = vmatpush1.bf16.msra.mxu0 %v696
  %821 = vmatprep.subr.bf16.mxu0 0
  %822 = vmatpush1.bf16.msra.mxu0 %v695
  %823 = vmatprep.subr.bf16.mxu0 0
  %824 = vmatpush2.bf16.msra.mxu0 %v710
  %825 = vmatprep.subr.bf16.mxu0 0
  %826 = vmatpush2.bf16.msra.mxu0 %v709
  %827 = vmatprep.subr.bf16.mxu0 0
  %828 = vmatpush2.bf16.msra.mxu0 %v708
  %829 = vmatprep.subr.bf16.mxu0 0
  %830 = vmatpush2.bf16.msra.mxu0 %v707
  %831 = vmatprep.subr.bf16.mxu0 0
  %832 = vmatpush2.bf16.msra.mxu0 %v706
  %833 = vmatprep.subr.bf16.mxu0 0
  %834 = vmatpush2.bf16.msra.mxu0 %v705
  %835 = vmatprep.subr.bf16.mxu0 0
  %836 = vmatpush2.bf16.msra.mxu0 %v704
  %837 = vmatprep.subr.bf16.mxu0 0
  %838 = vmatpush2.bf16.msra.mxu0 %v703
  %839 = vmatprep.mubr.bf16.mxu0 %v360
  %840 = vmatmul.mubr.bf16.gmra.mxu0 %v359
  %v841 = vpop.f32.mrf.mxu0
  %v842 = vadd.f32 %v192, %v841
  %v843 = vpop.f32.mrf.mxu0
  %v844 = vpop.f32.mrf.mxu0
  %v845 = vadd.f32 %v192, %v844
  %v846 = vpop.f32.mrf.mxu0
  %847 = vmatprep.mubr.bf16.mxu0 %v367
  %848 = vmatmul.mubr.bf16.gmra.mxu0 %v366
  %v849 = vpop.f32.mrf.mxu0
  %v850 = vadd.f32 %v192, %v849
  %v851 = vpop.f32.mrf.mxu0
  %v852 = vpop.f32.mrf.mxu0
  %v853 = vadd.f32 %v192, %v852
  %v854 = vpop.f32.mrf.mxu0
  %855 = vmatprep.mubr.bf16.mxu0 %v374
  %856 = vmatmul.mubr.bf16.gmra.mxu0 %v373
  %v857 = vpop.f32.mrf.mxu0
  %v858 = vadd.f32 %v192, %v857
  %v859 = vpop.f32.mrf.mxu0
  %v860 = vpop.f32.mrf.mxu0
  %v861 = vadd.f32 %v192, %v860
  %v862 = vpop.f32.mrf.mxu0
  %863 = vmatprep.mubr.bf16.mxu0 %v381
  %864 = vmatmul.mubr.bf16.gmra.mxu0 %v380
  %v865 = vpop.f32.mrf.mxu0
  %v866 = vadd.f32 %v192, %v865
  %v867 = vpop.f32.mrf.mxu0
  %v868 = vpop.f32.mrf.mxu0
  %v869 = vadd.f32 %v192, %v868
  %v870 = vpop.f32.mrf.mxu0
  %871 = vmatprep.mubr.bf16.mxu0 %v388
  %872 = vmatmul.mubr.bf16.gmra.mxu0 %v387
  %v873 = vpop.f32.mrf.mxu0
  %v874 = vadd.f32 %v192, %v873
  %v875 = vpop.f32.mrf.mxu0
  %v876 = vpop.f32.mrf.mxu0
  %v877 = vadd.f32 %v192, %v876
  %v878 = vpop.f32.mrf.mxu0
  %879 = vmatprep.mubr.bf16.mxu0 %v395
  %880 = vmatmul.mubr.bf16.gmra.mxu0 %v394
  %v881 = vpop.f32.mrf.mxu0
  %v882 = vadd.f32 %v192, %v881
  %v883 = vpop.f32.mrf.mxu0
  %v884 = vpop.f32.mrf.mxu0
  %v885 = vadd.f32 %v192, %v884
  %v886 = vpop.f32.mrf.mxu0
  %887 = vmatprep.mubr.bf16.mxu0 %v402
  %888 = vmatmul.mubr.bf16.gmra.mxu0 %v401
  %v889 = vpop.f32.mrf.mxu0
  %v890 = vadd.f32 %v192, %v889
  %v891 = vpop.f32.mrf.mxu0
  %v892 = vpop.f32.mrf.mxu0
  %v893 = vadd.f32 %v192, %v892
  %v894 = vpop.f32.mrf.mxu0
  %895 = vmatprep.mubr.bf16.mxu0 %v409
  %896 = vmatmul.mubr.bf16.gmra.mxu0 %v408
  %v897 = vpop.f32.mrf.mxu0
  %v898 = vadd.f32 %v192, %v897
  %v899 = vpop.f32.mrf.mxu0
  %v900 = vpop.f32.mrf.mxu0
  %v901 = vpop.f32.mrf.mxu0
  %902 = vdwg.mxu0
  %903 = vmatprep.subr.bf16.mxu0 0
  %904 = vmatpush1.bf16.msra.mxu0 %v718
  %905 = vmatprep.subr.bf16.mxu0 0
  %906 = vmatpush1.bf16.msra.mxu0 %v717
  %907 = vmatprep.subr.bf16.mxu0 0
  %908 = vmatpush1.bf16.msra.mxu0 %v716
  %909 = vmatprep.subr.bf16.mxu0 0
  %910 = vmatpush1.bf16.msra.mxu0 %v715
  %911 = vmatprep.subr.bf16.mxu0 0
  %912 = vmatpush1.bf16.msra.mxu0 %v714
  %913 = vmatprep.subr.bf16.mxu0 0
  %914 = vmatpush1.bf16.msra.mxu0 %v713
  %915 = vmatprep.subr.bf16.mxu0 0
  %916 = vmatpush1.bf16.msra.mxu0 %v712
  %917 = vmatprep.subr.bf16.mxu0 0
  %918 = vmatpush1.bf16.msra.mxu0 %v711
  %919 = vmatprep.subr.bf16.mxu0 0
  %920 = vmatpush2.bf16.msra.mxu0 %v726
  %921 = vmatprep.subr.bf16.mxu0 0
  %922 = vmatpush2.bf16.msra.mxu0 %v725
  %923 = vmatprep.subr.bf16.mxu0 0
  %924 = vmatpush2.bf16.msra.mxu0 %v724
  %925 = vmatprep.subr.bf16.mxu0 0
  %926 = vmatpush2.bf16.msra.mxu0 %v723
  %927 = vmatprep.subr.bf16.mxu0 0
  %928 = vmatpush2.bf16.msra.mxu0 %v722
  %929 = vmatprep.subr.bf16.mxu0 0
  %930 = vmatpush2.bf16.msra.mxu0 %v721
  %931 = vmatprep.subr.bf16.mxu0 0
  %932 = vmatpush2.bf16.msra.mxu0 %v720
  %933 = vmatprep.subr.bf16.mxu0 0
  %934 = vmatpush2.bf16.msra.mxu0 %v719
  %935 = vmatprep.mubr.bf16.mxu0 %v362
  %936 = vmatmul.mubr.bf16.gmra.mxu0 %v361
  %v937 = vpop.f32.mrf.mxu0
  %v938 = vadd.f32 %v842, %v937
  %v939 = vpop.f32.mrf.mxu0
  %v940 = vpop.f32.mrf.mxu0
  %v941 = vadd.f32 %v845, %v940
  %v942 = vpop.f32.mrf.mxu0
  %943 = vmatprep.mubr.bf16.mxu0 %v369
  %944 = vmatmul.mubr.bf16.gmra.mxu0 %v368
  %v945 = vpop.f32.mrf.mxu0
  %v946 = vadd.f32 %v850, %v945
  %v947 = vpop.f32.mrf.mxu0
  %v948 = vpop.f32.mrf.mxu0
  %v949 = vadd.f32 %v853, %v948
  %v950 = vpop.f32.mrf.mxu0
  %951 = vmatprep.mubr.bf16.mxu0 %v376
  %952 = vmatmul.mubr.bf16.gmra.mxu0 %v375
  %v953 = vpop.f32.mrf.mxu0
  %v954 = vadd.f32 %v858, %v953
  %v955 = vpop.f32.mrf.mxu0
  %v956 = vpop.f32.mrf.mxu0
  %v957 = vadd.f32 %v861, %v956
  %v958 = vpop.f32.mrf.mxu0
  %959 = vmatprep.mubr.bf16.mxu0 %v383
  %960 = vmatmul.mubr.bf16.gmra.mxu0 %v382
  %v961 = vpop.f32.mrf.mxu0
  %v962 = vadd.f32 %v866, %v961
  %v963 = vpop.f32.mrf.mxu0
  %v964 = vpop.f32.mrf.mxu0
  %v965 = vadd.f32 %v869, %v964
  %v966 = vpop.f32.mrf.mxu0
  %967 = vmatprep.mubr.bf16.mxu0 %v390
  %968 = vmatmul.mubr.bf16.gmra.mxu0 %v389
  %v969 = vpop.f32.mrf.mxu0
  %v970 = vadd.f32 %v874, %v969
  %v971 = vpop.f32.mrf.mxu0
  %v972 = vpop.f32.mrf.mxu0
  %v973 = vadd.f32 %v877, %v972
  %v974 = vpop.f32.mrf.mxu0
  %975 = vmatprep.mubr.bf16.mxu0 %v397
  %976 = vmatmul.mubr.bf16.gmra.mxu0 %v396
  %v977 = vpop.f32.mrf.mxu0
  %v978 = vadd.f32 %v882, %v977
  %v979 = vpop.f32.mrf.mxu0
  %v980 = vpop.f32.mrf.mxu0
  %v981 = vadd.f32 %v885, %v980
  %v982 = vpop.f32.mrf.mxu0
  %983 = vmatprep.mubr.bf16.mxu0 %v404
  %984 = vmatmul.mubr.bf16.gmra.mxu0 %v403
  %v985 = vpop.f32.mrf.mxu0
  %v986 = vadd.f32 %v890, %v985
  %v987 = vpop.f32.mrf.mxu0
  %v988 = vpop.f32.mrf.mxu0
  %v989 = vadd.f32 %v893, %v988
  %v990 = vpop.f32.mrf.mxu0
  %991 = vmatprep.mubr.bf16.mxu0 %v411
  %992 = vmatmul.mubr.bf16.gmra.mxu0 %v410
  %v993 = vpop.f32.mrf.mxu0
  %v994 = vadd.f32 %v898, %v993
  %v995 = vpop.f32.mrf.mxu0
  %v996 = vpop.f32.mrf.mxu0
  %v997 = vpop.f32.mrf.mxu0
  %998 = vdwg.mxu0
  %999 = vmatprep.subr.bf16.mxu0 0
  %1000 = vmatpush1.bf16.msra.mxu0 %v734
  %1001 = vmatprep.subr.bf16.mxu0 0
  %1002 = vmatpush1.bf16.msra.mxu0 %v733
  %1003 = vmatprep.subr.bf16.mxu0 0
  %1004 = vmatpush1.bf16.msra.mxu0 %v732
  %1005 = vmatprep.subr.bf16.mxu0 0
  %1006 = vmatpush1.bf16.msra.mxu0 %v731
  %1007 = vmatprep.subr.bf16.mxu0 0
  %1008 = vmatpush1.bf16.msra.mxu0 %v730
  %1009 = vmatprep.subr.bf16.mxu0 0
  %1010 = vmatpush1.bf16.msra.mxu0 %v729
  %1011 = vmatprep.subr.bf16.mxu0 0
  %1012 = vmatpush1.bf16.msra.mxu0 %v728
  %1013 = vmatprep.subr.bf16.mxu0 0
  %1014 = vmatpush1.bf16.msra.mxu0 %v727
  %1015 = vmatprep.subr.bf16.mxu0 0
  %1016 = vmatpush2.bf16.msra.mxu0 %v742
  %1017 = vmatprep.subr.bf16.mxu0 0
  %1018 = vmatpush2.bf16.msra.mxu0 %v741
  %1019 = vmatprep.subr.bf16.mxu0 0
  %1020 = vmatpush2.bf16.msra.mxu0 %v740
  %1021 = vmatprep.subr.bf16.mxu0 0
  %1022 = vmatpush2.bf16.msra.mxu0 %v739
  %1023 = vmatprep.subr.bf16.mxu0 0
  %1024 = vmatpush2.bf16.msra.mxu0 %v738
  %1025 = vmatprep.subr.bf16.mxu0 0
  %1026 = vmatpush2.bf16.msra.mxu0 %v737
  %1027 = vmatprep.subr.bf16.mxu0 0
  %1028 = vmatpush2.bf16.msra.mxu0 %v736
  %1029 = vmatprep.subr.bf16.mxu0 0
  %1030 = vmatpush2.bf16.msra.mxu0 %v735
  %1031 = vmatprep.mubr.bf16.mxu0 %v364
  %1032 = vmatmul.mubr.bf16.gmra.mxu0 %v363
  %v1033 = vpop.f32.mrf.mxu0
  %v1034 = vadd.f32 %v938, %v1033
  %v1035 = vpop.f32.mrf.mxu0
  %v1036 = vpop.f32.mrf.mxu0
  %v1037 = vadd.f32 %v941, %v1036
  %v1038 = vpop.f32.mrf.mxu0
  %1039 = vmatprep.mubr.bf16.mxu0 %v371
  %1040 = vmatmul.mubr.bf16.gmra.mxu0 %v370
  %v1041 = vpop.f32.mrf.mxu0
  %v1042 = vadd.f32 %v946, %v1041
  %v1043 = vpop.f32.mrf.mxu0
  %v1044 = vpop.f32.mrf.mxu0
  %v1045 = vadd.f32 %v949, %v1044
  %v1046 = vpop.f32.mrf.mxu0
  %1047 = vmatprep.mubr.bf16.mxu0 %v378
  %1048 = vmatmul.mubr.bf16.gmra.mxu0 %v377
  %v1049 = vpop.f32.mrf.mxu0
  %v1050 = vadd.f32 %v954, %v1049
  %v1051 = vpop.f32.mrf.mxu0
  %v1052 = vpop.f32.mrf.mxu0
  %v1053 = vadd.f32 %v957, %v1052
  %v1054 = vpop.f32.mrf.mxu0
  %1055 = vmatprep.mubr.bf16.mxu0 %v385
  %1056 = vmatmul.mubr.bf16.gmra.mxu0 %v384
  %v1057 = vpop.f32.mrf.mxu0
  %v1058 = vadd.f32 %v962, %v1057
  %v1059 = vpop.f32.mrf.mxu0
  %v1060 = vpop.f32.mrf.mxu0
  %v1061 = vadd.f32 %v965, %v1060
  %v1062 = vpop.f32.mrf.mxu0
  %1063 = vmatprep.mubr.bf16.mxu0 %v392
  %1064 = vmatmul.mubr.bf16.gmra.mxu0 %v391
  %v1065 = vpop.f32.mrf.mxu0
  %v1066 = vadd.f32 %v970, %v1065
  %v1067 = vpop.f32.mrf.mxu0
  %v1068 = vpop.f32.mrf.mxu0
  %v1069 = vadd.f32 %v973, %v1068
  %v1070 = vpop.f32.mrf.mxu0
  %1071 = vmatprep.mubr.bf16.mxu0 %v399
  %1072 = vmatmul.mubr.bf16.gmra.mxu0 %v398
  %v1073 = vpop.f32.mrf.mxu0
  %v1074 = vadd.f32 %v978, %v1073
  %v1075 = vpop.f32.mrf.mxu0
  %v1076 = vpop.f32.mrf.mxu0
  %v1077 = vadd.f32 %v981, %v1076
  %v1078 = vpop.f32.mrf.mxu0
  %1079 = vmatprep.mubr.bf16.mxu0 %v406
  %1080 = vmatmul.mubr.bf16.gmra.mxu0 %v405
  %v1081 = vpop.f32.mrf.mxu0
  %v1082 = vadd.f32 %v986, %v1081
  %v1083 = vpop.f32.mrf.mxu0
  %v1084 = vpop.f32.mrf.mxu0
  %v1085 = vadd.f32 %v989, %v1084
  %v1086 = vpop.f32.mrf.mxu0
  %1087 = vmatprep.mubr.bf16.mxu0 %v413
  %1088 = vmatmul.mubr.bf16.gmra.mxu0 %v412
  %v1089 = vpop.f32.mrf.mxu0
  %v1090 = vadd.f32 %v994, %v1089
  %v1091 = vpop.f32.mrf.mxu0
  %v1092 = vpop.f32.mrf.mxu0
  %v1093 = vpop.f32.mrf.mxu0
  %1094 = vdwg.mxu0
  %1095 = vmatprep.subr.bf16.mxu0 0
  %1096 = vmatpush1.bf16.msra.mxu0 %v750
  %1097 = vmatprep.subr.bf16.mxu0 0
  %1098 = vmatpush1.bf16.msra.mxu0 %v749
  %1099 = vmatprep.subr.bf16.mxu0 0
  %1100 = vmatpush1.bf16.msra.mxu0 %v748
  %1101 = vmatprep.subr.bf16.mxu0 0
  %1102 = vmatpush1.bf16.msra.mxu0 %v747
  %1103 = vmatprep.subr.bf16.mxu0 0
  %1104 = vmatpush1.bf16.msra.mxu0 %v746
  %1105 = vmatprep.subr.bf16.mxu0 0
  %1106 = vmatpush1.bf16.msra.mxu0 %v745
  %1107 = vmatprep.subr.bf16.mxu0 0
  %1108 = vmatpush1.bf16.msra.mxu0 %v744
  %1109 = vmatprep.subr.bf16.mxu0 0
  %1110 = vmatpush1.bf16.msra.mxu0 %v743
  %1111 = vmatprep.subr.bf16.mxu0 0
  %1112 = vmatpush2.bf16.msra.mxu0 0
  %1113 = vmatprep.subr.bf16.mxu0 0
  %1114 = vmatpush2.bf16.msra.mxu0 0
  %1115 = vmatprep.subr.bf16.mxu0 0
  %1116 = vmatpush2.bf16.msra.mxu0 0
  %1117 = vmatprep.subr.bf16.mxu0 0
  %1118 = vmatpush2.bf16.msra.mxu0 0
  %1119 = vmatprep.subr.bf16.mxu0 0
  %1120 = vmatpush2.bf16.msra.mxu0 0
  %1121 = vmatprep.subr.bf16.mxu0 0
  %1122 = vmatpush2.bf16.msra.mxu0 0
  %1123 = vmatprep.subr.bf16.mxu0 0
  %1124 = vmatpush2.bf16.msra.mxu0 0
  %1125 = vmatprep.subr.bf16.mxu0 0
  %1126 = vmatpush2.bf16.msra.mxu0 0
  %1127 = vmatprep.mubr.bf16.mxu0 0
  %1128 = vmatmul.mubr.bf16.gmra.mxu0 %v365
  %v1129 = vpop.f32.mrf.mxu0
  %v1130 = vadd.f32 %v1034, %v1129
  %v1131 = vpop.f32.mrf.mxu0
  %v1132 = vpop.f32.mrf.mxu0
  %v1133 = vadd.f32 %v1037, %v1132
  %v1134 = vpop.f32.mrf.mxu0
  %1135 = vmatprep.mubr.bf16.mxu0 0
  %1136 = vmatmul.mubr.bf16.gmra.mxu0 %v372
  %v1137 = vpop.f32.mrf.mxu0
  %v1138 = vadd.f32 %v1042, %v1137
  %v1139 = vpop.f32.mrf.mxu0
  %v1140 = vpop.f32.mrf.mxu0
  %v1141 = vadd.f32 %v1045, %v1140
  %v1142 = vpop.f32.mrf.mxu0
  %1143 = vmatprep.mubr.bf16.mxu0 0
  %1144 = vmatmul.mubr.bf16.gmra.mxu0 %v379
  %v1145 = vpop.f32.mrf.mxu0
  %v1146 = vadd.f32 %v1050, %v1145
  %v1147 = vpop.f32.mrf.mxu0
  %v1148 = vpop.f32.mrf.mxu0
  %v1149 = vadd.f32 %v1053, %v1148
  %v1150 = vpop.f32.mrf.mxu0
  %1151 = vmatprep.mubr.bf16.mxu0 0
  %1152 = vmatmul.mubr.bf16.gmra.mxu0 %v386
  %v1153 = vpop.f32.mrf.mxu0
  %v1154 = vadd.f32 %v1058, %v1153
  %v1155 = vpop.f32.mrf.mxu0
  %v1156 = vpop.f32.mrf.mxu0
  %v1157 = vadd.f32 %v1061, %v1156
  %v1158 = vpop.f32.mrf.mxu0
  %1159 = vmatprep.mubr.bf16.mxu0 0
  %1160 = vmatmul.mubr.bf16.gmra.mxu0 %v393
  %v1161 = vpop.f32.mrf.mxu0
  %v1162 = vadd.f32 %v1066, %v1161
  %v1163 = vpop.f32.mrf.mxu0
  %v1164 = vpop.f32.mrf.mxu0
  %v1165 = vadd.f32 %v1069, %v1164
  %v1166 = vpop.f32.mrf.mxu0
  %1167 = vmatprep.mubr.bf16.mxu0 0
  %1168 = vmatmul.mubr.bf16.gmra.mxu0 %v400
  %v1169 = vpop.f32.mrf.mxu0
  %v1170 = vadd.f32 %v1074, %v1169
  %v1171 = vpop.f32.mrf.mxu0
  %v1172 = vpop.f32.mrf.mxu0
  %v1173 = vadd.f32 %v1077, %v1172
  %v1174 = vpop.f32.mrf.mxu0
  %1175 = vmatprep.mubr.bf16.mxu0 0
  %1176 = vmatmul.mubr.bf16.gmra.mxu0 %v407
  %v1177 = vpop.f32.mrf.mxu0
  %v1178 = vadd.f32 %v1082, %v1177
  %v1179 = vpop.f32.mrf.mxu0
  %v1180 = vpop.f32.mrf.mxu0
  %v1181 = vadd.f32 %v1085, %v1180
  %v1182 = vpop.f32.mrf.mxu0
  %1183 = vmatprep.mubr.bf16.mxu0 0
  %1184 = vmatmul.mubr.bf16.gmra.mxu0 %v414
  %v1185 = vpop.f32.mrf.mxu0
  %v1186 = vadd.f32 %v1090, %v1185
  %v1187 = vpop.f32.mrf.mxu0
  %v1188 = vpop.f32.mrf.mxu0
  %v1189 = vpop.f32.mrf.mxu0
  %1190 = vdwg.mxu0
  %v1191 = vmax.f32 %v1130, 0.0
  %v1192 = vmax.f32 %v1133, 0.0
  %v1193 = vmax.f32 %v1138, 0.0
  %v1194 = vmax.f32 %v1141, 0.0
  %v1195 = vmax.f32 %v1146, 0.0
  %v1196 = vmax.f32 %v1149, 0.0
  %v1197 = vmax.f32 %v1154, 0.0
  %v1198 = vmax.f32 %v1157, 0.0
  %v1199 = vmax.f32 %v1162, 0.0
  %v1200 = vmax.f32 %v1165, 0.0
  %v1201 = vmax.f32 %v1170, 0.0
  %v1202 = vmax.f32 %v1173, 0.0
  %v1203 = vmax.f32 %v1178, 0.0
  %v1204 = vmax.f32 %v1181, 0.0
  %v1205 = vmax.f32 %v1186, 0.0
  %v1206 = vpack.c.bf16 %v1192, %v1191
  %v1207 = vpack.c.bf16 %v1194, %v1193
  %v1208 = vpack.c.bf16 %v1196, %v1195
  %v1209 = vpack.c.bf16 %v1198, %v1197
  %v1210 = vpack.c.bf16 %v1200, %v1199
  %v1211 = vpack.c.bf16 %v1202, %v1201
  %v1212 = vpack.c.bf16 %v1204, %v1203
  %v1213 = vpack.c.bf16 %v1205, %v1205
  %v1222 = vunpack.c.l.b16 %v1206
  %v1223 = vunpack.c.h.b16 %v1206
  %v1224 = vunpack.c.l.b16 %v1207
  %v1225 = vunpack.c.h.b16 %v1207
  %v1226 = vunpack.c.l.b16 %v1208
  %v1227 = vunpack.c.h.b16 %v1208
  %v1228 = vunpack.c.l.b16 %v1209
  %v1229 = vunpack.c.h.b16 %v1209
  %v1230 = vunpack.c.l.b16 %v1210
  %v1231 = vunpack.c.h.b16 %v1210
  %v1232 = vunpack.c.l.b16 %v1211
  %v1233 = vunpack.c.h.b16 %v1211
  %v1234 = vunpack.c.l.b16 %v1212
  %v1235 = vunpack.c.h.b16 %v1212
  %v1236 = vunpack.c.l.b16 %v1213
  %v1237 = vpack.c.b16 %v1222, %v1222
  %v1238 = vpack.c.b16 %v1223, %v1223
  %v1239 = vpack.c.b16 %v1224, %v1224
  %v1240 = vpack.c.b16 %v1225, %v1225
  %v1241 = vpack.c.b16 %v1226, %v1226
  %v1242 = vpack.c.b16 %v1227, %v1227
  %v1243 = vpack.c.b16 %v1228, %v1228
  %v1244 = vpack.c.b16 %v1229, %v1229
  %v1245 = vpack.c.b16 %v1230, %v1230
  %v1246 = vpack.c.b16 %v1231, %v1231
  %v1247 = vpack.c.b16 %v1232, %v1232
  %v1248 = vpack.c.b16 %v1233, %v1233
  %v1249 = vpack.c.b16 %v1234, %v1234
  %v1250 = vpack.c.b16 %v1235, %v1235
  %v1251 = vpack.c.b16 %v1236, %v1236
  %1267 = vst [vmem:[%s3] sm:$0xf] %v1237
  %1268 = vst [vmem:[%s3 + $0x4] sm:$0xf] %v1238
  %1269 = vst [vmem:[%s3 + $0x8] sm:$0xf] %v1239
  %1270 = vst [vmem:[%s3 + $0xc] sm:$0xf] %v1240
  %1271 = vst [vmem:[%s3 + $0x10] sm:$0xf] %v1241
  %1272 = vst [vmem:[%s3 + $0x14] sm:$0xf] %v1242
  %1273 = vst [vmem:[%s3 + $0x18] sm:$0xf] %v1243
  %1274 = vst [vmem:[%s3 + $0x1c] sm:$0xf] %v1244
  %1275 = vst [vmem:[%s3 + $0x20] sm:$0xf] %v1245
  %1276 = vst [vmem:[%s3 + $0x24] sm:$0xf] %v1246
  %1277 = vst [vmem:[%s3 + $0x28] sm:$0xf] %v1247
  %1278 = vst [vmem:[%s3 + $0x2c] sm:$0xf] %v1248
  %1279 = vst [vmem:[%s3 + $0x30] sm:$0xf] %v1249
  %1280 = vst [vmem:[%s3 + $0x34] sm:$0xf] %v1250
  %1281 = vst [vmem:[%s3 + $0x38] sm:$0xf] %v1251
  // Predicated region
  $region14: #{ss_model_forward.7} parent=0 // pred_check
    _
  $region15: #{ss_model_forward.7} parent=0 // pred_check_branch
    %1283 = sbr.rel (0) target = $region17
  $region16: #{ss_model_forward.7} parent=0 // pred_region
    _
  $region17: #{ss_model_forward.7} parent=0 // pred_fallthru
    _
  // Predicated region
  $region18: #{ss_model_forward.7} parent=0 // pred_check
    _
  $region19: #{ss_model_forward.7} parent=0 // pred_check_branch
    %1285 = sbr.rel (0) target = $region21
  $region20: #{ss_model_forward.7} parent=0 // pred_region
    _
  $region21: #{ss_model_forward.7} parent=0 // pred_fallthru
    _

// kernel: ss_model_forward.8
$region0: #{ss_model_forward.8}
  #allocation0 [shape = 'u32[]', space=smem, size = 0x4, offset = 0x4, fixed_abs, tag = 'smem constant byte address 0x4 - core index']
  #allocation1 [shape = 'u32[144,128]{1,0:T(1,128)}', space=vmem, size = 0x12000, scoped, tag = 'internal scratch']
  #allocation2 [shape = 'f32[16,256]{1,0:T(8,128)}', space=vmem, size = 0x4000, scoped, tag = 'scratch operand']
  %s0 = inlined_call_operand.vmem [shape: bf16[16,2048], index: 0, kind: input, shape index: {}]
  %s1 = inlined_call_operand.vmem [shape: bf16[2048,256], index: 1, kind: input, shape index: {}]
  %s2 = inlined_call_operand.vmem [shape: f32[1,256], index: 2, kind: input, shape index: {}]
  %s3 = inlined_call_operand.vmem [shape: bf16[16,256], index: 3, kind: output, shape index: {}]
  %s4 = sld [smem:[#allocation0]]
  $region76: #{ss_model_forward.8} parent=0
    _
  %s6 = ssub.s32 1, %s4
  %s7 = scalar_select 0, %s6, %s4
  $region1: #{ss_model_forward.8} parent=0
    #allocation3 [shape = 'u8[65536]{0}', space=vmem, size = 0x10000, scoped, tag = 'input window, operand 0']
    loop: start=0, step=1, limit=4
    $region2: #{ss_model_forward.8} parent=1 // loop_pre_header
      _
    $region3: #{ss_model_forward.8} parent=1 // loop_header
      %s9 = sphi 0, %s13
      %p10 = scmp.ge.s32.totalorder %s9, 4
      %s16 = sphi 0, %s35
      %s17 = sphi 0, %s31
      %s18 = sphi 0, %s27
      %s19 = sphi 0, %s16
      %s20 = sphi 0, %s17
      %s21 = sphi 0, %s18
      %s22 = sphi 0, %s19
      %s23 = sphi 0, %s20
      %s24 = sphi 0, %s21
      %s40 = sphi 0, %s42
      %s43 = sphi 0, %s40
      %s44 = sphi 0, %s43
      %s60 = sphi 0, %s44
      %s68 = sphi 0, %s70
      %s71 = sphi 0, %s68
      %s72 = sphi 0, %s71
      %s88 = sphi 0, %s72
      %s94 = sphi 0, %s96
      %s97 = sphi 0, %s94
      %s98 = sphi 0, %s97
      %s114 = sphi 0, %s98
      %s122 = sphi 0, %s124
      %s125 = sphi 0, %s122
      %s126 = sphi 0, %s125
      %s142 = sphi 0, %s126
    $region4: #{ss_model_forward.8} parent=1 // loop_header_branch
      %12 = sbr.rel (%p10) target = $region8
    $region5: #{ss_model_forward.8} parent=1 // loop_body
      %s14 = ssub.s32 %s9, 1
      %s15 = ssub.s32 %s9, 2
      %s25 = sadd.s32 1, %s18
      %p26 = scmp.ge.s32.totalorder %s25, 2
      %s27 = scalar_select %p26, 0, %s25
      %s28 = sadd.s32 1, %s17
      %s29 = scalar_select %p26, %s28, %s17
      %p30 = scmp.ge.s32.totalorder %s29, 1
      %s31 = scalar_select %p30, 0, %s29
      %s32 = sadd.s32 1, %s16
      %s33 = scalar_select %p30, %s32, %s16
      %p34 = scmp.ge.s32.totalorder %s33, 1
      %s35 = scalar_select %p34, 0, %s33
      %s36 = ssub.s32 %s16, %s35
      %s37 = ssub.s32 %s18, %s27
      %s38 = sor.u32 %s36, %s37
      %p39 = scmp.eq.s32.totalorder %s38, 0
      %s41 = sadd.s32 %s40, 1
      %s42 = scalar_select %p39, %s40, %s41
      %p45 = pneg %p39
      %p46 = scmp.eq.s32.totalorder %s9, 1
      %p47 = por %p45, %p46
      %p48 = scmp.ne.s32.totalorder %s40, %s43
      %p49 = scmp.eq.s32.totalorder %s9, 0
      %p50 = por %p48, %p49
      %p51 = scmp.ne.s32.totalorder %s40, %s43
      %p52 = scmp.eq.s32.totalorder %s14, 1
      %p53 = por %p51, %p52
      %p54 = scmp.ne.s32.totalorder %s43, %s44
      %p55 = scmp.eq.s32.totalorder %s14, 0
      %p56 = por %p54, %p55
      %p57 = scmp.ne.s32.totalorder %s43, %s44
      %p58 = scmp.eq.s32.totalorder %s15, 1
      %p59 = por %p57, %p58
      %p61 = scmp.ne.s32.totalorder %s44, %s60
      %p62 = scmp.eq.s32.totalorder %s15, 0
      %p63 = por %p61, %p62
      %s64 = ssub.s32 %s18, %s27
      %s65 = ssub.s32 %s17, %s31
      %s66 = sor.u32 %s64, %s65
      %p67 = scmp.eq.s32.totalorder %s66, 0
      %s69 = sadd.s32 %s68, 1
      %s70 = scalar_select %p67, %s68, %s69
      %p73 = pneg %p67
      %p74 = scmp.eq.s32.totalorder %s9, 1
      %p75 = por %p73, %p74
      %p76 = scmp.ne.s32.totalorder %s68, %s71
      %p77 = scmp.eq.s32.totalorder %s9, 0
      %p78 = por %p76, %p77
      %p79 = scmp.ne.s32.totalorder %s68, %s71
      %p80 = scmp.eq.s32.totalorder %s14, 1
      %p81 = por %p79, %p80
      %p82 = scmp.ne.s32.totalorder %s71, %s72
      %p83 = scmp.eq.s32.totalorder %s14, 0
      %p84 = por %p82, %p83
      %p85 = scmp.ne.s32.totalorder %s71, %s72
      %p86 = scmp.eq.s32.totalorder %s15, 1
      %p87 = por %p85, %p86
      %p89 = scmp.ne.s32.totalorder %s72, %s88
      %p90 = scmp.eq.s32.totalorder %s15, 0
      %p91 = por %p89, %p90
      %s92 = ssub.s32 %s17, %s31
      %p93 = scmp.eq.s32.totalorder %s92, 0
      %s95 = sadd.s32 %s94, 1
      %s96 = scalar_select %p93, %s94, %s95
      %p99 = pneg %p93
      %p100 = scmp.eq.s32.totalorder %s9, 1
      %p101 = por %p99, %p100
      %p102 = scmp.ne.s32.totalorder %s94, %s97
      %p103 = scmp.eq.s32.totalorder %s9, 0
      %p104 = por %p102, %p103
      %p105 = scmp.ne.s32.totalorder %s94, %s97
      %p106 = scmp.eq.s32.totalorder %s14, 1
      %p107 = por %p105, %p106
      %p108 = scmp.ne.s32.totalorder %s97, %s98
      %p109 = scmp.eq.s32.totalorder %s14, 0
      %p110 = por %p108, %p109
      %p111 = scmp.ne.s32.totalorder %s97, %s98
      %p112 = scmp.eq.s32.totalorder %s15, 1
      %p113 = por %p111, %p112
      %p115 = scmp.ne.s32.totalorder %s98, %s114
      %p116 = scmp.eq.s32.totalorder %s15, 0
      %p117 = por %p115, %p116
      %s118 = ssub.s32 %s16, %s35
      %s119 = ssub.s32 %s17, %s31
      %s120 = sor.u32 %s118, %s119
      %p121 = scmp.eq.s32.totalorder %s120, 0
      %s123 = sadd.s32 %s122, 1
      %s124 = scalar_select %p121, %s122, %s123
      %p127 = pneg %p121
      %p128 = scmp.eq.s32.totalorder %s9, 1
      %p129 = por %p127, %p128
      %p130 = scmp.ne.s32.totalorder %s122, %s125
      %p131 = scmp.eq.s32.totalorder %s9, 0
      %p132 = por %p130, %p131
      %p133 = scmp.ne.s32.totalorder %s122, %s125
      %p134 = scmp.eq.s32.totalorder %s14, 1
      %p135 = por %p133, %p134
      %p136 = scmp.ne.s32.totalorder %s125, %s126
      %p137 = scmp.eq.s32.totalorder %s14, 0
      %p138 = por %p136, %p137
      %p139 = scmp.ne.s32.totalorder %s125, %s126
      %p140 = scmp.eq.s32.totalorder %s15, 1
      %p141 = por %p139, %p140
      %p143 = scmp.ne.s32.totalorder %s126, %s142
      %p144 = scmp.eq.s32.totalorder %s15, 0
      %p145 = por %p143, %p144
      %p146 = scmp.le.s32.totalorder 1, %s9
      %p147 = scmp.lt.s32.totalorder %s9, 3
      %p148 = pnand %p146, %p147
      %p149 = pneg %p148
      // Predicated region
      $region9: #{ss_model_forward.8} parent=5 // pred_check
        _
      $region10: #{ss_model_forward.8} parent=5 // pred_check_branch
        %151 = sbr.rel (%p148) target = $region12
      $region11: #{ss_model_forward.8} parent=5 // pred_region
        %s152 = ssub.s32 %s9, 1
        // Predicated region
        $region13: #{ss_model_forward.8} parent=11 // pred_check
          %p153 = pneg %p110
        $region14: #{ss_model_forward.8} parent=11 // pred_check_branch
          %155 = sbr.rel (%p153) target = $region16
        $region15: #{ss_model_forward.8} parent=11 // pred_region
          %s156 = smul.u32 2, %s20
          %p157 = scmp.lt.s32.totalorder %s156, 1
          %s158 = scalar_select %p157, %s156, 1
          %s159 = scalar_lea.vmem %s2, %s158
          %s160 = smul.u32 2, %s20
        $region16: #{ss_model_forward.8} parent=11 // pred_fallthru
          _
      $region12: #{ss_model_forward.8} parent=5 // pred_fallthru
        _
      %p161 = scmp.lt.s32.totalorder %s9, 2
      // Predicated region
      $region17: #{ss_model_forward.8} parent=5 // pred_check
        %p162 = pneg %p161
      $region18: #{ss_model_forward.8} parent=5 // pred_check_branch
        %164 = sbr.rel (%p162) target = $region20
      $region19: #{ss_model_forward.8} parent=5 // pred_region
        // Predicated region
        $region21: #{ss_model_forward.8} parent=19 // pred_check
          %p165 = pneg %p50
        $region22: #{ss_model_forward.8} parent=19 // pred_check_branch
          %167 = sbr.rel (%p165) target = $region24
        $region23: #{ss_model_forward.8} parent=19 // pred_region
          %s168 = sand.u32 %s40, 1
          %s169 = sand.u32 %s40, 1
          %s170 = smul.addr %s169, 64
          %s171 = scalar_lea.vmem [#allocation3], %s170
          %s172 = smul.u32 2, %s16
          %s173 = smul.u32 8, %s18
          %s174 = smul.addr %s172, 16
          %s175 = sadd.s32 %s173, %s174
          %s176 = smul.addr %s175, 4
          %s177 = scalar_lea.vmem %s0, %s176
          // Predicated region
          $region25: #{ss_model_forward.8} parent=23 // pred_check
            _
          $region26: #{ss_model_forward.8} parent=23 // pred_check_branch
            %179 = sbr.rel (0) target = $region28
          $region27: #{ss_model_forward.8} parent=23 // pred_region
            // Predicated region
            $region29: #{ss_model_forward.8} parent=27 // pred_check
              _
            $region30: #{ss_model_forward.8} parent=27 // pred_check_branch
              %181 = sbr.rel (0) target = $region32
            $region31: #{ss_model_forward.8} parent=27 // pred_region
              loop: start=0, step=1, limit=1
              $region33: #{ss_model_forward.8} parent=31 // loop_pre_header
                _
              $region34: #{ss_model_forward.8} parent=31 // loop_header
                %s183 = sphi 0, %s187
                %p184 = scmp.ge.s32.totalorder %s183, 1
                %s188 = sphi %s177, %s177
                %s189 = sphi %s171, %s171
              $region35: #{ss_model_forward.8} parent=31 // loop_header_branch
                %186 = sbr.rel (%p184) target = $region39
              $region36: #{ss_model_forward.8} parent=31 // loop_body
                %v190 = vld [vmem:[%s188] sm:$0xff]
                %191 = vst [vmem:[%s189] sm:$0xff] %v190
                %v192 = vld [vmem:[%s188 + $0x8] sm:$0xff]
                %193 = vst [vmem:[%s189 + $0x8] sm:$0xff] %v192
                %v194 = vld [vmem:[%s188 + $0x10] sm:$0xff]
                %195 = vst [vmem:[%s189 + $0x10] sm:$0xff] %v194
                %v196 = vld [vmem:[%s188 + $0x18] sm:$0xff]
                %197 = vst [vmem:[%s189 + $0x18] sm:$0xff] %v196
                %v198 = vld [vmem:[%s188 + $0x40] sm:$0xff]
                %199 = vst [vmem:[%s189 + $0x20] sm:$0xff] %v198
                %v200 = vld [vmem:[%s188 + $0x48] sm:$0xff]
                %201 = vst [vmem:[%s189 + $0x28] sm:$0xff] %v200
                %v202 = vld [vmem:[%s188 + $0x50] sm:$0xff]
                %203 = vst [vmem:[%s189 + $0x30] sm:$0xff] %v202
                %v204 = vld [vmem:[%s188 + $0x58] sm:$0xff]
                %205 = vst [vmem:[%s189 + $0x38] sm:$0xff] %v204
              $region37: #{ss_model_forward.8} parent=31 // loop_footer
                %s187 = sadd.s32 1, %s183
              $region38: #{ss_model_forward.8} parent=31 // loop_footer_branch
                %182 = sbr.rel target = $region34
              $region39: #{ss_model_forward.8} parent=31 // loop_exit
                _
            $region32: #{ss_model_forward.8} parent=27 // pred_fallthru
              _
            // Predicated region
            $region40: #{ss_model_forward.8} parent=27 // pred_check
              _
            $region41: #{ss_model_forward.8} parent=27 // pred_check_branch
              %207 = sbr.rel target = $region43
            $region42: #{ss_model_forward.8} parent=27 // pred_region
              _
            $region43: #{ss_model_forward.8} parent=27 // pred_fallthru
              _
          $region28: #{ss_model_forward.8} parent=23 // pred_fallthru
            _
          %208 = vnop
        $region24: #{ss_model_forward.8} parent=19 // pred_fallthru
          _
        // Predicated region
        $region44: #{ss_model_forward.8} parent=19 // pred_check
          %p209 = pneg %p78
        $region45: #{ss_model_forward.8} parent=19 // pred_check_branch
          %211 = sbr.rel (%p209) target = $region47
        $region46: #{ss_model_forward.8} parent=19 // pred_region
          %s212 = smul.u32 128, %s18
          %s213 = smul.u32 2, %s17
          %p214 = scmp.lt.s32.totalorder %s212, 255
          %s215 = scalar_select %p214, %s212, 255
          %p216 = scmp.lt.s32.totalorder %s213, 1
          %s217 = scalar_select %p216, %s213, 1
          %s218 = smul.addr %s215, 2
          %s219 = sadd.s32 %s217, %s218
          %s220 = smul.addr %s219, 4
          %s221 = scalar_lea.vmem %s1, %s220
          %s222 = smul.u32 128, %s18
          %s223 = smul.u32 2, %s17
        $region47: #{ss_model_forward.8} parent=19 // pred_fallthru
          _
      $region20: #{ss_model_forward.8} parent=5 // pred_fallthru
        _
      %p224 = scmp.le.s32.totalorder 1, %s9
      %p225 = scmp.lt.s32.totalorder %s9, 3
      %p226 = pnand %p224, %p225
      %p227 = pneg %p226
      // Predicated region
      $region48: #{ss_model_forward.8} parent=5 // pred_check
        _
      $region49: #{ss_model_forward.8} parent=5 // pred_check_branch
        %229 = sbr.rel (%p226) target = $region51
      $region50: #{ss_model_forward.8} parent=5 // pred_region
        %s230 = ssub.s32 %s9, 1
        %s231 = sand.u32 %s43, 1
        %s232 = sand.u32 %s43, 1
        %s233 = smul.addr %s232, 64
        %s234 = scalar_lea.vmem [#allocation3], %s233
        // Predicated region
        $region52: #{ss_model_forward.8} parent=50 // pred_check
          %p235 = pneg %p56
        $region53: #{ss_model_forward.8} parent=50 // pred_check_branch
          %237 = sbr.rel (%p235) target = $region55
        $region54: #{ss_model_forward.8} parent=50 // pred_region
          _
        $region55: #{ss_model_forward.8} parent=50 // pred_fallthru
          _
        %s238 = sand.u32 %s43, 1
        %s239 = sand.u32 %s43, 1
        %s240 = smul.addr %s239, 64
        %s241 = scalar_lea.vmem [#allocation3], %s240
        %p242 = pneg %p56
        %p243 = pneg %p53
        %s244 = smul.u32 128, %s21
        %s245 = smul.u32 2, %s20
        %p246 = scmp.lt.s32.totalorder %s244, 255
        %s247 = scalar_select %p246, %s244, 255
        %p248 = scmp.lt.s32.totalorder %s245, 1
        %s249 = scalar_select %p248, %s245, 1
        %s250 = smul.addr %s247, 2
        %s251 = sadd.s32 %s249, %s250
        %s252 = smul.addr %s251, 4
        %s253 = scalar_lea.vmem %s1, %s252
        %p254 = pneg %p84
        %p255 = pneg %p81
        %s256 = smul.u32 2, %s20
        %p257 = scmp.lt.s32.totalorder %s256, 1
        %s258 = scalar_select %p257, %s256, 1
        %s259 = scalar_lea.vmem %s2, %s258
        %p260 = pneg %p110
        %p261 = pneg %p107
        %p262 = pneg %p138
        %p263 = pneg %p135
        %s264 = smul.u32 2, %s19
        %s265 = smul.u32 2, %s20
        %p266 = scmp.lt.s32.totalorder %s264, 1
        %s267 = scalar_select %p266, %s264, 1
        %p268 = scmp.lt.s32.totalorder %s265, 1
        %s269 = scalar_select %p268, %s265, 1
        %s270 = smul.addr %s267, 2
        %s271 = sadd.s32 %s269, %s270
        %s272 = smul.addr %s271, 4
        %s273 = scalar_lea.vmem %s3, %s272
        %s274 = smul.u32 2, %s19
        %s275 = smul.u32 8, %s21
        %s276 = smul.u32 128, %s21
        %s277 = smul.u32 2, %s20
        %p278 = scmp.lt.s32.totalorder %s276, 255
        %s279 = scalar_select %p278, %s276, 255
        %p280 = scmp.lt.s32.totalorder %s277, 1
        %s281 = scalar_select %p280, %s277, 1
        %s282 = smul.addr %s279, 2
        %s283 = sadd.s32 %s281, %s282
        %s284 = smul.addr %s283, 4
        %s285 = scalar_lea.vmem %s1, %s284
        %s286 = smul.u32 128, %s21
        %s287 = smul.u32 2, %s20
        %s288 = smul.u32 2, %s20
        %p289 = scmp.lt.s32.totalorder %s288, 1
        %s290 = scalar_select %p289, %s288, 1
        %s291 = scalar_lea.vmem %s2, %s290
        %s292 = smul.u32 2, %s20
        %s293 = smul.u32 2, %s19
        %s294 = smul.u32 2, %s20
        %p295 = scmp.lt.s32.totalorder %s293, 1
        %s296 = scalar_select %p295, %s293, 1
        %p297 = scmp.lt.s32.totalorder %s294, 1
        %s298 = scalar_select %p297, %s294, 1
        %s299 = smul.addr %s296, 2
        %s300 = sadd.s32 %s298, %s299
        %s301 = smul.addr %s300, 4
        %s302 = scalar_lea.vmem %s3, %s301
        %s303 = smul.u32 2, %s19
        %s304 = smul.u32 2, %s20
        %p305 = scmp.eq.s32.totalorder %s21, 0
        // Predicated region
        $region56: #{ss_model_forward.8} parent=50 // pred_check
          %p306 = pneg %p305
        $region57: #{ss_model_forward.8} parent=50 // pred_check_branch
          %308 = sbr.rel (%p306) target = $region59
        $region58: #{ss_model_forward.8} parent=50 // pred_region
          %309 = vst [vmem:[#allocation2] sm:$0xff] 0.0
          %310 = vst [vmem:[#allocation2 + $0x8] sm:$0xff] 0.0
          %311 = vst [vmem:[#allocation2 + $0x10] sm:$0xff] 0.0
          %312 = vst [vmem:[#allocation2 + $0x18] sm:$0xff] 0.0
        $region59: #{ss_model_forward.8} parent=50 // pred_fallthru
          _
        %v313 = vld [vmem:[#allocation2] sm:$0xff]
        %v314 = vld [vmem:[#allocation2 + $0x8] sm:$0xff]
        %v315 = vld [vmem:[#allocation2 + $0x10] sm:$0xff]
        %v316 = vld [vmem:[#allocation2 + $0x18] sm:$0xff]
        %v317 = vld [vmem:[%s234] sm:$0xff]
        %v318 = vld [vmem:[%s234 + $0x8] sm:$0xff]
        %v319 = vld [vmem:[%s234 + $0x10] sm:$0xff]
        %v320 = vld [vmem:[%s234 + $0x18] sm:$0xff]
        %v321 = vld [vmem:[%s234 + $0x20] sm:$0xff]
        %v322 = vld [vmem:[%s234 + $0x28] sm:$0xff]
        %v323 = vld [vmem:[%s234 + $0x30] sm:$0xff]
        %v324 = vld [vmem:[%s234 + $0x38] sm:$0xff]
        %v325 = vld [vmem:[%s285] sm:$0xff]
        %v326 = vld [vmem:[%s285 + $0x8] sm:$0xff]
        %v327 = vld [vmem:[%s285 + $0x10] sm:$0xff]
        %v328 = vld [vmem:[%s285 + $0x18] sm:$0xff]
        %v329 = vld [vmem:[%s285 + $0x20] sm:$0xff]
        %v330 = vld [vmem:[%s285 + $0x28] sm:$0xff]
        %v331 = vld [vmem:[%s285 + $0x30] sm:$0xff]
        %v332 = vld [vmem:[%s285 + $0x38] sm:$0xff]
        %v333 = vld [vmem:[%s285 + $0x40] sm:$0xff]
        %v334 = vld [vmem:[%s285 + $0x48] sm:$0xff]
        %v335 = vld [vmem:[%s285 + $0x50] sm:$0xff]
        %v336 = vld [vmem:[%s285 + $0x58] sm:$0xff]
        %v337 = vld [vmem:[%s285 + $0x60] sm:$0xff]
        %v338 = vld [vmem:[%s285 + $0x68] sm:$0xff]
        %v339 = vld [vmem:[%s285 + $0x70] sm:$0xff]
        %v340 = vld [vmem:[%s285 + $0x78] sm:$0xff]
        %v341 = vld [vmem:[%s285 + $0x80] sm:$0xff]
        %v342 = vld [vmem:[%s285 + $0x88] sm:$0xff]
        %v343 = vld [vmem:[%s285 + $0x90] sm:$0xff]
        %v344 = vld [vmem:[%s285 + $0x98] sm:$0xff]
        %v345 = vld [vmem:[%s285 + $0xa0] sm:$0xff]
        %v346 = vld [vmem:[%s285 + $0xa8] sm:$0xff]
        %v347 = vld [vmem:[%s285 + $0xb0] sm:$0xff]
        %v348 = vld [vmem:[%s285 + $0xb8] sm:$0xff]
        %v349 = vld [vmem:[%s285 + $0xc0] sm:$0xff]
        %v350 = vld [vmem:[%s285 + $0xc8] sm:$0xff]
        %v351 = vld [vmem:[%s285 + $0xd0] sm:$0xff]
        %v352 = vld [vmem:[%s285 + $0xd8] sm:$0xff]
        %v353 = vld [vmem:[%s285 + $0xe0] sm:$0xff]
        %v354 = vld [vmem:[%s285 + $0xe8] sm:$0xff]
        %v355 = vld [vmem:[%s285 + $0xf0] sm:$0xff]
        %v356 = vld [vmem:[%s285 + $0xf8] sm:$0xff]
        %v357 = vld [vmem:[%s285 + $0x100] sm:$0xff]
        %v358 = vld [vmem:[%s285 + $0x108] sm:$0xff]
        %v359 = vld [vmem:[%s285 + $0x110] sm:$0xff]
        %v360 = vld [vmem:[%s285 + $0x118] sm:$0xff]
        %v361 = vld [vmem:[%s285 + $0x120] sm:$0xff]
        %v362 = vld [vmem:[%s285 + $0x128] sm:$0xff]
        %v363 = vld [vmem:[%s285 + $0x130] sm:$0xff]
        %v364 = vld [vmem:[%s285 + $0x138] sm:$0xff]
        %v365 = vld [vmem:[%s285 + $0x140] sm:$0xff]
        %v366 = vld [vmem:[%s285 + $0x148] sm:$0xff]
        %v367 = vld [vmem:[%s285 + $0x150] sm:$0xff]
        %v368 = vld [vmem:[%s285 + $0x158] sm:$0xff]
        %v369 = vld [vmem:[%s285 + $0x160] sm:$0xff]
        %v370 = vld [vmem:[%s285 + $0x168] sm:$0xff]
        %v371 = vld [vmem:[%s285 + $0x170] sm:$0xff]
        %v372 = vld [vmem:[%s285 + $0x178] sm:$0xff]
        %v373 = vld [vmem:[%s285 + $0x180] sm:$0xff]
        %v374 = vld [vmem:[%s285 + $0x188] sm:$0xff]
        %v375 = vld [vmem:[%s285 + $0x190] sm:$0xff]
        %v376 = vld [vmem:[%s285 + $0x198] sm:$0xff]
        %v377 = vld [vmem:[%s285 + $0x1a0] sm:$0xff]
        %v378 = vld [vmem:[%s285 + $0x1a8] sm:$0xff]
        %v379 = vld [vmem:[%s285 + $0x1b0] sm:$0xff]
        %v380 = vld [vmem:[%s285 + $0x1b8] sm:$0xff]
        %v381 = vld [vmem:[%s285 + $0x1c0] sm:$0xff]
        %v382 = vld [vmem:[%s285 + $0x1c8] sm:$0xff]
        %v383 = vld [vmem:[%s285 + $0x1d0] sm:$0xff]
        %v384 = vld [vmem:[%s285 + $0x1d8] sm:$0xff]
        %v385 = vld [vmem:[%s285 + $0x1e0] sm:$0xff]
        %v386 = vld [vmem:[%s285 + $0x1e8] sm:$0xff]
        %v387 = vld [vmem:[%s285 + $0x1f0] sm:$0xff]
        %v388 = vld [vmem:[%s285 + $0x1f8] sm:$0xff]
        %v389 = vld [vmem:[%s285 + $0x200] sm:$0xff]
        %v390 = vld [vmem:[%s285 + $0x208] sm:$0xff]
        %v391 = vld [vmem:[%s285 + $0x210] sm:$0xff]
        %v392 = vld [vmem:[%s285 + $0x218] sm:$0xff]
        %v393 = vld [vmem:[%s285 + $0x220] sm:$0xff]
        %v394 = vld [vmem:[%s285 + $0x228] sm:$0xff]
        %v395 = vld [vmem:[%s285 + $0x230] sm:$0xff]
        %v396 = vld [vmem:[%s285 + $0x238] sm:$0xff]
        %v397 = vld [vmem:[%s285 + $0x240] sm:$0xff]
        %v398 = vld [vmem:[%s285 + $0x248] sm:$0xff]
        %v399 = vld [vmem:[%s285 + $0x250] sm:$0xff]
        %v400 = vld [vmem:[%s285 + $0x258] sm:$0xff]
        %v401 = vld [vmem:[%s285 + $0x260] sm:$0xff]
        %v402 = vld [vmem:[%s285 + $0x268] sm:$0xff]
        %v403 = vld [vmem:[%s285 + $0x270] sm:$0xff]
        %v404 = vld [vmem:[%s285 + $0x278] sm:$0xff]
        %v405 = vld [vmem:[%s285 + $0x280] sm:$0xff]
        %v406 = vld [vmem:[%s285 + $0x288] sm:$0xff]
        %v407 = vld [vmem:[%s285 + $0x290] sm:$0xff]
        %v408 = vld [vmem:[%s285 + $0x298] sm:$0xff]
        %v409 = vld [vmem:[%s285 + $0x2a0] sm:$0xff]
        %v410 = vld [vmem:[%s285 + $0x2a8] sm:$0xff]
        %v411 = vld [vmem:[%s285 + $0x2b0] sm:$0xff]
        %v412 = vld [vmem:[%s285 + $0x2b8] sm:$0xff]
        %v413 = vld [vmem:[%s285 + $0x2c0] sm:$0xff]
        %v414 = vld [vmem:[%s285 + $0x2c8] sm:$0xff]
        %v415 = vld [vmem:[%s285 + $0x2d0] sm:$0xff]
        %v416 = vld [vmem:[%s285 + $0x2d8] sm:$0xff]
        %v417 = vld [vmem:[%s285 + $0x2e0] sm:$0xff]
        %v418 = vld [vmem:[%s285 + $0x2e8] sm:$0xff]
        %v419 = vld [vmem:[%s285 + $0x2f0] sm:$0xff]
        %v420 = vld [vmem:[%s285 + $0x2f8] sm:$0xff]
        %v421 = vld [vmem:[%s285 + $0x300] sm:$0xff]
        %v422 = vld [vmem:[%s285 + $0x308] sm:$0xff]
        %v423 = vld [vmem:[%s285 + $0x310] sm:$0xff]
        %v424 = vld [vmem:[%s285 + $0x318] sm:$0xff]
        %v425 = vld [vmem:[%s285 + $0x320] sm:$0xff]
        %v426 = vld [vmem:[%s285 + $0x328] sm:$0xff]
        %v427 = vld [vmem:[%s285 + $0x330] sm:$0xff]
        %v428 = vld [vmem:[%s285 + $0x338] sm:$0xff]
        %v429 = vld [vmem:[%s285 + $0x340] sm:$0xff]
        %v430 = vld [vmem:[%s285 + $0x348] sm:$0xff]
        %v431 = vld [vmem:[%s285 + $0x350] sm:$0xff]
        %v432 = vld [vmem:[%s285 + $0x358] sm:$0xff]
        %v433 = vld [vmem:[%s285 + $0x360] sm:$0xff]
        %v434 = vld [vmem:[%s285 + $0x368] sm:$0xff]
        %v435 = vld [vmem:[%s285 + $0x370] sm:$0xff]
        %v436 = vld [vmem:[%s285 + $0x378] sm:$0xff]
        %v437 = vld [vmem:[%s285 + $0x380] sm:$0xff]
        %v438 = vld [vmem:[%s285 + $0x388] sm:$0xff]
        %v439 = vld [vmem:[%s285 + $0x390] sm:$0xff]
        %v440 = vld [vmem:[%s285 + $0x398] sm:$0xff]
        %v441 = vld [vmem:[%s285 + $0x3a0] sm:$0xff]
        %v442 = vld [vmem:[%s285 + $0x3a8] sm:$0xff]
        %v443 = vld [vmem:[%s285 + $0x3b0] sm:$0xff]
        %v444 = vld [vmem:[%s285 + $0x3b8] sm:$0xff]
        %v445 = vld [vmem:[%s285 + $0x3c0] sm:$0xff]
        %v446 = vld [vmem:[%s285 + $0x3c8] sm:$0xff]
        %v447 = vld [vmem:[%s285 + $0x3d0] sm:$0xff]
        %v448 = vld [vmem:[%s285 + $0x3d8] sm:$0xff]
        %v449 = vld [vmem:[%s285 + $0x3e0] sm:$0xff]
        %v450 = vld [vmem:[%s285 + $0x3e8] sm:$0xff]
        %v451 = vld [vmem:[%s285 + $0x3f0] sm:$0xff]
        %v452 = vld [vmem:[%s285 + $0x3f8] sm:$0xff]
        %v461 = vunpack.c.l.b16 %v317
        %v462 = vunpack.c.h.b16 %v317
        %v463 = vunpack.c.l.b16 %v318
        %v464 = vunpack.c.h.b16 %v318
        %v465 = vunpack.c.l.b16 %v319
        %v466 = vunpack.c.h.b16 %v319
        %v467 = vunpack.c.l.b16 %v320
        %v468 = vunpack.c.h.b16 %v320
        %v469 = vunpack.c.l.b16 %v321
        %v470 = vunpack.c.h.b16 %v321
        %v471 = vunpack.c.l.b16 %v322
        %v472 = vunpack.c.h.b16 %v322
        %v473 = vunpack.c.l.b16 %v323
        %v474 = vunpack.c.h.b16 %v323
        %v475 = vunpack.c.l.b16 %v324
        %v476 = vunpack.c.h.b16 %v324
        %v477 = vpack.c.b16 %v469, %v461
        %v478 = vpack.c.b16 %v470, %v462
        %v479 = vpack.c.b16 %v471, %v463
        %v480 = vpack.c.b16 %v472, %v464
        %v481 = vpack.c.b16 %v473, %v465
        %v482 = vpack.c.b16 %v474, %v466
        %v483 = vpack.c.b16 %v475, %v467
        %v484 = vpack.c.b16 %v476, %v468
        %v621 = vunpack.c.l.b16 %v325
        %v622 = vunpack.c.h.b16 %v325
        %v623 = vunpack.c.l.b16 %v326
        %v624 = vunpack.c.h.b16 %v326
        %v625 = vunpack.c.l.b16 %v327
        %v626 = vunpack.c.h.b16 %v327
        %v627 = vunpack.c.l.b16 %v328
        %v628 = vunpack.c.h.b16 %v328
        %v629 = vunpack.c.l.b16 %v329
        %v630 = vunpack.c.h.b16 %v329
        %v631 = vunpack.c.l.b16 %v330
        %v632 = vunpack.c.h.b16 %v330
        %v633 = vunpack.c.l.b16 %v331
        %v634 = vunpack.c.h.b16 %v331
        %v635 = vunpack.c.l.b16 %v332
        %v636 = vunpack.c.h.b16 %v332
        %v637 = vunpack.c.l.b16 %v333
        %v638 = vunpack.c.h.b16 %v333
        %v639 = vunpack.c.l.b16 %v334
        %v640 = vunpack.c.h.b16 %v334
        %v641 = vunpack.c.l.b16 %v335
        %v642 = vunpack.c.h.b16 %v335
        %v643 = vunpack.c.l.b16 %v336
        %v644 = vunpack.c.h.b16 %v336
        %v645 = vunpack.c.l.b16 %v337
        %v646 = vunpack.c.h.b16 %v337
        %v647 = vunpack.c.l.b16 %v338
        %v648 = vunpack.c.h.b16 %v338
        %v649 = vunpack.c.l.b16 %v339
        %v650 = vunpack.c.h.b16 %v339
        %v651 = vunpack.c.l.b16 %v340
        %v652 = vunpack.c.h.b16 %v340
        %v653 = vunpack.c.l.b16 %v341
        %v654 = vunpack.c.h.b16 %v341
        %v655 = vunpack.c.l.b16 %v342
        %v656 = vunpack.c.h.b16 %v342
        %v657 = vunpack.c.l.b16 %v343
        %v658 = vunpack.c.h.b16 %v343
        %v659 = vunpack.c.l.b16 %v344
        %v660 = vunpack.c.h.b16 %v344
        %v661 = vunpack.c.l.b16 %v345
        %v662 = vunpack.c.h.b16 %v345
        %v663 = vunpack.c.l.b16 %v346
        %v664 = vunpack.c.h.b16 %v346
        %v665 = vunpack.c.l.b16 %v347
        %v666 = vunpack.c.h.b16 %v347
        %v667 = vunpack.c.l.b16 %v348
        %v668 = vunpack.c.h.b16 %v348
        %v669 = vunpack.c.l.b16 %v349
        %v670 = vunpack.c.h.b16 %v349
        %v671 = vunpack.c.l.b16 %v350
        %v672 = vunpack.c.h.b16 %v350
        %v673 = vunpack.c.l.b16 %v351
        %v674 = vunpack.c.h.b16 %v351
        %v675 = vunpack.c.l.b16 %v352
        %v676 = vunpack.c.h.b16 %v352
        %v677 = vunpack.c.l.b16 %v353
        %v678 = vunpack.c.h.b16 %v353
        %v679 = vunpack.c.l.b16 %v354
        %v680 = vunpack.c.h.b16 %v354
        %v681 = vunpack.c.l.b16 %v355
        %v682 = vunpack.c.h.b16 %v355
        %v683 = vunpack.c.l.b16 %v356
        %v684 = vunpack.c.h.b16 %v356
        %v685 = vunpack.c.l.b16 %v357
        %v686 = vunpack.c.h.b16 %v357
        %v687 = vunpack.c.l.b16 %v358
        %v688 = vunpack.c.h.b16 %v358
        %v689 = vunpack.c.l.b16 %v359
        %v690 = vunpack.c.h.b16 %v359
        %v691 = vunpack.c.l.b16 %v360
        %v692 = vunpack.c.h.b16 %v360
        %v693 = vunpack.c.l.b16 %v361
        %v694 = vunpack.c.h.b16 %v361
        %v695 = vunpack.c.l.b16 %v362
        %v696 = vunpack.c.h.b16 %v362
        %v697 = vunpack.c.l.b16 %v363
        %v698 = vunpack.c.h.b16 %v363
        %v699 = vunpack.c.l.b16 %v364
        %v700 = vunpack.c.h.b16 %v364
        %v701 = vunpack.c.l.b16 %v365
        %v702 = vunpack.c.h.b16 %v365
        %v703 = vunpack.c.l.b16 %v366
        %v704 = vunpack.c.h.b16 %v366
        %v705 = vunpack.c.l.b16 %v367
        %v706 = vunpack.c.h.b16 %v367
        %v707 = vunpack.c.l.b16 %v368
        %v708 = vunpack.c.h.b16 %v368
        %v709 = vunpack.c.l.b16 %v369
        %v710 = vunpack.c.h.b16 %v369
        %v711 = vunpack.c.l.b16 %v370
        %v712 = vunpack.c.h.b16 %v370
        %v713 = vunpack.c.l.b16 %v371
        %v714 = vunpack.c.h.b16 %v371
        %v715 = vunpack.c.l.b16 %v372
        %v716 = vunpack.c.h.b16 %v372
        %v717 = vunpack.c.l.b16 %v373
        %v718 = vunpack.c.h.b16 %v373
        %v719 = vunpack.c.l.b16 %v374
        %v720 = vunpack.c.h.b16 %v374
        %v721 = vunpack.c.l.b16 %v375
        %v722 = vunpack.c.h.b16 %v375
        %v723 = vunpack.c.l.b16 %v376
        %v724 = vunpack.c.h.b16 %v376
        %v725 = vunpack.c.l.b16 %v377
        %v726 = vunpack.c.h.b16 %v377
        %v727 = vunpack.c.l.b16 %v378
        %v728 = vunpack.c.h.b16 %v378
        %v729 = vunpack.c.l.b16 %v379
        %v730 = vunpack.c.h.b16 %v379
        %v731 = vunpack.c.l.b16 %v380
        %v732 = vunpack.c.h.b16 %v380
        %v733 = vunpack.c.l.b16 %v381
        %v734 = vunpack.c.h.b16 %v381
        %v735 = vunpack.c.l.b16 %v382
        %v736 = vunpack.c.h.b16 %v382
        %v737 = vunpack.c.l.b16 %v383
        %v738 = vunpack.c.h.b16 %v383
        %v739 = vunpack.c.l.b16 %v384
        %v740 = vunpack.c.h.b16 %v384
        %v741 = vunpack.c.l.b16 %v385
        %v742 = vunpack.c.h.b16 %v385
        %v743 = vunpack.c.l.b16 %v386
        %v744 = vunpack.c.h.b16 %v386
        %v745 = vunpack.c.l.b16 %v387
        %v746 = vunpack.c.h.b16 %v387
        %v747 = vunpack.c.l.b16 %v388
        %v748 = vunpack.c.h.b16 %v388
        %v749 = vunpack.c.l.b16 %v389
        %v750 = vunpack.c.h.b16 %v389
        %v751 = vunpack.c.l.b16 %v390
        %v752 = vunpack.c.h.b16 %v390
        %v753 = vunpack.c.l.b16 %v391
        %v754 = vunpack.c.h.b16 %v391
        %v755 = vunpack.c.l.b16 %v392
        %v756 = vunpack.c.h.b16 %v392
        %v757 = vunpack.c.l.b16 %v393
        %v758 = vunpack.c.h.b16 %v393
        %v759 = vunpack.c.l.b16 %v394
        %v760 = vunpack.c.h.b16 %v394
        %v761 = vunpack.c.l.b16 %v395
        %v762 = vunpack.c.h.b16 %v395
        %v763 = vunpack.c.l.b16 %v396
        %v764 = vunpack.c.h.b16 %v396
        %v765 = vunpack.c.l.b16 %v397
        %v766 = vunpack.c.h.b16 %v397
        %v767 = vunpack.c.l.b16 %v398
        %v768 = vunpack.c.h.b16 %v398
        %v769 = vunpack.c.l.b16 %v399
        %v770 = vunpack.c.h.b16 %v399
        %v771 = vunpack.c.l.b16 %v400
        %v772 = vunpack.c.h.b16 %v400
        %v773 = vunpack.c.l.b16 %v401
        %v774 = vunpack.c.h.b16 %v401
        %v775 = vunpack.c.l.b16 %v402
        %v776 = vunpack.c.h.b16 %v402
        %v777 = vunpack.c.l.b16 %v403
        %v778 = vunpack.c.h.b16 %v403
        %v779 = vunpack.c.l.b16 %v404
        %v780 = vunpack.c.h.b16 %v404
        %v781 = vunpack.c.l.b16 %v405
        %v782 = vunpack.c.h.b16 %v405
        %v783 = vunpack.c.l.b16 %v406
        %v784 = vunpack.c.h.b16 %v406
        %v785 = vunpack.c.l.b16 %v407
        %v786 = vunpack.c.h.b16 %v407
        %v787 = vunpack.c.l.b16 %v408
        %v788 = vunpack.c.h.b16 %v408
        %v789 = vunpack.c.l.b16 %v409
        %v790 = vunpack.c.h.b16 %v409
        %v791 = vunpack.c.l.b16 %v410
        %v792 = vunpack.c.h.b16 %v410
        %v793 = vunpack.c.l.b16 %v411
        %v794 = vunpack.c.h.b16 %v411
        %v795 = vunpack.c.l.b16 %v412
        %v796 = vunpack.c.h.b16 %v412
        %v797 = vunpack.c.l.b16 %v413
        %v798 = vunpack.c.h.b16 %v413
        %v799 = vunpack.c.l.b16 %v414
        %v800 = vunpack.c.h.b16 %v414
        %v801 = vunpack.c.l.b16 %v415
        %v802 = vunpack.c.h.b16 %v415
        %v803 = vunpack.c.l.b16 %v416
        %v804 = vunpack.c.h.b16 %v416
        %v805 = vunpack.c.l.b16 %v417
        %v806 = vunpack.c.h.b16 %v417
        %v807 = vunpack.c.l.b16 %v418
        %v808 = vunpack.c.h.b16 %v418
        %v809 = vunpack.c.l.b16 %v419
        %v810 = vunpack.c.h.b16 %v419
        %v811 = vunpack.c.l.b16 %v420
        %v812 = vunpack.c.h.b16 %v420
        %v813 = vunpack.c.l.b16 %v421
        %v814 = vunpack.c.h.b16 %v421
        %v815 = vunpack.c.l.b16 %v422
        %v816 = vunpack.c.h.b16 %v422
        %v817 = vunpack.c.l.b16 %v423
        %v818 = vunpack.c.h.b16 %v423
        %v819 = vunpack.c.l.b16 %v424
        %v820 = vunpack.c.h.b16 %v424
        %v821 = vunpack.c.l.b16 %v425
        %v822 = vunpack.c.h.b16 %v425
        %v823 = vunpack.c.l.b16 %v426
        %v824 = vunpack.c.h.b16 %v426
        %v825 = vunpack.c.l.b16 %v427
        %v826 = vunpack.c.h.b16 %v427
        %v827 = vunpack.c.l.b16 %v428
        %v828 = vunpack.c.h.b16 %v428
        %v829 = vunpack.c.l.b16 %v429
        %v830 = vunpack.c.h.b16 %v429
        %v831 = vunpack.c.l.b16 %v430
        %v832 = vunpack.c.h.b16 %v430
        %v833 = vunpack.c.l.b16 %v431
        %v834 = vunpack.c.h.b16 %v431
        %v835 = vunpack.c.l.b16 %v432
        %v836 = vunpack.c.h.b16 %v432
        %v837 = vunpack.c.l.b16 %v433
        %v838 = vunpack.c.h.b16 %v433
        %v839 = vunpack.c.l.b16 %v434
        %v840 = vunpack.c.h.b16 %v434
        %v841 = vunpack.c.l.b16 %v435
        %v842 = vunpack.c.h.b16 %v435
        %v843 = vunpack.c.l.b16 %v436
        %v844 = vunpack.c.h.b16 %v436
        %v845 = vunpack.c.l.b16 %v437
        %v846 = vunpack.c.h.b16 %v437
        %v847 = vunpack.c.l.b16 %v438
        %v848 = vunpack.c.h.b16 %v438
        %v849 = vunpack.c.l.b16 %v439
        %v850 = vunpack.c.h.b16 %v439
        %v851 = vunpack.c.l.b16 %v440
        %v852 = vunpack.c.h.b16 %v440
        %v853 = vunpack.c.l.b16 %v441
        %v854 = vunpack.c.h.b16 %v441
        %v855 = vunpack.c.l.b16 %v442
        %v856 = vunpack.c.h.b16 %v442
        %v857 = vunpack.c.l.b16 %v443
        %v858 = vunpack.c.h.b16 %v443
        %v859 = vunpack.c.l.b16 %v444
        %v860 = vunpack.c.h.b16 %v444
        %v861 = vunpack.c.l.b16 %v445
        %v862 = vunpack.c.h.b16 %v445
        %v863 = vunpack.c.l.b16 %v446
        %v864 = vunpack.c.h.b16 %v446
        %v865 = vunpack.c.l.b16 %v447
        %v866 = vunpack.c.h.b16 %v447
        %v867 = vunpack.c.l.b16 %v448
        %v868 = vunpack.c.h.b16 %v448
        %v869 = vunpack.c.l.b16 %v449
        %v870 = vunpack.c.h.b16 %v449
        %v871 = vunpack.c.l.b16 %v450
        %v872 = vunpack.c.h.b16 %v450
        %v873 = vunpack.c.l.b16 %v451
        %v874 = vunpack.c.h.b16 %v451
        %v875 = vunpack.c.l.b16 %v452
        %v876 = vunpack.c.h.b16 %v452
        %v877 = vpack.c.b16 %v623, %v621
        %v878 = vpack.c.b16 %v624, %v622
        %v879 = vpack.c.b16 %v627, %v625
        %v880 = vpack.c.b16 %v628, %v626
        %v881 = vpack.c.b16 %v631, %v629
        %v882 = vpack.c.b16 %v632, %v630
        %v883 = vpack.c.b16 %v635, %v633
        %v884 = vpack.c.b16 %v636, %v634
        %v885 = vpack.c.b16 %v639, %v637
        %v886 = vpack.c.b16 %v640, %v638
        %v887 = vpack.c.b16 %v643, %v641
        %v888 = vpack.c.b16 %v644, %v642
        %v889 = vpack.c.b16 %v647, %v645
        %v890 = vpack.c.b16 %v648, %v646
        %v891 = vpack.c.b16 %v651, %v649
        %v892 = vpack.c.b16 %v652, %v650
        %v893 = vpack.c.b16 %v655, %v653
        %v894 = vpack.c.b16 %v656, %v654
        %v895 = vpack.c.b16 %v659, %v657
        %v896 = vpack.c.b16 %v660, %v658
        %v897 = vpack.c.b16 %v663, %v661
        %v898 = vpack.c.b16 %v664, %v662
        %v899 = vpack.c.b16 %v667, %v665
        %v900 = vpack.c.b16 %v668, %v666
        %v901 = vpack.c.b16 %v671, %v669
        %v902 = vpack.c.b16 %v672, %v670
        %v903 = vpack.c.b16 %v675, %v673
        %v904 = vpack.c.b16 %v676, %v674
        %v905 = vpack.c.b16 %v679, %v677
        %v906 = vpack.c.b16 %v680, %v678
        %v907 = vpack.c.b16 %v683, %v681
        %v908 = vpack.c.b16 %v684, %v682
        %v909 = vpack.c.b16 %v687, %v685
        %v910 = vpack.c.b16 %v688, %v686
        %v911 = vpack.c.b16 %v691, %v689
        %v912 = vpack.c.b16 %v692, %v690
        %v913 = vpack.c.b16 %v695, %v693
        %v914 = vpack.c.b16 %v696, %v694
        %v915 = vpack.c.b16 %v699, %v697
        %v916 = vpack.c.b16 %v700, %v698
        %v917 = vpack.c.b16 %v703, %v701
        %v918 = vpack.c.b16 %v704, %v702
        %v919 = vpack.c.b16 %v707, %v705
        %v920 = vpack.c.b16 %v708, %v706
        %v921 = vpack.c.b16 %v711, %v709
        %v922 = vpack.c.b16 %v712, %v710
        %v923 = vpack.c.b16 %v715, %v713
        %v924 = vpack.c.b16 %v716, %v714
        %v925 = vpack.c.b16 %v719, %v717
        %v926 = vpack.c.b16 %v720, %v718
        %v927 = vpack.c.b16 %v723, %v721
        %v928 = vpack.c.b16 %v724, %v722
        %v929 = vpack.c.b16 %v727, %v725
        %v930 = vpack.c.b16 %v728, %v726
        %v931 = vpack.c.b16 %v731, %v729
        %v932 = vpack.c.b16 %v732, %v730
        %v933 = vpack.c.b16 %v735, %v733
        %v934 = vpack.c.b16 %v736, %v734
        %v935 = vpack.c.b16 %v739, %v737
        %v936 = vpack.c.b16 %v740, %v738
        %v937 = vpack.c.b16 %v743, %v741
        %v938 = vpack.c.b16 %v744, %v742
        %v939 = vpack.c.b16 %v747, %v745
        %v940 = vpack.c.b16 %v748, %v746
        %v941 = vpack.c.b16 %v751, %v749
        %v942 = vpack.c.b16 %v752, %v750
        %v943 = vpack.c.b16 %v755, %v753
        %v944 = vpack.c.b16 %v756, %v754
        %v945 = vpack.c.b16 %v759, %v757
        %v946 = vpack.c.b16 %v760, %v758
        %v947 = vpack.c.b16 %v763, %v761
        %v948 = vpack.c.b16 %v764, %v762
        %v949 = vpack.c.b16 %v767, %v765
        %v950 = vpack.c.b16 %v768, %v766
        %v951 = vpack.c.b16 %v771, %v769
        %v952 = vpack.c.b16 %v772, %v770
        %v953 = vpack.c.b16 %v775, %v773
        %v954 = vpack.c.b16 %v776, %v774
        %v955 = vpack.c.b16 %v779, %v777
        %v956 = vpack.c.b16 %v780, %v778
        %v957 = vpack.c.b16 %v783, %v781
        %v958 = vpack.c.b16 %v784, %v782
        %v959 = vpack.c.b16 %v787, %v785
        %v960 = vpack.c.b16 %v788, %v786
        %v961 = vpack.c.b16 %v791, %v789
        %v962 = vpack.c.b16 %v792, %v790
        %v963 = vpack.c.b16 %v795, %v793
        %v964 = vpack.c.b16 %v796, %v794
        %v965 = vpack.c.b16 %v799, %v797
        %v966 = vpack.c.b16 %v800, %v798
        %v967 = vpack.c.b16 %v803, %v801
        %v968 = vpack.c.b16 %v804, %v802
        %v969 = vpack.c.b16 %v807, %v805
        %v970 = vpack.c.b16 %v808, %v806
        %v971 = vpack.c.b16 %v811, %v809
        %v972 = vpack.c.b16 %v812, %v810
        %v973 = vpack.c.b16 %v815, %v813
        %v974 = vpack.c.b16 %v816, %v814
        %v975 = vpack.c.b16 %v819, %v817
        %v976 = vpack.c.b16 %v820, %v818
        %v977 = vpack.c.b16 %v823, %v821
        %v978 = vpack.c.b16 %v824, %v822
        %v979 = vpack.c.b16 %v827, %v825
        %v980 = vpack.c.b16 %v828, %v826
        %v981 = vpack.c.b16 %v831, %v829
        %v982 = vpack.c.b16 %v832, %v830
        %v983 = vpack.c.b16 %v835, %v833
        %v984 = vpack.c.b16 %v836, %v834
        %v985 = vpack.c.b16 %v839, %v837
        %v986 = vpack.c.b16 %v840, %v838
        %v987 = vpack.c.b16 %v843, %v841
        %v988 = vpack.c.b16 %v844, %v842
        %v989 = vpack.c.b16 %v847, %v845
        %v990 = vpack.c.b16 %v848, %v846
        %v991 = vpack.c.b16 %v851, %v849
        %v992 = vpack.c.b16 %v852, %v850
        %v993 = vpack.c.b16 %v855, %v853
        %v994 = vpack.c.b16 %v856, %v854
        %v995 = vpack.c.b16 %v859, %v857
        %v996 = vpack.c.b16 %v860, %v858
        %v997 = vpack.c.b16 %v863, %v861
        %v998 = vpack.c.b16 %v864, %v862
        %v999 = vpack.c.b16 %v867, %v865
        %v1000 = vpack.c.b16 %v868, %v866
        %v1001 = vpack.c.b16 %v871, %v869
        %v1002 = vpack.c.b16 %v872, %v870
        %v1003 = vpack.c.b16 %v875, %v873
        %v1004 = vpack.c.b16 %v876, %v874
        %1133 = vmatprep.subr.bf16.mxu0 %v892
        %1134 = vmatpush1.bf16.msra.mxu0 %v891
        %1135 = vmatprep.subr.bf16.mxu0 %v890
        %1136 = vmatpush1.bf16.msra.mxu0 %v889
        %1137 = vmatprep.subr.bf16.mxu0 %v888
        %1138 = vmatpush1.bf16.msra.mxu0 %v887
        %1139 = vmatprep.subr.bf16.mxu0 %v886
        %1140 = vmatpush1.bf16.msra.mxu0 %v885
        %1141 = vmatprep.subr.bf16.mxu0 %v884
        %1142 = vmatpush1.bf16.msra.mxu0 %v883
        %1143 = vmatprep.subr.bf16.mxu0 %v882
        %1144 = vmatpush1.bf16.msra.mxu0 %v881
        %1145 = vmatprep.subr.bf16.mxu0 %v880
        %1146 = vmatpush1.bf16.msra.mxu0 %v879
        %1147 = vmatprep.subr.bf16.mxu0 %v878
        %1148 = vmatpush1.bf16.msra.mxu0 %v877
        %1149 = vmatprep.subr.bf16.mxu0 %v908
        %1150 = vmatpush2.bf16.msra.mxu0 %v907
        %1151 = vmatprep.subr.bf16.mxu0 %v906
        %1152 = vmatpush2.bf16.msra.mxu0 %v905
        %1153 = vmatprep.subr.bf16.mxu0 %v904
        %1154 = vmatpush2.bf16.msra.mxu0 %v903
        %1155 = vmatprep.subr.bf16.mxu0 %v902
        %1156 = vmatpush2.bf16.msra.mxu0 %v901
        %1157 = vmatprep.subr.bf16.mxu0 %v900
        %1158 = vmatpush2.bf16.msra.mxu0 %v899
        %1159 = vmatprep.subr.bf16.mxu0 %v898
        %1160 = vmatpush2.bf16.msra.mxu0 %v897
        %1161 = vmatprep.subr.bf16.mxu0 %v896
        %1162 = vmatpush2.bf16.msra.mxu0 %v895
        %1163 = vmatprep.subr.bf16.mxu0 %v894
        %1164 = vmatpush2.bf16.msra.mxu0 %v893
        %1165 = vmatprep.mubr.bf16.mxu0 %v478
        %1166 = vmatmul.mubr.bf16.gmra.mxu0 %v477
        %v1167 = vpop.f32.mrf.mxu0
        %v1168 = vadd.f32 0.0, %v1167
        %v1169 = vpop.f32.mrf.mxu0
        %v1170 = vadd.f32 0.0, %v1169
        %v1171 = vpop.f32.mrf.mxu0
        %v1172 = vadd.f32 0.0, %v1171
        %v1173 = vpop.f32.mrf.mxu0
        %v1174 = vadd.f32 0.0, %v1173
        %1175 = vdwg.mxu0
        %1176 = vmatprep.subr.bf16.mxu0 %v924
        %1177 = vmatpush1.bf16.msra.mxu0 %v923
        %1178 = vmatprep.subr.bf16.mxu0 %v922
        %1179 = vmatpush1.bf16.msra.mxu0 %v921
        %1180 = vmatprep.subr.bf16.mxu0 %v920
        %1181 = vmatpush1.bf16.msra.mxu0 %v919
        %1182 = vmatprep.subr.bf16.mxu0 %v918
        %1183 = vmatpush1.bf16.msra.mxu0 %v917
        %1184 = vmatprep.subr.bf16.mxu0 %v916
        %1185 = vmatpush1.bf16.msra.mxu0 %v915
        %1186 = vmatprep.subr.bf16.mxu0 %v914
        %1187 = vmatpush1.bf16.msra.mxu0 %v913
        %1188 = vmatprep.subr.bf16.mxu0 %v912
        %1189 = vmatpush1.bf16.msra.mxu0 %v911
        %1190 = vmatprep.subr.bf16.mxu0 %v910
        %1191 = vmatpush1.bf16.msra.mxu0 %v909
        %1192 = vmatprep.subr.bf16.mxu0 %v940
        %1193 = vmatpush2.bf16.msra.mxu0 %v939
        %1194 = vmatprep.subr.bf16.mxu0 %v938
        %1195 = vmatpush2.bf16.msra.mxu0 %v937
        %1196 = vmatprep.subr.bf16.mxu0 %v936
        %1197 = vmatpush2.bf16.msra.mxu0 %v935
        %1198 = vmatprep.subr.bf16.mxu0 %v934
        %1199 = vmatpush2.bf16.msra.mxu0 %v933
        %1200 = vmatprep.subr.bf16.mxu0 %v932
        %1201 = vmatpush2.bf16.msra.mxu0 %v931
        %1202 = vmatprep.subr.bf16.mxu0 %v930
        %1203 = vmatpush2.bf16.msra.mxu0 %v929
        %1204 = vmatprep.subr.bf16.mxu0 %v928
        %1205 = vmatpush2.bf16.msra.mxu0 %v927
        %1206 = vmatprep.subr.bf16.mxu0 %v926
        %1207 = vmatpush2.bf16.msra.mxu0 %v925
        %1208 = vmatprep.mubr.bf16.mxu0 %v480
        %1209 = vmatmul.mubr.bf16.gmra.mxu0 %v479
        %v1210 = vpop.f32.mrf.mxu0
        %v1211 = vadd.f32 %v1168, %v1210
        %v1212 = vpop.f32.mrf.mxu0
        %v1213 = vadd.f32 %v1170, %v1212
        %v1214 = vpop.f32.mrf.mxu0
        %v1215 = vadd.f32 %v1172, %v1214
        %v1216 = vpop.f32.mrf.mxu0
        %v1217 = vadd.f32 %v1174, %v1216
        %1218 = vdwg.mxu0
        %1219 = vmatprep.subr.bf16.mxu0 %v956
        %1220 = vmatpush1.bf16.msra.mxu0 %v955
        %1221 = vmatprep.subr.bf16.mxu0 %v954
        %1222 = vmatpush1.bf16.msra.mxu0 %v953
        %1223 = vmatprep.subr.bf16.mxu0 %v952
        %1224 = vmatpush1.bf16.msra.mxu0 %v951
        %1225 = vmatprep.subr.bf16.mxu0 %v950
        %1226 = vmatpush1.bf16.msra.mxu0 %v949
        %1227 = vmatprep.subr.bf16.mxu0 %v948
        %1228 = vmatpush1.bf16.msra.mxu0 %v947
        %1229 = vmatprep.subr.bf16.mxu0 %v946
        %1230 = vmatpush1.bf16.msra.mxu0 %v945
        %1231 = vmatprep.subr.bf16.mxu0 %v944
        %1232 = vmatpush1.bf16.msra.mxu0 %v943
        %1233 = vmatprep.subr.bf16.mxu0 %v942
        %1234 = vmatpush1.bf16.msra.mxu0 %v941
        %1235 = vmatprep.subr.bf16.mxu0 %v972
        %1236 = vmatpush2.bf16.msra.mxu0 %v971
        %1237 = vmatprep.subr.bf16.mxu0 %v970
        %1238 = vmatpush2.bf16.msra.mxu0 %v969
        %1239 = vmatprep.subr.bf16.mxu0 %v968
        %1240 = vmatpush2.bf16.msra.mxu0 %v967
        %1241 = vmatprep.subr.bf16.mxu0 %v966
        %1242 = vmatpush2.bf16.msra.mxu0 %v965
        %1243 = vmatprep.subr.bf16.mxu0 %v964
        %1244 = vmatpush2.bf16.msra.mxu0 %v963
        %1245 = vmatprep.subr.bf16.mxu0 %v962
        %1246 = vmatpush2.bf16.msra.mxu0 %v961
        %1247 = vmatprep.subr.bf16.mxu0 %v960
        %1248 = vmatpush2.bf16.msra.mxu0 %v959
        %1249 = vmatprep.subr.bf16.mxu0 %v958
        %1250 = vmatpush2.bf16.msra.mxu0 %v957
        %1251 = vmatprep.mubr.bf16.mxu0 %v482
        %1252 = vmatmul.mubr.bf16.gmra.mxu0 %v481
        %v1253 = vpop.f32.mrf.mxu0
        %v1254 = vadd.f32 %v1211, %v1253
        %v1255 = vpop.f32.mrf.mxu0
        %v1256 = vadd.f32 %v1213, %v1255
        %v1257 = vpop.f32.mrf.mxu0
        %v1258 = vadd.f32 %v1215, %v1257
        %v1259 = vpop.f32.mrf.mxu0
        %v1260 = vadd.f32 %v1217, %v1259
        %1261 = vdwg.mxu0
        %1262 = vmatprep.subr.bf16.mxu0 %v988
        %1263 = vmatpush1.bf16.msra.mxu0 %v987
        %1264 = vmatprep.subr.bf16.mxu0 %v986
        %1265 = vmatpush1.bf16.msra.mxu0 %v985
        %1266 = vmatprep.subr.bf16.mxu0 %v984
        %1267 = vmatpush1.bf16.msra.mxu0 %v983
        %1268 = vmatprep.subr.bf16.mxu0 %v982
        %1269 = vmatpush1.bf16.msra.mxu0 %v981
        %1270 = vmatprep.subr.bf16.mxu0 %v980
        %1271 = vmatpush1.bf16.msra.mxu0 %v979
        %1272 = vmatprep.subr.bf16.mxu0 %v978
        %1273 = vmatpush1.bf16.msra.mxu0 %v977
        %1274 = vmatprep.subr.bf16.mxu0 %v976
        %1275 = vmatpush1.bf16.msra.mxu0 %v975
        %1276 = vmatprep.subr.bf16.mxu0 %v974
        %1277 = vmatpush1.bf16.msra.mxu0 %v973
        %1278 = vmatprep.subr.bf16.mxu0 %v1004
        %1279 = vmatpush2.bf16.msra.mxu0 %v1003
        %1280 = vmatprep.subr.bf16.mxu0 %v1002
        %1281 = vmatpush2.bf16.msra.mxu0 %v1001
        %1282 = vmatprep.subr.bf16.mxu0 %v1000
        %1283 = vmatpush2.bf16.msra.mxu0 %v999
        %1284 = vmatprep.subr.bf16.mxu0 %v998
        %1285 = vmatpush2.bf16.msra.mxu0 %v997
        %1286 = vmatprep.subr.bf16.mxu0 %v996
        %1287 = vmatpush2.bf16.msra.mxu0 %v995
        %1288 = vmatprep.subr.bf16.mxu0 %v994
        %1289 = vmatpush2.bf16.msra.mxu0 %v993
        %1290 = vmatprep.subr.bf16.mxu0 %v992
        %1291 = vmatpush2.bf16.msra.mxu0 %v991
        %1292 = vmatprep.subr.bf16.mxu0 %v990
        %1293 = vmatpush2.bf16.msra.mxu0 %v989
        %1294 = vmatprep.mubr.bf16.mxu0 %v484
        %1295 = vmatmul.mubr.bf16.gmra.mxu0 %v483
        %v1296 = vpop.f32.mrf.mxu0
        %v1297 = vadd.f32 %v1254, %v1296
        %v1298 = vpop.f32.mrf.mxu0
        %v1299 = vadd.f32 %v1256, %v1298
        %v1300 = vpop.f32.mrf.mxu0
        %v1301 = vadd.f32 %v1258, %v1300
        %v1302 = vpop.f32.mrf.mxu0
        %v1303 = vadd.f32 %v1260, %v1302
        %1304 = vdwg.mxu0
        %v1305 = vadd.f32 %v313, %v1297
        %v1306 = vadd.f32 %v314, %v1299
        %v1307 = vadd.f32 %v315, %v1301
        %v1308 = vadd.f32 %v316, %v1303
        %1309 = vst [vmem:[#allocation2] sm:$0xff] %v1305
        %1310 = vst [vmem:[#allocation2 + $0x8] sm:$0xff] %v1306
        %1311 = vst [vmem:[#allocation2 + $0x10] sm:$0xff] %v1307
        %1312 = vst [vmem:[#allocation2 + $0x18] sm:$0xff] %v1308
        %p1313 = scmp.eq.s32.totalorder %s21, 1
        // Predicated region
        $region60: #{ss_model_forward.8} parent=50 // pred_check
          %p1314 = pneg %p1313
        $region61: #{ss_model_forward.8} parent=50 // pred_check_branch
          %1316 = sbr.rel (%p1314) target = $region63
        $region62: #{ss_model_forward.8} parent=50 // pred_region
          %v1317 = vld [vmem:[#allocation2] sm:$0xff]
          %v1318 = vld [vmem:[#allocation2 + $0x8] sm:$0xff]
          %v1319 = vld [vmem:[#allocation2 + $0x10] sm:$0xff]
          %v1320 = vld [vmem:[#allocation2 + $0x18] sm:$0xff]
          %v1321 = vld [vmem:[%s291] sm:$0x3]
          %v1323 = vlaneseq
          %v1324 = vshrl.u32 %v1323, 7
          %v1325 = vsub.s32 0, %v1324
          %v1326 = vrot.slane %v1321, %v1325
          %v1327 = vlaneseq
          %v1328 = vshrl.u32 %v1327, 7
          %v1329 = vsub.s32 1, %v1328
          %v1330 = vrot.slane %v1321, %v1329
          %v1333 = vadd.f32 %v1317, %v1326
          %v1334 = vadd.f32 %v1318, %v1330
          %v1335 = vadd.f32 %v1319, %v1326
          %v1336 = vadd.f32 %v1320, %v1330
          %v1337 = vmax.f32 %v1333, 0.0
          %v1338 = vmax.f32 %v1334, 0.0
          %v1339 = vmax.f32 %v1335, 0.0
          %v1340 = vmax.f32 %v1336, 0.0
          %v1341 = vpack.c.bf16 %v1339, %v1337
          %v1342 = vpack.c.bf16 %v1340, %v1338
          %v1345 = vunpack.c.l.b16 %v1341
          %v1346 = vunpack.c.l.b16 %v1342
          %v1347 = vunpack.c.h.b16 %v1341
          %v1348 = vunpack.c.h.b16 %v1342
          %v1349 = vpack.c.b16 %v1346, %v1345
          %v1350 = vpack.c.b16 %v1348, %v1347
          %1353 = vst [vmem:[%s302] sm:$0xff] %v1349
          %1354 = vst [vmem:[%s302 + $0x8] sm:$0xff] %v1350
        $region63: #{ss_model_forward.8} parent=50 // pred_fallthru
          _
        %s1355 = smul.u32 2, %s19
        %s1356 = smul.u32 2, %s20
        %p1357 = scmp.lt.s32.totalorder %s1355, 1
        %s1358 = scalar_select %p1357, %s1355, 1
        %p1359 = scmp.lt.s32.totalorder %s1356, 1
        %s1360 = scalar_select %p1359, %s1356, 1
        %s1361 = smul.addr %s1358, 2
        %s1362 = sadd.s32 %s1360, %s1361
        %s1363 = smul.addr %s1362, 4
        %s1364 = scalar_lea.vmem %s3, %s1363
        // Predicated region
        $region64: #{ss_model_forward.8} parent=50 // pred_check
          %p1365 = pneg %p135
        $region65: #{ss_model_forward.8} parent=50 // pred_check_branch
          %1367 = sbr.rel (%p1365) target = $region67
        $region66: #{ss_model_forward.8} parent=50 // pred_region
          %s1368 = smul.u32 2, %s19
          %s1369 = smul.u32 2, %s20
        $region67: #{ss_model_forward.8} parent=50 // pred_fallthru
          _
        // Predicated region
        $region68: #{ss_model_forward.8} parent=50 // pred_check
          %p1370 = pneg %p135
        $region69: #{ss_model_forward.8} parent=50 // pred_check_branch
          %1372 = sbr.rel (%p1370) target = $region71
        $region70: #{ss_model_forward.8} parent=50 // pred_region
          %s1373 = smul.u32 2, %s19
          %s1374 = smul.u32 2, %s20
          %p1375 = scmp.lt.s32.totalorder %s1373, 1
          %s1376 = scalar_select %p1375, %s1373, 1
          %p1377 = scmp.lt.s32.totalorder %s1374, 1
          %s1378 = scalar_select %p1377, %s1374, 1
          %s1379 = smul.addr %s1376, 2
          %s1380 = sadd.s32 %s1378, %s1379
          %s1381 = smul.addr %s1380, 4
          %s1382 = scalar_lea.vmem %s3, %s1381
        $region71: #{ss_model_forward.8} parent=50 // pred_fallthru
          _
      $region51: #{ss_model_forward.8} parent=5 // pred_fallthru
        _
      %p1383 = scmp.le.s32.totalorder 2, %s9
      // Predicated region
      $region72: #{ss_model_forward.8} parent=5 // pred_check
        %p1384 = pneg %p1383
      $region73: #{ss_model_forward.8} parent=5 // pred_check_branch
        %1386 = sbr.rel (%p1384) target = $region75
      $region74: #{ss_model_forward.8} parent=5 // pred_region
        %s1387 = ssub.s32 %s9, 2
      $region75: #{ss_model_forward.8} parent=5 // pred_fallthru
        _
    $region6: #{ss_model_forward.8} parent=1 // loop_footer
      %s13 = sadd.s32 1, %s9
    $region7: #{ss_model_forward.8} parent=1 // loop_footer_branch
      %8 = sbr.rel target = $region3
    $region8: #{ss_model_forward.8} parent=1 // loop_exit
      _

// kernel: ss_model_forward.9
$region0: #{ss_model_forward.9}
  #allocation0 [shape = 'u32[]', space=smem, size = 0x4, offset = 0x4, fixed_abs, tag = 'smem constant byte address 0x4 - core index']
  #allocation1 [shape = 'u32[144,128]{1,0:T(1,128)}', space=vmem, size = 0x12000, scoped, tag = 'internal scratch']
  %s0 = inlined_call_operand.vmem [shape: bf16[8,768], index: 0, kind: input, shape index: {}]
  %s1 = inlined_call_operand.vmem [shape: bf16[768,512], index: 1, kind: input, shape index: {}]
  %s2 = inlined_call_operand.vmem [shape: f32[1,512], index: 2, kind: input, shape index: {}]
  %s3 = inlined_call_operand.vmem [shape: f32[8,512], index: 3, kind: output, shape index: {}]
  %s4 = sld [smem:[#allocation0]]
  $region22: #{ss_model_forward.9} parent=0
    _
  %s6 = ssub.s32 1, %s4
  %s7 = scalar_select 0, %s6, %s4
  // Predicated region
  $region2: #{ss_model_forward.9} parent=0 // pred_check
    _
  $region3: #{ss_model_forward.9} parent=0 // pred_check_branch
    %9 = sbr.rel (0) target = $region5
  $region4: #{ss_model_forward.9} parent=0 // pred_region
    _
  $region5: #{ss_model_forward.9} parent=0 // pred_fallthru
    _
  // Predicated region
  $region6: #{ss_model_forward.9} parent=0 // pred_check
    _
  $region7: #{ss_model_forward.9} parent=0 // pred_check_branch
    %11 = sbr.rel (0) target = $region9
  $region8: #{ss_model_forward.9} parent=0 // pred_region
    _
  $region9: #{ss_model_forward.9} parent=0 // pred_fallthru
    _
  // Predicated region
  $region10: #{ss_model_forward.9} parent=0 // pred_check
    _
  $region11: #{ss_model_forward.9} parent=0 // pred_check_branch
    %13 = sbr.rel (0) target = $region13
  $region12: #{ss_model_forward.9} parent=0 // pred_region
    _
  $region13: #{ss_model_forward.9} parent=0 // pred_fallthru
    _
  %v14 = vld [vmem:[%s0] sm:$0xff]
  %v15 = vld [vmem:[%s0 + $0x8] sm:$0xff]
  %v16 = vld [vmem:[%s0 + $0x10] sm:$0xff]
  %v17 = vld [vmem:[%s1] sm:$0xff]
  %v18 = vld [vmem:[%s1 + $0x8] sm:$0xff]
  %v19 = vld [vmem:[%s1 + $0x10] sm:$0xff]
  %v20 = vld [vmem:[%s1 + $0x18] sm:$0xff]
  %v21 = vld [vmem:[%s1 + $0x20] sm:$0xff]
  %v22 = vld [vmem:[%s1 + $0x28] sm:$0xff]
  %v23 = vld [vmem:[%s1 + $0x30] sm:$0xff]
  %v24 = vld [vmem:[%s1 + $0x38] sm:$0xff]
  %v25 = vld [vmem:[%s1 + $0x40] sm:$0xff]
  %v26 = vld [vmem:[%s1 + $0x48] sm:$0xff]
  %v27 = vld [vmem:[%s1 + $0x50] sm:$0xff]
  %v28 = vld [vmem:[%s1 + $0x58] sm:$0xff]
  %v29 = vld [vmem:[%s1 + $0x60] sm:$0xff]
  %v30 = vld [vmem:[%s1 + $0x68] sm:$0xff]
  %v31 = vld [vmem:[%s1 + $0x70] sm:$0xff]
  %v32 = vld [vmem:[%s1 + $0x78] sm:$0xff]
  %v33 = vld [vmem:[%s1 + $0x80] sm:$0xff]
  %v34 = vld [vmem:[%s1 + $0x88] sm:$0xff]
  %v35 = vld [vmem:[%s1 + $0x90] sm:$0xff]
  %v36 = vld [vmem:[%s1 + $0x98] sm:$0xff]
  %v37 = vld [vmem:[%s1 + $0xa0] sm:$0xff]
  %v38 = vld [vmem:[%s1 + $0xa8] sm:$0xff]
  %v39 = vld [vmem:[%s1 + $0xb0] sm:$0xff]
  %v40 = vld [vmem:[%s1 + $0xb8] sm:$0xff]
  %v41 = vld [vmem:[%s1 + $0xc0] sm:$0xff]
  %v42 = vld [vmem:[%s1 + $0xc8] sm:$0xff]
  %v43 = vld [vmem:[%s1 + $0xd0] sm:$0xff]
  %v44 = vld [vmem:[%s1 + $0xd8] sm:$0xff]
  %v45 = vld [vmem:[%s1 + $0xe0] sm:$0xff]
  %v46 = vld [vmem:[%s1 + $0xe8] sm:$0xff]
  %v47 = vld [vmem:[%s1 + $0xf0] sm:$0xff]
  %v48 = vld [vmem:[%s1 + $0xf8] sm:$0xff]
  %v49 = vld [vmem:[%s1 + $0x100] sm:$0xff]
  %v50 = vld [vmem:[%s1 + $0x108] sm:$0xff]
  %v51 = vld [vmem:[%s1 + $0x110] sm:$0xff]
  %v52 = vld [vmem:[%s1 + $0x118] sm:$0xff]
  %v53 = vld [vmem:[%s1 + $0x120] sm:$0xff]
  %v54 = vld [vmem:[%s1 + $0x128] sm:$0xff]
  %v55 = vld [vmem:[%s1 + $0x130] sm:$0xff]
  %v56 = vld [vmem:[%s1 + $0x138] sm:$0xff]
  %v57 = vld [vmem:[%s1 + $0x140] sm:$0xff]
  %v58 = vld [vmem:[%s1 + $0x148] sm:$0xff]
  %v59 = vld [vmem:[%s1 + $0x150] sm:$0xff]
  %v60 = vld [vmem:[%s1 + $0x158] sm:$0xff]
  %v61 = vld [vmem:[%s1 + $0x160] sm:$0xff]
  %v62 = vld [vmem:[%s1 + $0x168] sm:$0xff]
  %v63 = vld [vmem:[%s1 + $0x170] sm:$0xff]
  %v64 = vld [vmem:[%s1 + $0x178] sm:$0xff]
  %v65 = vld [vmem:[%s1 + $0x180] sm:$0xff]
  %v66 = vld [vmem:[%s1 + $0x188] sm:$0xff]
  %v67 = vld [vmem:[%s1 + $0x190] sm:$0xff]
  %v68 = vld [vmem:[%s1 + $0x198] sm:$0xff]
  %v69 = vld [vmem:[%s1 + $0x1a0] sm:$0xff]
  %v70 = vld [vmem:[%s1 + $0x1a8] sm:$0xff]
  %v71 = vld [vmem:[%s1 + $0x1b0] sm:$0xff]
  %v72 = vld [vmem:[%s1 + $0x1b8] sm:$0xff]
  %v73 = vld [vmem:[%s1 + $0x1c0] sm:$0xff]
  %v74 = vld [vmem:[%s1 + $0x1c8] sm:$0xff]
  %v75 = vld [vmem:[%s1 + $0x1d0] sm:$0xff]
  %v76 = vld [vmem:[%s1 + $0x1d8] sm:$0xff]
  %v77 = vld [vmem:[%s1 + $0x1e0] sm:$0xff]
  %v78 = vld [vmem:[%s1 + $0x1e8] sm:$0xff]
  %v79 = vld [vmem:[%s1 + $0x1f0] sm:$0xff]
  %v80 = vld [vmem:[%s1 + $0x1f8] sm:$0xff]
  %v81 = vld [vmem:[%s1 + $0x200] sm:$0xff]
  %v82 = vld [vmem:[%s1 + $0x208] sm:$0xff]
  %v83 = vld [vmem:[%s1 + $0x210] sm:$0xff]
  %v84 = vld [vmem:[%s1 + $0x218] sm:$0xff]
  %v85 = vld [vmem:[%s1 + $0x220] sm:$0xff]
  %v86 = vld [vmem:[%s1 + $0x228] sm:$0xff]
  %v87 = vld [vmem:[%s1 + $0x230] sm:$0xff]
  %v88 = vld [vmem:[%s1 + $0x238] sm:$0xff]
  %v89 = vld [vmem:[%s1 + $0x240] sm:$0xff]
  %v90 = vld [vmem:[%s1 + $0x248] sm:$0xff]
  %v91 = vld [vmem:[%s1 + $0x250] sm:$0xff]
  %v92 = vld [vmem:[%s1 + $0x258] sm:$0xff]
  %v93 = vld [vmem:[%s1 + $0x260] sm:$0xff]
  %v94 = vld [vmem:[%s1 + $0x268] sm:$0xff]
  %v95 = vld [vmem:[%s1 + $0x270] sm:$0xff]
  %v96 = vld [vmem:[%s1 + $0x278] sm:$0xff]
  %v97 = vld [vmem:[%s1 + $0x280] sm:$0xff]
  %v98 = vld [vmem:[%s1 + $0x288] sm:$0xff]
  %v99 = vld [vmem:[%s1 + $0x290] sm:$0xff]
  %v100 = vld [vmem:[%s1 + $0x298] sm:$0xff]
  %v101 = vld [vmem:[%s1 + $0x2a0] sm:$0xff]
  %v102 = vld [vmem:[%s1 + $0x2a8] sm:$0xff]
  %v103 = vld [vmem:[%s1 + $0x2b0] sm:$0xff]
  %v104 = vld [vmem:[%s1 + $0x2b8] sm:$0xff]
  %v105 = vld [vmem:[%s1 + $0x2c0] sm:$0xff]
  %v106 = vld [vmem:[%s1 + $0x2c8] sm:$0xff]
  %v107 = vld [vmem:[%s1 + $0x2d0] sm:$0xff]
  %v108 = vld [vmem:[%s1 + $0x2d8] sm:$0xff]
  %v109 = vld [vmem:[%s1 + $0x2e0] sm:$0xff]
  %v110 = vld [vmem:[%s1 + $0x2e8] sm:$0xff]
  %v111 = vld [vmem:[%s1 + $0x2f0] sm:$0xff]
  %v112 = vld [vmem:[%s1 + $0x2f8] sm:$0xff]
  %v113 = vld [vmem:[%s1 + $0x300] sm:$0xff]
  %v114 = vld [vmem:[%s1 + $0x308] sm:$0xff]
  %v115 = vld [vmem:[%s1 + $0x310] sm:$0xff]
  %v116 = vld [vmem:[%s1 + $0x318] sm:$0xff]
  %v117 = vld [vmem:[%s1 + $0x320] sm:$0xff]
  %v118 = vld [vmem:[%s1 + $0x328] sm:$0xff]
  %v119 = vld [vmem:[%s1 + $0x330] sm:$0xff]
  %v120 = vld [vmem:[%s1 + $0x338] sm:$0xff]
  %v121 = vld [vmem:[%s1 + $0x340] sm:$0xff]
  %v122 = vld [vmem:[%s1 + $0x348] sm:$0xff]
  %v123 = vld [vmem:[%s1 + $0x350] sm:$0xff]
  %v124 = vld [vmem:[%s1 + $0x358] sm:$0xff]
  %v125 = vld [vmem:[%s1 + $0x360] sm:$0xff]
  %v126 = vld [vmem:[%s1 + $0x368] sm:$0xff]
  %v127 = vld [vmem:[%s1 + $0x370] sm:$0xff]
  %v128 = vld [vmem:[%s1 + $0x378] sm:$0xff]
  %v129 = vld [vmem:[%s1 + $0x380] sm:$0xff]
  %v130 = vld [vmem:[%s1 + $0x388] sm:$0xff]
  %v131 = vld [vmem:[%s1 + $0x390] sm:$0xff]
  %v132 = vld [vmem:[%s1 + $0x398] sm:$0xff]
  %v133 = vld [vmem:[%s1 + $0x3a0] sm:$0xff]
  %v134 = vld [vmem:[%s1 + $0x3a8] sm:$0xff]
  %v135 = vld [vmem:[%s1 + $0x3b0] sm:$0xff]
  %v136 = vld [vmem:[%s1 + $0x3b8] sm:$0xff]
  %v137 = vld [vmem:[%s1 + $0x3c0] sm:$0xff]
  %v138 = vld [vmem:[%s1 + $0x3c8] sm:$0xff]
  %v139 = vld [vmem:[%s1 + $0x3d0] sm:$0xff]
  %v140 = vld [vmem:[%s1 + $0x3d8] sm:$0xff]
  %v141 = vld [vmem:[%s1 + $0x3e0] sm:$0xff]
  %v142 = vld [vmem:[%s1 + $0x3e8] sm:$0xff]
  %v143 = vld [vmem:[%s1 + $0x3f0] sm:$0xff]
  %v144 = vld [vmem:[%s1 + $0x3f8] sm:$0xff]
  %v145 = vld [vmem:[%s1 + $0x400] sm:$0xff]
  %v146 = vld [vmem:[%s1 + $0x408] sm:$0xff]
  %v147 = vld [vmem:[%s1 + $0x410] sm:$0xff]
  %v148 = vld [vmem:[%s1 + $0x418] sm:$0xff]
  %v149 = vld [vmem:[%s1 + $0x420] sm:$0xff]
  %v150 = vld [vmem:[%s1 + $0x428] sm:$0xff]
  %v151 = vld [vmem:[%s1 + $0x430] sm:$0xff]
  %v152 = vld [vmem:[%s1 + $0x438] sm:$0xff]
  %v153 = vld [vmem:[%s1 + $0x440] sm:$0xff]
  %v154 = vld [vmem:[%s1 + $0x448] sm:$0xff]
  %v155 = vld [vmem:[%s1 + $0x450] sm:$0xff]
  %v156 = vld [vmem:[%s1 + $0x458] sm:$0xff]
  %v157 = vld [vmem:[%s1 + $0x460] sm:$0xff]
  %v158 = vld [vmem:[%s1 + $0x468] sm:$0xff]
  %v159 = vld [vmem:[%s1 + $0x470] sm:$0xff]
  %v160 = vld [vmem:[%s1 + $0x478] sm:$0xff]
  %v161 = vld [vmem:[%s1 + $0x480] sm:$0xff]
  %v162 = vld [vmem:[%s1 + $0x488] sm:$0xff]
  %v163 = vld [vmem:[%s1 + $0x490] sm:$0xff]
  %v164 = vld [vmem:[%s1 + $0x498] sm:$0xff]
  %v165 = vld [vmem:[%s1 + $0x4a0] sm:$0xff]
  %v166 = vld [vmem:[%s1 + $0x4a8] sm:$0xff]
  %v167 = vld [vmem:[%s1 + $0x4b0] sm:$0xff]
  %v168 = vld [vmem:[%s1 + $0x4b8] sm:$0xff]
  %v169 = vld [vmem:[%s1 + $0x4c0] sm:$0xff]
  %v170 = vld [vmem:[%s1 + $0x4c8] sm:$0xff]
  %v171 = vld [vmem:[%s1 + $0x4d0] sm:$0xff]
  %v172 = vld [vmem:[%s1 + $0x4d8] sm:$0xff]
  %v173 = vld [vmem:[%s1 + $0x4e0] sm:$0xff]
  %v174 = vld [vmem:[%s1 + $0x4e8] sm:$0xff]
  %v175 = vld [vmem:[%s1 + $0x4f0] sm:$0xff]
  %v176 = vld [vmem:[%s1 + $0x4f8] sm:$0xff]
  %v177 = vld [vmem:[%s1 + $0x500] sm:$0xff]
  %v178 = vld [vmem:[%s1 + $0x508] sm:$0xff]
  %v179 = vld [vmem:[%s1 + $0x510] sm:$0xff]
  %v180 = vld [vmem:[%s1 + $0x518] sm:$0xff]
  %v181 = vld [vmem:[%s1 + $0x520] sm:$0xff]
  %v182 = vld [vmem:[%s1 + $0x528] sm:$0xff]
  %v183 = vld [vmem:[%s1 + $0x530] sm:$0xff]
  %v184 = vld [vmem:[%s1 + $0x538] sm:$0xff]
  %v185 = vld [vmem:[%s1 + $0x540] sm:$0xff]
  %v186 = vld [vmem:[%s1 + $0x548] sm:$0xff]
  %v187 = vld [vmem:[%s1 + $0x550] sm:$0xff]
  %v188 = vld [vmem:[%s1 + $0x558] sm:$0xff]
  %v189 = vld [vmem:[%s1 + $0x560] sm:$0xff]
  %v190 = vld [vmem:[%s1 + $0x568] sm:$0xff]
  %v191 = vld [vmem:[%s1 + $0x570] sm:$0xff]
  %v192 = vld [vmem:[%s1 + $0x578] sm:$0xff]
  %v193 = vld [vmem:[%s1 + $0x580] sm:$0xff]
  %v194 = vld [vmem:[%s1 + $0x588] sm:$0xff]
  %v195 = vld [vmem:[%s1 + $0x590] sm:$0xff]
  %v196 = vld [vmem:[%s1 + $0x598] sm:$0xff]
  %v197 = vld [vmem:[%s1 + $0x5a0] sm:$0xff]
  %v198 = vld [vmem:[%s1 + $0x5a8] sm:$0xff]
  %v199 = vld [vmem:[%s1 + $0x5b0] sm:$0xff]
  %v200 = vld [vmem:[%s1 + $0x5b8] sm:$0xff]
  %v201 = vld [vmem:[%s1 + $0x5c0] sm:$0xff]
  %v202 = vld [vmem:[%s1 + $0x5c8] sm:$0xff]
  %v203 = vld [vmem:[%s1 + $0x5d0] sm:$0xff]
  %v204 = vld [vmem:[%s1 + $0x5d8] sm:$0xff]
  %v205 = vld [vmem:[%s1 + $0x5e0] sm:$0xff]
  %v206 = vld [vmem:[%s1 + $0x5e8] sm:$0xff]
  %v207 = vld [vmem:[%s1 + $0x5f0] sm:$0xff]
  %v208 = vld [vmem:[%s1 + $0x5f8] sm:$0xff]
  %v209 = vld [vmem:[%s2] sm:$0xf]
  %v211 = vlaneseq
  %v212 = vshrl.u32 %v211, 7
  %v213 = vsub.s32 0, %v212
  %v214 = vrot.slane %v209, %v213
  %v215 = vlaneseq
  %v216 = vshrl.u32 %v215, 7
  %v217 = vsub.s32 1, %v216
  %v218 = vrot.slane %v209, %v217
  %v219 = vlaneseq
  %v220 = vshrl.u32 %v219, 7
  %v221 = vsub.s32 2, %v220
  %v222 = vrot.slane %v209, %v221
  %v223 = vlaneseq
  %v224 = vshrl.u32 %v223, 7
  %v225 = vsub.s32 3, %v224
  %v226 = vrot.slane %v209, %v225
  %v234 = vunpack.c.l.b16 %v14
  %v235 = vunpack.c.h.b16 %v14
  %v236 = vunpack.c.l.b16 %v15
  %v237 = vunpack.c.h.b16 %v15
  %v238 = vunpack.c.l.b16 %v16
  %v239 = vunpack.c.h.b16 %v16
  %v240 = vpack.c.b16 %v234, %v234
  %v241 = vpack.c.b16 %v235, %v235
  %v242 = vpack.c.b16 %v236, %v236
  %v243 = vpack.c.b16 %v237, %v237
  %v244 = vpack.c.b16 %v238, %v238
  %v245 = vpack.c.b16 %v239, %v239
  %v444 = vunpack.c.l.b16 %v17
  %v445 = vunpack.c.h.b16 %v17
  %v446 = vunpack.c.l.b16 %v18
  %v447 = vunpack.c.h.b16 %v18
  %v448 = vunpack.c.l.b16 %v19
  %v449 = vunpack.c.h.b16 %v19
  %v450 = vunpack.c.l.b16 %v20
  %v451 = vunpack.c.h.b16 %v20
  %v452 = vunpack.c.l.b16 %v21
  %v453 = vunpack.c.h.b16 %v21
  %v454 = vunpack.c.l.b16 %v22
  %v455 = vunpack.c.h.b16 %v22
  %v456 = vunpack.c.l.b16 %v23
  %v457 = vunpack.c.h.b16 %v23
  %v458 = vunpack.c.l.b16 %v24
  %v459 = vunpack.c.h.b16 %v24
  %v460 = vunpack.c.l.b16 %v25
  %v461 = vunpack.c.h.b16 %v25
  %v462 = vunpack.c.l.b16 %v26
  %v463 = vunpack.c.h.b16 %v26
  %v464 = vunpack.c.l.b16 %v27
  %v465 = vunpack.c.h.b16 %v27
  %v466 = vunpack.c.l.b16 %v28
  %v467 = vunpack.c.h.b16 %v28
  %v468 = vunpack.c.l.b16 %v29
  %v469 = vunpack.c.h.b16 %v29
  %v470 = vunpack.c.l.b16 %v30
  %v471 = vunpack.c.h.b16 %v30
  %v472 = vunpack.c.l.b16 %v31
  %v473 = vunpack.c.h.b16 %v31
  %v474 = vunpack.c.l.b16 %v32
  %v475 = vunpack.c.h.b16 %v32
  %v476 = vunpack.c.l.b16 %v33
  %v477 = vunpack.c.h.b16 %v33
  %v478 = vunpack.c.l.b16 %v34
  %v479 = vunpack.c.h.b16 %v34
  %v480 = vunpack.c.l.b16 %v35
  %v481 = vunpack.c.h.b16 %v35
  %v482 = vunpack.c.l.b16 %v36
  %v483 = vunpack.c.h.b16 %v36
  %v484 = vunpack.c.l.b16 %v37
  %v485 = vunpack.c.h.b16 %v37
  %v486 = vunpack.c.l.b16 %v38
  %v487 = vunpack.c.h.b16 %v38
  %v488 = vunpack.c.l.b16 %v39
  %v489 = vunpack.c.h.b16 %v39
  %v490 = vunpack.c.l.b16 %v40
  %v491 = vunpack.c.h.b16 %v40
  %v492 = vunpack.c.l.b16 %v41
  %v493 = vunpack.c.h.b16 %v41
  %v494 = vunpack.c.l.b16 %v42
  %v495 = vunpack.c.h.b16 %v42
  %v496 = vunpack.c.l.b16 %v43
  %v497 = vunpack.c.h.b16 %v43
  %v498 = vunpack.c.l.b16 %v44
  %v499 = vunpack.c.h.b16 %v44
  %v500 = vunpack.c.l.b16 %v45
  %v501 = vunpack.c.h.b16 %v45
  %v502 = vunpack.c.l.b16 %v46
  %v503 = vunpack.c.h.b16 %v46
  %v504 = vunpack.c.l.b16 %v47
  %v505 = vunpack.c.h.b16 %v47
  %v506 = vunpack.c.l.b16 %v48
  %v507 = vunpack.c.h.b16 %v48
  %v508 = vunpack.c.l.b16 %v49
  %v509 = vunpack.c.h.b16 %v49
  %v510 = vunpack.c.l.b16 %v50
  %v511 = vunpack.c.h.b16 %v50
  %v512 = vunpack.c.l.b16 %v51
  %v513 = vunpack.c.h.b16 %v51
  %v514 = vunpack.c.l.b16 %v52
  %v515 = vunpack.c.h.b16 %v52
  %v516 = vunpack.c.l.b16 %v53
  %v517 = vunpack.c.h.b16 %v53
  %v518 = vunpack.c.l.b16 %v54
  %v519 = vunpack.c.h.b16 %v54
  %v520 = vunpack.c.l.b16 %v55
  %v521 = vunpack.c.h.b16 %v55
  %v522 = vunpack.c.l.b16 %v56
  %v523 = vunpack.c.h.b16 %v56
  %v524 = vunpack.c.l.b16 %v57
  %v525 = vunpack.c.h.b16 %v57
  %v526 = vunpack.c.l.b16 %v58
  %v527 = vunpack.c.h.b16 %v58
  %v528 = vunpack.c.l.b16 %v59
  %v529 = vunpack.c.h.b16 %v59
  %v530 = vunpack.c.l.b16 %v60
  %v531 = vunpack.c.h.b16 %v60
  %v532 = vunpack.c.l.b16 %v61
  %v533 = vunpack.c.h.b16 %v61
  %v534 = vunpack.c.l.b16 %v62
  %v535 = vunpack.c.h.b16 %v62
  %v536 = vunpack.c.l.b16 %v63
  %v537 = vunpack.c.h.b16 %v63
  %v538 = vunpack.c.l.b16 %v64
  %v539 = vunpack.c.h.b16 %v64
  %v540 = vunpack.c.l.b16 %v65
  %v541 = vunpack.c.h.b16 %v65
  %v542 = vunpack.c.l.b16 %v66
  %v543 = vunpack.c.h.b16 %v66
  %v544 = vunpack.c.l.b16 %v67
  %v545 = vunpack.c.h.b16 %v67
  %v546 = vunpack.c.l.b16 %v68
  %v547 = vunpack.c.h.b16 %v68
  %v548 = vunpack.c.l.b16 %v69
  %v549 = vunpack.c.h.b16 %v69
  %v550 = vunpack.c.l.b16 %v70
  %v551 = vunpack.c.h.b16 %v70
  %v552 = vunpack.c.l.b16 %v71
  %v553 = vunpack.c.h.b16 %v71
  %v554 = vunpack.c.l.b16 %v72
  %v555 = vunpack.c.h.b16 %v72
  %v556 = vunpack.c.l.b16 %v73
  %v557 = vunpack.c.h.b16 %v73
  %v558 = vunpack.c.l.b16 %v74
  %v559 = vunpack.c.h.b16 %v74
  %v560 = vunpack.c.l.b16 %v75
  %v561 = vunpack.c.h.b16 %v75
  %v562 = vunpack.c.l.b16 %v76
  %v563 = vunpack.c.h.b16 %v76
  %v564 = vunpack.c.l.b16 %v77
  %v565 = vunpack.c.h.b16 %v77
  %v566 = vunpack.c.l.b16 %v78
  %v567 = vunpack.c.h.b16 %v78
  %v568 = vunpack.c.l.b16 %v79
  %v569 = vunpack.c.h.b16 %v79
  %v570 = vunpack.c.l.b16 %v80
  %v571 = vunpack.c.h.b16 %v80
  %v572 = vunpack.c.l.b16 %v81
  %v573 = vunpack.c.h.b16 %v81
  %v574 = vunpack.c.l.b16 %v82
  %v575 = vunpack.c.h.b16 %v82
  %v576 = vunpack.c.l.b16 %v83
  %v577 = vunpack.c.h.b16 %v83
  %v578 = vunpack.c.l.b16 %v84
  %v579 = vunpack.c.h.b16 %v84
  %v580 = vunpack.c.l.b16 %v85
  %v581 = vunpack.c.h.b16 %v85
  %v582 = vunpack.c.l.b16 %v86
  %v583 = vunpack.c.h.b16 %v86
  %v584 = vunpack.c.l.b16 %v87
  %v585 = vunpack.c.h.b16 %v87
  %v586 = vunpack.c.l.b16 %v88
  %v587 = vunpack.c.h.b16 %v88
  %v588 = vunpack.c.l.b16 %v89
  %v589 = vunpack.c.h.b16 %v89
  %v590 = vunpack.c.l.b16 %v90
  %v591 = vunpack.c.h.b16 %v90
  %v592 = vunpack.c.l.b16 %v91
  %v593 = vunpack.c.h.b16 %v91
  %v594 = vunpack.c.l.b16 %v92
  %v595 = vunpack.c.h.b16 %v92
  %v596 = vunpack.c.l.b16 %v93
  %v597 = vunpack.c.h.b16 %v93
  %v598 = vunpack.c.l.b16 %v94
  %v599 = vunpack.c.h.b16 %v94
  %v600 = vunpack.c.l.b16 %v95
  %v601 = vunpack.c.h.b16 %v95
  %v602 = vunpack.c.l.b16 %v96
  %v603 = vunpack.c.h.b16 %v96
  %v604 = vunpack.c.l.b16 %v97
  %v605 = vunpack.c.h.b16 %v97
  %v606 = vunpack.c.l.b16 %v98
  %v607 = vunpack.c.h.b16 %v98
  %v608 = vunpack.c.l.b16 %v99
  %v609 = vunpack.c.h.b16 %v99
  %v610 = vunpack.c.l.b16 %v100
  %v611 = vunpack.c.h.b16 %v100
  %v612 = vunpack.c.l.b16 %v101
  %v613 = vunpack.c.h.b16 %v101
  %v614 = vunpack.c.l.b16 %v102
  %v615 = vunpack.c.h.b16 %v102
  %v616 = vunpack.c.l.b16 %v103
  %v617 = vunpack.c.h.b16 %v103
  %v618 = vunpack.c.l.b16 %v104
  %v619 = vunpack.c.h.b16 %v104
  %v620 = vunpack.c.l.b16 %v105
  %v621 = vunpack.c.h.b16 %v105
  %v622 = vunpack.c.l.b16 %v106
  %v623 = vunpack.c.h.b16 %v106
  %v624 = vunpack.c.l.b16 %v107
  %v625 = vunpack.c.h.b16 %v107
  %v626 = vunpack.c.l.b16 %v108
  %v627 = vunpack.c.h.b16 %v108
  %v628 = vunpack.c.l.b16 %v109
  %v629 = vunpack.c.h.b16 %v109
  %v630 = vunpack.c.l.b16 %v110
  %v631 = vunpack.c.h.b16 %v110
  %v632 = vunpack.c.l.b16 %v111
  %v633 = vunpack.c.h.b16 %v111
  %v634 = vunpack.c.l.b16 %v112
  %v635 = vunpack.c.h.b16 %v112
  %v636 = vunpack.c.l.b16 %v113
  %v637 = vunpack.c.h.b16 %v113
  %v638 = vunpack.c.l.b16 %v114
  %v639 = vunpack.c.h.b16 %v114
  %v640 = vunpack.c.l.b16 %v115
  %v641 = vunpack.c.h.b16 %v115
  %v642 = vunpack.c.l.b16 %v116
  %v643 = vunpack.c.h.b16 %v116
  %v644 = vunpack.c.l.b16 %v117
  %v645 = vunpack.c.h.b16 %v117
  %v646 = vunpack.c.l.b16 %v118
  %v647 = vunpack.c.h.b16 %v118
  %v648 = vunpack.c.l.b16 %v119
  %v649 = vunpack.c.h.b16 %v119
  %v650 = vunpack.c.l.b16 %v120
  %v651 = vunpack.c.h.b16 %v120
  %v652 = vunpack.c.l.b16 %v121
  %v653 = vunpack.c.h.b16 %v121
  %v654 = vunpack.c.l.b16 %v122
  %v655 = vunpack.c.h.b16 %v122
  %v656 = vunpack.c.l.b16 %v123
  %v657 = vunpack.c.h.b16 %v123
  %v658 = vunpack.c.l.b16 %v124
  %v659 = vunpack.c.h.b16 %v124
  %v660 = vunpack.c.l.b16 %v125
  %v661 = vunpack.c.h.b16 %v125
  %v662 = vunpack.c.l.b16 %v126
  %v663 = vunpack.c.h.b16 %v126
  %v664 = vunpack.c.l.b16 %v127
  %v665 = vunpack.c.h.b16 %v127
  %v666 = vunpack.c.l.b16 %v128
  %v667 = vunpack.c.h.b16 %v128
  %v668 = vunpack.c.l.b16 %v129
  %v669 = vunpack.c.h.b16 %v129
  %v670 = vunpack.c.l.b16 %v130
  %v671 = vunpack.c.h.b16 %v130
  %v672 = vunpack.c.l.b16 %v131
  %v673 = vunpack.c.h.b16 %v131
  %v674 = vunpack.c.l.b16 %v132
  %v675 = vunpack.c.h.b16 %v132
  %v676 = vunpack.c.l.b16 %v133
  %v677 = vunpack.c.h.b16 %v133
  %v678 = vunpack.c.l.b16 %v134
  %v679 = vunpack.c.h.b16 %v134
  %v680 = vunpack.c.l.b16 %v135
  %v681 = vunpack.c.h.b16 %v135
  %v682 = vunpack.c.l.b16 %v136
  %v683 = vunpack.c.h.b16 %v136
  %v684 = vunpack.c.l.b16 %v137
  %v685 = vunpack.c.h.b16 %v137
  %v686 = vunpack.c.l.b16 %v138
  %v687 = vunpack.c.h.b16 %v138
  %v688 = vunpack.c.l.b16 %v139
  %v689 = vunpack.c.h.b16 %v139
  %v690 = vunpack.c.l.b16 %v140
  %v691 = vunpack.c.h.b16 %v140
  %v692 = vunpack.c.l.b16 %v141
  %v693 = vunpack.c.h.b16 %v141
  %v694 = vunpack.c.l.b16 %v142
  %v695 = vunpack.c.h.b16 %v142
  %v696 = vunpack.c.l.b16 %v143
  %v697 = vunpack.c.h.b16 %v143
  %v698 = vunpack.c.l.b16 %v144
  %v699 = vunpack.c.h.b16 %v144
  %v700 = vunpack.c.l.b16 %v145
  %v701 = vunpack.c.h.b16 %v145
  %v702 = vunpack.c.l.b16 %v146
  %v703 = vunpack.c.h.b16 %v146
  %v704 = vunpack.c.l.b16 %v147
  %v705 = vunpack.c.h.b16 %v147
  %v706 = vunpack.c.l.b16 %v148
  %v707 = vunpack.c.h.b16 %v148
  %v708 = vunpack.c.l.b16 %v149
  %v709 = vunpack.c.h.b16 %v149
  %v710 = vunpack.c.l.b16 %v150
  %v711 = vunpack.c.h.b16 %v150
  %v712 = vunpack.c.l.b16 %v151
  %v713 = vunpack.c.h.b16 %v151
  %v714 = vunpack.c.l.b16 %v152
  %v715 = vunpack.c.h.b16 %v152
  %v716 = vunpack.c.l.b16 %v153
  %v717 = vunpack.c.h.b16 %v153
  %v718 = vunpack.c.l.b16 %v154
  %v719 = vunpack.c.h.b16 %v154
  %v720 = vunpack.c.l.b16 %v155
  %v721 = vunpack.c.h.b16 %v155
  %v722 = vunpack.c.l.b16 %v156
  %v723 = vunpack.c.h.b16 %v156
  %v724 = vunpack.c.l.b16 %v157
  %v725 = vunpack.c.h.b16 %v157
  %v726 = vunpack.c.l.b16 %v158
  %v727 = vunpack.c.h.b16 %v158
  %v728 = vunpack.c.l.b16 %v159
  %v729 = vunpack.c.h.b16 %v159
  %v730 = vunpack.c.l.b16 %v160
  %v731 = vunpack.c.h.b16 %v160
  %v732 = vunpack.c.l.b16 %v161
  %v733 = vunpack.c.h.b16 %v161
  %v734 = vunpack.c.l.b16 %v162
  %v735 = vunpack.c.h.b16 %v162
  %v736 = vunpack.c.l.b16 %v163
  %v737 = vunpack.c.h.b16 %v163
  %v738 = vunpack.c.l.b16 %v164
  %v739 = vunpack.c.h.b16 %v164
  %v740 = vunpack.c.l.b16 %v165
  %v741 = vunpack.c.h.b16 %v165
  %v742 = vunpack.c.l.b16 %v166
  %v743 = vunpack.c.h.b16 %v166
  %v744 = vunpack.c.l.b16 %v167
  %v745 = vunpack.c.h.b16 %v167
  %v746 = vunpack.c.l.b16 %v168
  %v747 = vunpack.c.h.b16 %v168
  %v748 = vunpack.c.l.b16 %v169
  %v749 = vunpack.c.h.b16 %v169
  %v750 = vunpack.c.l.b16 %v170
  %v751 = vunpack.c.h.b16 %v170
  %v752 = vunpack.c.l.b16 %v171
  %v753 = vunpack.c.h.b16 %v171
  %v754 = vunpack.c.l.b16 %v172
  %v755 = vunpack.c.h.b16 %v172
  %v756 = vunpack.c.l.b16 %v173
  %v757 = vunpack.c.h.b16 %v173
  %v758 = vunpack.c.l.b16 %v174
  %v759 = vunpack.c.h.b16 %v174
  %v760 = vunpack.c.l.b16 %v175
  %v761 = vunpack.c.h.b16 %v175
  %v762 = vunpack.c.l.b16 %v176
  %v763 = vunpack.c.h.b16 %v176
  %v764 = vunpack.c.l.b16 %v177
  %v765 = vunpack.c.h.b16 %v177
  %v766 = vunpack.c.l.b16 %v178
  %v767 = vunpack.c.h.b16 %v178
  %v768 = vunpack.c.l.b16 %v179
  %v769 = vunpack.c.h.b16 %v179
  %v770 = vunpack.c.l.b16 %v180
  %v771 = vunpack.c.h.b16 %v180
  %v772 = vunpack.c.l.b16 %v181
  %v773 = vunpack.c.h.b16 %v181
  %v774 = vunpack.c.l.b16 %v182
  %v775 = vunpack.c.h.b16 %v182
  %v776 = vunpack.c.l.b16 %v183
  %v777 = vunpack.c.h.b16 %v183
  %v778 = vunpack.c.l.b16 %v184
  %v779 = vunpack.c.h.b16 %v184
  %v780 = vunpack.c.l.b16 %v185
  %v781 = vunpack.c.h.b16 %v185
  %v782 = vunpack.c.l.b16 %v186
  %v783 = vunpack.c.h.b16 %v186
  %v784 = vunpack.c.l.b16 %v187
  %v785 = vunpack.c.h.b16 %v187
  %v786 = vunpack.c.l.b16 %v188
  %v787 = vunpack.c.h.b16 %v188
  %v788 = vunpack.c.l.b16 %v189
  %v789 = vunpack.c.h.b16 %v189
  %v790 = vunpack.c.l.b16 %v190
  %v791 = vunpack.c.h.b16 %v190
  %v792 = vunpack.c.l.b16 %v191
  %v793 = vunpack.c.h.b16 %v191
  %v794 = vunpack.c.l.b16 %v192
  %v795 = vunpack.c.h.b16 %v192
  %v796 = vunpack.c.l.b16 %v193
  %v797 = vunpack.c.h.b16 %v193
  %v798 = vunpack.c.l.b16 %v194
  %v799 = vunpack.c.h.b16 %v194
  %v800 = vunpack.c.l.b16 %v195
  %v801 = vunpack.c.h.b16 %v195
  %v802 = vunpack.c.l.b16 %v196
  %v803 = vunpack.c.h.b16 %v196
  %v804 = vunpack.c.l.b16 %v197
  %v805 = vunpack.c.h.b16 %v197
  %v806 = vunpack.c.l.b16 %v198
  %v807 = vunpack.c.h.b16 %v198
  %v808 = vunpack.c.l.b16 %v199
  %v809 = vunpack.c.h.b16 %v199
  %v810 = vunpack.c.l.b16 %v200
  %v811 = vunpack.c.h.b16 %v200
  %v812 = vunpack.c.l.b16 %v201
  %v813 = vunpack.c.h.b16 %v201
  %v814 = vunpack.c.l.b16 %v202
  %v815 = vunpack.c.h.b16 %v202
  %v816 = vunpack.c.l.b16 %v203
  %v817 = vunpack.c.h.b16 %v203
  %v818 = vunpack.c.l.b16 %v204
  %v819 = vunpack.c.h.b16 %v204
  %v820 = vunpack.c.l.b16 %v205
  %v821 = vunpack.c.h.b16 %v205
  %v822 = vunpack.c.l.b16 %v206
  %v823 = vunpack.c.h.b16 %v206
  %v824 = vunpack.c.l.b16 %v207
  %v825 = vunpack.c.h.b16 %v207
  %v826 = vunpack.c.l.b16 %v208
  %v827 = vunpack.c.h.b16 %v208
  %v828 = vpack.c.b16 %v448, %v444
  %v829 = vpack.c.b16 %v449, %v445
  %v830 = vpack.c.b16 %v450, %v446
  %v831 = vpack.c.b16 %v451, %v447
  %v832 = vpack.c.b16 %v456, %v452
  %v833 = vpack.c.b16 %v457, %v453
  %v834 = vpack.c.b16 %v458, %v454
  %v835 = vpack.c.b16 %v459, %v455
  %v836 = vpack.c.b16 %v464, %v460
  %v837 = vpack.c.b16 %v465, %v461
  %v838 = vpack.c.b16 %v466, %v462
  %v839 = vpack.c.b16 %v467, %v463
  %v840 = vpack.c.b16 %v472, %v468
  %v841 = vpack.c.b16 %v473, %v469
  %v842 = vpack.c.b16 %v474, %v470
  %v843 = vpack.c.b16 %v475, %v471
  %v844 = vpack.c.b16 %v480, %v476
  %v845 = vpack.c.b16 %v481, %v477
  %v846 = vpack.c.b16 %v482, %v478
  %v847 = vpack.c.b16 %v483, %v479
  %v848 = vpack.c.b16 %v488, %v484
  %v849 = vpack.c.b16 %v489, %v485
  %v850 = vpack.c.b16 %v490, %v486
  %v851 = vpack.c.b16 %v491, %v487
  %v852 = vpack.c.b16 %v496, %v492
  %v853 = vpack.c.b16 %v497, %v493
  %v854 = vpack.c.b16 %v498, %v494
  %v855 = vpack.c.b16 %v499, %v495
  %v856 = vpack.c.b16 %v504, %v500
  %v857 = vpack.c.b16 %v505, %v501
  %v858 = vpack.c.b16 %v506, %v502
  %v859 = vpack.c.b16 %v507, %v503
  %v860 = vpack.c.b16 %v512, %v508
  %v861 = vpack.c.b16 %v513, %v509
  %v862 = vpack.c.b16 %v514, %v510
  %v863 = vpack.c.b16 %v515, %v511
  %v864 = vpack.c.b16 %v520, %v516
  %v865 = vpack.c.b16 %v521, %v517
  %v866 = vpack.c.b16 %v522, %v518
  %v867 = vpack.c.b16 %v523, %v519
  %v868 = vpack.c.b16 %v528, %v524
  %v869 = vpack.c.b16 %v529, %v525
  %v870 = vpack.c.b16 %v530, %v526
  %v871 = vpack.c.b16 %v531, %v527
  %v872 = vpack.c.b16 %v536, %v532
  %v873 = vpack.c.b16 %v537, %v533
  %v874 = vpack.c.b16 %v538, %v534
  %v875 = vpack.c.b16 %v539, %v535
  %v876 = vpack.c.b16 %v544, %v540
  %v877 = vpack.c.b16 %v545, %v541
  %v878 = vpack.c.b16 %v546, %v542
  %v879 = vpack.c.b16 %v547, %v543
  %v880 = vpack.c.b16 %v552, %v548
  %v881 = vpack.c.b16 %v553, %v549
  %v882 = vpack.c.b16 %v554, %v550
  %v883 = vpack.c.b16 %v555, %v551
  %v884 = vpack.c.b16 %v560, %v556
  %v885 = vpack.c.b16 %v561, %v557
  %v886 = vpack.c.b16 %v562, %v558
  %v887 = vpack.c.b16 %v563, %v559
  %v888 = vpack.c.b16 %v568, %v564
  %v889 = vpack.c.b16 %v569, %v565
  %v890 = vpack.c.b16 %v570, %v566
  %v891 = vpack.c.b16 %v571, %v567
  %v892 = vpack.c.b16 %v576, %v572
  %v893 = vpack.c.b16 %v577, %v573
  %v894 = vpack.c.b16 %v578, %v574
  %v895 = vpack.c.b16 %v579, %v575
  %v896 = vpack.c.b16 %v584, %v580
  %v897 = vpack.c.b16 %v585, %v581
  %v898 = vpack.c.b16 %v586, %v582
  %v899 = vpack.c.b16 %v587, %v583
  %v900 = vpack.c.b16 %v592, %v588
  %v901 = vpack.c.b16 %v593, %v589
  %v902 = vpack.c.b16 %v594, %v590
  %v903 = vpack.c.b16 %v595, %v591
  %v904 = vpack.c.b16 %v600, %v596
  %v905 = vpack.c.b16 %v601, %v597
  %v906 = vpack.c.b16 %v602, %v598
  %v907 = vpack.c.b16 %v603, %v599
  %v908 = vpack.c.b16 %v608, %v604
  %v909 = vpack.c.b16 %v609, %v605
  %v910 = vpack.c.b16 %v610, %v606
  %v911 = vpack.c.b16 %v611, %v607
  %v912 = vpack.c.b16 %v616, %v612
  %v913 = vpack.c.b16 %v617, %v613
  %v914 = vpack.c.b16 %v618, %v614
  %v915 = vpack.c.b16 %v619, %v615
  %v916 = vpack.c.b16 %v624, %v620
  %v917 = vpack.c.b16 %v625, %v621
  %v918 = vpack.c.b16 %v626, %v622
  %v919 = vpack.c.b16 %v627, %v623
  %v920 = vpack.c.b16 %v632, %v628
  %v921 = vpack.c.b16 %v633, %v629
  %v922 = vpack.c.b16 %v634, %v630
  %v923 = vpack.c.b16 %v635, %v631
  %v924 = vpack.c.b16 %v640, %v636
  %v925 = vpack.c.b16 %v641, %v637
  %v926 = vpack.c.b16 %v642, %v638
  %v927 = vpack.c.b16 %v643, %v639
  %v928 = vpack.c.b16 %v648, %v644
  %v929 = vpack.c.b16 %v649, %v645
  %v930 = vpack.c.b16 %v650, %v646
  %v931 = vpack.c.b16 %v651, %v647
  %v932 = vpack.c.b16 %v656, %v652
  %v933 = vpack.c.b16 %v657, %v653
  %v934 = vpack.c.b16 %v658, %v654
  %v935 = vpack.c.b16 %v659, %v655
  %v936 = vpack.c.b16 %v664, %v660
  %v937 = vpack.c.b16 %v665, %v661
  %v938 = vpack.c.b16 %v666, %v662
  %v939 = vpack.c.b16 %v667, %v663
  %v940 = vpack.c.b16 %v672, %v668
  %v941 = vpack.c.b16 %v673, %v669
  %v942 = vpack.c.b16 %v674, %v670
  %v943 = vpack.c.b16 %v675, %v671
  %v944 = vpack.c.b16 %v680, %v676
  %v945 = vpack.c.b16 %v681, %v677
  %v946 = vpack.c.b16 %v682, %v678
  %v947 = vpack.c.b16 %v683, %v679
  %v948 = vpack.c.b16 %v688, %v684
  %v949 = vpack.c.b16 %v689, %v685
  %v950 = vpack.c.b16 %v690, %v686
  %v951 = vpack.c.b16 %v691, %v687
  %v952 = vpack.c.b16 %v696, %v692
  %v953 = vpack.c.b16 %v697, %v693
  %v954 = vpack.c.b16 %v698, %v694
  %v955 = vpack.c.b16 %v699, %v695
  %v956 = vpack.c.b16 %v704, %v700
  %v957 = vpack.c.b16 %v705, %v701
  %v958 = vpack.c.b16 %v706, %v702
  %v959 = vpack.c.b16 %v707, %v703
  %v960 = vpack.c.b16 %v712, %v708
  %v961 = vpack.c.b16 %v713, %v709
  %v962 = vpack.c.b16 %v714, %v710
  %v963 = vpack.c.b16 %v715, %v711
  %v964 = vpack.c.b16 %v720, %v716
  %v965 = vpack.c.b16 %v721, %v717
  %v966 = vpack.c.b16 %v722, %v718
  %v967 = vpack.c.b16 %v723, %v719
  %v968 = vpack.c.b16 %v728, %v724
  %v969 = vpack.c.b16 %v729, %v725
  %v970 = vpack.c.b16 %v730, %v726
  %v971 = vpack.c.b16 %v731, %v727
  %v972 = vpack.c.b16 %v736, %v732
  %v973 = vpack.c.b16 %v737, %v733
  %v974 = vpack.c.b16 %v738, %v734
  %v975 = vpack.c.b16 %v739, %v735
  %v976 = vpack.c.b16 %v744, %v740
  %v977 = vpack.c.b16 %v745, %v741
  %v978 = vpack.c.b16 %v746, %v742
  %v979 = vpack.c.b16 %v747, %v743
  %v980 = vpack.c.b16 %v752, %v748
  %v981 = vpack.c.b16 %v753, %v749
  %v982 = vpack.c.b16 %v754, %v750
  %v983 = vpack.c.b16 %v755, %v751
  %v984 = vpack.c.b16 %v760, %v756
  %v985 = vpack.c.b16 %v761, %v757
  %v986 = vpack.c.b16 %v762, %v758
  %v987 = vpack.c.b16 %v763, %v759
  %v988 = vpack.c.b16 %v768, %v764
  %v989 = vpack.c.b16 %v769, %v765
  %v990 = vpack.c.b16 %v770, %v766
  %v991 = vpack.c.b16 %v771, %v767
  %v992 = vpack.c.b16 %v776, %v772
  %v993 = vpack.c.b16 %v777, %v773
  %v994 = vpack.c.b16 %v778, %v774
  %v995 = vpack.c.b16 %v779, %v775
  %v996 = vpack.c.b16 %v784, %v780
  %v997 = vpack.c.b16 %v785, %v781
  %v998 = vpack.c.b16 %v786, %v782
  %v999 = vpack.c.b16 %v787, %v783
  %v1000 = vpack.c.b16 %v792, %v788
  %v1001 = vpack.c.b16 %v793, %v789
  %v1002 = vpack.c.b16 %v794, %v790
  %v1003 = vpack.c.b16 %v795, %v791
  %v1004 = vpack.c.b16 %v800, %v796
  %v1005 = vpack.c.b16 %v801, %v797
  %v1006 = vpack.c.b16 %v802, %v798
  %v1007 = vpack.c.b16 %v803, %v799
  %v1008 = vpack.c.b16 %v808, %v804
  %v1009 = vpack.c.b16 %v809, %v805
  %v1010 = vpack.c.b16 %v810, %v806
  %v1011 = vpack.c.b16 %v811, %v807
  %v1012 = vpack.c.b16 %v816, %v812
  %v1013 = vpack.c.b16 %v817, %v813
  %v1014 = vpack.c.b16 %v818, %v814
  %v1015 = vpack.c.b16 %v819, %v815
  %v1016 = vpack.c.b16 %v824, %v820
  %v1017 = vpack.c.b16 %v825, %v821
  %v1018 = vpack.c.b16 %v826, %v822
  %v1019 = vpack.c.b16 %v827, %v823
  %1212 = vmatprep.subr.bf16.mxu0 %v857
  %1213 = vmatpush1.bf16.msra.mxu0 %v856
  %1214 = vmatprep.subr.bf16.mxu0 %v853
  %1215 = vmatpush1.bf16.msra.mxu0 %v852
  %1216 = vmatprep.subr.bf16.mxu0 %v849
  %1217 = vmatpush1.bf16.msra.mxu0 %v848
  %1218 = vmatprep.subr.bf16.mxu0 %v845
  %1219 = vmatpush1.bf16.msra.mxu0 %v844
  %1220 = vmatprep.subr.bf16.mxu0 %v841
  %1221 = vmatpush1.bf16.msra.mxu0 %v840
  %1222 = vmatprep.subr.bf16.mxu0 %v837
  %1223 = vmatpush1.bf16.msra.mxu0 %v836
  %1224 = vmatprep.subr.bf16.mxu0 %v833
  %1225 = vmatpush1.bf16.msra.mxu0 %v832
  %1226 = vmatprep.subr.bf16.mxu0 %v829
  %1227 = vmatpush1.bf16.msra.mxu0 %v828
  %1228 = vmatprep.subr.bf16.mxu0 %v889
  %1229 = vmatpush2.bf16.msra.mxu0 %v888
  %1230 = vmatprep.subr.bf16.mxu0 %v885
  %1231 = vmatpush2.bf16.msra.mxu0 %v884
  %1232 = vmatprep.subr.bf16.mxu0 %v881
  %1233 = vmatpush2.bf16.msra.mxu0 %v880
  %1234 = vmatprep.subr.bf16.mxu0 %v877
  %1235 = vmatpush2.bf16.msra.mxu0 %v876
  %1236 = vmatprep.subr.bf16.mxu0 %v873
  %1237 = vmatpush2.bf16.msra.mxu0 %v872
  %1238 = vmatprep.subr.bf16.mxu0 %v869
  %1239 = vmatpush2.bf16.msra.mxu0 %v868
  %1240 = vmatprep.subr.bf16.mxu0 %v865
  %1241 = vmatpush2.bf16.msra.mxu0 %v864
  %1242 = vmatprep.subr.bf16.mxu0 %v861
  %1243 = vmatpush2.bf16.msra.mxu0 %v860
  %1244 = vmatprep.mubr.bf16.mxu0 %v241
  %1245 = vmatmul.mubr.bf16.gmra.mxu0 %v240
  %v1246 = vpop.f32.mrf.mxu0
  %v1247 = vadd.f32 %v214, %v1246
  %v1248 = vpop.f32.mrf.mxu0
  %v1249 = vadd.f32 %v218, %v1248
  %v1250 = vpop.f32.mrf.mxu0
  %v1251 = vpop.f32.mrf.mxu0
  %1252 = vdwg.mxu0
  %1253 = vmatprep.subr.bf16.mxu0 %v921
  %1254 = vmatpush1.bf16.msra.mxu0 %v920
  %1255 = vmatprep.subr.bf16.mxu0 %v917
  %1256 = vmatpush1.bf16.msra.mxu0 %v916
  %1257 = vmatprep.subr.bf16.mxu0 %v913
  %1258 = vmatpush1.bf16.msra.mxu0 %v912
  %1259 = vmatprep.subr.bf16.mxu0 %v909
  %1260 = vmatpush1.bf16.msra.mxu0 %v908
  %1261 = vmatprep.subr.bf16.mxu0 %v905
  %1262 = vmatpush1.bf16.msra.mxu0 %v904
  %1263 = vmatprep.subr.bf16.mxu0 %v901
  %1264 = vmatpush1.bf16.msra.mxu0 %v900
  %1265 = vmatprep.subr.bf16.mxu0 %v897
  %1266 = vmatpush1.bf16.msra.mxu0 %v896
  %1267 = vmatprep.subr.bf16.mxu0 %v893
  %1268 = vmatpush1.bf16.msra.mxu0 %v892
  %1269 = vmatprep.subr.bf16.mxu0 %v953
  %1270 = vmatpush2.bf16.msra.mxu0 %v952
  %1271 = vmatprep.subr.bf16.mxu0 %v949
  %1272 = vmatpush2.bf16.msra.mxu0 %v948
  %1273 = vmatprep.subr.bf16.mxu0 %v945
  %1274 = vmatpush2.bf16.msra.mxu0 %v944
  %1275 = vmatprep.subr.bf16.mxu0 %v941
  %1276 = vmatpush2.bf16.msra.mxu0 %v940
  %1277 = vmatprep.subr.bf16.mxu0 %v937
  %1278 = vmatpush2.bf16.msra.mxu0 %v936
  %1279 = vmatprep.subr.bf16.mxu0 %v933
  %1280 = vmatpush2.bf16.msra.mxu0 %v932
  %1281 = vmatprep.subr.bf16.mxu0 %v929
  %1282 = vmatpush2.bf16.msra.mxu0 %v928
  %1283 = vmatprep.subr.bf16.mxu0 %v925
  %1284 = vmatpush2.bf16.msra.mxu0 %v924
  %1285 = vmatprep.mubr.bf16.mxu0 %v243
  %1286 = vmatmul.mubr.bf16.gmra.mxu0 %v242
  %v1287 = vpop.f32.mrf.mxu0
  %v1288 = vadd.f32 %v1247, %v1287
  %v1289 = vpop.f32.mrf.mxu0
  %v1290 = vadd.f32 %v1249, %v1289
  %v1291 = vpop.f32.mrf.mxu0
  %v1292 = vpop.f32.mrf.mxu0
  %1293 = vdwg.mxu0
  %1294 = vmatprep.subr.bf16.mxu0 %v985
  %1295 = vmatpush1.bf16.msra.mxu0 %v984
  %1296 = vmatprep.subr.bf16.mxu0 %v981
  %1297 = vmatpush1.bf16.msra.mxu0 %v980
  %1298 = vmatprep.subr.bf16.mxu0 %v977
  %1299 = vmatpush1.bf16.msra.mxu0 %v976
  %1300 = vmatprep.subr.bf16.mxu0 %v973
  %1301 = vmatpush1.bf16.msra.mxu0 %v972
  %1302 = vmatprep.subr.bf16.mxu0 %v969
  %1303 = vmatpush1.bf16.msra.mxu0 %v968
  %1304 = vmatprep.subr.bf16.mxu0 %v965
  %1305 = vmatpush1.bf16.msra.mxu0 %v964
  %1306 = vmatprep.subr.bf16.mxu0 %v961
  %1307 = vmatpush1.bf16.msra.mxu0 %v960
  %1308 = vmatprep.subr.bf16.mxu0 %v957
  %1309 = vmatpush1.bf16.msra.mxu0 %v956
  %1310 = vmatprep.subr.bf16.mxu0 %v1017
  %1311 = vmatpush2.bf16.msra.mxu0 %v1016
  %1312 = vmatprep.subr.bf16.mxu0 %v1013
  %1313 = vmatpush2.bf16.msra.mxu0 %v1012
  %1314 = vmatprep.subr.bf16.mxu0 %v1009
  %1315 = vmatpush2.bf16.msra.mxu0 %v1008
  %1316 = vmatprep.subr.bf16.mxu0 %v1005
  %1317 = vmatpush2.bf16.msra.mxu0 %v1004
  %1318 = vmatprep.subr.bf16.mxu0 %v1001
  %1319 = vmatpush2.bf16.msra.mxu0 %v1000
  %1320 = vmatprep.subr.bf16.mxu0 %v997
  %1321 = vmatpush2.bf16.msra.mxu0 %v996
  %1322 = vmatprep.subr.bf16.mxu0 %v993
  %1323 = vmatpush2.bf16.msra.mxu0 %v992
  %1324 = vmatprep.subr.bf16.mxu0 %v989
  %1325 = vmatpush2.bf16.msra.mxu0 %v988
  %1326 = vmatprep.mubr.bf16.mxu0 %v245
  %1327 = vmatmul.mubr.bf16.gmra.mxu0 %v244
  %v1328 = vpop.f32.mrf.mxu0
  %v1329 = vadd.f32 %v1288, %v1328
  %v1330 = vpop.f32.mrf.mxu0
  %v1331 = vadd.f32 %v1290, %v1330
  %v1332 = vpop.f32.mrf.mxu0
  %v1333 = vpop.f32.mrf.mxu0
  %1334 = vdwg.mxu0
  %1335 = vmatprep.subr.bf16.mxu0 %v859
  %1336 = vmatpush1.bf16.msra.mxu0 %v858
  %1337 = vmatprep.subr.bf16.mxu0 %v855
  %1338 = vmatpush1.bf16.msra.mxu0 %v854
  %1339 = vmatprep.subr.bf16.mxu0 %v851
  %1340 = vmatpush1.bf16.msra.mxu0 %v850
  %1341 = vmatprep.subr.bf16.mxu0 %v847
  %1342 = vmatpush1.bf16.msra.mxu0 %v846
  %1343 = vmatprep.subr.bf16.mxu0 %v843
  %1344 = vmatpush1.bf16.msra.mxu0 %v842
  %1345 = vmatprep.subr.bf16.mxu0 %v839
  %1346 = vmatpush1.bf16.msra.mxu0 %v838
  %1347 = vmatprep.subr.bf16.mxu0 %v835
  %1348 = vmatpush1.bf16.msra.mxu0 %v834
  %1349 = vmatprep.subr.bf16.mxu0 %v831
  %1350 = vmatpush1.bf16.msra.mxu0 %v830
  %1351 = vmatprep.subr.bf16.mxu0 %v891
  %1352 = vmatpush2.bf16.msra.mxu0 %v890
  %1353 = vmatprep.subr.bf16.mxu0 %v887
  %1354 = vmatpush2.bf16.msra.mxu0 %v886
  %1355 = vmatprep.subr.bf16.mxu0 %v883
  %1356 = vmatpush2.bf16.msra.mxu0 %v882
  %1357 = vmatprep.subr.bf16.mxu0 %v879
  %1358 = vmatpush2.bf16.msra.mxu0 %v878
  %1359 = vmatprep.subr.bf16.mxu0 %v875
  %1360 = vmatpush2.bf16.msra.mxu0 %v874
  %1361 = vmatprep.subr.bf16.mxu0 %v871
  %1362 = vmatpush2.bf16.msra.mxu0 %v870
  %1363 = vmatprep.subr.bf16.mxu0 %v867
  %1364 = vmatpush2.bf16.msra.mxu0 %v866
  %1365 = vmatprep.subr.bf16.mxu0 %v863
  %1366 = vmatpush2.bf16.msra.mxu0 %v862
  %1367 = vmatprep.mubr.bf16.mxu0 %v241
  %1368 = vmatmul.mubr.bf16.gmra.mxu0 %v240
  %v1369 = vpop.f32.mrf.mxu0
  %v1370 = vadd.f32 %v222, %v1369
  %v1371 = vpop.f32.mrf.mxu0
  %v1372 = vadd.f32 %v226, %v1371
  %v1373 = vpop.f32.mrf.mxu0
  %v1374 = vpop.f32.mrf.mxu0
  %1375 = vdwg.mxu0
  %1376 = vmatprep.subr.bf16.mxu0 %v923
  %1377 = vmatpush1.bf16.msra.mxu0 %v922
  %1378 = vmatprep.subr.bf16.mxu0 %v919
  %1379 = vmatpush1.bf16.msra.mxu0 %v918
  %1380 = vmatprep.subr.bf16.mxu0 %v915
  %1381 = vmatpush1.bf16.msra.mxu0 %v914
  %1382 = vmatprep.subr.bf16.mxu0 %v911
  %1383 = vmatpush1.bf16.msra.mxu0 %v910
  %1384 = vmatprep.subr.bf16.mxu0 %v907
  %1385 = vmatpush1.bf16.msra.mxu0 %v906
  %1386 = vmatprep.subr.bf16.mxu0 %v903
  %1387 = vmatpush1.bf16.msra.mxu0 %v902
  %1388 = vmatprep.subr.bf16.mxu0 %v899
  %1389 = vmatpush1.bf16.msra.mxu0 %v898
  %1390 = vmatprep.subr.bf16.mxu0 %v895
  %1391 = vmatpush1.bf16.msra.mxu0 %v894
  %1392 = vmatprep.subr.bf16.mxu0 %v955
  %1393 = vmatpush2.bf16.msra.mxu0 %v954
  %1394 = vmatprep.subr.bf16.mxu0 %v951
  %1395 = vmatpush2.bf16.msra.mxu0 %v950
  %1396 = vmatprep.subr.bf16.mxu0 %v947
  %1397 = vmatpush2.bf16.msra.mxu0 %v946
  %1398 = vmatprep.subr.bf16.mxu0 %v943
  %1399 = vmatpush2.bf16.msra.mxu0 %v942
  %1400 = vmatprep.subr.bf16.mxu0 %v939
  %1401 = vmatpush2.bf16.msra.mxu0 %v938
  %1402 = vmatprep.subr.bf16.mxu0 %v935
  %1403 = vmatpush2.bf16.msra.mxu0 %v934
  %1404 = vmatprep.subr.bf16.mxu0 %v931
  %1405 = vmatpush2.bf16.msra.mxu0 %v930
  %1406 = vmatprep.subr.bf16.mxu0 %v927
  %1407 = vmatpush2.bf16.msra.mxu0 %v926
  %1408 = vmatprep.mubr.bf16.mxu0 %v243
  %1409 = vmatmul.mubr.bf16.gmra.mxu0 %v242
  %v1410 = vpop.f32.mrf.mxu0
  %v1411 = vadd.f32 %v1370, %v1410
  %v1412 = vpop.f32.mrf.mxu0
  %v1413 = vadd.f32 %v1372, %v1412
  %v1414 = vpop.f32.mrf.mxu0
  %v1415 = vpop.f32.mrf.mxu0
  %1416 = vdwg.mxu0
  %1417 = vmatprep.subr.bf16.mxu0 %v987
  %1418 = vmatpush1.bf16.msra.mxu0 %v986
  %1419 = vmatprep.subr.bf16.mxu0 %v983
  %1420 = vmatpush1.bf16.msra.mxu0 %v982
  %1421 = vmatprep.subr.bf16.mxu0 %v979
  %1422 = vmatpush1.bf16.msra.mxu0 %v978
  %1423 = vmatprep.subr.bf16.mxu0 %v975
  %1424 = vmatpush1.bf16.msra.mxu0 %v974
  %1425 = vmatprep.subr.bf16.mxu0 %v971
  %1426 = vmatpush1.bf16.msra.mxu0 %v970
  %1427 = vmatprep.subr.bf16.mxu0 %v967
  %1428 = vmatpush1.bf16.msra.mxu0 %v966
  %1429 = vmatprep.subr.bf16.mxu0 %v963
  %1430 = vmatpush1.bf16.msra.mxu0 %v962
  %1431 = vmatprep.subr.bf16.mxu0 %v959
  %1432 = vmatpush1.bf16.msra.mxu0 %v958
  %1433 = vmatprep.subr.bf16.mxu0 %v1019
  %1434 = vmatpush2.bf16.msra.mxu0 %v1018
  %1435 = vmatprep.subr.bf16.mxu0 %v1015
  %1436 = vmatpush2.bf16.msra.mxu0 %v1014
  %1437 = vmatprep.subr.bf16.mxu0 %v1011
  %1438 = vmatpush2.bf16.msra.mxu0 %v1010
  %1439 = vmatprep.subr.bf16.mxu0 %v1007
  %1440 = vmatpush2.bf16.msra.mxu0 %v1006
  %1441 = vmatprep.subr.bf16.mxu0 %v1003
  %1442 = vmatpush2.bf16.msra.mxu0 %v1002
  %1443 = vmatprep.subr.bf16.mxu0 %v999
  %1444 = vmatpush2.bf16.msra.mxu0 %v998
  %1445 = vmatprep.subr.bf16.mxu0 %v995
  %1446 = vmatpush2.bf16.msra.mxu0 %v994
  %1447 = vmatprep.subr.bf16.mxu0 %v991
  %1448 = vmatpush2.bf16.msra.mxu0 %v990
  %1449 = vmatprep.mubr.bf16.mxu0 %v245
  %1450 = vmatmul.mubr.bf16.gmra.mxu0 %v244
  %v1451 = vpop.f32.mrf.mxu0
  %v1452 = vadd.f32 %v1411, %v1451
  %v1453 = vpop.f32.mrf.mxu0
  %v1454 = vadd.f32 %v1413, %v1453
  %v1455 = vpop.f32.mrf.mxu0
  %v1456 = vpop.f32.mrf.mxu0
  %1457 = vdwg.mxu0
  %v1458 = vmax.f32 %v1329, 0.0
  %v1459 = vmax.f32 %v1331, 0.0
  %v1460 = vmax.f32 %v1452, 0.0
  %v1461 = vmax.f32 %v1454, 0.0
  %1462 = vst [vmem:[%s3] sm:$0xff] %v1458
  %1463 = vst [vmem:[%s3 + $0x8] sm:$0xff] %v1459
  %1464 = vst [vmem:[%s3 + $0x10] sm:$0xff] %v1460
  %1465 = vst [vmem:[%s3 + $0x18] sm:$0xff] %v1461
  // Predicated region
  $region14: #{ss_model_forward.9} parent=0 // pred_check
    _
  $region15: #{ss_model_forward.9} parent=0 // pred_check_branch
    %1467 = sbr.rel (0) target = $region17
  $region16: #{ss_model_forward.9} parent=0 // pred_region
    _
  $region17: #{ss_model_forward.9} parent=0 // pred_fallthru
    _
  // Predicated region
  $region18: #{ss_model_forward.9} parent=0 // pred_check
    _
  $region19: #{ss_model_forward.9} parent=0 // pred_check_branch
    %1469 = sbr.rel (0) target = $region21
  $region20: #{ss_model_forward.9} parent=0 // pred_region
    _
  $region21: #{ss_model_forward.9} parent=0 // pred_fallthru
    _

// kernel: ss_model_forward.10
$region0: #{ss_model_forward.10}
  #allocation0 [shape = 'u32[]', space=smem, size = 0x4, offset = 0x4, fixed_abs, tag = 'smem constant byte address 0x4 - core index']
  #allocation1 [shape = 'u32[144,128]{1,0:T(1,128)}', space=vmem, size = 0x12000, scoped, tag = 'internal scratch']
  %s0 = inlined_call_operand.vmem [shape: f32[8,1,512], index: 0, kind: input, shape index: {}]
  %s1 = inlined_call_operand.vmem [shape: bf16[512,512], index: 1, kind: input, shape index: {}]
  %s2 = inlined_call_operand.vmem [shape: f32[1,512], index: 2, kind: input, shape index: {}]
  %s3 = inlined_call_operand.vmem [shape: f32[8,512], index: 3, kind: output, shape index: {}]
  %s4 = sld [smem:[#allocation0]]
  $region22: #{ss_model_forward.10} parent=0
    _
  %s6 = ssub.s32 1, %s4
  %s7 = scalar_select 0, %s6, %s4
  // Predicated region
  $region2: #{ss_model_forward.10} parent=0 // pred_check
    _
  $region3: #{ss_model_forward.10} parent=0 // pred_check_branch
    %9 = sbr.rel (0) target = $region5
  $region4: #{ss_model_forward.10} parent=0 // pred_region
    _
  $region5: #{ss_model_forward.10} parent=0 // pred_fallthru
    _
  // Predicated region
  $region6: #{ss_model_forward.10} parent=0 // pred_check
    _
  $region7: #{ss_model_forward.10} parent=0 // pred_check_branch
    %11 = sbr.rel (0) target = $region9
  $region8: #{ss_model_forward.10} parent=0 // pred_region
    _
  $region9: #{ss_model_forward.10} parent=0 // pred_fallthru
    _
  // Predicated region
  $region10: #{ss_model_forward.10} parent=0 // pred_check
    _
  $region11: #{ss_model_forward.10} parent=0 // pred_check_branch
    %13 = sbr.rel (0) target = $region13
  $region12: #{ss_model_forward.10} parent=0 // pred_region
    _
  $region13: #{ss_model_forward.10} parent=0 // pred_fallthru
    _
  %v14 = vld [vmem:[%s0] sm:$0xf]
  %v15 = vld [vmem:[%s0 + $0x4] sm:$0xf]
  %v16 = vld [vmem:[%s0 + $0x8] sm:$0xf]
  %v17 = vld [vmem:[%s0 + $0xc] sm:$0xf]
  %v18 = vld [vmem:[%s0 + $0x10] sm:$0xf]
  %v19 = vld [vmem:[%s0 + $0x14] sm:$0xf]
  %v20 = vld [vmem:[%s0 + $0x18] sm:$0xf]
  %v21 = vld [vmem:[%s0 + $0x1c] sm:$0xf]
  %v22 = vadd.f32 %v14, 0.0
  %v23 = vadd.f32 %v15, 0.0
  %v24 = vadd.f32 %v16, 0.0
  %v25 = vadd.f32 %v17, 0.0
  %v26 = vadd.f32 %v18, 0.0
  %v27 = vadd.f32 %v19, 0.0
  %v28 = vadd.f32 %v20, 0.0
  %v29 = vadd.f32 %v21, 0.0
  %v38 = vlaneseq
  %v39 = vshrl.u32 %v38, 7
  %v40 = vsub.s32 0, %v39
  %v41 = vrot.slane %v22, %v40
  %v42 = vlaneseq
  %v43 = vshrl.u32 %v42, 7
  %v44 = vsub.s32 1, %v43
  %v45 = vrot.slane %v22, %v44
  %v46 = vlaneseq
  %v47 = vshrl.u32 %v46, 7
  %v48 = vsub.s32 2, %v47
  %v49 = vrot.slane %v22, %v48
  %v50 = vlaneseq
  %v51 = vshrl.u32 %v50, 7
  %v52 = vsub.s32 3, %v51
  %v53 = vrot.slane %v22, %v52
  %v54 = vlaneseq
  %v55 = vshrl.u32 %v54, 7
  %v56 = vsub.s32 0, %v55
  %v57 = vrot.slane %v23, %v56
  %v58 = vlaneseq
  %v59 = vshrl.u32 %v58, 7
  %v60 = vsub.s32 1, %v59
  %v61 = vrot.slane %v23, %v60
  %v62 = vlaneseq
  %v63 = vshrl.u32 %v62, 7
  %v64 = vsub.s32 2, %v63
  %v65 = vrot.slane %v23, %v64
  %v66 = vlaneseq
  %v67 = vshrl.u32 %v66, 7
  %v68 = vsub.s32 3, %v67
  %v69 = vrot.slane %v23, %v68
  %v70 = vlaneseq
  %v71 = vshrl.u32 %v70, 7
  %v72 = vsub.s32 0, %v71
  %v73 = vrot.slane %v24, %v72
  %v74 = vlaneseq
  %v75 = vshrl.u32 %v74, 7
  %v76 = vsub.s32 1, %v75
  %v77 = vrot.slane %v24, %v76
  %v78 = vlaneseq
  %v79 = vshrl.u32 %v78, 7
  %v80 = vsub.s32 2, %v79
  %v81 = vrot.slane %v24, %v80
  %v82 = vlaneseq
  %v83 = vshrl.u32 %v82, 7
  %v84 = vsub.s32 3, %v83
  %v85 = vrot.slane %v24, %v84
  %v86 = vlaneseq
  %v87 = vshrl.u32 %v86, 7
  %v88 = vsub.s32 0, %v87
  %v89 = vrot.slane %v25, %v88
  %v90 = vlaneseq
  %v91 = vshrl.u32 %v90, 7
  %v92 = vsub.s32 1, %v91
  %v93 = vrot.slane %v25, %v92
  %v94 = vlaneseq
  %v95 = vshrl.u32 %v94, 7
  %v96 = vsub.s32 2, %v95
  %v97 = vrot.slane %v25, %v96
  %v98 = vlaneseq
  %v99 = vshrl.u32 %v98, 7
  %v100 = vsub.s32 3, %v99
  %v101 = vrot.slane %v25, %v100
  %v102 = vlaneseq
  %v103 = vshrl.u32 %v102, 7
  %v104 = vsub.s32 0, %v103
  %v105 = vrot.slane %v26, %v104
  %v106 = vlaneseq
  %v107 = vshrl.u32 %v106, 7
  %v108 = vsub.s32 1, %v107
  %v109 = vrot.slane %v26, %v108
  %v110 = vlaneseq
  %v111 = vshrl.u32 %v110, 7
  %v112 = vsub.s32 2, %v111
  %v113 = vrot.slane %v26, %v112
  %v114 = vlaneseq
  %v115 = vshrl.u32 %v114, 7
  %v116 = vsub.s32 3, %v115
  %v117 = vrot.slane %v26, %v116
  %v118 = vlaneseq
  %v119 = vshrl.u32 %v118, 7
  %v120 = vsub.s32 0, %v119
  %v121 = vrot.slane %v27, %v120
  %v122 = vlaneseq
  %v123 = vshrl.u32 %v122, 7
  %v124 = vsub.s32 1, %v123
  %v125 = vrot.slane %v27, %v124
  %v126 = vlaneseq
  %v127 = vshrl.u32 %v126, 7
  %v128 = vsub.s32 2, %v127
  %v129 = vrot.slane %v27, %v128
  %v130 = vlaneseq
  %v131 = vshrl.u32 %v130, 7
  %v132 = vsub.s32 3, %v131
  %v133 = vrot.slane %v27, %v132
  %v134 = vlaneseq
  %v135 = vshrl.u32 %v134, 7
  %v136 = vsub.s32 0, %v135
  %v137 = vrot.slane %v28, %v136
  %v138 = vlaneseq
  %v139 = vshrl.u32 %v138, 7
  %v140 = vsub.s32 1, %v139
  %v141 = vrot.slane %v28, %v140
  %v142 = vlaneseq
  %v143 = vshrl.u32 %v142, 7
  %v144 = vsub.s32 2, %v143
  %v145 = vrot.slane %v28, %v144
  %v146 = vlaneseq
  %v147 = vshrl.u32 %v146, 7
  %v148 = vsub.s32 3, %v147
  %v149 = vrot.slane %v28, %v148
  %v150 = vlaneseq
  %v151 = vshrl.u32 %v150, 7
  %v152 = vsub.s32 0, %v151
  %v153 = vrot.slane %v29, %v152
  %v154 = vlaneseq
  %v155 = vshrl.u32 %v154, 7
  %v156 = vsub.s32 1, %v155
  %v157 = vrot.slane %v29, %v156
  %v158 = vlaneseq
  %v159 = vshrl.u32 %v158, 7
  %v160 = vsub.s32 2, %v159
  %v161 = vrot.slane %v29, %v160
  %v162 = vlaneseq
  %v163 = vshrl.u32 %v162, 7
  %v164 = vsub.s32 3, %v163
  %v165 = vrot.slane %v29, %v164
  %v198 = vpack.c.bf16 %v41, %v41
  %v199 = vpack.c.bf16 %v45, %v45
  %v200 = vpack.c.bf16 %v49, %v49
  %v201 = vpack.c.bf16 %v53, %v53
  %v202 = vpack.c.bf16 %v57, %v57
  %v203 = vpack.c.bf16 %v61, %v61
  %v204 = vpack.c.bf16 %v65, %v65
  %v205 = vpack.c.bf16 %v69, %v69
  %v206 = vpack.c.bf16 %v73, %v73
  %v207 = vpack.c.bf16 %v77, %v77
  %v208 = vpack.c.bf16 %v81, %v81
  %v209 = vpack.c.bf16 %v85, %v85
  %v210 = vpack.c.bf16 %v89, %v89
  %v211 = vpack.c.bf16 %v93, %v93
  %v212 = vpack.c.bf16 %v97, %v97
  %v213 = vpack.c.bf16 %v101, %v101
  %v214 = vpack.c.bf16 %v105, %v105
  %v215 = vpack.c.bf16 %v109, %v109
  %v216 = vpack.c.bf16 %v113, %v113
  %v217 = vpack.c.bf16 %v117, %v117
  %v218 = vpack.c.bf16 %v121, %v121
  %v219 = vpack.c.bf16 %v125, %v125
  %v220 = vpack.c.bf16 %v129, %v129
  %v221 = vpack.c.bf16 %v133, %v133
  %v222 = vpack.c.bf16 %v137, %v137
  %v223 = vpack.c.bf16 %v141, %v141
  %v224 = vpack.c.bf16 %v145, %v145
  %v225 = vpack.c.bf16 %v149, %v149
  %v226 = vpack.c.bf16 %v153, %v153
  %v227 = vpack.c.bf16 %v157, %v157
  %v228 = vpack.c.bf16 %v161, %v161
  %v229 = vpack.c.bf16 %v165, %v165
  %v230 = vld [vmem:[%s1] sm:$0xff]
  %v231 = vld [vmem:[%s1 + $0x8] sm:$0xff]
  %v232 = vld [vmem:[%s1 + $0x10] sm:$0xff]
  %v233 = vld [vmem:[%s1 + $0x18] sm:$0xff]
  %v234 = vld [vmem:[%s1 + $0x20] sm:$0xff]
  %v235 = vld [vmem:[%s1 + $0x28] sm:$0xff]
  %v236 = vld [vmem:[%s1 + $0x30] sm:$0xff]
  %v237 = vld [vmem:[%s1 + $0x38] sm:$0xff]
  %v238 = vld [vmem:[%s1 + $0x40] sm:$0xff]
  %v239 = vld [vmem:[%s1 + $0x48] sm:$0xff]
  %v240 = vld [vmem:[%s1 + $0x50] sm:$0xff]
  %v241 = vld [vmem:[%s1 + $0x58] sm:$0xff]
  %v242 = vld [vmem:[%s1 + $0x60] sm:$0xff]
  %v243 = vld [vmem:[%s1 + $0x68] sm:$0xff]
  %v244 = vld [vmem:[%s1 + $0x70] sm:$0xff]
  %v245 = vld [vmem:[%s1 + $0x78] sm:$0xff]
  %v246 = vld [vmem:[%s1 + $0x80] sm:$0xff]
  %v247 = vld [vmem:[%s1 + $0x88] sm:$0xff]
  %v248 = vld [vmem:[%s1 + $0x90] sm:$0xff]
  %v249 = vld [vmem:[%s1 + $0x98] sm:$0xff]
  %v250 = vld [vmem:[%s1 + $0xa0] sm:$0xff]
  %v251 = vld [vmem:[%s1 + $0xa8] sm:$0xff]
  %v252 = vld [vmem:[%s1 + $0xb0] sm:$0xff]
  %v253 = vld [vmem:[%s1 + $0xb8] sm:$0xff]
  %v254 = vld [vmem:[%s1 + $0xc0] sm:$0xff]
  %v255 = vld [vmem:[%s1 + $0xc8] sm:$0xff]
  %v256 = vld [vmem:[%s1 + $0xd0] sm:$0xff]
  %v257 = vld [vmem:[%s1 + $0xd8] sm:$0xff]
  %v258 = vld [vmem:[%s1 + $0xe0] sm:$0xff]
  %v259 = vld [vmem:[%s1 + $0xe8] sm:$0xff]
  %v260 = vld [vmem:[%s1 + $0xf0] sm:$0xff]
  %v261 = vld [vmem:[%s1 + $0xf8] sm:$0xff]
  %v262 = vld [vmem:[%s1 + $0x100] sm:$0xff]
  %v263 = vld [vmem:[%s1 + $0x108] sm:$0xff]
  %v264 = vld [vmem:[%s1 + $0x110] sm:$0xff]
  %v265 = vld [vmem:[%s1 + $0x118] sm:$0xff]
  %v266 = vld [vmem:[%s1 + $0x120] sm:$0xff]
  %v267 = vld [vmem:[%s1 + $0x128] sm:$0xff]
  %v268 = vld [vmem:[%s1 + $0x130] sm:$0xff]
  %v269 = vld [vmem:[%s1 + $0x138] sm:$0xff]
  %v270 = vld [vmem:[%s1 + $0x140] sm:$0xff]
  %v271 = vld [vmem:[%s1 + $0x148] sm:$0xff]
  %v272 = vld [vmem:[%s1 + $0x150] sm:$0xff]
  %v273 = vld [vmem:[%s1 + $0x158] sm:$0xff]
  %v274 = vld [vmem:[%s1 + $0x160] sm:$0xff]
  %v275 = vld [vmem:[%s1 + $0x168] sm:$0xff]
  %v276 = vld [vmem:[%s1 + $0x170] sm:$0xff]
  %v277 = vld [vmem:[%s1 + $0x178] sm:$0xff]
  %v278 = vld [vmem:[%s1 + $0x180] sm:$0xff]
  %v279 = vld [vmem:[%s1 + $0x188] sm:$0xff]
  %v280 = vld [vmem:[%s1 + $0x190] sm:$0xff]
  %v281 = vld [vmem:[%s1 + $0x198] sm:$0xff]
  %v282 = vld [vmem:[%s1 + $0x1a0] sm:$0xff]
  %v283 = vld [vmem:[%s1 + $0x1a8] sm:$0xff]
  %v284 = vld [vmem:[%s1 + $0x1b0] sm:$0xff]
  %v285 = vld [vmem:[%s1 + $0x1b8] sm:$0xff]
  %v286 = vld [vmem:[%s1 + $0x1c0] sm:$0xff]
  %v287 = vld [vmem:[%s1 + $0x1c8] sm:$0xff]
  %v288 = vld [vmem:[%s1 + $0x1d0] sm:$0xff]
  %v289 = vld [vmem:[%s1 + $0x1d8] sm:$0xff]
  %v290 = vld [vmem:[%s1 + $0x1e0] sm:$0xff]
  %v291 = vld [vmem:[%s1 + $0x1e8] sm:$0xff]
  %v292 = vld [vmem:[%s1 + $0x1f0] sm:$0xff]
  %v293 = vld [vmem:[%s1 + $0x1f8] sm:$0xff]
  %v294 = vld [vmem:[%s1 + $0x200] sm:$0xff]
  %v295 = vld [vmem:[%s1 + $0x208] sm:$0xff]
  %v296 = vld [vmem:[%s1 + $0x210] sm:$0xff]
  %v297 = vld [vmem:[%s1 + $0x218] sm:$0xff]
  %v298 = vld [vmem:[%s1 + $0x220] sm:$0xff]
  %v299 = vld [vmem:[%s1 + $0x228] sm:$0xff]
  %v300 = vld [vmem:[%s1 + $0x230] sm:$0xff]
  %v301 = vld [vmem:[%s1 + $0x238] sm:$0xff]
  %v302 = vld [vmem:[%s1 + $0x240] sm:$0xff]
  %v303 = vld [vmem:[%s1 + $0x248] sm:$0xff]
  %v304 = vld [vmem:[%s1 + $0x250] sm:$0xff]
  %v305 = vld [vmem:[%s1 + $0x258] sm:$0xff]
  %v306 = vld [vmem:[%s1 + $0x260] sm:$0xff]
  %v307 = vld [vmem:[%s1 + $0x268] sm:$0xff]
  %v308 = vld [vmem:[%s1 + $0x270] sm:$0xff]
  %v309 = vld [vmem:[%s1 + $0x278] sm:$0xff]
  %v310 = vld [vmem:[%s1 + $0x280] sm:$0xff]
  %v311 = vld [vmem:[%s1 + $0x288] sm:$0xff]
  %v312 = vld [vmem:[%s1 + $0x290] sm:$0xff]
  %v313 = vld [vmem:[%s1 + $0x298] sm:$0xff]
  %v314 = vld [vmem:[%s1 + $0x2a0] sm:$0xff]
  %v315 = vld [vmem:[%s1 + $0x2a8] sm:$0xff]
  %v316 = vld [vmem:[%s1 + $0x2b0] sm:$0xff]
  %v317 = vld [vmem:[%s1 + $0x2b8] sm:$0xff]
  %v318 = vld [vmem:[%s1 + $0x2c0] sm:$0xff]
  %v319 = vld [vmem:[%s1 + $0x2c8] sm:$0xff]
  %v320 = vld [vmem:[%s1 + $0x2d0] sm:$0xff]
  %v321 = vld [vmem:[%s1 + $0x2d8] sm:$0xff]
  %v322 = vld [vmem:[%s1 + $0x2e0] sm:$0xff]
  %v323 = vld [vmem:[%s1 + $0x2e8] sm:$0xff]
  %v324 = vld [vmem:[%s1 + $0x2f0] sm:$0xff]
  %v325 = vld [vmem:[%s1 + $0x2f8] sm:$0xff]
  %v326 = vld [vmem:[%s1 + $0x300] sm:$0xff]
  %v327 = vld [vmem:[%s1 + $0x308] sm:$0xff]
  %v328 = vld [vmem:[%s1 + $0x310] sm:$0xff]
  %v329 = vld [vmem:[%s1 + $0x318] sm:$0xff]
  %v330 = vld [vmem:[%s1 + $0x320] sm:$0xff]
  %v331 = vld [vmem:[%s1 + $0x328] sm:$0xff]
  %v332 = vld [vmem:[%s1 + $0x330] sm:$0xff]
  %v333 = vld [vmem:[%s1 + $0x338] sm:$0xff]
  %v334 = vld [vmem:[%s1 + $0x340] sm:$0xff]
  %v335 = vld [vmem:[%s1 + $0x348] sm:$0xff]
  %v336 = vld [vmem:[%s1 + $0x350] sm:$0xff]
  %v337 = vld [vmem:[%s1 + $0x358] sm:$0xff]
  %v338 = vld [vmem:[%s1 + $0x360] sm:$0xff]
  %v339 = vld [vmem:[%s1 + $0x368] sm:$0xff]
  %v340 = vld [vmem:[%s1 + $0x370] sm:$0xff]
  %v341 = vld [vmem:[%s1 + $0x378] sm:$0xff]
  %v342 = vld [vmem:[%s1 + $0x380] sm:$0xff]
  %v343 = vld [vmem:[%s1 + $0x388] sm:$0xff]
  %v344 = vld [vmem:[%s1 + $0x390] sm:$0xff]
  %v345 = vld [vmem:[%s1 + $0x398] sm:$0xff]
  %v346 = vld [vmem:[%s1 + $0x3a0] sm:$0xff]
  %v347 = vld [vmem:[%s1 + $0x3a8] sm:$0xff]
  %v348 = vld [vmem:[%s1 + $0x3b0] sm:$0xff]
  %v349 = vld [vmem:[%s1 + $0x3b8] sm:$0xff]
  %v350 = vld [vmem:[%s1 + $0x3c0] sm:$0xff]
  %v351 = vld [vmem:[%s1 + $0x3c8] sm:$0xff]
  %v352 = vld [vmem:[%s1 + $0x3d0] sm:$0xff]
  %v353 = vld [vmem:[%s1 + $0x3d8] sm:$0xff]
  %v354 = vld [vmem:[%s1 + $0x3e0] sm:$0xff]
  %v355 = vld [vmem:[%s1 + $0x3e8] sm:$0xff]
  %v356 = vld [vmem:[%s1 + $0x3f0] sm:$0xff]
  %v357 = vld [vmem:[%s1 + $0x3f8] sm:$0xff]
  %v358 = vld [vmem:[%s2] sm:$0xf]
  %v360 = vlaneseq
  %v361 = vshrl.u32 %v360, 7
  %v362 = vsub.s32 0, %v361
  %v363 = vrot.slane %v358, %v362
  %v364 = vlaneseq
  %v365 = vshrl.u32 %v364, 7
  %v366 = vsub.s32 1, %v365
  %v367 = vrot.slane %v358, %v366
  %v368 = vlaneseq
  %v369 = vshrl.u32 %v368, 7
  %v370 = vsub.s32 2, %v369
  %v371 = vrot.slane %v358, %v370
  %v372 = vlaneseq
  %v373 = vshrl.u32 %v372, 7
  %v374 = vsub.s32 3, %v373
  %v375 = vrot.slane %v358, %v374
  %v412 = vunpack.c.l.b16 %v198
  %v413 = vunpack.c.l.b16 %v199
  %v414 = vunpack.c.l.b16 %v200
  %v415 = vunpack.c.l.b16 %v201
  %v416 = vunpack.c.l.b16 %v202
  %v417 = vunpack.c.l.b16 %v203
  %v418 = vunpack.c.l.b16 %v204
  %v419 = vunpack.c.l.b16 %v205
  %v420 = vunpack.c.l.b16 %v206
  %v421 = vunpack.c.l.b16 %v207
  %v422 = vunpack.c.l.b16 %v208
  %v423 = vunpack.c.l.b16 %v209
  %v424 = vunpack.c.l.b16 %v210
  %v425 = vunpack.c.l.b16 %v211
  %v426 = vunpack.c.l.b16 %v212
  %v427 = vunpack.c.l.b16 %v213
  %v428 = vunpack.c.l.b16 %v214
  %v429 = vunpack.c.l.b16 %v215
  %v430 = vunpack.c.l.b16 %v216
  %v431 = vunpack.c.l.b16 %v217
  %v432 = vunpack.c.l.b16 %v218
  %v433 = vunpack.c.l.b16 %v219
  %v434 = vunpack.c.l.b16 %v220
  %v435 = vunpack.c.l.b16 %v221
  %v436 = vunpack.c.l.b16 %v222
  %v437 = vunpack.c.l.b16 %v223
  %v438 = vunpack.c.l.b16 %v224
  %v439 = vunpack.c.l.b16 %v225
  %v440 = vunpack.c.l.b16 %v226
  %v441 = vunpack.c.l.b16 %v227
  %v442 = vunpack.c.l.b16 %v228
  %v443 = vunpack.c.l.b16 %v229
  %v444 = vrot.slane %v416, 7
  %vm445 = vcmask 1041409
  %v446 = vsel %vm445, %v444, %v412
  %v447 = vrot.slane %v420, 6
  %vm448 = vcmask 1042434
  %v449 = vsel %vm448, %v447, %v446
  %v450 = vrot.slane %v424, 5
  %vm451 = vcmask 1043459
  %v452 = vsel %vm451, %v450, %v449
  %v453 = vrot.slane %v428, 4
  %vm454 = vcmask 1044484
  %v455 = vsel %vm454, %v453, %v452
  %v456 = vrot.slane %v432, 3
  %vm457 = vcmask 1045509
  %v458 = vsel %vm457, %v456, %v455
  %v459 = vrot.slane %v436, 2
  %vm460 = vcmask 1046534
  %v461 = vsel %vm460, %v459, %v458
  %v462 = vrot.slane %v440, 1
  %vm463 = vcmask 1047559
  %v464 = vsel %vm463, %v462, %v461
  %v465 = vrot.slane %v417, 7
  %v466 = vsel %vm445, %v465, %v413
  %v467 = vrot.slane %v421, 6
  %v468 = vsel %vm448, %v467, %v466
  %v469 = vrot.slane %v425, 5
  %v470 = vsel %vm451, %v469, %v468
  %v471 = vrot.slane %v429, 4
  %v472 = vsel %vm454, %v471, %v470
  %v473 = vrot.slane %v433, 3
  %v474 = vsel %vm457, %v473, %v472
  %v475 = vrot.slane %v437, 2
  %v476 = vsel %vm460, %v475, %v474
  %v477 = vrot.slane %v441, 1
  %v478 = vsel %vm463, %v477, %v476
  %v479 = vrot.slane %v418, 7
  %v480 = vsel %vm445, %v479, %v414
  %v481 = vrot.slane %v422, 6
  %v482 = vsel %vm448, %v481, %v480
  %v483 = vrot.slane %v426, 5
  %v484 = vsel %vm451, %v483, %v482
  %v485 = vrot.slane %v430, 4
  %v486 = vsel %vm454, %v485, %v484
  %v487 = vrot.slane %v434, 3
  %v488 = vsel %vm457, %v487, %v486
  %v489 = vrot.slane %v438, 2
  %v490 = vsel %vm460, %v489, %v488
  %v491 = vrot.slane %v442, 1
  %v492 = vsel %vm463, %v491, %v490
  %v493 = vrot.slane %v419, 7
  %v494 = vsel %vm445, %v493, %v415
  %v495 = vrot.slane %v423, 6
  %v496 = vsel %vm448, %v495, %v494
  %v497 = vrot.slane %v427, 5
  %v498 = vsel %vm451, %v497, %v496
  %v499 = vrot.slane %v431, 4
  %v500 = vsel %vm454, %v499, %v498
  %v501 = vrot.slane %v435, 3
  %v502 = vsel %vm457, %v501, %v500
  %v503 = vrot.slane %v439, 2
  %v504 = vsel %vm460, %v503, %v502
  %v505 = vrot.slane %v443, 1
  %v506 = vsel %vm463, %v505, %v504
  %v507 = vpack.c.b16 %v464, %v464
  %v508 = vpack.c.b16 %v478, %v478
  %v509 = vpack.c.b16 %v492, %v492
  %v510 = vpack.c.b16 %v506, %v506
  %v643 = vunpack.c.l.b16 %v230
  %v644 = vunpack.c.h.b16 %v230
  %v645 = vunpack.c.l.b16 %v231
  %v646 = vunpack.c.h.b16 %v231
  %v647 = vunpack.c.l.b16 %v232
  %v648 = vunpack.c.h.b16 %v232
  %v649 = vunpack.c.l.b16 %v233
  %v650 = vunpack.c.h.b16 %v233
  %v651 = vunpack.c.l.b16 %v234
  %v652 = vunpack.c.h.b16 %v234
  %v653 = vunpack.c.l.b16 %v235
  %v654 = vunpack.c.h.b16 %v235
  %v655 = vunpack.c.l.b16 %v236
  %v656 = vunpack.c.h.b16 %v236
  %v657 = vunpack.c.l.b16 %v237
  %v658 = vunpack.c.h.b16 %v237
  %v659 = vunpack.c.l.b16 %v238
  %v660 = vunpack.c.h.b16 %v238
  %v661 = vunpack.c.l.b16 %v239
  %v662 = vunpack.c.h.b16 %v239
  %v663 = vunpack.c.l.b16 %v240
  %v664 = vunpack.c.h.b16 %v240
  %v665 = vunpack.c.l.b16 %v241
  %v666 = vunpack.c.h.b16 %v241
  %v667 = vunpack.c.l.b16 %v242
  %v668 = vunpack.c.h.b16 %v242
  %v669 = vunpack.c.l.b16 %v243
  %v670 = vunpack.c.h.b16 %v243
  %v671 = vunpack.c.l.b16 %v244
  %v672 = vunpack.c.h.b16 %v244
  %v673 = vunpack.c.l.b16 %v245
  %v674 = vunpack.c.h.b16 %v245
  %v675 = vunpack.c.l.b16 %v246
  %v676 = vunpack.c.h.b16 %v246
  %v677 = vunpack.c.l.b16 %v247
  %v678 = vunpack.c.h.b16 %v247
  %v679 = vunpack.c.l.b16 %v248
  %v680 = vunpack.c.h.b16 %v248
  %v681 = vunpack.c.l.b16 %v249
  %v682 = vunpack.c.h.b16 %v249
  %v683 = vunpack.c.l.b16 %v250
  %v684 = vunpack.c.h.b16 %v250
  %v685 = vunpack.c.l.b16 %v251
  %v686 = vunpack.c.h.b16 %v251
  %v687 = vunpack.c.l.b16 %v252
  %v688 = vunpack.c.h.b16 %v252
  %v689 = vunpack.c.l.b16 %v253
  %v690 = vunpack.c.h.b16 %v253
  %v691 = vunpack.c.l.b16 %v254
  %v692 = vunpack.c.h.b16 %v254
  %v693 = vunpack.c.l.b16 %v255
  %v694 = vunpack.c.h.b16 %v255
  %v695 = vunpack.c.l.b16 %v256
  %v696 = vunpack.c.h.b16 %v256
  %v697 = vunpack.c.l.b16 %v257
  %v698 = vunpack.c.h.b16 %v257
  %v699 = vunpack.c.l.b16 %v258
  %v700 = vunpack.c.h.b16 %v258
  %v701 = vunpack.c.l.b16 %v259
  %v702 = vunpack.c.h.b16 %v259
  %v703 = vunpack.c.l.b16 %v260
  %v704 = vunpack.c.h.b16 %v260
  %v705 = vunpack.c.l.b16 %v261
  %v706 = vunpack.c.h.b16 %v261
  %v707 = vunpack.c.l.b16 %v262
  %v708 = vunpack.c.h.b16 %v262
  %v709 = vunpack.c.l.b16 %v263
  %v710 = vunpack.c.h.b16 %v263
  %v711 = vunpack.c.l.b16 %v264
  %v712 = vunpack.c.h.b16 %v264
  %v713 = vunpack.c.l.b16 %v265
  %v714 = vunpack.c.h.b16 %v265
  %v715 = vunpack.c.l.b16 %v266
  %v716 = vunpack.c.h.b16 %v266
  %v717 = vunpack.c.l.b16 %v267
  %v718 = vunpack.c.h.b16 %v267
  %v719 = vunpack.c.l.b16 %v268
  %v720 = vunpack.c.h.b16 %v268
  %v721 = vunpack.c.l.b16 %v269
  %v722 = vunpack.c.h.b16 %v269
  %v723 = vunpack.c.l.b16 %v270
  %v724 = vunpack.c.h.b16 %v270
  %v725 = vunpack.c.l.b16 %v271
  %v726 = vunpack.c.h.b16 %v271
  %v727 = vunpack.c.l.b16 %v272
  %v728 = vunpack.c.h.b16 %v272
  %v729 = vunpack.c.l.b16 %v273
  %v730 = vunpack.c.h.b16 %v273
  %v731 = vunpack.c.l.b16 %v274
  %v732 = vunpack.c.h.b16 %v274
  %v733 = vunpack.c.l.b16 %v275
  %v734 = vunpack.c.h.b16 %v275
  %v735 = vunpack.c.l.b16 %v276
  %v736 = vunpack.c.h.b16 %v276
  %v737 = vunpack.c.l.b16 %v277
  %v738 = vunpack.c.h.b16 %v277
  %v739 = vunpack.c.l.b16 %v278
  %v740 = vunpack.c.h.b16 %v278
  %v741 = vunpack.c.l.b16 %v279
  %v742 = vunpack.c.h.b16 %v279
  %v743 = vunpack.c.l.b16 %v280
  %v744 = vunpack.c.h.b16 %v280
  %v745 = vunpack.c.l.b16 %v281
  %v746 = vunpack.c.h.b16 %v281
  %v747 = vunpack.c.l.b16 %v282
  %v748 = vunpack.c.h.b16 %v282
  %v749 = vunpack.c.l.b16 %v283
  %v750 = vunpack.c.h.b16 %v283
  %v751 = vunpack.c.l.b16 %v284
  %v752 = vunpack.c.h.b16 %v284
  %v753 = vunpack.c.l.b16 %v285
  %v754 = vunpack.c.h.b16 %v285
  %v755 = vunpack.c.l.b16 %v286
  %v756 = vunpack.c.h.b16 %v286
  %v757 = vunpack.c.l.b16 %v287
  %v758 = vunpack.c.h.b16 %v287
  %v759 = vunpack.c.l.b16 %v288
  %v760 = vunpack.c.h.b16 %v288
  %v761 = vunpack.c.l.b16 %v289
  %v762 = vunpack.c.h.b16 %v289
  %v763 = vunpack.c.l.b16 %v290
  %v764 = vunpack.c.h.b16 %v290
  %v765 = vunpack.c.l.b16 %v291
  %v766 = vunpack.c.h.b16 %v291
  %v767 = vunpack.c.l.b16 %v292
  %v768 = vunpack.c.h.b16 %v292
  %v769 = vunpack.c.l.b16 %v293
  %v770 = vunpack.c.h.b16 %v293
  %v771 = vunpack.c.l.b16 %v294
  %v772 = vunpack.c.h.b16 %v294
  %v773 = vunpack.c.l.b16 %v295
  %v774 = vunpack.c.h.b16 %v295
  %v775 = vunpack.c.l.b16 %v296
  %v776 = vunpack.c.h.b16 %v296
  %v777 = vunpack.c.l.b16 %v297
  %v778 = vunpack.c.h.b16 %v297
  %v779 = vunpack.c.l.b16 %v298
  %v780 = vunpack.c.h.b16 %v298
  %v781 = vunpack.c.l.b16 %v299
  %v782 = vunpack.c.h.b16 %v299
  %v783 = vunpack.c.l.b16 %v300
  %v784 = vunpack.c.h.b16 %v300
  %v785 = vunpack.c.l.b16 %v301
  %v786 = vunpack.c.h.b16 %v301
  %v787 = vunpack.c.l.b16 %v302
  %v788 = vunpack.c.h.b16 %v302
  %v789 = vunpack.c.l.b16 %v303
  %v790 = vunpack.c.h.b16 %v303
  %v791 = vunpack.c.l.b16 %v304
  %v792 = vunpack.c.h.b16 %v304
  %v793 = vunpack.c.l.b16 %v305
  %v794 = vunpack.c.h.b16 %v305
  %v795 = vunpack.c.l.b16 %v306
  %v796 = vunpack.c.h.b16 %v306
  %v797 = vunpack.c.l.b16 %v307
  %v798 = vunpack.c.h.b16 %v307
  %v799 = vunpack.c.l.b16 %v308
  %v800 = vunpack.c.h.b16 %v308
  %v801 = vunpack.c.l.b16 %v309
  %v802 = vunpack.c.h.b16 %v309
  %v803 = vunpack.c.l.b16 %v310
  %v804 = vunpack.c.h.b16 %v310
  %v805 = vunpack.c.l.b16 %v311
  %v806 = vunpack.c.h.b16 %v311
  %v807 = vunpack.c.l.b16 %v312
  %v808 = vunpack.c.h.b16 %v312
  %v809 = vunpack.c.l.b16 %v313
  %v810 = vunpack.c.h.b16 %v313
  %v811 = vunpack.c.l.b16 %v314
  %v812 = vunpack.c.h.b16 %v314
  %v813 = vunpack.c.l.b16 %v315
  %v814 = vunpack.c.h.b16 %v315
  %v815 = vunpack.c.l.b16 %v316
  %v816 = vunpack.c.h.b16 %v316
  %v817 = vunpack.c.l.b16 %v317
  %v818 = vunpack.c.h.b16 %v317
  %v819 = vunpack.c.l.b16 %v318
  %v820 = vunpack.c.h.b16 %v318
  %v821 = vunpack.c.l.b16 %v319
  %v822 = vunpack.c.h.b16 %v319
  %v823 = vunpack.c.l.b16 %v320
  %v824 = vunpack.c.h.b16 %v320
  %v825 = vunpack.c.l.b16 %v321
  %v826 = vunpack.c.h.b16 %v321
  %v827 = vunpack.c.l.b16 %v322
  %v828 = vunpack.c.h.b16 %v322
  %v829 = vunpack.c.l.b16 %v323
  %v830 = vunpack.c.h.b16 %v323
  %v831 = vunpack.c.l.b16 %v324
  %v832 = vunpack.c.h.b16 %v324
  %v833 = vunpack.c.l.b16 %v325
  %v834 = vunpack.c.h.b16 %v325
  %v835 = vunpack.c.l.b16 %v326
  %v836 = vunpack.c.h.b16 %v326
  %v837 = vunpack.c.l.b16 %v327
  %v838 = vunpack.c.h.b16 %v327
  %v839 = vunpack.c.l.b16 %v328
  %v840 = vunpack.c.h.b16 %v328
  %v841 = vunpack.c.l.b16 %v329
  %v842 = vunpack.c.h.b16 %v329
  %v843 = vunpack.c.l.b16 %v330
  %v844 = vunpack.c.h.b16 %v330
  %v845 = vunpack.c.l.b16 %v331
  %v846 = vunpack.c.h.b16 %v331
  %v847 = vunpack.c.l.b16 %v332
  %v848 = vunpack.c.h.b16 %v332
  %v849 = vunpack.c.l.b16 %v333
  %v850 = vunpack.c.h.b16 %v333
  %v851 = vunpack.c.l.b16 %v334
  %v852 = vunpack.c.h.b16 %v334
  %v853 = vunpack.c.l.b16 %v335
  %v854 = vunpack.c.h.b16 %v335
  %v855 = vunpack.c.l.b16 %v336
  %v856 = vunpack.c.h.b16 %v336
  %v857 = vunpack.c.l.b16 %v337
  %v858 = vunpack.c.h.b16 %v337
  %v859 = vunpack.c.l.b16 %v338
  %v860 = vunpack.c.h.b16 %v338
  %v861 = vunpack.c.l.b16 %v339
  %v862 = vunpack.c.h.b16 %v339
  %v863 = vunpack.c.l.b16 %v340
  %v864 = vunpack.c.h.b16 %v340
  %v865 = vunpack.c.l.b16 %v341
  %v866 = vunpack.c.h.b16 %v341
  %v867 = vunpack.c.l.b16 %v342
  %v868 = vunpack.c.h.b16 %v342
  %v869 = vunpack.c.l.b16 %v343
  %v870 = vunpack.c.h.b16 %v343
  %v871 = vunpack.c.l.b16 %v344
  %v872 = vunpack.c.h.b16 %v344
  %v873 = vunpack.c.l.b16 %v345
  %v874 = vunpack.c.h.b16 %v345
  %v875 = vunpack.c.l.b16 %v346
  %v876 = vunpack.c.h.b16 %v346
  %v877 = vunpack.c.l.b16 %v347
  %v878 = vunpack.c.h.b16 %v347
  %v879 = vunpack.c.l.b16 %v348
  %v880 = vunpack.c.h.b16 %v348
  %v881 = vunpack.c.l.b16 %v349
  %v882 = vunpack.c.h.b16 %v349
  %v883 = vunpack.c.l.b16 %v350
  %v884 = vunpack.c.h.b16 %v350
  %v885 = vunpack.c.l.b16 %v351
  %v886 = vunpack.c.h.b16 %v351
  %v887 = vunpack.c.l.b16 %v352
  %v888 = vunpack.c.h.b16 %v352
  %v889 = vunpack.c.l.b16 %v353
  %v890 = vunpack.c.h.b16 %v353
  %v891 = vunpack.c.l.b16 %v354
  %v892 = vunpack.c.h.b16 %v354
  %v893 = vunpack.c.l.b16 %v355
  %v894 = vunpack.c.h.b16 %v355
  %v895 = vunpack.c.l.b16 %v356
  %v896 = vunpack.c.h.b16 %v356
  %v897 = vunpack.c.l.b16 %v357
  %v898 = vunpack.c.h.b16 %v357
  %v899 = vpack.c.b16 %v647, %v643
  %v900 = vpack.c.b16 %v648, %v644
  %v901 = vpack.c.b16 %v649, %v645
  %v902 = vpack.c.b16 %v650, %v646
  %v903 = vpack.c.b16 %v655, %v651
  %v904 = vpack.c.b16 %v656, %v652
  %v905 = vpack.c.b16 %v657, %v653
  %v906 = vpack.c.b16 %v658, %v654
  %v907 = vpack.c.b16 %v663, %v659
  %v908 = vpack.c.b16 %v664, %v660
  %v909 = vpack.c.b16 %v665, %v661
  %v910 = vpack.c.b16 %v666, %v662
  %v911 = vpack.c.b16 %v671, %v667
  %v912 = vpack.c.b16 %v672, %v668
  %v913 = vpack.c.b16 %v673, %v669
  %v914 = vpack.c.b16 %v674, %v670
  %v915 = vpack.c.b16 %v679, %v675
  %v916 = vpack.c.b16 %v680, %v676
  %v917 = vpack.c.b16 %v681, %v677
  %v918 = vpack.c.b16 %v682, %v678
  %v919 = vpack.c.b16 %v687, %v683
  %v920 = vpack.c.b16 %v688, %v684
  %v921 = vpack.c.b16 %v689, %v685
  %v922 = vpack.c.b16 %v690, %v686
  %v923 = vpack.c.b16 %v695, %v691
  %v924 = vpack.c.b16 %v696, %v692
  %v925 = vpack.c.b16 %v697, %v693
  %v926 = vpack.c.b16 %v698, %v694
  %v927 = vpack.c.b16 %v703, %v699
  %v928 = vpack.c.b16 %v704, %v700
  %v929 = vpack.c.b16 %v705, %v701
  %v930 = vpack.c.b16 %v706, %v702
  %v931 = vpack.c.b16 %v711, %v707
  %v932 = vpack.c.b16 %v712, %v708
  %v933 = vpack.c.b16 %v713, %v709
  %v934 = vpack.c.b16 %v714, %v710
  %v935 = vpack.c.b16 %v719, %v715
  %v936 = vpack.c.b16 %v720, %v716
  %v937 = vpack.c.b16 %v721, %v717
  %v938 = vpack.c.b16 %v722, %v718
  %v939 = vpack.c.b16 %v727, %v723
  %v940 = vpack.c.b16 %v728, %v724
  %v941 = vpack.c.b16 %v729, %v725
  %v942 = vpack.c.b16 %v730, %v726
  %v943 = vpack.c.b16 %v735, %v731
  %v944 = vpack.c.b16 %v736, %v732
  %v945 = vpack.c.b16 %v737, %v733
  %v946 = vpack.c.b16 %v738, %v734
  %v947 = vpack.c.b16 %v743, %v739
  %v948 = vpack.c.b16 %v744, %v740
  %v949 = vpack.c.b16 %v745, %v741
  %v950 = vpack.c.b16 %v746, %v742
  %v951 = vpack.c.b16 %v751, %v747
  %v952 = vpack.c.b16 %v752, %v748
  %v953 = vpack.c.b16 %v753, %v749
  %v954 = vpack.c.b16 %v754, %v750
  %v955 = vpack.c.b16 %v759, %v755
  %v956 = vpack.c.b16 %v760, %v756
  %v957 = vpack.c.b16 %v761, %v757
  %v958 = vpack.c.b16 %v762, %v758
  %v959 = vpack.c.b16 %v767, %v763
  %v960 = vpack.c.b16 %v768, %v764
  %v961 = vpack.c.b16 %v769, %v765
  %v962 = vpack.c.b16 %v770, %v766
  %v963 = vpack.c.b16 %v775, %v771
  %v964 = vpack.c.b16 %v776, %v772
  %v965 = vpack.c.b16 %v777, %v773
  %v966 = vpack.c.b16 %v778, %v774
  %v967 = vpack.c.b16 %v783, %v779
  %v968 = vpack.c.b16 %v784, %v780
  %v969 = vpack.c.b16 %v785, %v781
  %v970 = vpack.c.b16 %v786, %v782
  %v971 = vpack.c.b16 %v791, %v787
  %v972 = vpack.c.b16 %v792, %v788
  %v973 = vpack.c.b16 %v793, %v789
  %v974 = vpack.c.b16 %v794, %v790
  %v975 = vpack.c.b16 %v799, %v795
  %v976 = vpack.c.b16 %v800, %v796
  %v977 = vpack.c.b16 %v801, %v797
  %v978 = vpack.c.b16 %v802, %v798
  %v979 = vpack.c.b16 %v807, %v803
  %v980 = vpack.c.b16 %v808, %v804
  %v981 = vpack.c.b16 %v809, %v805
  %v982 = vpack.c.b16 %v810, %v806
  %v983 = vpack.c.b16 %v815, %v811
  %v984 = vpack.c.b16 %v816, %v812
  %v985 = vpack.c.b16 %v817, %v813
  %v986 = vpack.c.b16 %v818, %v814
  %v987 = vpack.c.b16 %v823, %v819
  %v988 = vpack.c.b16 %v824, %v820
  %v989 = vpack.c.b16 %v825, %v821
  %v990 = vpack.c.b16 %v826, %v822
  %v991 = vpack.c.b16 %v831, %v827
  %v992 = vpack.c.b16 %v832, %v828
  %v993 = vpack.c.b16 %v833, %v829
  %v994 = vpack.c.b16 %v834, %v830
  %v995 = vpack.c.b16 %v839, %v835
  %v996 = vpack.c.b16 %v840, %v836
  %v997 = vpack.c.b16 %v841, %v837
  %v998 = vpack.c.b16 %v842, %v838
  %v999 = vpack.c.b16 %v847, %v843
  %v1000 = vpack.c.b16 %v848, %v844
  %v1001 = vpack.c.b16 %v849, %v845
  %v1002 = vpack.c.b16 %v850, %v846
  %v1003 = vpack.c.b16 %v855, %v851
  %v1004 = vpack.c.b16 %v856, %v852
  %v1005 = vpack.c.b16 %v857, %v853
  %v1006 = vpack.c.b16 %v858, %v854
  %v1007 = vpack.c.b16 %v863, %v859
  %v1008 = vpack.c.b16 %v864, %v860
  %v1009 = vpack.c.b16 %v865, %v861
  %v1010 = vpack.c.b16 %v866, %v862
  %v1011 = vpack.c.b16 %v871, %v867
  %v1012 = vpack.c.b16 %v872, %v868
  %v1013 = vpack.c.b16 %v873, %v869
  %v1014 = vpack.c.b16 %v874, %v870
  %v1015 = vpack.c.b16 %v879, %v875
  %v1016 = vpack.c.b16 %v880, %v876
  %v1017 = vpack.c.b16 %v881, %v877
  %v1018 = vpack.c.b16 %v882, %v878
  %v1019 = vpack.c.b16 %v887, %v883
  %v1020 = vpack.c.b16 %v888, %v884
  %v1021 = vpack.c.b16 %v889, %v885
  %v1022 = vpack.c.b16 %v890, %v886
  %v1023 = vpack.c.b16 %v895, %v891
  %v1024 = vpack.c.b16 %v896, %v892
  %v1025 = vpack.c.b16 %v897, %v893
  %v1026 = vpack.c.b16 %v898, %v894
  %1155 = vmatprep.subr.bf16.mxu0 %v928
  %1156 = vmatpush1.bf16.msra.mxu0 %v927
  %1157 = vmatprep.subr.bf16.mxu0 %v924
  %1158 = vmatpush1.bf16.msra.mxu0 %v923
  %1159 = vmatprep.subr.bf16.mxu0 %v920
  %1160 = vmatpush1.bf16.msra.mxu0 %v919
  %1161 = vmatprep.subr.bf16.mxu0 %v916
  %1162 = vmatpush1.bf16.msra.mxu0 %v915
  %1163 = vmatprep.subr.bf16.mxu0 %v912
  %1164 = vmatpush1.bf16.msra.mxu0 %v911
  %1165 = vmatprep.subr.bf16.mxu0 %v908
  %1166 = vmatpush1.bf16.msra.mxu0 %v907
  %1167 = vmatprep.subr.bf16.mxu0 %v904
  %1168 = vmatpush1.bf16.msra.mxu0 %v903
  %1169 = vmatprep.subr.bf16.mxu0 %v900
  %1170 = vmatpush1.bf16.msra.mxu0 %v899
  %1171 = vmatprep.subr.bf16.mxu0 %v960
  %1172 = vmatpush2.bf16.msra.mxu0 %v959
  %1173 = vmatprep.subr.bf16.mxu0 %v956
  %1174 = vmatpush2.bf16.msra.mxu0 %v955
  %1175 = vmatprep.subr.bf16.mxu0 %v952
  %1176 = vmatpush2.bf16.msra.mxu0 %v951
  %1177 = vmatprep.subr.bf16.mxu0 %v948
  %1178 = vmatpush2.bf16.msra.mxu0 %v947
  %1179 = vmatprep.subr.bf16.mxu0 %v944
  %1180 = vmatpush2.bf16.msra.mxu0 %v943
  %1181 = vmatprep.subr.bf16.mxu0 %v940
  %1182 = vmatpush2.bf16.msra.mxu0 %v939
  %1183 = vmatprep.subr.bf16.mxu0 %v936
  %1184 = vmatpush2.bf16.msra.mxu0 %v935
  %1185 = vmatprep.subr.bf16.mxu0 %v932
  %1186 = vmatpush2.bf16.msra.mxu0 %v931
  %1187 = vmatprep.mubr.bf16.mxu0 %v508
  %1188 = vmatmul.mubr.bf16.gmra.mxu0 %v507
  %v1189 = vpop.f32.mrf.mxu0
  %v1190 = vadd.f32 %v363, %v1189
  %v1191 = vpop.f32.mrf.mxu0
  %v1192 = vadd.f32 %v367, %v1191
  %v1193 = vpop.f32.mrf.mxu0
  %v1194 = vpop.f32.mrf.mxu0
  %1195 = vdwg.mxu0
  %1196 = vmatprep.subr.bf16.mxu0 %v992
  %1197 = vmatpush1.bf16.msra.mxu0 %v991
  %1198 = vmatprep.subr.bf16.mxu0 %v988
  %1199 = vmatpush1.bf16.msra.mxu0 %v987
  %1200 = vmatprep.subr.bf16.mxu0 %v984
  %1201 = vmatpush1.bf16.msra.mxu0 %v983
  %1202 = vmatprep.subr.bf16.mxu0 %v980
  %1203 = vmatpush1.bf16.msra.mxu0 %v979
  %1204 = vmatprep.subr.bf16.mxu0 %v976
  %1205 = vmatpush1.bf16.msra.mxu0 %v975
  %1206 = vmatprep.subr.bf16.mxu0 %v972
  %1207 = vmatpush1.bf16.msra.mxu0 %v971
  %1208 = vmatprep.subr.bf16.mxu0 %v968
  %1209 = vmatpush1.bf16.msra.mxu0 %v967
  %1210 = vmatprep.subr.bf16.mxu0 %v964
  %1211 = vmatpush1.bf16.msra.mxu0 %v963
  %1212 = vmatprep.subr.bf16.mxu0 %v1024
  %1213 = vmatpush2.bf16.msra.mxu0 %v1023
  %1214 = vmatprep.subr.bf16.mxu0 %v1020
  %1215 = vmatpush2.bf16.msra.mxu0 %v1019
  %1216 = vmatprep.subr.bf16.mxu0 %v1016
  %1217 = vmatpush2.bf16.msra.mxu0 %v1015
  %1218 = vmatprep.subr.bf16.mxu0 %v1012
  %1219 = vmatpush2.bf16.msra.mxu0 %v1011
  %1220 = vmatprep.subr.bf16.mxu0 %v1008
  %1221 = vmatpush2.bf16.msra.mxu0 %v1007
  %1222 = vmatprep.subr.bf16.mxu0 %v1004
  %1223 = vmatpush2.bf16.msra.mxu0 %v1003
  %1224 = vmatprep.subr.bf16.mxu0 %v1000
  %1225 = vmatpush2.bf16.msra.mxu0 %v999
  %1226 = vmatprep.subr.bf16.mxu0 %v996
  %1227 = vmatpush2.bf16.msra.mxu0 %v995
  %1228 = vmatprep.mubr.bf16.mxu0 %v510
  %1229 = vmatmul.mubr.bf16.gmra.mxu0 %v509
  %v1230 = vpop.f32.mrf.mxu0
  %v1231 = vadd.f32 %v1190, %v1230
  %v1232 = vpop.f32.mrf.mxu0
  %v1233 = vadd.f32 %v1192, %v1232
  %v1234 = vpop.f32.mrf.mxu0
  %v1235 = vpop.f32.mrf.mxu0
  %1236 = vdwg.mxu0
  %1237 = vmatprep.subr.bf16.mxu0 %v930
  %1238 = vmatpush1.bf16.msra.mxu0 %v929
  %1239 = vmatprep.subr.bf16.mxu0 %v926
  %1240 = vmatpush1.bf16.msra.mxu0 %v925
  %1241 = vmatprep.subr.bf16.mxu0 %v922
  %1242 = vmatpush1.bf16.msra.mxu0 %v921
  %1243 = vmatprep.subr.bf16.mxu0 %v918
  %1244 = vmatpush1.bf16.msra.mxu0 %v917
  %1245 = vmatprep.subr.bf16.mxu0 %v914
  %1246 = vmatpush1.bf16.msra.mxu0 %v913
  %1247 = vmatprep.subr.bf16.mxu0 %v910
  %1248 = vmatpush1.bf16.msra.mxu0 %v909
  %1249 = vmatprep.subr.bf16.mxu0 %v906
  %1250 = vmatpush1.bf16.msra.mxu0 %v905
  %1251 = vmatprep.subr.bf16.mxu0 %v902
  %1252 = vmatpush1.bf16.msra.mxu0 %v901
  %1253 = vmatprep.subr.bf16.mxu0 %v962
  %1254 = vmatpush2.bf16.msra.mxu0 %v961
  %1255 = vmatprep.subr.bf16.mxu0 %v958
  %1256 = vmatpush2.bf16.msra.mxu0 %v957
  %1257 = vmatprep.subr.bf16.mxu0 %v954
  %1258 = vmatpush2.bf16.msra.mxu0 %v953
  %1259 = vmatprep.subr.bf16.mxu0 %v950
  %1260 = vmatpush2.bf16.msra.mxu0 %v949
  %1261 = vmatprep.subr.bf16.mxu0 %v946
  %1262 = vmatpush2.bf16.msra.mxu0 %v945
  %1263 = vmatprep.subr.bf16.mxu0 %v942
  %1264 = vmatpush2.bf16.msra.mxu0 %v941
  %1265 = vmatprep.subr.bf16.mxu0 %v938
  %1266 = vmatpush2.bf16.msra.mxu0 %v937
  %1267 = vmatprep.subr.bf16.mxu0 %v934
  %1268 = vmatpush2.bf16.msra.mxu0 %v933
  %1269 = vmatprep.mubr.bf16.mxu0 %v508
  %1270 = vmatmul.mubr.bf16.gmra.mxu0 %v507
  %v1271 = vpop.f32.mrf.mxu0
  %v1272 = vadd.f32 %v371, %v1271
  %v1273 = vpop.f32.mrf.mxu0
  %v1274 = vadd.f32 %v375, %v1273
  %v1275 = vpop.f32.mrf.mxu0
  %v1276 = vpop.f32.mrf.mxu0
  %1277 = vdwg.mxu0
  %1278 = vmatprep.subr.bf16.mxu0 %v994
  %1279 = vmatpush1.bf16.msra.mxu0 %v993
  %1280 = vmatprep.subr.bf16.mxu0 %v990
  %1281 = vmatpush1.bf16.msra.mxu0 %v989
  %1282 = vmatprep.subr.bf16.mxu0 %v986
  %1283 = vmatpush1.bf16.msra.mxu0 %v985
  %1284 = vmatprep.subr.bf16.mxu0 %v982
  %1285 = vmatpush1.bf16.msra.mxu0 %v981
  %1286 = vmatprep.subr.bf16.mxu0 %v978
  %1287 = vmatpush1.bf16.msra.mxu0 %v977
  %1288 = vmatprep.subr.bf16.mxu0 %v974
  %1289 = vmatpush1.bf16.msra.mxu0 %v973
  %1290 = vmatprep.subr.bf16.mxu0 %v970
  %1291 = vmatpush1.bf16.msra.mxu0 %v969
  %1292 = vmatprep.subr.bf16.mxu0 %v966
  %1293 = vmatpush1.bf16.msra.mxu0 %v965
  %1294 = vmatprep.subr.bf16.mxu0 %v1026
  %1295 = vmatpush2.bf16.msra.mxu0 %v1025
  %1296 = vmatprep.subr.bf16.mxu0 %v1022
  %1297 = vmatpush2.bf16.msra.mxu0 %v1021
  %1298 = vmatprep.subr.bf16.mxu0 %v1018
  %1299 = vmatpush2.bf16.msra.mxu0 %v1017
  %1300 = vmatprep.subr.bf16.mxu0 %v1014
  %1301 = vmatpush2.bf16.msra.mxu0 %v1013
  %1302 = vmatprep.subr.bf16.mxu0 %v1010
  %1303 = vmatpush2.bf16.msra.mxu0 %v1009
  %1304 = vmatprep.subr.bf16.mxu0 %v1006
  %1305 = vmatpush2.bf16.msra.mxu0 %v1005
  %1306 = vmatprep.subr.bf16.mxu0 %v1002
  %1307 = vmatpush2.bf16.msra.mxu0 %v1001
  %1308 = vmatprep.subr.bf16.mxu0 %v998
  %1309 = vmatpush2.bf16.msra.mxu0 %v997
  %1310 = vmatprep.mubr.bf16.mxu0 %v510
  %1311 = vmatmul.mubr.bf16.gmra.mxu0 %v509
  %v1312 = vpop.f32.mrf.mxu0
  %v1313 = vadd.f32 %v1272, %v1312
  %v1314 = vpop.f32.mrf.mxu0
  %v1315 = vadd.f32 %v1274, %v1314
  %v1316 = vpop.f32.mrf.mxu0
  %v1317 = vpop.f32.mrf.mxu0
  %1318 = vdwg.mxu0
  %1319 = vst [vmem:[%s3] sm:$0xff] %v1231
  %1320 = vst [vmem:[%s3 + $0x8] sm:$0xff] %v1233
  %1321 = vst [vmem:[%s3 + $0x10] sm:$0xff] %v1313
  %1322 = vst [vmem:[%s3 + $0x18] sm:$0xff] %v1315
  // Predicated region
  $region14: #{ss_model_forward.10} parent=0 // pred_check
    _
  $region15: #{ss_model_forward.10} parent=0 // pred_check_branch
    %1324 = sbr.rel (0) target = $region17
  $region16: #{ss_model_forward.10} parent=0 // pred_region
    _
  $region17: #{ss_model_forward.10} parent=0 // pred_fallthru
    _
  // Predicated region
  $region18: #{ss_model_forward.10} parent=0 // pred_check
    _
  $region19: #{ss_model_forward.10} parent=0 // pred_check_branch
    %1326 = sbr.rel (0) target = $region21
  $region20: #{ss_model_forward.10} parent=0 // pred_region
    _
  $region21: #{ss_model_forward.10} parent=0 // pred_fallthru
    _

// kernel: ss_model_forward.11
$region0: #{ss_model_forward.11}
  #allocation0 [shape = 'u32[]', space=smem, size = 0x4, offset = 0x4, fixed_abs, tag = 'smem constant byte address 0x4 - core index']
  #allocation1 [shape = 'u32[144,128]{1,0:T(1,128)}', space=vmem, size = 0x12000, scoped, tag = 'internal scratch']
  %s0 = inlined_call_operand.vmem [shape: f32[4,512], index: 0, kind: input, shape index: {}]
  %s1 = inlined_call_operand.vmem [shape: bf16[512,256], index: 1, kind: input, shape index: {}]
  %s2 = inlined_call_operand.vmem [shape: f32[1,256], index: 2, kind: input, shape index: {}]
  %s3 = inlined_call_operand.vmem [shape: f32[1,256], index: 3, kind: input, shape index: {}]
  %s4 = inlined_call_operand.vmem [shape: bf16[256,256], index: 4, kind: input, shape index: {}]
  %s5 = inlined_call_operand.vmem [shape: f32[1,256], index: 5, kind: input, shape index: {}]
  %s6 = inlined_call_operand.vmem [shape: f32[1,256], index: 6, kind: input, shape index: {}]
  %s7 = inlined_call_operand.vmem [shape: f32[512,6], index: 7, kind: input, shape index: {}]
  %s8 = inlined_call_operand.vmem [shape: f32[1,6], index: 8, kind: input, shape index: {}]
  %s9 = inlined_call_operand.vmem [shape: f32[2,6], index: 9, kind: input, shape index: {}]
  %s10 = inlined_call_operand.hbm [shape: f32[1,1], index: 10, kind: output, shape index: {0}]
  %s11 = inlined_call_operand.hbm [shape: f32[2,6], index: 11, kind: output, shape index: {1}]
  %12 = xla_tuple %s10, %s11
  %s13 = sld [smem:[#allocation0]]
  $region58: #{ss_model_forward.11} parent=0
    _
  %s15 = ssub.s32 1, %s13
  %s16 = scalar_select 0, %s15, %s13
  $region1: #{ss_model_forward.11} parent=0
    #allocation2 [shape = 'u8[512]{0}', space=vmem, size = 0x400, scoped, tag = 'output window, operand 0, single buffered']
    #allocation3 [shape = 's32[1]{0}', space=sflag, size = 0x4, scoped, tag = 'scoped memory for ss_model_forward.11']
    #allocation4 [shape = 'u8[1024]{0}', space=vmem, size = 0x400, scoped, tag = 'output window, operand 1, single buffered']
    #allocation5 [shape = 's32[1]{0}', space=sflag, size = 0x4, scoped, tag = 'scoped memory for ss_model_forward.11']
    %17 = vsyncpa [#allocation3], 0
    %18 = vsyncpa [#allocation5], 0
    // Predicated region
    $region2: #{ss_model_forward.11} parent=1 // pred_check
      _
    $region3: #{ss_model_forward.11} parent=1 // pred_check_branch
      %20 = sbr.rel (0) target = $region5
    $region4: #{ss_model_forward.11} parent=1 // pred_region
      _
    $region5: #{ss_model_forward.11} parent=1 // pred_fallthru
      _
    // Predicated region
    $region6: #{ss_model_forward.11} parent=1 // pred_check
      _
    $region7: #{ss_model_forward.11} parent=1 // pred_check_branch
      %22 = sbr.rel (0) target = $region9
    $region8: #{ss_model_forward.11} parent=1 // pred_region
      _
    $region9: #{ss_model_forward.11} parent=1 // pred_fallthru
      _
    // Predicated region
    $region10: #{ss_model_forward.11} parent=1 // pred_check
      _
    $region11: #{ss_model_forward.11} parent=1 // pred_check_branch
      %24 = sbr.rel (0) target = $region13
    $region12: #{ss_model_forward.11} parent=1 // pred_region
      _
    $region13: #{ss_model_forward.11} parent=1 // pred_fallthru
      _
    // Predicated region
    $region14: #{ss_model_forward.11} parent=1 // pred_check
      _
    $region15: #{ss_model_forward.11} parent=1 // pred_check_branch
      %26 = sbr.rel (0) target = $region17
    $region16: #{ss_model_forward.11} parent=1 // pred_region
      _
    $region17: #{ss_model_forward.11} parent=1 // pred_fallthru
      _
    // Predicated region
    $region18: #{ss_model_forward.11} parent=1 // pred_check
      _
    $region19: #{ss_model_forward.11} parent=1 // pred_check_branch
      %28 = sbr.rel (0) target = $region21
    $region20: #{ss_model_forward.11} parent=1 // pred_region
      _
    $region21: #{ss_model_forward.11} parent=1 // pred_fallthru
      _
    // Predicated region
    $region22: #{ss_model_forward.11} parent=1 // pred_check
      _
    $region23: #{ss_model_forward.11} parent=1 // pred_check_branch
      %30 = sbr.rel (0) target = $region25
    $region24: #{ss_model_forward.11} parent=1 // pred_region
      _
    $region25: #{ss_model_forward.11} parent=1 // pred_fallthru
      _
    // Predicated region
    $region26: #{ss_model_forward.11} parent=1 // pred_check
      _
    $region27: #{ss_model_forward.11} parent=1 // pred_check_branch
      %32 = sbr.rel (0) target = $region29
    $region28: #{ss_model_forward.11} parent=1 // pred_region
      _
    $region29: #{ss_model_forward.11} parent=1 // pred_fallthru
      _
    // Predicated region
    $region30: #{ss_model_forward.11} parent=1 // pred_check
      _
    $region31: #{ss_model_forward.11} parent=1 // pred_check_branch
      %34 = sbr.rel (0) target = $region33
    $region32: #{ss_model_forward.11} parent=1 // pred_region
      _
    $region33: #{ss_model_forward.11} parent=1 // pred_fallthru
      _
    // Predicated region
    $region34: #{ss_model_forward.11} parent=1 // pred_check
      _
    $region35: #{ss_model_forward.11} parent=1 // pred_check_branch
      %36 = sbr.rel (0) target = $region37
    $region36: #{ss_model_forward.11} parent=1 // pred_region
      _
    $region37: #{ss_model_forward.11} parent=1 // pred_fallthru
      _
    // Predicated region
    $region38: #{ss_model_forward.11} parent=1 // pred_check
      _
    $region39: #{ss_model_forward.11} parent=1 // pred_check_branch
      %38 = sbr.rel (0) target = $region41
    $region40: #{ss_model_forward.11} parent=1 // pred_region
      _
    $region41: #{ss_model_forward.11} parent=1 // pred_fallthru
      _
    %v39 = vld [vmem:[%s0] sm:$0xff]
    %v40 = vld [vmem:[%s0 + $0x8] sm:$0xff]
    %v43 = vcombine.high %v39, %v39
    %v44 = vcombine.high %v40, %v40
    %v47 = vpack.c.bf16 %v39, %v39
    %v48 = vpack.c.bf16 %v43, %v43
    %v49 = vpack.c.bf16 %v40, %v40
    %v50 = vpack.c.bf16 %v44, %v44
    %v51 = vld [vmem:[%s1] sm:$0xff]
    %v52 = vld [vmem:[%s1 + $0x8] sm:$0xff]
    %v53 = vld [vmem:[%s1 + $0x10] sm:$0xff]
    %v54 = vld [vmem:[%s1 + $0x18] sm:$0xff]
    %v55 = vld [vmem:[%s1 + $0x20] sm:$0xff]
    %v56 = vld [vmem:[%s1 + $0x28] sm:$0xff]
    %v57 = vld [vmem:[%s1 + $0x30] sm:$0xff]
    %v58 = vld [vmem:[%s1 + $0x38] sm:$0xff]
    %v59 = vld [vmem:[%s1 + $0x40] sm:$0xff]
    %v60 = vld [vmem:[%s1 + $0x48] sm:$0xff]
    %v61 = vld [vmem:[%s1 + $0x50] sm:$0xff]
    %v62 = vld [vmem:[%s1 + $0x58] sm:$0xff]
    %v63 = vld [vmem:[%s1 + $0x60] sm:$0xff]
    %v64 = vld [vmem:[%s1 + $0x68] sm:$0xff]
    %v65 = vld [vmem:[%s1 + $0x70] sm:$0xff]
    %v66 = vld [vmem:[%s1 + $0x78] sm:$0xff]
    %v67 = vld [vmem:[%s1 + $0x80] sm:$0xff]
    %v68 = vld [vmem:[%s1 + $0x88] sm:$0xff]
    %v69 = vld [vmem:[%s1 + $0x90] sm:$0xff]
    %v70 = vld [vmem:[%s1 + $0x98] sm:$0xff]
    %v71 = vld [vmem:[%s1 + $0xa0] sm:$0xff]
    %v72 = vld [vmem:[%s1 + $0xa8] sm:$0xff]
    %v73 = vld [vmem:[%s1 + $0xb0] sm:$0xff]
    %v74 = vld [vmem:[%s1 + $0xb8] sm:$0xff]
    %v75 = vld [vmem:[%s1 + $0xc0] sm:$0xff]
    %v76 = vld [vmem:[%s1 + $0xc8] sm:$0xff]
    %v77 = vld [vmem:[%s1 + $0xd0] sm:$0xff]
    %v78 = vld [vmem:[%s1 + $0xd8] sm:$0xff]
    %v79 = vld [vmem:[%s1 + $0xe0] sm:$0xff]
    %v80 = vld [vmem:[%s1 + $0xe8] sm:$0xff]
    %v81 = vld [vmem:[%s1 + $0xf0] sm:$0xff]
    %v82 = vld [vmem:[%s1 + $0xf8] sm:$0xff]
    %v83 = vld [vmem:[%s1 + $0x100] sm:$0xff]
    %v84 = vld [vmem:[%s1 + $0x108] sm:$0xff]
    %v85 = vld [vmem:[%s1 + $0x110] sm:$0xff]
    %v86 = vld [vmem:[%s1 + $0x118] sm:$0xff]
    %v87 = vld [vmem:[%s1 + $0x120] sm:$0xff]
    %v88 = vld [vmem:[%s1 + $0x128] sm:$0xff]
    %v89 = vld [vmem:[%s1 + $0x130] sm:$0xff]
    %v90 = vld [vmem:[%s1 + $0x138] sm:$0xff]
    %v91 = vld [vmem:[%s1 + $0x140] sm:$0xff]
    %v92 = vld [vmem:[%s1 + $0x148] sm:$0xff]
    %v93 = vld [vmem:[%s1 + $0x150] sm:$0xff]
    %v94 = vld [vmem:[%s1 + $0x158] sm:$0xff]
    %v95 = vld [vmem:[%s1 + $0x160] sm:$0xff]
    %v96 = vld [vmem:[%s1 + $0x168] sm:$0xff]
    %v97 = vld [vmem:[%s1 + $0x170] sm:$0xff]
    %v98 = vld [vmem:[%s1 + $0x178] sm:$0xff]
    %v99 = vld [vmem:[%s1 + $0x180] sm:$0xff]
    %v100 = vld [vmem:[%s1 + $0x188] sm:$0xff]
    %v101 = vld [vmem:[%s1 + $0x190] sm:$0xff]
    %v102 = vld [vmem:[%s1 + $0x198] sm:$0xff]
    %v103 = vld [vmem:[%s1 + $0x1a0] sm:$0xff]
    %v104 = vld [vmem:[%s1 + $0x1a8] sm:$0xff]
    %v105 = vld [vmem:[%s1 + $0x1b0] sm:$0xff]
    %v106 = vld [vmem:[%s1 + $0x1b8] sm:$0xff]
    %v107 = vld [vmem:[%s1 + $0x1c0] sm:$0xff]
    %v108 = vld [vmem:[%s1 + $0x1c8] sm:$0xff]
    %v109 = vld [vmem:[%s1 + $0x1d0] sm:$0xff]
    %v110 = vld [vmem:[%s1 + $0x1d8] sm:$0xff]
    %v111 = vld [vmem:[%s1 + $0x1e0] sm:$0xff]
    %v112 = vld [vmem:[%s1 + $0x1e8] sm:$0xff]
    %v113 = vld [vmem:[%s1 + $0x1f0] sm:$0xff]
    %v114 = vld [vmem:[%s1 + $0x1f8] sm:$0xff]
    %v179 = vunpack.c.l.b16 %v51
    %v180 = vunpack.c.h.b16 %v51
    %v181 = vunpack.c.l.b16 %v52
    %v182 = vunpack.c.h.b16 %v52
    %v183 = vunpack.c.l.b16 %v53
    %v184 = vunpack.c.h.b16 %v53
    %v185 = vunpack.c.l.b16 %v54
    %v186 = vunpack.c.h.b16 %v54
    %v187 = vunpack.c.l.b16 %v55
    %v188 = vunpack.c.h.b16 %v55
    %v189 = vunpack.c.l.b16 %v56
    %v190 = vunpack.c.h.b16 %v56
    %v191 = vunpack.c.l.b16 %v57
    %v192 = vunpack.c.h.b16 %v57
    %v193 = vunpack.c.l.b16 %v58
    %v194 = vunpack.c.h.b16 %v58
    %v195 = vunpack.c.l.b16 %v59
    %v196 = vunpack.c.h.b16 %v59
    %v197 = vunpack.c.l.b16 %v60
    %v198 = vunpack.c.h.b16 %v60
    %v199 = vunpack.c.l.b16 %v61
    %v200 = vunpack.c.h.b16 %v61
    %v201 = vunpack.c.l.b16 %v62
    %v202 = vunpack.c.h.b16 %v62
    %v203 = vunpack.c.l.b16 %v63
    %v204 = vunpack.c.h.b16 %v63
    %v205 = vunpack.c.l.b16 %v64
    %v206 = vunpack.c.h.b16 %v64
    %v207 = vunpack.c.l.b16 %v65
    %v208 = vunpack.c.h.b16 %v65
    %v209 = vunpack.c.l.b16 %v66
    %v210 = vunpack.c.h.b16 %v66
    %v211 = vunpack.c.l.b16 %v67
    %v212 = vunpack.c.h.b16 %v67
    %v213 = vunpack.c.l.b16 %v68
    %v214 = vunpack.c.h.b16 %v68
    %v215 = vunpack.c.l.b16 %v69
    %v216 = vunpack.c.h.b16 %v69
    %v217 = vunpack.c.l.b16 %v70
    %v218 = vunpack.c.h.b16 %v70
    %v219 = vunpack.c.l.b16 %v71
    %v220 = vunpack.c.h.b16 %v71
    %v221 = vunpack.c.l.b16 %v72
    %v222 = vunpack.c.h.b16 %v72
    %v223 = vunpack.c.l.b16 %v73
    %v224 = vunpack.c.h.b16 %v73
    %v225 = vunpack.c.l.b16 %v74
    %v226 = vunpack.c.h.b16 %v74
    %v227 = vunpack.c.l.b16 %v75
    %v228 = vunpack.c.h.b16 %v75
    %v229 = vunpack.c.l.b16 %v76
    %v230 = vunpack.c.h.b16 %v76
    %v231 = vunpack.c.l.b16 %v77
    %v232 = vunpack.c.h.b16 %v77
    %v233 = vunpack.c.l.b16 %v78
    %v234 = vunpack.c.h.b16 %v78
    %v235 = vunpack.c.l.b16 %v79
    %v236 = vunpack.c.h.b16 %v79
    %v237 = vunpack.c.l.b16 %v80
    %v238 = vunpack.c.h.b16 %v80
    %v239 = vunpack.c.l.b16 %v81
    %v240 = vunpack.c.h.b16 %v81
    %v241 = vunpack.c.l.b16 %v82
    %v242 = vunpack.c.h.b16 %v82
    %v243 = vunpack.c.l.b16 %v83
    %v244 = vunpack.c.h.b16 %v83
    %v245 = vunpack.c.l.b16 %v84
    %v246 = vunpack.c.h.b16 %v84
    %v247 = vunpack.c.l.b16 %v85
    %v248 = vunpack.c.h.b16 %v85
    %v249 = vunpack.c.l.b16 %v86
    %v250 = vunpack.c.h.b16 %v86
    %v251 = vunpack.c.l.b16 %v87
    %v252 = vunpack.c.h.b16 %v87
    %v253 = vunpack.c.l.b16 %v88
    %v254 = vunpack.c.h.b16 %v88
    %v255 = vunpack.c.l.b16 %v89
    %v256 = vunpack.c.h.b16 %v89
    %v257 = vunpack.c.l.b16 %v90
    %v258 = vunpack.c.h.b16 %v90
    %v259 = vunpack.c.l.b16 %v91
    %v260 = vunpack.c.h.b16 %v91
    %v261 = vunpack.c.l.b16 %v92
    %v262 = vunpack.c.h.b16 %v92
    %v263 = vunpack.c.l.b16 %v93
    %v264 = vunpack.c.h.b16 %v93
    %v265 = vunpack.c.l.b16 %v94
    %v266 = vunpack.c.h.b16 %v94
    %v267 = vunpack.c.l.b16 %v95
    %v268 = vunpack.c.h.b16 %v95
    %v269 = vunpack.c.l.b16 %v96
    %v270 = vunpack.c.h.b16 %v96
    %v271 = vunpack.c.l.b16 %v97
    %v272 = vunpack.c.h.b16 %v97
    %v273 = vunpack.c.l.b16 %v98
    %v274 = vunpack.c.h.b16 %v98
    %v275 = vunpack.c.l.b16 %v99
    %v276 = vunpack.c.h.b16 %v99
    %v277 = vunpack.c.l.b16 %v100
    %v278 = vunpack.c.h.b16 %v100
    %v279 = vunpack.c.l.b16 %v101
    %v280 = vunpack.c.h.b16 %v101
    %v281 = vunpack.c.l.b16 %v102
    %v282 = vunpack.c.h.b16 %v102
    %v283 = vunpack.c.l.b16 %v103
    %v284 = vunpack.c.h.b16 %v103
    %v285 = vunpack.c.l.b16 %v104
    %v286 = vunpack.c.h.b16 %v104
    %v287 = vunpack.c.l.b16 %v105
    %v288 = vunpack.c.h.b16 %v105
    %v289 = vunpack.c.l.b16 %v106
    %v290 = vunpack.c.h.b16 %v106
    %v291 = vunpack.c.l.b16 %v107
    %v292 = vunpack.c.h.b16 %v107
    %v293 = vunpack.c.l.b16 %v108
    %v294 = vunpack.c.h.b16 %v108
    %v295 = vunpack.c.l.b16 %v109
    %v296 = vunpack.c.h.b16 %v109
    %v297 = vunpack.c.l.b16 %v110
    %v298 = vunpack.c.h.b16 %v110
    %v299 = vunpack.c.l.b16 %v111
    %v300 = vunpack.c.h.b16 %v111
    %v301 = vunpack.c.l.b16 %v112
    %v302 = vunpack.c.h.b16 %v112
    %v303 = vunpack.c.l.b16 %v113
    %v304 = vunpack.c.h.b16 %v113
    %v305 = vunpack.c.l.b16 %v114
    %v306 = vunpack.c.h.b16 %v114
    %v307 = vpack.c.b16 %v181, %v179
    %v308 = vpack.c.b16 %v182, %v180
    %v309 = vpack.c.b16 %v185, %v183
    %v310 = vpack.c.b16 %v186, %v184
    %v311 = vpack.c.b16 %v189, %v187
    %v312 = vpack.c.b16 %v190, %v188
    %v313 = vpack.c.b16 %v193, %v191
    %v314 = vpack.c.b16 %v194, %v192
    %v315 = vpack.c.b16 %v197, %v195
    %v316 = vpack.c.b16 %v198, %v196
    %v317 = vpack.c.b16 %v201, %v199
    %v318 = vpack.c.b16 %v202, %v200
    %v319 = vpack.c.b16 %v205, %v203
    %v320 = vpack.c.b16 %v206, %v204
    %v321 = vpack.c.b16 %v209, %v207
    %v322 = vpack.c.b16 %v210, %v208
    %v323 = vpack.c.b16 %v213, %v211
    %v324 = vpack.c.b16 %v214, %v212
    %v325 = vpack.c.b16 %v217, %v215
    %v326 = vpack.c.b16 %v218, %v216
    %v327 = vpack.c.b16 %v221, %v219
    %v328 = vpack.c.b16 %v222, %v220
    %v329 = vpack.c.b16 %v225, %v223
    %v330 = vpack.c.b16 %v226, %v224
    %v331 = vpack.c.b16 %v229, %v227
    %v332 = vpack.c.b16 %v230, %v228
    %v333 = vpack.c.b16 %v233, %v231
    %v334 = vpack.c.b16 %v234, %v232
    %v335 = vpack.c.b16 %v237, %v235
    %v336 = vpack.c.b16 %v238, %v236
    %v337 = vpack.c.b16 %v241, %v239
    %v338 = vpack.c.b16 %v242, %v240
    %v339 = vpack.c.b16 %v245, %v243
    %v340 = vpack.c.b16 %v246, %v244
    %v341 = vpack.c.b16 %v249, %v247
    %v342 = vpack.c.b16 %v250, %v248
    %v343 = vpack.c.b16 %v253, %v251
    %v344 = vpack.c.b16 %v254, %v252
    %v345 = vpack.c.b16 %v257, %v255
    %v346 = vpack.c.b16 %v258, %v256
    %v347 = vpack.c.b16 %v261, %v259
    %v348 = vpack.c.b16 %v262, %v260
    %v349 = vpack.c.b16 %v265, %v263
    %v350 = vpack.c.b16 %v266, %v264
    %v351 = vpack.c.b16 %v269, %v267
    %v352 = vpack.c.b16 %v270, %v268
    %v353 = vpack.c.b16 %v273, %v271
    %v354 = vpack.c.b16 %v274, %v272
    %v355 = vpack.c.b16 %v277, %v275
    %v356 = vpack.c.b16 %v278, %v276
    %v357 = vpack.c.b16 %v281, %v279
    %v358 = vpack.c.b16 %v282, %v280
    %v359 = vpack.c.b16 %v285, %v283
    %v360 = vpack.c.b16 %v286, %v284
    %v361 = vpack.c.b16 %v289, %v287
    %v362 = vpack.c.b16 %v290, %v288
    %v363 = vpack.c.b16 %v293, %v291
    %v364 = vpack.c.b16 %v294, %v292
    %v365 = vpack.c.b16 %v297, %v295
    %v366 = vpack.c.b16 %v298, %v296
    %v367 = vpack.c.b16 %v301, %v299
    %v368 = vpack.c.b16 %v302, %v300
    %v369 = vpack.c.b16 %v305, %v303
    %v370 = vpack.c.b16 %v306, %v304
    %435 = vmatprep.subr.bf16.mxu0 %v322
    %436 = vmatpush1.bf16.msra.mxu0 %v321
    %437 = vmatprep.subr.bf16.mxu0 %v320
    %438 = vmatpush1.bf16.msra.mxu0 %v319
    %439 = vmatprep.subr.bf16.mxu0 %v318
    %440 = vmatpush1.bf16.msra.mxu0 %v317
    %441 = vmatprep.subr.bf16.mxu0 %v316
    %442 = vmatpush1.bf16.msra.mxu0 %v315
    %443 = vmatprep.subr.bf16.mxu0 %v314
    %444 = vmatpush1.bf16.msra.mxu0 %v313
    %445 = vmatprep.subr.bf16.mxu0 %v312
    %446 = vmatpush1.bf16.msra.mxu0 %v311
    %447 = vmatprep.subr.bf16.mxu0 %v310
    %448 = vmatpush1.bf16.msra.mxu0 %v309
    %449 = vmatprep.subr.bf16.mxu0 %v308
    %450 = vmatpush1.bf16.msra.mxu0 %v307
    %451 = vmatprep.subr.bf16.mxu0 %v338
    %452 = vmatpush2.bf16.msra.mxu0 %v337
    %453 = vmatprep.subr.bf16.mxu0 %v336
    %454 = vmatpush2.bf16.msra.mxu0 %v335
    %455 = vmatprep.subr.bf16.mxu0 %v334
    %456 = vmatpush2.bf16.msra.mxu0 %v333
    %457 = vmatprep.subr.bf16.mxu0 %v332
    %458 = vmatpush2.bf16.msra.mxu0 %v331
    %459 = vmatprep.subr.bf16.mxu0 %v330
    %460 = vmatpush2.bf16.msra.mxu0 %v329
    %461 = vmatprep.subr.bf16.mxu0 %v328
    %462 = vmatpush2.bf16.msra.mxu0 %v327
    %463 = vmatprep.subr.bf16.mxu0 %v326
    %464 = vmatpush2.bf16.msra.mxu0 %v325
    %465 = vmatprep.subr.bf16.mxu0 %v324
    %466 = vmatpush2.bf16.msra.mxu0 %v323
    %467 = vmatprep.mubr.bf16.mxu0 %v48
    %468 = vmatmul.mubr.bf16.gmra.mxu0 %v47
    %v469 = vpop.f32.mrf.mxu0
    %v470 = vadd.f32 0.0, %v469
    %v471 = vpop.f32.mrf.mxu0
    %v472 = vadd.f32 0.0, %v471
    %v473 = vpop.f32.mrf.mxu0
    %v474 = vpop.f32.mrf.mxu0
    %475 = vdwg.mxu0
    %476 = vmatprep.subr.bf16.mxu0 %v354
    %477 = vmatpush1.bf16.msra.mxu0 %v353
    %478 = vmatprep.subr.bf16.mxu0 %v352
    %479 = vmatpush1.bf16.msra.mxu0 %v351
    %480 = vmatprep.subr.bf16.mxu0 %v350
    %481 = vmatpush1.bf16.msra.mxu0 %v349
    %482 = vmatprep.subr.bf16.mxu0 %v348
    %483 = vmatpush1.bf16.msra.mxu0 %v347
    %484 = vmatprep.subr.bf16.mxu0 %v346
    %485 = vmatpush1.bf16.msra.mxu0 %v345
    %486 = vmatprep.subr.bf16.mxu0 %v344
    %487 = vmatpush1.bf16.msra.mxu0 %v343
    %488 = vmatprep.subr.bf16.mxu0 %v342
    %489 = vmatpush1.bf16.msra.mxu0 %v341
    %490 = vmatprep.subr.bf16.mxu0 %v340
    %491 = vmatpush1.bf16.msra.mxu0 %v339
    %492 = vmatprep.subr.bf16.mxu0 %v370
    %493 = vmatpush2.bf16.msra.mxu0 %v369
    %494 = vmatprep.subr.bf16.mxu0 %v368
    %495 = vmatpush2.bf16.msra.mxu0 %v367
    %496 = vmatprep.subr.bf16.mxu0 %v366
    %497 = vmatpush2.bf16.msra.mxu0 %v365
    %498 = vmatprep.subr.bf16.mxu0 %v364
    %499 = vmatpush2.bf16.msra.mxu0 %v363
    %500 = vmatprep.subr.bf16.mxu0 %v362
    %501 = vmatpush2.bf16.msra.mxu0 %v361
    %502 = vmatprep.subr.bf16.mxu0 %v360
    %503 = vmatpush2.bf16.msra.mxu0 %v359
    %504 = vmatprep.subr.bf16.mxu0 %v358
    %505 = vmatpush2.bf16.msra.mxu0 %v357
    %506 = vmatprep.subr.bf16.mxu0 %v356
    %507 = vmatpush2.bf16.msra.mxu0 %v355
    %508 = vmatprep.mubr.bf16.mxu0 %v50
    %509 = vmatmul.mubr.bf16.gmra.mxu0 %v49
    %v510 = vpop.f32.mrf.mxu0
    %v511 = vadd.f32 %v470, %v510
    %v512 = vpop.f32.mrf.mxu0
    %v513 = vadd.f32 %v472, %v512
    %v514 = vpop.f32.mrf.mxu0
    %v515 = vpop.f32.mrf.mxu0
    %516 = vdwg.mxu0
    %v517 = vld [vmem:[%s2] sm:$0x3]
    %v518 = vld [vmem:[%s3] sm:$0x3]
    %v519 = vld [vmem:[%s5] sm:$0x3]
    %v520 = vld [vmem:[%s6] sm:$0x3]
    %vm521 = vcmask 1041408
    %v522 = vsel %vm521, %v511, 0.0
    %v523 = vrot.slane %v522, 4
    %v524 = vadd.f32 %v522, %v523
    %v525 = vrot.slane %v524, 2
    %v526 = vadd.f32 %v524, %v525
    %v527 = vrot.slane %v526, 1
    %v528 = vadd.f32 %v526, %v527
    %v529 = vsel %vm521, %v513, 0.0
    %v530 = vrot.slane %v529, 4
    %v531 = vadd.f32 %v529, %v530
    %v532 = vrot.slane %v531, 2
    %v533 = vadd.f32 %v531, %v532
    %v534 = vrot.slane %v533, 1
    %v535 = vadd.f32 %v533, %v534
    %v536 = vrcp.pop 2.0
    %v537 = vmul.f32 %v528, %v536
    %v538 = vmul.f32 %v535, %v536
    %v539 = vsub.f32 %v511, %v537
    %v540 = vsub.f32 %v513, %v538
    %v541 = vmul.f32 %v539, %v539
    %v542 = vmul.f32 %v540, %v540
    %v543 = vsel %vm521, %v541, 0.0
    %v544 = vrot.slane %v543, 4
    %v545 = vadd.f32 %v543, %v544
    %v546 = vrot.slane %v545, 2
    %v547 = vadd.f32 %v545, %v546
    %v548 = vrot.slane %v547, 1
    %v549 = vadd.f32 %v547, %v548
    %v550 = vsel %vm521, %v542, 0.0
    %v551 = vrot.slane %v550, 4
    %v552 = vadd.f32 %v550, %v551
    %v553 = vrot.slane %v552, 2
    %v554 = vadd.f32 %v552, %v553
    %v555 = vrot.slane %v554, 1
    %v556 = vadd.f32 %v554, %v555
    %v557 = vmul.f32 %v549, %v536
    %v558 = vmul.f32 %v556, %v536
    %v559 = vadd.f32 %v557, 1e-05
    %v560 = vadd.f32 %v558, 1e-05
    %v561 = vrsqrt.pop %v559
    %v562 = vrsqrt.pop %v560
    %v563 = vmul.f32 %v539, %v561
    %v564 = vmul.f32 %v540, %v562
    %v566 = vlaneseq
    %v567 = vshrl.u32 %v566, 7
    %v568 = vsub.s32 0, %v567
    %v569 = vrot.slane %v517, %v568
    %v570 = vlaneseq
    %v571 = vshrl.u32 %v570, 7
    %v572 = vsub.s32 1, %v571
    %v573 = vrot.slane %v517, %v572
    %v576 = vmul.f32 %v563, %v569
    %v577 = vmul.f32 %v564, %v573
    %v579 = vlaneseq
    %v580 = vshrl.u32 %v579, 7
    %v581 = vsub.s32 0, %v580
    %v582 = vrot.slane %v518, %v581
    %v583 = vlaneseq
    %v584 = vshrl.u32 %v583, 7
    %v585 = vsub.s32 1, %v584
    %v586 = vrot.slane %v518, %v585
    %v589 = vadd.f32 %v576, %v582
    %v590 = vadd.f32 %v577, %v586
    %v591 = vmax.f32 %v589, 0.0
    %v592 = vmax.f32 %v590, 0.0
    %v595 = vrot.slane %v511, 2
    %v596 = vrot.slane %v513, 2
    %v599 = vsel %vm521, %v595, 0.0
    %v600 = vrot.slane %v599, 4
    %v601 = vadd.f32 %v599, %v600
    %v602 = vrot.slane %v601, 2
    %v603 = vadd.f32 %v601, %v602
    %v604 = vrot.slane %v603, 1
    %v605 = vadd.f32 %v603, %v604
    %v606 = vsel %vm521, %v596, 0.0
    %v607 = vrot.slane %v606, 4
    %v608 = vadd.f32 %v606, %v607
    %v609 = vrot.slane %v608, 2
    %v610 = vadd.f32 %v608, %v609
    %v611 = vrot.slane %v610, 1
    %v612 = vadd.f32 %v610, %v611
    %v613 = vmul.f32 %v605, %v536
    %v614 = vmul.f32 %v612, %v536
    %v615 = vsub.f32 %v511, %v613
    %v616 = vsub.f32 %v513, %v614
    %v617 = vmul.f32 %v615, %v615
    %v618 = vmul.f32 %v616, %v616
    %v621 = vrot.slane %v617, 2
    %v622 = vrot.slane %v618, 2
    %v625 = vsel %vm521, %v621, 0.0
    %v626 = vrot.slane %v625, 4
    %v627 = vadd.f32 %v625, %v626
    %v628 = vrot.slane %v627, 2
    %v629 = vadd.f32 %v627, %v628
    %v630 = vrot.slane %v629, 1
    %v631 = vadd.f32 %v629, %v630
    %v632 = vsel %vm521, %v622, 0.0
    %v633 = vrot.slane %v632, 4
    %v634 = vadd.f32 %v632, %v633
    %v635 = vrot.slane %v634, 2
    %v636 = vadd.f32 %v634, %v635
    %v637 = vrot.slane %v636, 1
    %v638 = vadd.f32 %v636, %v637
    %v639 = vmul.f32 %v631, %v536
    %v640 = vmul.f32 %v638, %v536
    %v641 = vadd.f32 %v639, 1e-05
    %v642 = vadd.f32 %v640, 1e-05
    %v643 = vrsqrt.pop %v641
    %v644 = vrsqrt.pop %v642
    %v645 = vmul.f32 %v615, %v643
    %v646 = vmul.f32 %v616, %v644
    %v647 = vmul.f32 %v645, %v569
    %v648 = vmul.f32 %v646, %v573
    %v649 = vadd.f32 %v647, %v582
    %v650 = vadd.f32 %v648, %v586
    %v651 = vmax.f32 %v649, 0.0
    %v652 = vmax.f32 %v650, 0.0
    %v653 = vpack.c.bf16 %v591, %v591
    %v654 = vpack.c.bf16 %v592, %v592
    %v655 = vld [vmem:[%s4] sm:$0xff]
    %v656 = vld [vmem:[%s4 + $0x8] sm:$0xff]
    %v657 = vld [vmem:[%s4 + $0x10] sm:$0xff]
    %v658 = vld [vmem:[%s4 + $0x18] sm:$0xff]
    %v659 = vld [vmem:[%s4 + $0x20] sm:$0xff]
    %v660 = vld [vmem:[%s4 + $0x28] sm:$0xff]
    %v661 = vld [vmem:[%s4 + $0x30] sm:$0xff]
    %v662 = vld [vmem:[%s4 + $0x38] sm:$0xff]
    %v663 = vld [vmem:[%s4 + $0x40] sm:$0xff]
    %v664 = vld [vmem:[%s4 + $0x48] sm:$0xff]
    %v665 = vld [vmem:[%s4 + $0x50] sm:$0xff]
    %v666 = vld [vmem:[%s4 + $0x58] sm:$0xff]
    %v667 = vld [vmem:[%s4 + $0x60] sm:$0xff]
    %v668 = vld [vmem:[%s4 + $0x68] sm:$0xff]
    %v669 = vld [vmem:[%s4 + $0x70] sm:$0xff]
    %v670 = vld [vmem:[%s4 + $0x78] sm:$0xff]
    %v671 = vld [vmem:[%s4 + $0x80] sm:$0xff]
    %v672 = vld [vmem:[%s4 + $0x88] sm:$0xff]
    %v673 = vld [vmem:[%s4 + $0x90] sm:$0xff]
    %v674 = vld [vmem:[%s4 + $0x98] sm:$0xff]
    %v675 = vld [vmem:[%s4 + $0xa0] sm:$0xff]
    %v676 = vld [vmem:[%s4 + $0xa8] sm:$0xff]
    %v677 = vld [vmem:[%s4 + $0xb0] sm:$0xff]
    %v678 = vld [vmem:[%s4 + $0xb8] sm:$0xff]
    %v679 = vld [vmem:[%s4 + $0xc0] sm:$0xff]
    %v680 = vld [vmem:[%s4 + $0xc8] sm:$0xff]
    %v681 = vld [vmem:[%s4 + $0xd0] sm:$0xff]
    %v682 = vld [vmem:[%s4 + $0xd8] sm:$0xff]
    %v683 = vld [vmem:[%s4 + $0xe0] sm:$0xff]
    %v684 = vld [vmem:[%s4 + $0xe8] sm:$0xff]
    %v685 = vld [vmem:[%s4 + $0xf0] sm:$0xff]
    %v686 = vld [vmem:[%s4 + $0xf8] sm:$0xff]
    %v719 = vunpack.c.l.b16 %v655
    %v720 = vunpack.c.h.b16 %v655
    %v721 = vunpack.c.l.b16 %v656
    %v722 = vunpack.c.h.b16 %v656
    %v723 = vunpack.c.l.b16 %v657
    %v724 = vunpack.c.h.b16 %v657
    %v725 = vunpack.c.l.b16 %v658
    %v726 = vunpack.c.h.b16 %v658
    %v727 = vunpack.c.l.b16 %v659
    %v728 = vunpack.c.h.b16 %v659
    %v729 = vunpack.c.l.b16 %v660
    %v730 = vunpack.c.h.b16 %v660
    %v731 = vunpack.c.l.b16 %v661
    %v732 = vunpack.c.h.b16 %v661
    %v733 = vunpack.c.l.b16 %v662
    %v734 = vunpack.c.h.b16 %v662
    %v735 = vunpack.c.l.b16 %v663
    %v736 = vunpack.c.h.b16 %v663
    %v737 = vunpack.c.l.b16 %v664
    %v738 = vunpack.c.h.b16 %v664
    %v739 = vunpack.c.l.b16 %v665
    %v740 = vunpack.c.h.b16 %v665
    %v741 = vunpack.c.l.b16 %v666
    %v742 = vunpack.c.h.b16 %v666
    %v743 = vunpack.c.l.b16 %v667
    %v744 = vunpack.c.h.b16 %v667
    %v745 = vunpack.c.l.b16 %v668
    %v746 = vunpack.c.h.b16 %v668
    %v747 = vunpack.c.l.b16 %v669
    %v748 = vunpack.c.h.b16 %v669
    %v749 = vunpack.c.l.b16 %v670
    %v750 = vunpack.c.h.b16 %v670
    %v751 = vunpack.c.l.b16 %v671
    %v752 = vunpack.c.h.b16 %v671
    %v753 = vunpack.c.l.b16 %v672
    %v754 = vunpack.c.h.b16 %v672
    %v755 = vunpack.c.l.b16 %v673
    %v756 = vunpack.c.h.b16 %v673
    %v757 = vunpack.c.l.b16 %v674
    %v758 = vunpack.c.h.b16 %v674
    %v759 = vunpack.c.l.b16 %v675
    %v760 = vunpack.c.h.b16 %v675
    %v761 = vunpack.c.l.b16 %v676
    %v762 = vunpack.c.h.b16 %v676
    %v763 = vunpack.c.l.b16 %v677
    %v764 = vunpack.c.h.b16 %v677
    %v765 = vunpack.c.l.b16 %v678
    %v766 = vunpack.c.h.b16 %v678
    %v767 = vunpack.c.l.b16 %v679
    %v768 = vunpack.c.h.b16 %v679
    %v769 = vunpack.c.l.b16 %v680
    %v770 = vunpack.c.h.b16 %v680
    %v771 = vunpack.c.l.b16 %v681
    %v772 = vunpack.c.h.b16 %v681
    %v773 = vunpack.c.l.b16 %v682
    %v774 = vunpack.c.h.b16 %v682
    %v775 = vunpack.c.l.b16 %v683
    %v776 = vunpack.c.h.b16 %v683
    %v777 = vunpack.c.l.b16 %v684
    %v778 = vunpack.c.h.b16 %v684
    %v779 = vunpack.c.l.b16 %v685
    %v780 = vunpack.c.h.b16 %v685
    %v781 = vunpack.c.l.b16 %v686
    %v782 = vunpack.c.h.b16 %v686
    %v783 = vpack.c.b16 %v721, %v719
    %v784 = vpack.c.b16 %v722, %v720
    %v785 = vpack.c.b16 %v725, %v723
    %v786 = vpack.c.b16 %v726, %v724
    %v787 = vpack.c.b16 %v729, %v727
    %v788 = vpack.c.b16 %v730, %v728
    %v789 = vpack.c.b16 %v733, %v731
    %v790 = vpack.c.b16 %v734, %v732
    %v791 = vpack.c.b16 %v737, %v735
    %v792 = vpack.c.b16 %v738, %v736
    %v793 = vpack.c.b16 %v741, %v739
    %v794 = vpack.c.b16 %v742, %v740
    %v795 = vpack.c.b16 %v745, %v743
    %v796 = vpack.c.b16 %v746, %v744
    %v797 = vpack.c.b16 %v749, %v747
    %v798 = vpack.c.b16 %v750, %v748
    %v799 = vpack.c.b16 %v753, %v751
    %v800 = vpack.c.b16 %v754, %v752
    %v801 = vpack.c.b16 %v757, %v755
    %v802 = vpack.c.b16 %v758, %v756
    %v803 = vpack.c.b16 %v761, %v759
    %v804 = vpack.c.b16 %v762, %v760
    %v805 = vpack.c.b16 %v765, %v763
    %v806 = vpack.c.b16 %v766, %v764
    %v807 = vpack.c.b16 %v769, %v767
    %v808 = vpack.c.b16 %v770, %v768
    %v809 = vpack.c.b16 %v773, %v771
    %v810 = vpack.c.b16 %v774, %v772
    %v811 = vpack.c.b16 %v777, %v775
    %v812 = vpack.c.b16 %v778, %v776
    %v813 = vpack.c.b16 %v781, %v779
    %v814 = vpack.c.b16 %v782, %v780
    %847 = vmatprep.subr.bf16.mxu0 %v798
    %848 = vmatpush1.bf16.msra.mxu0 %v797
    %849 = vmatprep.subr.bf16.mxu0 %v796
    %850 = vmatpush1.bf16.msra.mxu0 %v795
    %851 = vmatprep.subr.bf16.mxu0 %v794
    %852 = vmatpush1.bf16.msra.mxu0 %v793
    %853 = vmatprep.subr.bf16.mxu0 %v792
    %854 = vmatpush1.bf16.msra.mxu0 %v791
    %855 = vmatprep.subr.bf16.mxu0 %v790
    %856 = vmatpush1.bf16.msra.mxu0 %v789
    %857 = vmatprep.subr.bf16.mxu0 %v788
    %858 = vmatpush1.bf16.msra.mxu0 %v787
    %859 = vmatprep.subr.bf16.mxu0 %v786
    %860 = vmatpush1.bf16.msra.mxu0 %v785
    %861 = vmatprep.subr.bf16.mxu0 %v784
    %862 = vmatpush1.bf16.msra.mxu0 %v783
    %863 = vmatprep.subr.bf16.mxu0 %v814
    %864 = vmatpush2.bf16.msra.mxu0 %v813
    %865 = vmatprep.subr.bf16.mxu0 %v812
    %866 = vmatpush2.bf16.msra.mxu0 %v811
    %867 = vmatprep.subr.bf16.mxu0 %v810
    %868 = vmatpush2.bf16.msra.mxu0 %v809
    %869 = vmatprep.subr.bf16.mxu0 %v808
    %870 = vmatpush2.bf16.msra.mxu0 %v807
    %871 = vmatprep.subr.bf16.mxu0 %v806
    %872 = vmatpush2.bf16.msra.mxu0 %v805
    %873 = vmatprep.subr.bf16.mxu0 %v804
    %874 = vmatpush2.bf16.msra.mxu0 %v803
    %875 = vmatprep.subr.bf16.mxu0 %v802
    %876 = vmatpush2.bf16.msra.mxu0 %v801
    %877 = vmatprep.subr.bf16.mxu0 %v800
    %878 = vmatpush2.bf16.msra.mxu0 %v799
    %879 = vmatprep.mubr.bf16.mxu0 %v654
    %880 = vmatmul.mubr.bf16.gmra.mxu0 %v653
    %v881 = vpop.f32.mrf.mxu0
    %v882 = vadd.f32 0.0, %v881
    %v883 = vpop.f32.mrf.mxu0
    %v884 = vadd.f32 0.0, %v883
    %v885 = vpop.f32.mrf.mxu0
    %v886 = vpop.f32.mrf.mxu0
    %887 = vdwg.mxu0
    %v888 = vpack.c.bf16 %v651, %v651
    %v889 = vpack.c.bf16 %v652, %v652
    %v892 = vrot.slane %v888, 1
    %v893 = vrot.slane %v889, 1
    %896 = vmatprep.subr.bf16.mxu0 %v798
    %897 = vmatpush1.bf16.msra.mxu0 %v797
    %898 = vmatprep.subr.bf16.mxu0 %v796
    %899 = vmatpush1.bf16.msra.mxu0 %v795
    %900 = vmatprep.subr.bf16.mxu0 %v794
    %901 = vmatpush1.bf16.msra.mxu0 %v793
    %902 = vmatprep.subr.bf16.mxu0 %v792
    %903 = vmatpush1.bf16.msra.mxu0 %v791
    %904 = vmatprep.subr.bf16.mxu0 %v790
    %905 = vmatpush1.bf16.msra.mxu0 %v789
    %906 = vmatprep.subr.bf16.mxu0 %v788
    %907 = vmatpush1.bf16.msra.mxu0 %v787
    %908 = vmatprep.subr.bf16.mxu0 %v786
    %909 = vmatpush1.bf16.msra.mxu0 %v785
    %910 = vmatprep.subr.bf16.mxu0 %v784
    %911 = vmatpush1.bf16.msra.mxu0 %v783
    %912 = vmatprep.subr.bf16.mxu0 %v814
    %913 = vmatpush2.bf16.msra.mxu0 %v813
    %914 = vmatprep.subr.bf16.mxu0 %v812
    %915 = vmatpush2.bf16.msra.mxu0 %v811
    %916 = vmatprep.subr.bf16.mxu0 %v810
    %917 = vmatpush2.bf16.msra.mxu0 %v809
    %918 = vmatprep.subr.bf16.mxu0 %v808
    %919 = vmatpush2.bf16.msra.mxu0 %v807
    %920 = vmatprep.subr.bf16.mxu0 %v806
    %921 = vmatpush2.bf16.msra.mxu0 %v805
    %922 = vmatprep.subr.bf16.mxu0 %v804
    %923 = vmatpush2.bf16.msra.mxu0 %v803
    %924 = vmatprep.subr.bf16.mxu0 %v802
    %925 = vmatpush2.bf16.msra.mxu0 %v801
    %926 = vmatprep.subr.bf16.mxu0 %v800
    %927 = vmatpush2.bf16.msra.mxu0 %v799
    %928 = vmatprep.mubr.bf16.mxu0 %v893
    %929 = vmatmul.mubr.bf16.gmra.mxu0 %v892
    %v930 = vpop.f32.mrf.mxu0
    %v931 = vadd.f32 0.0, %v930
    %v932 = vpop.f32.mrf.mxu0
    %v933 = vadd.f32 0.0, %v932
    %v934 = vpop.f32.mrf.mxu0
    %v935 = vpop.f32.mrf.mxu0
    %936 = vdwg.mxu0
    %v937 = vsel %vm521, %v882, 0.0
    %v938 = vrot.slane %v937, 4
    %v939 = vadd.f32 %v937, %v938
    %v940 = vrot.slane %v939, 2
    %v941 = vadd.f32 %v939, %v940
    %v942 = vrot.slane %v941, 1
    %v943 = vadd.f32 %v941, %v942
    %v944 = vsel %vm521, %v884, 0.0
    %v945 = vrot.slane %v944, 4
    %v946 = vadd.f32 %v944, %v945
    %v947 = vrot.slane %v946, 2
    %v948 = vadd.f32 %v946, %v947
    %v949 = vrot.slane %v948, 1
    %v950 = vadd.f32 %v948, %v949
    %v951 = vmul.f32 %v943, %v536
    %v952 = vmul.f32 %v950, %v536
    %v953 = vsub.f32 %v882, %v951
    %v954 = vsub.f32 %v884, %v952
    %v955 = vmul.f32 %v953, %v953
    %v956 = vmul.f32 %v954, %v954
    %v957 = vsel %vm521, %v955, 0.0
    %v958 = vrot.slane %v957, 4
    %v959 = vadd.f32 %v957, %v958
    %v960 = vrot.slane %v959, 2
    %v961 = vadd.f32 %v959, %v960
    %v962 = vrot.slane %v961, 1
    %v963 = vadd.f32 %v961, %v962
    %v964 = vsel %vm521, %v956, 0.0
    %v965 = vrot.slane %v964, 4
    %v966 = vadd.f32 %v964, %v965
    %v967 = vrot.slane %v966, 2
    %v968 = vadd.f32 %v966, %v967
    %v969 = vrot.slane %v968, 1
    %v970 = vadd.f32 %v968, %v969
    %v971 = vmul.f32 %v963, %v536
    %v972 = vmul.f32 %v970, %v536
    %v973 = vadd.f32 %v971, 1e-05
    %v974 = vadd.f32 %v972, 1e-05
    %v975 = vrsqrt.pop %v973
    %v976 = vrsqrt.pop %v974
    %v977 = vmul.f32 %v953, %v975
    %v978 = vmul.f32 %v954, %v976
    %v980 = vlaneseq
    %v981 = vshrl.u32 %v980, 7
    %v982 = vsub.s32 0, %v981
    %v983 = vrot.slane %v519, %v982
    %v984 = vlaneseq
    %v985 = vshrl.u32 %v984, 7
    %v986 = vsub.s32 1, %v985
    %v987 = vrot.slane %v519, %v986
    %v990 = vmul.f32 %v977, %v983
    %v991 = vmul.f32 %v978, %v987
    %v993 = vlaneseq
    %v994 = vshrl.u32 %v993, 7
    %v995 = vsub.s32 0, %v994
    %v996 = vrot.slane %v520, %v995
    %v997 = vlaneseq
    %v998 = vshrl.u32 %v997, 7
    %v999 = vsub.s32 1, %v998
    %v1000 = vrot.slane %v520, %v999
    %v1003 = vadd.f32 %v990, %v996
    %v1004 = vadd.f32 %v991, %v1000
    %v1005 = vsel %vm521, %v931, 0.0
    %v1006 = vrot.slane %v1005, 4
    %v1007 = vadd.f32 %v1005, %v1006
    %v1008 = vrot.slane %v1007, 2
    %v1009 = vadd.f32 %v1007, %v1008
    %v1010 = vrot.slane %v1009, 1
    %v1011 = vadd.f32 %v1009, %v1010
    %v1012 = vsel %vm521, %v933, 0.0
    %v1013 = vrot.slane %v1012, 4
    %v1014 = vadd.f32 %v1012, %v1013
    %v1015 = vrot.slane %v1014, 2
    %v1016 = vadd.f32 %v1014, %v1015
    %v1017 = vrot.slane %v1016, 1
    %v1018 = vadd.f32 %v1016, %v1017
    %v1019 = vmul.f32 %v1011, %v536
    %v1020 = vmul.f32 %v1018, %v536
    %v1021 = vsub.f32 %v931, %v1019
    %v1022 = vsub.f32 %v933, %v1020
    %v1023 = vmul.f32 %v1021, %v1021
    %v1024 = vmul.f32 %v1022, %v1022
    %v1025 = vsel %vm521, %v1023, 0.0
    %v1026 = vrot.slane %v1025, 4
    %v1027 = vadd.f32 %v1025, %v1026
    %v1028 = vrot.slane %v1027, 2
    %v1029 = vadd.f32 %v1027, %v1028
    %v1030 = vrot.slane %v1029, 1
    %v1031 = vadd.f32 %v1029, %v1030
    %v1032 = vsel %vm521, %v1024, 0.0
    %v1033 = vrot.slane %v1032, 4
    %v1034 = vadd.f32 %v1032, %v1033
    %v1035 = vrot.slane %v1034, 2
    %v1036 = vadd.f32 %v1034, %v1035
    %v1037 = vrot.slane %v1036, 1
    %v1038 = vadd.f32 %v1036, %v1037
    %v1039 = vmul.f32 %v1031, %v536
    %v1040 = vmul.f32 %v1038, %v536
    %v1041 = vadd.f32 %v1039, 1e-05
    %v1042 = vadd.f32 %v1040, 1e-05
    %v1043 = vrsqrt.pop %v1041
    %v1044 = vrsqrt.pop %v1042
    %v1045 = vmul.f32 %v1021, %v1043
    %v1046 = vmul.f32 %v1022, %v1044
    %v1047 = vmul.f32 %v1045, %v983
    %v1048 = vmul.f32 %v1046, %v987
    %v1049 = vadd.f32 %v1047, %v996
    %v1050 = vadd.f32 %v1048, %v1000
    %v1051 = vmul.f32 %v1003, %v1003
    %v1052 = vmul.f32 %v1004, %v1004
    %v1053 = vsel %vm521, %v1051, 0.0
    %v1054 = vsel %vm521, %v1052, 0.0
    %v1055 = vadd.f32 %v1053, %v1054
    %1056 = vadd.xlane.f32.xlu0 %v1055
    %v1057 = vpop.xlane.xlu0 %1056
    %v1058 = vmax.f32 %v1057, 1e-24
    %v1059 = vrsqrt.pop %v1058
    %v1060 = vmul.f32 %v1003, %v1059
    %v1061 = vmul.f32 %v1004, %v1059
    %v1062 = vmul.f32 %v1049, %v1049
    %v1063 = vmul.f32 %v1050, %v1050
    %v1064 = vsel %vm521, %v1062, 0.0
    %v1065 = vsel %vm521, %v1063, 0.0
    %v1066 = vadd.f32 %v1064, %v1065
    %1067 = vadd.xlane.f32.xlu0 %v1066
    %v1068 = vpop.xlane.xlu0 %1067
    %v1069 = vmax.f32 %v1068, 1e-24
    %v1070 = vrsqrt.pop %v1069
    %v1071 = vmul.f32 %v1049, %v1070
    %v1072 = vmul.f32 %v1050, %v1070
    %1073 = vmatprep.subr.mxu0 0.0
    %1074 = vmatpush1.xpose.msra.mxu0 0.0
    %1075 = vmatprep.subr.mxu0 0.0
    %1076 = vmatpush1.xpose.msra.mxu0 0.0
    %1077 = vmatprep.subr.mxu0 0.0
    %1078 = vmatpush1.xpose.msra.mxu0 0.0
    %1079 = vmatprep.subr.mxu0 0.0
    %1080 = vmatpush1.xpose.msra.mxu0 0.0
    %1081 = vmatprep.subr.mxu0 0.0
    %1082 = vmatpush1.xpose.msra.mxu0 0.0
    %1083 = vmatprep.subr.mxu0 0.0
    %1084 = vmatpush1.xpose.msra.mxu0 0.0
    %1085 = vmatprep.subr.mxu0 0.0
    %1086 = vmatpush1.xpose.msra.mxu0 0.0
    %1087 = vmatprep.subr.mxu0 0.0
    %1088 = vmatpush1.xpose.msra.mxu0 0.0
    %1089 = vmatprep.subr.mxu0 0.0
    %1090 = vmatpush1.xpose.msra.mxu0 0.0
    %1091 = vmatprep.subr.mxu0 0.0
    %1092 = vmatpush1.xpose.msra.mxu0 0.0
    %1093 = vmatprep.subr.mxu0 0.0
    %1094 = vmatpush1.xpose.msra.mxu0 0.0
    %1095 = vmatprep.subr.mxu0 0.0
    %1096 = vmatpush1.xpose.msra.mxu0 0.0
    %1097 = vmatprep.subr.mxu0 0.0
    %1098 = vmatpush1.xpose.msra.mxu0 0.0
    %1099 = vmatprep.subr.mxu0 0.0
    %1100 = vmatpush1.xpose.msra.mxu0 0.0
    %1101 = vmatprep.subr.mxu0 0.0
    %1102 = vmatpush1.xpose.msra.mxu0 0.0
    %1103 = vmatprep.subr.mxu0 %v1072
    %1104 = vmatpush1.xpose.msra.mxu0 %v1071
    %1105 = vmatprep.subr.mxu0 0.0
    %1106 = vmatpush2.xpose.msra.mxu0 0.0
    %1107 = vmatprep.subr.mxu0 0.0
    %1108 = vmatpush2.xpose.msra.mxu0 0.0
    %1109 = vmatprep.subr.mxu0 0.0
    %1110 = vmatpush2.xpose.msra.mxu0 0.0
    %1111 = vmatprep.subr.mxu0 0.0
    %1112 = vmatpush2.xpose.msra.mxu0 0.0
    %1113 = vmatprep.subr.mxu0 0.0
    %1114 = vmatpush2.xpose.msra.mxu0 0.0
    %1115 = vmatprep.subr.mxu0 0.0
    %1116 = vmatpush2.xpose.msra.mxu0 0.0
    %1117 = vmatprep.subr.mxu0 0.0
    %1118 = vmatpush2.xpose.msra.mxu0 0.0
    %1119 = vmatprep.subr.mxu0 0.0
    %1120 = vmatpush2.xpose.msra.mxu0 0.0
    %1121 = vmatprep.subr.mxu0 0.0
    %1122 = vmatpush2.xpose.msra.mxu0 0.0
    %1123 = vmatprep.subr.mxu0 0.0
    %1124 = vmatpush2.xpose.msra.mxu0 0.0
    %1125 = vmatprep.subr.mxu0 0.0
    %1126 = vmatpush2.xpose.msra.mxu0 0.0
    %1127 = vmatprep.subr.mxu0 0.0
    %1128 = vmatpush2.xpose.msra.mxu0 0.0
    %1129 = vmatprep.subr.mxu0 0.0
    %1130 = vmatpush2.xpose.msra.mxu0 0.0
    %1131 = vmatprep.subr.mxu0 0.0
    %1132 = vmatpush2.xpose.msra.mxu0 0.0
    %1133 = vmatprep.subr.mxu0 0.0
    %1134 = vmatpush2.xpose.msra.mxu0 0.0
    %1135 = vmatprep.subr.mxu0 0.0
    %1136 = vmatpush2.xpose.msra.mxu0 0.0
    %1137 = vmatprep.mubr.f32.mxu0 %v1061
    %1138 = vmatmul.mubr.f32.gmra.mxu0 %v1060
    %v1139 = vpop.f32.mrf.mxu0
    %v1140 = vadd.f32 0.0, %v1139
    %v1141 = vpop.f32.mrf.mxu0
    %1142 = vdwg.mxu0
    %v1143 = vmul.f32 %v1140, 10.0
    %vm1144 = vcmask 9216
    %v1145 = vsel %vm1144, %v1143, -inf
    %1146 = vmax.xlane.f32.xlu0 %v1145
    %v1147 = vpop.xlane.xlu0 %1146
    %v1148 = vsub.f32 %v1143, %v1147
    %v1149 = vmul.f32 %v1148, 1.442695
    %v1150 = vpow.pop %v1149
    %v1151 = vsel %vm1144, %v1150, 0.0
    %1152 = vadd.xlane.f32.xlu0 %v1151
    %v1153 = vpop.xlane.xlu0 %1152
    %v1154 = vlog2.pop %v1153
    %v1155 = vmul.f32 %v1154, 0.6931472
    %v1156 = vadd.f32 %v1147, %v1155
    %v1157 = vrot.slane %v1145, 4
    %v1158 = vmax.f32 %v1145, %v1157
    %v1159 = vrot.slane %v1158, 2
    %v1160 = vmax.f32 %v1158, %v1159
    %v1161 = vrot.slane %v1160, 1
    %v1162 = vmax.f32 %v1160, %v1161
    %v1163 = vsub.f32 %v1143, %v1162
    %v1164 = vmul.f32 %v1163, 1.442695
    %v1165 = vpow.pop %v1164
    %v1166 = vsel %vm1144, %v1165, 0.0
    %v1167 = vrot.slane %v1166, 4
    %v1168 = vadd.f32 %v1166, %v1167
    %v1169 = vrot.slane %v1168, 2
    %v1170 = vadd.f32 %v1168, %v1169
    %v1171 = vrot.slane %v1170, 1
    %v1172 = vadd.f32 %v1170, %v1171
    %v1173 = vlog2.pop %v1172
    %v1174 = vmul.f32 %v1173, 0.6931472
    %v1175 = vadd.f32 %v1162, %v1174
    %v1176 = vlaneseq
    %v1177 = vshrl.u32 %v1176, 7
    %v1178 = vlaneseq
    %v1179 = vand.u32 %v1178, 127
    %vm1180 = vcmp.eq.s32.totalorder %v1177, %v1179
    %v1181 = vsel %vm1180, %v1143, 0.0
    %v1182 = vsel %vm1144, %v1181, 0.0
    %1183 = vadd.xlane.f32.xlu0 %v1182
    %v1184 = vpop.xlane.xlu0 %1183
    %v1185 = vrot.slane %v1184, 4
    %v1186 = vadd.f32 %v1184, %v1185
    %v1187 = vrot.slane %v1186, 2
    %v1188 = vadd.f32 %v1186, %v1187
    %v1189 = vrot.slane %v1188, 1
    %v1190 = vadd.f32 %v1188, %v1189
    %s1191 = vtos %v1190
    %vm1192 = vcmask 1024
    %v1193 = vsel %vm1192, %v1156, 0.0
    %1194 = vadd.xlane.f32.xlu0 %v1193
    %v1195 = vpop.xlane.xlu0 %1194
    %v1196 = vrot.slane %v1195, 4
    %v1197 = vadd.f32 %v1195, %v1196
    %v1198 = vrot.slane %v1197, 2
    %v1199 = vadd.f32 %v1197, %v1198
    %v1200 = vrot.slane %v1199, 1
    %v1201 = vadd.f32 %v1199, %v1200
    %s1202 = vtos %v1201
    %vm1203 = vcmask 8192
    %v1204 = vsel %vm1203, %v1175, 0.0
    %1205 = vadd.xlane.f32.xlu0 %v1204
    %v1206 = vpop.xlane.xlu0 %1205
    %v1207 = vrot.slane %v1206, 4
    %v1208 = vadd.f32 %v1206, %v1207
    %v1209 = vrot.slane %v1208, 2
    %v1210 = vadd.f32 %v1208, %v1209
    %v1211 = vrot.slane %v1210, 1
    %v1212 = vadd.f32 %v1210, %v1211
    %s1213 = vtos %v1212
    %s1214 = sadd.f32 %s1202, %s1213
    %s1215 = smul.f32 %s1191, 2.0
    %s1216 = ssub.f32 %s1214, %s1215
    %v1217 = vrcp.pop 4.0
    %s1218 = vtos %v1217
    %s1219 = smul.f32 %s1216, %s1218
    %v1220 = vld [vmem:[%s7] sm:$0xff]
    %v1221 = vld [vmem:[%s7 + $0x8] sm:$0xff]
    %v1222 = vld [vmem:[%s7 + $0x10] sm:$0xff]
    %v1223 = vld [vmem:[%s7 + $0x18] sm:$0xff]
    %v1224 = vld [vmem:[%s7 + $0x20] sm:$0xff]
    %v1225 = vld [vmem:[%s7 + $0x28] sm:$0xff]
    %v1226 = vld [vmem:[%s7 + $0x30] sm:$0xff]
    %v1227 = vld [vmem:[%s7 + $0x38] sm:$0xff]
    %v1228 = vld [vmem:[%s7 + $0x40] sm:$0xff]
    %v1229 = vld [vmem:[%s7 + $0x48] sm:$0xff]
    %v1230 = vld [vmem:[%s7 + $0x50] sm:$0xff]
    %v1231 = vld [vmem:[%s7 + $0x58] sm:$0xff]
    %v1232 = vld [vmem:[%s7 + $0x60] sm:$0xff]
    %v1233 = vld [vmem:[%s7 + $0x68] sm:$0xff]
    %v1234 = vld [vmem:[%s7 + $0x70] sm:$0xff]
    %v1235 = vld [vmem:[%s7 + $0x78] sm:$0xff]
    %v1236 = vld [vmem:[%s7 + $0x80] sm:$0xff]
    %v1237 = vld [vmem:[%s7 + $0x88] sm:$0xff]
    %v1238 = vld [vmem:[%s7 + $0x90] sm:$0xff]
    %v1239 = vld [vmem:[%s7 + $0x98] sm:$0xff]
    %v1240 = vld [vmem:[%s7 + $0xa0] sm:$0xff]
    %v1241 = vld [vmem:[%s7 + $0xa8] sm:$0xff]
    %v1242 = vld [vmem:[%s7 + $0xb0] sm:$0xff]
    %v1243 = vld [vmem:[%s7 + $0xb8] sm:$0xff]
    %v1244 = vld [vmem:[%s7 + $0xc0] sm:$0xff]
    %v1245 = vld [vmem:[%s7 + $0xc8] sm:$0xff]
    %v1246 = vld [vmem:[%s7 + $0xd0] sm:$0xff]
    %v1247 = vld [vmem:[%s7 + $0xd8] sm:$0xff]
    %v1248 = vld [vmem:[%s7 + $0xe0] sm:$0xff]
    %v1249 = vld [vmem:[%s7 + $0xe8] sm:$0xff]
    %v1250 = vld [vmem:[%s7 + $0xf0] sm:$0xff]
    %v1251 = vld [vmem:[%s7 + $0xf8] sm:$0xff]
    %v1252 = vld [vmem:[%s7 + $0x100] sm:$0xff]
    %v1253 = vld [vmem:[%s7 + $0x108] sm:$0xff]
    %v1254 = vld [vmem:[%s7 + $0x110] sm:$0xff]
    %v1255 = vld [vmem:[%s7 + $0x118] sm:$0xff]
    %v1256 = vld [vmem:[%s7 + $0x120] sm:$0xff]
    %v1257 = vld [vmem:[%s7 + $0x128] sm:$0xff]
    %v1258 = vld [vmem:[%s7 + $0x130] sm:$0xff]
    %v1259 = vld [vmem:[%s7 + $0x138] sm:$0xff]
    %v1260 = vld [vmem:[%s7 + $0x140] sm:$0xff]
    %v1261 = vld [vmem:[%s7 + $0x148] sm:$0xff]
    %v1262 = vld [vmem:[%s7 + $0x150] sm:$0xff]
    %v1263 = vld [vmem:[%s7 + $0x158] sm:$0xff]
    %v1264 = vld [vmem:[%s7 + $0x160] sm:$0xff]
    %v1265 = vld [vmem:[%s7 + $0x168] sm:$0xff]
    %v1266 = vld [vmem:[%s7 + $0x170] sm:$0xff]
    %v1267 = vld [vmem:[%s7 + $0x178] sm:$0xff]
    %v1268 = vld [vmem:[%s7 + $0x180] sm:$0xff]
    %v1269 = vld [vmem:[%s7 + $0x188] sm:$0xff]
    %v1270 = vld [vmem:[%s7 + $0x190] sm:$0xff]
    %v1271 = vld [vmem:[%s7 + $0x198] sm:$0xff]
    %v1272 = vld [vmem:[%s7 + $0x1a0] sm:$0xff]
    %v1273 = vld [vmem:[%s7 + $0x1a8] sm:$0xff]
    %v1274 = vld [vmem:[%s7 + $0x1b0] sm:$0xff]
    %v1275 = vld [vmem:[%s7 + $0x1b8] sm:$0xff]
    %v1276 = vld [vmem:[%s7 + $0x1c0] sm:$0xff]
    %v1277 = vld [vmem:[%s7 + $0x1c8] sm:$0xff]
    %v1278 = vld [vmem:[%s7 + $0x1d0] sm:$0xff]
    %v1279 = vld [vmem:[%s7 + $0x1d8] sm:$0xff]
    %v1280 = vld [vmem:[%s7 + $0x1e0] sm:$0xff]
    %v1281 = vld [vmem:[%s7 + $0x1e8] sm:$0xff]
    %v1282 = vld [vmem:[%s7 + $0x1f0] sm:$0xff]
    %v1283 = vld [vmem:[%s7 + $0x1f8] sm:$0xff]
    %v1284 = vld [vmem:[%s8] sm:$0x1]
    %v1286 = vlaneseq
    %v1287 = vshrl.u32 %v1286, 7
    %v1288 = vsub.s32 0, %v1287
    %v1289 = vrot.slane %v1284, %v1288
    %1291 = vmatprep.subr.mxu0 0.0
    %1292 = vmatpush1.msra.mxu0 %v1235
    %1293 = vmatprep.subr.mxu0 0.0
    %1294 = vmatpush1.msra.mxu0 %v1234
    %1295 = vmatprep.subr.mxu0 0.0
    %1296 = vmatpush1.msra.mxu0 %v1233
    %1297 = vmatprep.subr.mxu0 0.0
    %1298 = vmatpush1.msra.mxu0 %v1232
    %1299 = vmatprep.subr.mxu0 0.0
    %1300 = vmatpush1.msra.mxu0 %v1231
    %1301 = vmatprep.subr.mxu0 0.0
    %1302 = vmatpush1.msra.mxu0 %v1230
    %1303 = vmatprep.subr.mxu0 0.0
    %1304 = vmatpush1.msra.mxu0 %v1229
    %1305 = vmatprep.subr.mxu0 0.0
    %1306 = vmatpush1.msra.mxu0 %v1228
    %1307 = vmatprep.subr.mxu0 0.0
    %1308 = vmatpush1.msra.mxu0 %v1227
    %1309 = vmatprep.subr.mxu0 0.0
    %1310 = vmatpush1.msra.mxu0 %v1226
    %1311 = vmatprep.subr.mxu0 0.0
    %1312 = vmatpush1.msra.mxu0 %v1225
    %1313 = vmatprep.subr.mxu0 0.0
    %1314 = vmatpush1.msra.mxu0 %v1224
    %1315 = vmatprep.subr.mxu0 0.0
    %1316 = vmatpush1.msra.mxu0 %v1223
    %1317 = vmatprep.subr.mxu0 0.0
    %1318 = vmatpush1.msra.mxu0 %v1222
    %1319 = vmatprep.subr.mxu0 0.0
    %1320 = vmatpush1.msra.mxu0 %v1221
    %1321 = vmatprep.subr.mxu0 0.0
    %1322 = vmatpush1.msra.mxu0 %v1220
    %1323 = vmatprep.subr.mxu0 0.0
    %1324 = vmatpush2.msra.mxu0 %v1251
    %1325 = vmatprep.subr.mxu0 0.0
    %1326 = vmatpush2.msra.mxu0 %v1250
    %1327 = vmatprep.subr.mxu0 0.0
    %1328 = vmatpush2.msra.mxu0 %v1249
    %1329 = vmatprep.subr.mxu0 0.0
    %1330 = vmatpush2.msra.mxu0 %v1248
    %1331 = vmatprep.subr.mxu0 0.0
    %1332 = vmatpush2.msra.mxu0 %v1247
    %1333 = vmatprep.subr.mxu0 0.0
    %1334 = vmatpush2.msra.mxu0 %v1246
    %1335 = vmatprep.subr.mxu0 0.0
    %1336 = vmatpush2.msra.mxu0 %v1245
    %1337 = vmatprep.subr.mxu0 0.0
    %1338 = vmatpush2.msra.mxu0 %v1244
    %1339 = vmatprep.subr.mxu0 0.0
    %1340 = vmatpush2.msra.mxu0 %v1243
    %1341 = vmatprep.subr.mxu0 0.0
    %1342 = vmatpush2.msra.mxu0 %v1242
    %1343 = vmatprep.subr.mxu0 0.0
    %1344 = vmatpush2.msra.mxu0 %v1241
    %1345 = vmatprep.subr.mxu0 0.0
    %1346 = vmatpush2.msra.mxu0 %v1240
    %1347 = vmatprep.subr.mxu0 0.0
    %1348 = vmatpush2.msra.mxu0 %v1239
    %1349 = vmatprep.subr.mxu0 0.0
    %1350 = vmatpush2.msra.mxu0 %v1238
    %1351 = vmatprep.subr.mxu0 0.0
    %1352 = vmatpush2.msra.mxu0 %v1237
    %1353 = vmatprep.subr.mxu0 0.0
    %1354 = vmatpush2.msra.mxu0 %v1236
    %1355 = vmatprep.mubr.f32.mxu0 %v43
    %1356 = vmatmul.mubr.f32.gmra.mxu0 %v39
    %v1357 = vpop.f32.mrf.mxu0
    %v1358 = vadd.f32 %v1289, %v1357
    %v1359 = vpop.f32.mrf.mxu0
    %1360 = vdwg.mxu0
    %1361 = vmatprep.subr.mxu0 0.0
    %1362 = vmatpush1.msra.mxu0 %v1267
    %1363 = vmatprep.subr.mxu0 0.0
    %1364 = vmatpush1.msra.mxu0 %v1266
    %1365 = vmatprep.subr.mxu0 0.0
    %1366 = vmatpush1.msra.mxu0 %v1265
    %1367 = vmatprep.subr.mxu0 0.0
    %1368 = vmatpush1.msra.mxu0 %v1264
    %1369 = vmatprep.subr.mxu0 0.0
    %1370 = vmatpush1.msra.mxu0 %v1263
    %1371 = vmatprep.subr.mxu0 0.0
    %1372 = vmatpush1.msra.mxu0 %v1262
    %1373 = vmatprep.subr.mxu0 0.0
    %1374 = vmatpush1.msra.mxu0 %v1261
    %1375 = vmatprep.subr.mxu0 0.0
    %1376 = vmatpush1.msra.mxu0 %v1260
    %1377 = vmatprep.subr.mxu0 0.0
    %1378 = vmatpush1.msra.mxu0 %v1259
    %1379 = vmatprep.subr.mxu0 0.0
    %1380 = vmatpush1.msra.mxu0 %v1258
    %1381 = vmatprep.subr.mxu0 0.0
    %1382 = vmatpush1.msra.mxu0 %v1257
    %1383 = vmatprep.subr.mxu0 0.0
    %1384 = vmatpush1.msra.mxu0 %v1256
    %1385 = vmatprep.subr.mxu0 0.0
    %1386 = vmatpush1.msra.mxu0 %v1255
    %1387 = vmatprep.subr.mxu0 0.0
    %1388 = vmatpush1.msra.mxu0 %v1254
    %1389 = vmatprep.subr.mxu0 0.0
    %1390 = vmatpush1.msra.mxu0 %v1253
    %1391 = vmatprep.subr.mxu0 0.0
    %1392 = vmatpush1.msra.mxu0 %v1252
    %1393 = vmatprep.subr.mxu0 0.0
    %1394 = vmatpush2.msra.mxu0 %v1283
    %1395 = vmatprep.subr.mxu0 0.0
    %1396 = vmatpush2.msra.mxu0 %v1282
    %1397 = vmatprep.subr.mxu0 0.0
    %1398 = vmatpush2.msra.mxu0 %v1281
    %1399 = vmatprep.subr.mxu0 0.0
    %1400 = vmatpush2.msra.mxu0 %v1280
    %1401 = vmatprep.subr.mxu0 0.0
    %1402 = vmatpush2.msra.mxu0 %v1279
    %1403 = vmatprep.subr.mxu0 0.0
    %1404 = vmatpush2.msra.mxu0 %v1278
    %1405 = vmatprep.subr.mxu0 0.0
    %1406 = vmatpush2.msra.mxu0 %v1277
    %1407 = vmatprep.subr.mxu0 0.0
    %1408 = vmatpush2.msra.mxu0 %v1276
    %1409 = vmatprep.subr.mxu0 0.0
    %1410 = vmatpush2.msra.mxu0 %v1275
    %1411 = vmatprep.subr.mxu0 0.0
    %1412 = vmatpush2.msra.mxu0 %v1274
    %1413 = vmatprep.subr.mxu0 0.0
    %1414 = vmatpush2.msra.mxu0 %v1273
    %1415 = vmatprep.subr.mxu0 0.0
    %1416 = vmatpush2.msra.mxu0 %v1272
    %1417 = vmatprep.subr.mxu0 0.0
    %1418 = vmatpush2.msra.mxu0 %v1271
    %1419 = vmatprep.subr.mxu0 0.0
    %1420 = vmatpush2.msra.mxu0 %v1270
    %1421 = vmatprep.subr.mxu0 0.0
    %1422 = vmatpush2.msra.mxu0 %v1269
    %1423 = vmatprep.subr.mxu0 0.0
    %1424 = vmatpush2.msra.mxu0 %v1268
    %1425 = vmatprep.mubr.f32.mxu0 %v44
    %1426 = vmatmul.mubr.f32.gmra.mxu0 %v40
    %v1427 = vpop.f32.mrf.mxu0
    %v1428 = vadd.f32 %v1358, %v1427
    %v1429 = vpop.f32.mrf.mxu0
    %1430 = vdwg.mxu0
    %v1431 = vld [vmem:[%s9] sm:$0x3]
    %v1432 = vmax.f32 %v1428, 0.0
    %v1433 = vmul.f32 %v1428, %v1431
    %v1434 = vsub.f32 %v1432, %v1433
    %v1435 = vand.u32 2147483647, %v1428
    %v1436 = vsub.f32 0.0, %v1435
    %v1437 = vmul.f32 %v1436, 1.442695
    %v1438 = vpow.pop %v1437
    %v1439 = vadd.f32 %v1438, 1.0
    %v1440 = vlog2.pop %v1439
    %v1441 = vmul.f32 %v1440, 0.6931472
    %v1442 = vadd.f32 %v1434, %v1441
    %vm1443 = vcmask 41984
    %v1444 = vsel %vm1443, %v1442, 0.0
    %1445 = vadd.xlane.f32.xlu0 %v1444
    %v1446 = vpop.xlane.xlu0 %1445
    %v1447 = vrot.slane %v1446, 4
    %v1448 = vadd.f32 %v1446, %v1447
    %v1449 = vrot.slane %v1448, 2
    %v1450 = vadd.f32 %v1448, %v1449
    %v1451 = vrot.slane %v1450, 1
    %v1452 = vadd.f32 %v1450, %v1451
    %s1453 = vtos %v1452
    %v1454 = vrcp.pop 12.0
    %s1455 = vtos %v1454
    %s1456 = smul.f32 %s1453, %s1455
    %1457 = vst.msk [vmem:[#allocation4] sm:$0x3] %vm1443, %v1428
    %s1458 = sadd.f32 %s1219, %s1456
    %v1459 = vstv %s1458
    %vm1460 = vcmask 0
    %1461 = vst.msk [vmem:[#allocation2] sm:$0x1] %vm1460, %v1459
    // Predicated region
    $region42: #{ss_model_forward.11} parent=1 // pred_check
      _
    $region43: #{ss_model_forward.11} parent=1 // pred_check_branch
      %1463 = sbr.rel (0) target = $region45
    $region44: #{ss_model_forward.11} parent=1 // pred_region
      %s1465 = ssub.s32 16, 16
      %1466 = vsyncadd [#allocation3], %s1465
      %s1468 = sshll.u32 [#allocation2], 4
      %s1469 = int_to_ptr.vmem [resolvable:$true] %s1468
      %1471 = dma.vmem_to_hbm [thread:$0]  %s1469, 16, %s10, [#allocation3]
    $region45: #{ss_model_forward.11} parent=1 // pred_fallthru
      _
    // Predicated region
    $region46: #{ss_model_forward.11} parent=1 // pred_check
      _
    $region47: #{ss_model_forward.11} parent=1 // pred_check_branch
      %1473 = sbr.rel (0) target = $region49
    $region48: #{ss_model_forward.11} parent=1 // pred_region
      %s1475 = ssub.s32 32, 32
      %1476 = vsyncadd [#allocation5], %s1475
      %s1478 = sshll.u32 [#allocation4], 4
      %s1479 = int_to_ptr.vmem [resolvable:$true] %s1478
      %1481 = dma.vmem_to_hbm [thread:$0]  %s1479, 32, %s11, [#allocation5]
    $region49: #{ss_model_forward.11} parent=1 // pred_fallthru
      _
    // Predicated region
    $region50: #{ss_model_forward.11} parent=1 // pred_check
      _
    $region51: #{ss_model_forward.11} parent=1 // pred_check_branch
      %1483 = sbr.rel (0) target = $region53
    $region52: #{ss_model_forward.11} parent=1 // pred_region
      %1484 = dma.done [#allocation3], 16
    $region53: #{ss_model_forward.11} parent=1 // pred_fallthru
      _
    // Predicated region
    $region54: #{ss_model_forward.11} parent=1 // pred_check
      _
    $region55: #{ss_model_forward.11} parent=1 // pred_check_branch
      %1486 = sbr.rel (0) target = $region57
    $region56: #{ss_model_forward.11} parent=1 // pred_region
      %1487 = dma.done [#allocation5], 32
    $region57: #{ss_model_forward.11} parent=1 // pred_fallthru
      _
    %1488 = vsyncpa [#allocation3], 1
    %1489 = vsyncpa [#allocation5], 1

</llo_original>
